<compile_context>
chip_gen: v5e
topology: v5e:2x2
jax: 0.10.0
libtpu: 0.0.40
codegen_flags: <defaults>
</compile_context>

<pallas_src>
import numpy as np

import jax
import jax.numpy as jnp
from jax.experimental import pallas as pl
from jax.experimental.pallas import tpu as pltpu

EMB_DIM = 8


# ---------------------- static 0/1 gather tables (host) ---------------------

def _conv_gather(hin, win, kh, kw, stride, pad):
    """S[t, ih*win+iw, oh*oW+ow] = 1 iff input (ih,iw) is tap t of output (oh,ow)."""
    oh_ = (hin + 2 * pad - kh) // stride + 1
    ow_ = (win + 2 * pad - kw) // stride + 1
    s = np.zeros((kh * kw, hin * win, oh_ * ow_), np.float32)
    for dh in range(kh):
        for dw in range(kw):
            t = dh * kw + dw
            for yo in range(oh_):
                for xo in range(ow_):
                    yi = yo * stride + dh - pad
                    xi = xo * stride + dw - pad
                    if 0 <= yi < hin and 0 <= xi < win:
                        s[t, yi * win + xi, yo * ow_ + xo] = 1.0
    return s


def _convT_gather(hin, win, kh, kw, stride, pad):
    """ConvTranspose2d scatter expressed as a gather over output positions."""
    oh_ = (hin - 1) * stride + kh - 2 * pad
    ow_ = (win - 1) * stride + kw - 2 * pad
    s = np.zeros((kh * kw, hin * win, oh_ * ow_), np.float32)
    for dh in range(kh):
        for dw in range(kw):
            t = dh * kw + dw
            for yi in range(hin):
                for xi in range(win):
                    yo = yi * stride + dh - pad
                    xo = xi * stride + dw - pad
                    if 0 <= yo < oh_ and 0 <= xo < ow_:
                        s[t, yi * win + xi, yo * ow_ + xo] = 1.0
    return s


def _pool_gather(hin, win, stride):
    """2x2 max-pool window selection (4 taps)."""
    oh_ = (hin - 2) // stride + 1
    ow_ = (win - 2) // stride + 1
    s = np.zeros((4, hin * win, oh_ * ow_), np.float32)
    for dh in range(2):
        for dw in range(2):
            t = dh * 2 + dw
            for yo in range(oh_):
                for xo in range(ow_):
                    s[t, (yo * stride + dh) * win + (xo * stride + dw),
                      yo * ow_ + xo] = 1.0
    return s


_SP1 = _pool_gather(10, 10, 2)            # MaxPool2d(2,2):      10x10 -> 5x5   (4,100,25)
_SE2 = _conv_gather(5, 5, 3, 3, 2, 1)     # Conv2d(16,emb,3,2,1):  5x5 -> 3x3   (9,25,9)
_SP2 = _pool_gather(3, 3, 1)              # MaxPool2d(2,1):        3x3 -> 2x2   (4,9,4)
_SD1 = _convT_gather(2, 2, 3, 3, 2, 0)    # ConvT(emb,16,3,2):     2x2 -> 5x5   (9,4,25)
_SD2 = _convT_gather(5, 5, 5, 5, 3, 1)    # ConvT(16,8,5,3,1):     5x5 -> 15x15 (25,25,225)


# --------------------------------- kernel -----------------------------------

def _acc_reduce(make_part, n, op, width=4):
    """Bounded-width accumulator reduction: depth ~ n/width + width instead of n,
    while keeping at most `width`+1 partial results live (vreg pressure)."""
    accs = []
    for t in range(n):
        v = make_part(t)
        if len(accs) < width:
            accs.append(v)
        else:
            accs[t % width] = op(accs[t % width], v)
    r = accs[0]
    for a in accs[1:]:
        r = op(r, a)
    return r


def _ae_fused_kernel(xc_ref, w1_ref, b1_ref, sp1_ref,
                     w2_ref, b2_ref, se2_ref, sp2_ref,
                     wd1_ref, bd1_ref, sd1_ref,
                     wd2_ref, bd2_ref, sd2_ref,
                     wd3_ref, bd3_ref,
                     y_ref, feat_ref):
    f32 = jnp.float32
    bt = xc_ref.shape[0]          # images per grid step (unrolled below)

    def conv(x, ws_ref, s_ref, b_ref):
        # x: (Cin, HWin); ws_ref: (T*Cout, Cin) tap-stacked weights;
        # s_ref: (T, HWin, HWout) 0/1 gather; b_ref: (Cout, 1).
        taps = s_ref.shape[0]
        cout = b_ref.shape[0]
        z = jnp.dot(ws_ref[...], x, preferred_element_type=f32)   # (T*Cout, HWin)

        def part(t):
            return jnp.dot(z[t * cout:(t + 1) * cout, :], s_ref[t],
                           preferred_element_type=f32)

        return _acc_reduce(part, taps, jnp.add) + b_ref[...]

    def maxpool(x, s_ref):
        def part(t):
            return jnp.dot(x, s_ref[t], preferred_element_type=f32)
        return _acc_reduce(part, 4, jnp.maximum)

    def relu(v):
        return jnp.maximum(v, 0.0)

    # Unrolled over the batch tile: the images' dependency chains are
    # independent, so the VLIW scheduler interleaves them (latency hiding).
    for b in range(bt):
        # ------------------------------ encoder -----------------------------
        xc = xc_ref[b]                                                # (9, 100)
        h1 = relu(jnp.dot(w1_ref[...], xc, preferred_element_type=f32)
                  + b1_ref[...])                                      # (16, 100)
        p1 = maxpool(h1, sp1_ref)                                     # (16, 25)
        h2 = relu(conv(p1, w2_ref, se2_ref, b2_ref))                  # (emb, 9)
        feat = maxpool(h2, sp2_ref)                                   # (emb, 4)
        feat_ref[b, :, :] = feat

        # ------------------------------ decoder -----------------------------
        d1 = relu(conv(feat, wd1_ref, sd1_ref, bd1_ref))              # (16, 25)
        d2 = relu(conv(d1, wd2_ref, sd2_ref, bd2_ref))                # (8, 225)
        # dec3 (ConvTranspose2d(8,1,2,stride=2,padding=1)): stride == kernel,
        # so col2im is a pure sub-pixel interleave.  Emit per-tap rows (4, 225)
        # with bias + tanh applied here (each output pixel receives exactly one
        # tap); the host does only a depth-to-space + crop.
        y = jnp.tanh(jnp.dot(wd3_ref[...], d2, preferred_element_type=f32)
                     + bd3_ref[...])                                  # (4, 225)
        y_ref[b, :, :] = y


# --------------------------------- wrapper ----------------------------------

def _const_spec(arr):
    zero = (0,) * arr.ndim
    return pl.BlockSpec(arr.shape, lambda i, _z=zero: _z)


def autoencoder_forward(params, x, *, batch_tile=2):
    """Forward pass of the PyTorch `autoencoder` module.  x: (B, 1, 28, 28)."""
    B = x.shape[0]
    f32 = jnp.float32

    BT = max(1, min(batch_tile, B))
    Bp = ((B + BT - 1) // BT) * BT          # pad batch to a multiple of the tile

    # Tap-stacked weights / biases (tiny, fused by XLA into the call prologue).
    w1 = params["enc1_w"].reshape(16, 9).astype(f32)
    b1 = params["enc1_b"].reshape(16, 1).astype(f32)
    w2 = params["enc2_w"].transpose(2, 3, 0, 1).reshape(9 * EMB_DIM, 16).astype(f32)
    b2 = params["enc2_b"].reshape(EMB_DIM, 1).astype(f32)
    wd1 = params["dec1_w"].transpose(2, 3, 1, 0).reshape(9 * 16, EMB_DIM).astype(f32)
    bd1 = params["dec1_b"].reshape(16, 1).astype(f32)
    wd2 = params["dec2_w"].transpose(2, 3, 1, 0).reshape(25 * 8, 16).astype(f32)
    bd2 = params["dec2_b"].reshape(8, 1).astype(f32)
    wd3 = params["dec3_w"].transpose(2, 3, 1, 0).reshape(4, 8).astype(f32)
    bd3 = jnp.tile(params["dec3_b"].reshape(1, 1).astype(f32), (4, 1))

    # 0/1 selection matrices in f32 (<1 MiB total, DMA'd into VMEM once):
    # no per-image casts inside the kernel.
    sp1 = jnp.asarray(_SP1, f32)
    se2 = jnp.asarray(_SE2, f32)
    sp2 = jnp.asarray(_SP2, f32)
    sd1 = jnp.asarray(_SD1, f32)
    sd2 = jnp.asarray(_SD2, f32)

    # Input im2col for enc1: kernel 3 == stride 3 -> pure space-to-depth.
    xp = jnp.pad(x.reshape(B, 28, 28), ((0, Bp - B), (1, 1), (1, 1)))  # (Bp,30,30)
    x_cols = (xp.reshape(Bp, 10, 3, 10, 3)
                .transpose(0, 2, 4, 1, 3)
                .reshape(Bp, 9, 100)
                .astype(f32))                                          # (Bp, 9, 100)

    consts = (w1, b1, sp1, w2, b2, se2, sp2,
              wd1, bd1, sd1, wd2, bd2, sd2, wd3, bd3)

    in_specs = [pl.BlockSpec((BT, 9, 100), lambda i: (i, 0, 0))]
    in_specs += [_const_spec(c) for c in consts]

    y, feat = pl.pallas_call(
        _ae_fused_kernel,
        grid=(Bp // BT,),
        in_specs=in_specs,
        out_specs=[
            pl.BlockSpec((BT, 4, 225), lambda i: (i, 0, 0)),
            pl.BlockSpec((BT, EMB_DIM, 4), lambda i: (i, 0, 0)),
        ],
        out_shape=[
            jax.ShapeDtypeStruct((Bp, 4, 225), f32),
            jax.ShapeDtypeStruct((Bp, EMB_DIM, 4), f32),
        ],
        compiler_params=pltpu.CompilerParams(
            dimension_semantics=("parallel",)),
    )(x_cols, *consts)

    y = y[:B]
    feat = feat[:B]

    # Final stride-2 / kernel-2 transposed conv: depth-to-space + crop (pad=1).
    full = (y.reshape(B, 2, 2, 15, 15)
              .transpose(0, 3, 1, 4, 2)
              .reshape(B, 30, 30))
    x_rec = full[:, 1:29, 1:29].reshape(B, 1, 28, 28)
    feat_flat = feat.reshape(B, EMB_DIM * 4)
    return x_rec, feat_flat


# ------------------------------ reference (XLA) ------------------------------

def _reference_forward(params, x):
    dn = ("NCHW", "OIHW", "NCHW")
    hi = jax.lax.Precision.HIGHEST

    def conv(x, w, b, s, p):
        y = jax.lax.conv_general_dilated(x, w, (s, s), [(p, p), (p, p)],
                                         dimension_numbers=dn, precision=hi)
        return y + b.reshape(1, -1, 1, 1)

    def convT(x, w, b, s, p):
        k = w.shape[-1]
        wt = jnp.flip(w, (-2, -1)).transpose(1, 0, 2, 3)
        y = jax.lax.conv_general_dilated(x, wt, (1, 1),
                                         [(k - 1 - p, k - 1 - p)] * 2,
                                         lhs_dilation=(s, s),
                                         dimension_numbers=dn, precision=hi)
        return y + b.reshape(1, -1, 1, 1)

    def pool(x, s):
        return jax.lax.reduce_window(x, -jnp.inf, jax.lax.max,
                                     (1, 1, 2, 2), (1, 1, s, s), "VALID")

    h = jax.nn.relu(conv(x, params["enc1_w"], params["enc1_b"], 3, 1))
    h = pool(h, 2)
    h = jax.nn.relu(conv(h, params["enc2_w"], params["enc2_b"], 2, 1))
    feature = pool(h, 1)
    d = jax.nn.relu(convT(feature, params["dec1_w"], params["dec1_b"], 2, 0))
    d = jax.nn.relu(convT(d, params["dec2_w"], params["dec2_b"], 3, 1))
    xr = jnp.tanh(convT(d, params["dec3_w"], params["dec3_b"], 2, 1))
    return xr, feature.reshape(feature.shape[0], -1)


# --------------------------------- params -----------------------------------

def init_params(key):
    def w_init(k, shape, fan_in):
        scale = 1.0 / jnp.sqrt(fan_in)
        return jax.random.uniform(k, shape, jnp.float32, -scale, scale)

    ks = jax.random.split(key, 10)
    return {
        # encoder
        "enc1_w": w_init(ks[0], (16, 1, 3, 3), 1 * 9),
        "enc1_b": w_init(ks[1], (16,), 1 * 9),
        "enc2_w": w_init(ks[2], (EMB_DIM, 16, 3, 3), 16 * 9),
        "enc2_b": w_init(ks[3], (EMB_DIM,), 16 * 9),
        # decoder (ConvTranspose2d weight layout: (in_c, out_c, kH, kW))
        "dec1_w": w_init(ks[4], (EMB_DIM, 16, 3, 3), 16 * 9),
        "dec1_b": w_init(ks[5], (16,), 16 * 9),
        "dec2_w": w_init(ks[6], (16, 8, 5, 5), 8 * 25),
        "dec2_b": w_init(ks[7], (8,), 8 * 25),
        "dec3_w": w_init(ks[8], (8, 1, 2, 2), 1 * 4),
        "dec3_b": w_init(ks[9], (1,), 1 * 4),
    }


if __name__ == "__main__":
    key = jax.random.PRNGKey(0)
    kp, kx = jax.random.split(key)
    params = init_params(kp)
    x = jax.random.normal(kx, (2, 1, 28, 28), jnp.float32)     # MNIST-like input

    fwd = jax.jit(autoencoder_forward)
    x_rec, feat = fwd(params, x)
    jax.block_until_ready((x_rec, feat))

    assert x_rec.shape == (2, 1, 28, 28), x_rec.shape
    assert feat.shape == (2, EMB_DIM * 2 * 2), feat.shape
    assert bool(jnp.all(jnp.abs(x_rec) <= 1.0))                 # tanh range

    # Numerical sanity check against a plain-XLA reference of the same module.
    xr_ref, ft_ref = _reference_forward(params, x)
    err_x = float(jnp.max(jnp.abs(x_rec - xr_ref)))
    err_f = float(jnp.max(jnp.abs(feat - ft_ref)))
    assert err_x < 3e-2 and err_f < 3e-2, (err_x, err_f)

    print("KERNEL_OK")
</pallas_src>

<mosaic_0001>
module attributes {stable_mosaic.version = 11 : i64} {
  func.func @_ae_fused_kernel(%arg0: i32, %arg1: memref<2x9x100xf32, #tpu.memory_space<vmem>>, %arg2: memref<16x9xf32, #tpu.memory_space<vmem>>, %arg3: memref<16x1xf32, #tpu.memory_space<vmem>>, %arg4: memref<4x100x25xf32, #tpu.memory_space<vmem>>, %arg5: memref<72x16xf32, #tpu.memory_space<vmem>>, %arg6: memref<8x1xf32, #tpu.memory_space<vmem>>, %arg7: memref<9x25x9xf32, #tpu.memory_space<vmem>>, %arg8: memref<4x9x4xf32, #tpu.memory_space<vmem>>, %arg9: memref<144x8xf32, #tpu.memory_space<vmem>>, %arg10: memref<16x1xf32, #tpu.memory_space<vmem>>, %arg11: memref<9x4x25xf32, #tpu.memory_space<vmem>>, %arg12: memref<200x16xf32, #tpu.memory_space<vmem>>, %arg13: memref<8x1xf32, #tpu.memory_space<vmem>>, %arg14: memref<25x25x225xf32, #tpu.memory_space<vmem>>, %arg15: memref<4x8xf32, #tpu.memory_space<vmem>>, %arg16: memref<4x1xf32, #tpu.memory_space<vmem>>, %arg17: memref<2x4x225xf32, #tpu.memory_space<vmem>>, %arg18: memref<2x8x4xf32, #tpu.memory_space<vmem>>) attributes {dimension_semantics = [#tpu.dimension_semantics<parallel>], iteration_bounds = array<i64: 1>, scalar_prefetch = 0 : i64, scratch_operands = 0 : i64, tpu.core_type = #tpu.core_type<tc>, window_params = [{transform_indices = @transform_0, window_bounds = array<i64: 2, 9, 100>}, {pipeline_mode = #tpu.pipeline_mode<synchronous>, transform_indices = @transform_1, window_bounds = array<i64: 16, 9>}, {pipeline_mode = #tpu.pipeline_mode<synchronous>, transform_indices = @transform_2, window_bounds = array<i64: 16, 1>}, {pipeline_mode = #tpu.pipeline_mode<synchronous>, transform_indices = @transform_3, window_bounds = array<i64: 4, 100, 25>}, {pipeline_mode = #tpu.pipeline_mode<synchronous>, transform_indices = @transform_4, window_bounds = array<i64: 72, 16>}, {pipeline_mode = #tpu.pipeline_mode<synchronous>, transform_indices = @transform_5, window_bounds = array<i64: 8, 1>}, {pipeline_mode = #tpu.pipeline_mode<synchronous>, transform_indices = @transform_6, window_bounds = array<i64: 9, 25, 9>}, {pipeline_mode = #tpu.pipeline_mode<synchronous>, transform_indices = @transform_7, window_bounds = array<i64: 4, 9, 4>}, {pipeline_mode = #tpu.pipeline_mode<synchronous>, transform_indices = @transform_8, window_bounds = array<i64: 144, 8>}, {pipeline_mode = #tpu.pipeline_mode<synchronous>, transform_indices = @transform_9, window_bounds = array<i64: 16, 1>}, {pipeline_mode = #tpu.pipeline_mode<synchronous>, transform_indices = @transform_10, window_bounds = array<i64: 9, 4, 25>}, {pipeline_mode = #tpu.pipeline_mode<synchronous>, transform_indices = @transform_11, window_bounds = array<i64: 200, 16>}, {pipeline_mode = #tpu.pipeline_mode<synchronous>, transform_indices = @transform_12, window_bounds = array<i64: 8, 1>}, {pipeline_mode = #tpu.pipeline_mode<synchronous>, transform_indices = @transform_13, window_bounds = array<i64: 25, 25, 225>}, {pipeline_mode = #tpu.pipeline_mode<synchronous>, transform_indices = @transform_14, window_bounds = array<i64: 4, 8>}, {pipeline_mode = #tpu.pipeline_mode<synchronous>, transform_indices = @transform_15, window_bounds = array<i64: 4, 1>}, {transform_indices = @transform_16, window_bounds = array<i64: 2, 4, 225>}, {transform_indices = @transform_17, window_bounds = array<i64: 2, 8, 4>}]} {
    %c0 = arith.constant 0 : index
    %c0_0 = arith.constant 0 : index
    %c0_1 = arith.constant 0 : index
    %0 = vector.load %arg1[%c0, %c0_0, %c0_1] : memref<2x9x100xf32, #tpu.memory_space<vmem>>, vector<1x9x100xf32>
    %1 = vector.shape_cast %0 : vector<1x9x100xf32> to vector<9x100xf32>
    %c0_2 = arith.constant 0 : index
    %c0_3 = arith.constant 0 : index
    %2 = vector.load %arg2[%c0_2, %c0_3] : memref<16x9xf32, #tpu.memory_space<vmem>>, vector<16x9xf32>
    %cst = arith.constant dense<0.000000e+00> : vector<16x100xf32>
    %3 = tpu.matmul %2, %1, %cst {dimension_numbers = #tpu.dot_dimension_numbers<[1], [0], [0], [1], [0, 0, 1, 1], [], []>} : vector<16x9xf32>, vector<9x100xf32>, vector<16x100xf32> -> vector<16x100xf32>
    %c0_4 = arith.constant 0 : index
    %c0_5 = arith.constant 0 : index
    %4 = vector.load %arg3[%c0_4, %c0_5] : memref<16x1xf32, #tpu.memory_space<vmem>>, vector<16x1xf32>
    %5 = vector.broadcast %4 : vector<16x1xf32> to vector<16x100xf32>
    %6 = arith.addf %3, %5 : vector<16x100xf32>
    %cst_6 = arith.constant 0.000000e+00 : f32
    %7 = vector.broadcast %cst_6 : f32 to vector<16x100xf32>
    %8 = arith.maximumf %6, %7 : vector<16x100xf32>
    %c0_7 = arith.constant 0 : index
    %c0_8 = arith.constant 0 : index
    %c0_9 = arith.constant 0 : index
    %9 = vector.load %arg4[%c0_7, %c0_8, %c0_9] : memref<4x100x25xf32, #tpu.memory_space<vmem>>, vector<1x100x25xf32>
    %10 = vector.shape_cast %9 : vector<1x100x25xf32> to vector<100x25xf32>
    %cst_10 = arith.constant dense<0.000000e+00> : vector<16x25xf32>
    %11 = tpu.matmul %8, %10, %cst_10 {dimension_numbers = #tpu.dot_dimension_numbers<[1], [0], [0], [1], [0, 0, 1, 1], [], []>} : vector<16x100xf32>, vector<100x25xf32>, vector<16x25xf32> -> vector<16x25xf32>
    %c1 = arith.constant 1 : index
    %c0_11 = arith.constant 0 : index
    %c0_12 = arith.constant 0 : index
    %12 = vector.load %arg4[%c1, %c0_11, %c0_12] : memref<4x100x25xf32, #tpu.memory_space<vmem>>, vector<1x100x25xf32>
    %13 = vector.shape_cast %12 : vector<1x100x25xf32> to vector<100x25xf32>
    %cst_13 = arith.constant dense<0.000000e+00> : vector<16x25xf32>
    %14 = tpu.matmul %8, %13, %cst_13 {dimension_numbers = #tpu.dot_dimension_numbers<[1], [0], [0], [1], [0, 0, 1, 1], [], []>} : vector<16x100xf32>, vector<100x25xf32>, vector<16x25xf32> -> vector<16x25xf32>
    %c2 = arith.constant 2 : index
    %c0_14 = arith.constant 0 : index
    %c0_15 = arith.constant 0 : index
    %15 = vector.load %arg4[%c2, %c0_14, %c0_15] : memref<4x100x25xf32, #tpu.memory_space<vmem>>, vector<1x100x25xf32>
    %16 = vector.shape_cast %15 : vector<1x100x25xf32> to vector<100x25xf32>
    %cst_16 = arith.constant dense<0.000000e+00> : vector<16x25xf32>
    %17 = tpu.matmul %8, %16, %cst_16 {dimension_numbers = #tpu.dot_dimension_numbers<[1], [0], [0], [1], [0, 0, 1, 1], [], []>} : vector<16x100xf32>, vector<100x25xf32>, vector<16x25xf32> -> vector<16x25xf32>
    %c3 = arith.constant 3 : index
    %c0_17 = arith.constant 0 : index
    %c0_18 = arith.constant 0 : index
    %18 = vector.load %arg4[%c3, %c0_17, %c0_18] : memref<4x100x25xf32, #tpu.memory_space<vmem>>, vector<1x100x25xf32>
    %19 = vector.shape_cast %18 : vector<1x100x25xf32> to vector<100x25xf32>
    %cst_19 = arith.constant dense<0.000000e+00> : vector<16x25xf32>
    %20 = tpu.matmul %8, %19, %cst_19 {dimension_numbers = #tpu.dot_dimension_numbers<[1], [0], [0], [1], [0, 0, 1, 1], [], []>} : vector<16x100xf32>, vector<100x25xf32>, vector<16x25xf32> -> vector<16x25xf32>
    %21 = arith.maximumf %11, %14 : vector<16x25xf32>
    %22 = arith.maximumf %21, %17 : vector<16x25xf32>
    %23 = arith.maximumf %22, %20 : vector<16x25xf32>
    %c0_20 = arith.constant 0 : index
    %c0_21 = arith.constant 0 : index
    %24 = vector.load %arg5[%c0_20, %c0_21] : memref<72x16xf32, #tpu.memory_space<vmem>>, vector<72x16xf32>
    %cst_22 = arith.constant dense<0.000000e+00> : vector<72x25xf32>
    %25 = tpu.matmul %24, %23, %cst_22 {dimension_numbers = #tpu.dot_dimension_numbers<[1], [0], [0], [1], [0, 0, 1, 1], [], []>} : vector<72x16xf32>, vector<16x25xf32>, vector<72x25xf32> -> vector<72x25xf32>
    %26 = vector.extract_strided_slice %25 {offsets = [0, 0], sizes = [8, 25], strides = [1, 1]} : vector<72x25xf32> to vector<8x25xf32>
    %c0_23 = arith.constant 0 : index
    %c0_24 = arith.constant 0 : index
    %c0_25 = arith.constant 0 : index
    %27 = vector.load %arg7[%c0_23, %c0_24, %c0_25] : memref<9x25x9xf32, #tpu.memory_space<vmem>>, vector<1x25x9xf32>
    %28 = vector.shape_cast %27 : vector<1x25x9xf32> to vector<25x9xf32>
    %cst_26 = arith.constant dense<0.000000e+00> : vector<8x9xf32>
    %29 = tpu.matmul %26, %28, %cst_26 {dimension_numbers = #tpu.dot_dimension_numbers<[1], [0], [0], [1], [0, 0, 1, 1], [], []>} : vector<8x25xf32>, vector<25x9xf32>, vector<8x9xf32> -> vector<8x9xf32>
    %30 = vector.extract_strided_slice %25 {offsets = [8, 0], sizes = [8, 25], strides = [1, 1]} : vector<72x25xf32> to vector<8x25xf32>
    %c1_27 = arith.constant 1 : index
    %c0_28 = arith.constant 0 : index
    %c0_29 = arith.constant 0 : index
    %31 = vector.load %arg7[%c1_27, %c0_28, %c0_29] : memref<9x25x9xf32, #tpu.memory_space<vmem>>, vector<1x25x9xf32>
    %32 = vector.shape_cast %31 : vector<1x25x9xf32> to vector<25x9xf32>
    %cst_30 = arith.constant dense<0.000000e+00> : vector<8x9xf32>
    %33 = tpu.matmul %30, %32, %cst_30 {dimension_numbers = #tpu.dot_dimension_numbers<[1], [0], [0], [1], [0, 0, 1, 1], [], []>} : vector<8x25xf32>, vector<25x9xf32>, vector<8x9xf32> -> vector<8x9xf32>
    %34 = vector.extract_strided_slice %25 {offsets = [16, 0], sizes = [8, 25], strides = [1, 1]} : vector<72x25xf32> to vector<8x25xf32>
    %c2_31 = arith.constant 2 : index
    %c0_32 = arith.constant 0 : index
    %c0_33 = arith.constant 0 : index
    %35 = vector.load %arg7[%c2_31, %c0_32, %c0_33] : memref<9x25x9xf32, #tpu.memory_space<vmem>>, vector<1x25x9xf32>
    %36 = vector.shape_cast %35 : vector<1x25x9xf32> to vector<25x9xf32>
    %cst_34 = arith.constant dense<0.000000e+00> : vector<8x9xf32>
    %37 = tpu.matmul %34, %36, %cst_34 {dimension_numbers = #tpu.dot_dimension_numbers<[1], [0], [0], [1], [0, 0, 1, 1], [], []>} : vector<8x25xf32>, vector<25x9xf32>, vector<8x9xf32> -> vector<8x9xf32>
    %38 = vector.extract_strided_slice %25 {offsets = [24, 0], sizes = [8, 25], strides = [1, 1]} : vector<72x25xf32> to vector<8x25xf32>
    %c3_35 = arith.constant 3 : index
    %c0_36 = arith.constant 0 : index
    %c0_37 = arith.constant 0 : index
    %39 = vector.load %arg7[%c3_35, %c0_36, %c0_37] : memref<9x25x9xf32, #tpu.memory_space<vmem>>, vector<1x25x9xf32>
    %40 = vector.shape_cast %39 : vector<1x25x9xf32> to vector<25x9xf32>
    %cst_38 = arith.constant dense<0.000000e+00> : vector<8x9xf32>
    %41 = tpu.matmul %38, %40, %cst_38 {dimension_numbers = #tpu.dot_dimension_numbers<[1], [0], [0], [1], [0, 0, 1, 1], [], []>} : vector<8x25xf32>, vector<25x9xf32>, vector<8x9xf32> -> vector<8x9xf32>
    %42 = vector.extract_strided_slice %25 {offsets = [32, 0], sizes = [8, 25], strides = [1, 1]} : vector<72x25xf32> to vector<8x25xf32>
    %c4 = arith.constant 4 : index
    %c0_39 = arith.constant 0 : index
    %c0_40 = arith.constant 0 : index
    %43 = vector.load %arg7[%c4, %c0_39, %c0_40] : memref<9x25x9xf32, #tpu.memory_space<vmem>>, vector<1x25x9xf32>
    %44 = vector.shape_cast %43 : vector<1x25x9xf32> to vector<25x9xf32>
    %cst_41 = arith.constant dense<0.000000e+00> : vector<8x9xf32>
    %45 = tpu.matmul %42, %44, %cst_41 {dimension_numbers = #tpu.dot_dimension_numbers<[1], [0], [0], [1], [0, 0, 1, 1], [], []>} : vector<8x25xf32>, vector<25x9xf32>, vector<8x9xf32> -> vector<8x9xf32>
    %46 = arith.addf %29, %45 : vector<8x9xf32>
    %47 = vector.extract_strided_slice %25 {offsets = [40, 0], sizes = [8, 25], strides = [1, 1]} : vector<72x25xf32> to vector<8x25xf32>
    %c5 = arith.constant 5 : index
    %c0_42 = arith.constant 0 : index
    %c0_43 = arith.constant 0 : index
    %48 = vector.load %arg7[%c5, %c0_42, %c0_43] : memref<9x25x9xf32, #tpu.memory_space<vmem>>, vector<1x25x9xf32>
    %49 = vector.shape_cast %48 : vector<1x25x9xf32> to vector<25x9xf32>
    %cst_44 = arith.constant dense<0.000000e+00> : vector<8x9xf32>
    %50 = tpu.matmul %47, %49, %cst_44 {dimension_numbers = #tpu.dot_dimension_numbers<[1], [0], [0], [1], [0, 0, 1, 1], [], []>} : vector<8x25xf32>, vector<25x9xf32>, vector<8x9xf32> -> vector<8x9xf32>
    %51 = arith.addf %33, %50 : vector<8x9xf32>
    %52 = vector.extract_strided_slice %25 {offsets = [48, 0], sizes = [8, 25], strides = [1, 1]} : vector<72x25xf32> to vector<8x25xf32>
    %c6 = arith.constant 6 : index
    %c0_45 = arith.constant 0 : index
    %c0_46 = arith.constant 0 : index
    %53 = vector.load %arg7[%c6, %c0_45, %c0_46] : memref<9x25x9xf32, #tpu.memory_space<vmem>>, vector<1x25x9xf32>
    %54 = vector.shape_cast %53 : vector<1x25x9xf32> to vector<25x9xf32>
    %cst_47 = arith.constant dense<0.000000e+00> : vector<8x9xf32>
    %55 = tpu.matmul %52, %54, %cst_47 {dimension_numbers = #tpu.dot_dimension_numbers<[1], [0], [0], [1], [0, 0, 1, 1], [], []>} : vector<8x25xf32>, vector<25x9xf32>, vector<8x9xf32> -> vector<8x9xf32>
    %56 = arith.addf %37, %55 : vector<8x9xf32>
    %57 = vector.extract_strided_slice %25 {offsets = [56, 0], sizes = [8, 25], strides = [1, 1]} : vector<72x25xf32> to vector<8x25xf32>
    %c7 = arith.constant 7 : index
    %c0_48 = arith.constant 0 : index
    %c0_49 = arith.constant 0 : index
    %58 = vector.load %arg7[%c7, %c0_48, %c0_49] : memref<9x25x9xf32, #tpu.memory_space<vmem>>, vector<1x25x9xf32>
    %59 = vector.shape_cast %58 : vector<1x25x9xf32> to vector<25x9xf32>
    %cst_50 = arith.constant dense<0.000000e+00> : vector<8x9xf32>
    %60 = tpu.matmul %57, %59, %cst_50 {dimension_numbers = #tpu.dot_dimension_numbers<[1], [0], [0], [1], [0, 0, 1, 1], [], []>} : vector<8x25xf32>, vector<25x9xf32>, vector<8x9xf32> -> vector<8x9xf32>
    %61 = arith.addf %41, %60 : vector<8x9xf32>
    %62 = vector.extract_strided_slice %25 {offsets = [64, 0], sizes = [8, 25], strides = [1, 1]} : vector<72x25xf32> to vector<8x25xf32>
    %c8 = arith.constant 8 : index
    %c0_51 = arith.constant 0 : index
    %c0_52 = arith.constant 0 : index
    %63 = vector.load %arg7[%c8, %c0_51, %c0_52] : memref<9x25x9xf32, #tpu.memory_space<vmem>>, vector<1x25x9xf32>
    %64 = vector.shape_cast %63 : vector<1x25x9xf32> to vector<25x9xf32>
    %cst_53 = arith.constant dense<0.000000e+00> : vector<8x9xf32>
    %65 = tpu.matmul %62, %64, %cst_53 {dimension_numbers = #tpu.dot_dimension_numbers<[1], [0], [0], [1], [0, 0, 1, 1], [], []>} : vector<8x25xf32>, vector<25x9xf32>, vector<8x9xf32> -> vector<8x9xf32>
    %66 = arith.addf %46, %65 : vector<8x9xf32>
    %67 = arith.addf %66, %51 : vector<8x9xf32>
    %68 = arith.addf %67, %56 : vector<8x9xf32>
    %69 = arith.addf %68, %61 : vector<8x9xf32>
    %c0_54 = arith.constant 0 : index
    %c0_55 = arith.constant 0 : index
    %70 = vector.load %arg6[%c0_54, %c0_55] : memref<8x1xf32, #tpu.memory_space<vmem>>, vector<8x1xf32>
    %71 = vector.broadcast %70 : vector<8x1xf32> to vector<8x9xf32>
    %72 = arith.addf %69, %71 : vector<8x9xf32>
    %cst_56 = arith.constant 0.000000e+00 : f32
    %73 = vector.broadcast %cst_56 : f32 to vector<8x9xf32>
    %74 = arith.maximumf %72, %73 : vector<8x9xf32>
    %c0_57 = arith.constant 0 : index
    %c0_58 = arith.constant 0 : index
    %c0_59 = arith.constant 0 : index
    %75 = vector.load %arg8[%c0_57, %c0_58, %c0_59] : memref<4x9x4xf32, #tpu.memory_space<vmem>>, vector<1x9x4xf32>
    %76 = vector.shape_cast %75 : vector<1x9x4xf32> to vector<9x4xf32>
    %cst_60 = arith.constant dense<0.000000e+00> : vector<8x4xf32>
    %77 = tpu.matmul %74, %76, %cst_60 {dimension_numbers = #tpu.dot_dimension_numbers<[1], [0], [0], [1], [0, 0, 1, 1], [], []>} : vector<8x9xf32>, vector<9x4xf32>, vector<8x4xf32> -> vector<8x4xf32>
    %c1_61 = arith.constant 1 : index
    %c0_62 = arith.constant 0 : index
    %c0_63 = arith.constant 0 : index
    %78 = vector.load %arg8[%c1_61, %c0_62, %c0_63] : memref<4x9x4xf32, #tpu.memory_space<vmem>>, vector<1x9x4xf32>
    %79 = vector.shape_cast %78 : vector<1x9x4xf32> to vector<9x4xf32>
    %cst_64 = arith.constant dense<0.000000e+00> : vector<8x4xf32>
    %80 = tpu.matmul %74, %79, %cst_64 {dimension_numbers = #tpu.dot_dimension_numbers<[1], [0], [0], [1], [0, 0, 1, 1], [], []>} : vector<8x9xf32>, vector<9x4xf32>, vector<8x4xf32> -> vector<8x4xf32>
    %c2_65 = arith.constant 2 : index
    %c0_66 = arith.constant 0 : index
    %c0_67 = arith.constant 0 : index
    %81 = vector.load %arg8[%c2_65, %c0_66, %c0_67] : memref<4x9x4xf32, #tpu.memory_space<vmem>>, vector<1x9x4xf32>
    %82 = vector.shape_cast %81 : vector<1x9x4xf32> to vector<9x4xf32>
    %cst_68 = arith.constant dense<0.000000e+00> : vector<8x4xf32>
    %83 = tpu.matmul %74, %82, %cst_68 {dimension_numbers = #tpu.dot_dimension_numbers<[1], [0], [0], [1], [0, 0, 1, 1], [], []>} : vector<8x9xf32>, vector<9x4xf32>, vector<8x4xf32> -> vector<8x4xf32>
    %c3_69 = arith.constant 3 : index
    %c0_70 = arith.constant 0 : index
    %c0_71 = arith.constant 0 : index
    %84 = vector.load %arg8[%c3_69, %c0_70, %c0_71] : memref<4x9x4xf32, #tpu.memory_space<vmem>>, vector<1x9x4xf32>
    %85 = vector.shape_cast %84 : vector<1x9x4xf32> to vector<9x4xf32>
    %cst_72 = arith.constant dense<0.000000e+00> : vector<8x4xf32>
    %86 = tpu.matmul %74, %85, %cst_72 {dimension_numbers = #tpu.dot_dimension_numbers<[1], [0], [0], [1], [0, 0, 1, 1], [], []>} : vector<8x9xf32>, vector<9x4xf32>, vector<8x4xf32> -> vector<8x4xf32>
    %87 = arith.maximumf %77, %80 : vector<8x4xf32>
    %88 = arith.maximumf %87, %83 : vector<8x4xf32>
    %89 = arith.maximumf %88, %86 : vector<8x4xf32>
    %c0_73 = arith.constant 0 : index
    %c0_74 = arith.constant 0 : index
    %c0_75 = arith.constant 0 : index
    %90 = vector.load %arg18[%c0_73, %c0_74, %c0_75] : memref<2x8x4xf32, #tpu.memory_space<vmem>>, vector<1x8x4xf32>
    %91 = vector.shape_cast %90 : vector<1x8x4xf32> to vector<8x4xf32>
    %92 = vector.shape_cast %89 : vector<8x4xf32> to vector<1x8x4xf32>
    tpu.vector_store %arg18[%c0_73, %c0_74, %c0_75], %92 {strides = array<i32>} : memref<2x8x4xf32, #tpu.memory_space<vmem>>, vector<1x8x4xf32>,
    %c0_76 = arith.constant 0 : index
    %c0_77 = arith.constant 0 : index
    %93 = vector.load %arg9[%c0_76, %c0_77] : memref<144x8xf32, #tpu.memory_space<vmem>>, vector<144x8xf32>
    %cst_78 = arith.constant dense<0.000000e+00> : vector<144x4xf32>
    %94 = tpu.matmul %93, %89, %cst_78 {dimension_numbers = #tpu.dot_dimension_numbers<[1], [0], [0], [1], [0, 0, 1, 1], [], []>} : vector<144x8xf32>, vector<8x4xf32>, vector<144x4xf32> -> vector<144x4xf32>
    %95 = vector.extract_strided_slice %94 {offsets = [0, 0], sizes = [16, 4], strides = [1, 1]} : vector<144x4xf32> to vector<16x4xf32>
    %c0_79 = arith.constant 0 : index
    %c0_80 = arith.constant 0 : index
    %c0_81 = arith.constant 0 : index
    %96 = vector.load %arg11[%c0_79, %c0_80, %c0_81] : memref<9x4x25xf32, #tpu.memory_space<vmem>>, vector<1x4x25xf32>
    %97 = vector.shape_cast %96 : vector<1x4x25xf32> to vector<4x25xf32>
    %cst_82 = arith.constant dense<0.000000e+00> : vector<16x25xf32>
    %98 = tpu.matmul %95, %97, %cst_82 {dimension_numbers = #tpu.dot_dimension_numbers<[1], [0], [0], [1], [0, 0, 1, 1], [], []>} : vector<16x4xf32>, vector<4x25xf32>, vector<16x25xf32> -> vector<16x25xf32>
    %99 = vector.extract_strided_slice %94 {offsets = [16, 0], sizes = [16, 4], strides = [1, 1]} : vector<144x4xf32> to vector<16x4xf32>
    %c1_83 = arith.constant 1 : index
    %c0_84 = arith.constant 0 : index
    %c0_85 = arith.constant 0 : index
    %100 = vector.load %arg11[%c1_83, %c0_84, %c0_85] : memref<9x4x25xf32, #tpu.memory_space<vmem>>, vector<1x4x25xf32>
    %101 = vector.shape_cast %100 : vector<1x4x25xf32> to vector<4x25xf32>
    %cst_86 = arith.constant dense<0.000000e+00> : vector<16x25xf32>
    %102 = tpu.matmul %99, %101, %cst_86 {dimension_numbers = #tpu.dot_dimension_numbers<[1], [0], [0], [1], [0, 0, 1, 1], [], []>} : vector<16x4xf32>, vector<4x25xf32>, vector<16x25xf32> -> vector<16x25xf32>
    %103 = vector.extract_strided_slice %94 {offsets = [32, 0], sizes = [16, 4], strides = [1, 1]} : vector<144x4xf32> to vector<16x4xf32>
    %c2_87 = arith.constant 2 : index
    %c0_88 = arith.constant 0 : index
    %c0_89 = arith.constant 0 : index
    %104 = vector.load %arg11[%c2_87, %c0_88, %c0_89] : memref<9x4x25xf32, #tpu.memory_space<vmem>>, vector<1x4x25xf32>
    %105 = vector.shape_cast %104 : vector<1x4x25xf32> to vector<4x25xf32>
    %cst_90 = arith.constant dense<0.000000e+00> : vector<16x25xf32>
    %106 = tpu.matmul %103, %105, %cst_90 {dimension_numbers = #tpu.dot_dimension_numbers<[1], [0], [0], [1], [0, 0, 1, 1], [], []>} : vector<16x4xf32>, vector<4x25xf32>, vector<16x25xf32> -> vector<16x25xf32>
    %107 = vector.extract_strided_slice %94 {offsets = [48, 0], sizes = [16, 4], strides = [1, 1]} : vector<144x4xf32> to vector<16x4xf32>
    %c3_91 = arith.constant 3 : index
    %c0_92 = arith.constant 0 : index
    %c0_93 = arith.constant 0 : index
    %108 = vector.load %arg11[%c3_91, %c0_92, %c0_93] : memref<9x4x25xf32, #tpu.memory_space<vmem>>, vector<1x4x25xf32>
    %109 = vector.shape_cast %108 : vector<1x4x25xf32> to vector<4x25xf32>
    %cst_94 = arith.constant dense<0.000000e+00> : vector<16x25xf32>
    %110 = tpu.matmul %107, %109, %cst_94 {dimension_numbers = #tpu.dot_dimension_numbers<[1], [0], [0], [1], [0, 0, 1, 1], [], []>} : vector<16x4xf32>, vector<4x25xf32>, vector<16x25xf32> -> vector<16x25xf32>
    %111 = vector.extract_strided_slice %94 {offsets = [64, 0], sizes = [16, 4], strides = [1, 1]} : vector<144x4xf32> to vector<16x4xf32>
    %c4_95 = arith.constant 4 : index
    %c0_96 = arith.constant 0 : index
    %c0_97 = arith.constant 0 : index
    %112 = vector.load %arg11[%c4_95, %c0_96, %c0_97] : memref<9x4x25xf32, #tpu.memory_space<vmem>>, vector<1x4x25xf32>
    %113 = vector.shape_cast %112 : vector<1x4x25xf32> to vector<4x25xf32>
    %cst_98 = arith.constant dense<0.000000e+00> : vector<16x25xf32>
    %114 = tpu.matmul %111, %113, %cst_98 {dimension_numbers = #tpu.dot_dimension_numbers<[1], [0], [0], [1], [0, 0, 1, 1], [], []>} : vector<16x4xf32>, vector<4x25xf32>, vector<16x25xf32> -> vector<16x25xf32>
    %115 = arith.addf %98, %114 : vector<16x25xf32>
    %116 = vector.extract_strided_slice %94 {offsets = [80, 0], sizes = [16, 4], strides = [1, 1]} : vector<144x4xf32> to vector<16x4xf32>
    %c5_99 = arith.constant 5 : index
    %c0_100 = arith.constant 0 : index
    %c0_101 = arith.constant 0 : index
    %117 = vector.load %arg11[%c5_99, %c0_100, %c0_101] : memref<9x4x25xf32, #tpu.memory_space<vmem>>, vector<1x4x25xf32>
    %118 = vector.shape_cast %117 : vector<1x4x25xf32> to vector<4x25xf32>
    %cst_102 = arith.constant dense<0.000000e+00> : vector<16x25xf32>
    %119 = tpu.matmul %116, %118, %cst_102 {dimension_numbers = #tpu.dot_dimension_numbers<[1], [0], [0], [1], [0, 0, 1, 1], [], []>} : vector<16x4xf32>, vector<4x25xf32>, vector<16x25xf32> -> vector<16x25xf32>
    %120 = arith.addf %102, %119 : vector<16x25xf32>
    %121 = vector.extract_strided_slice %94 {offsets = [96, 0], sizes = [16, 4], strides = [1, 1]} : vector<144x4xf32> to vector<16x4xf32>
    %c6_103 = arith.constant 6 : index
    %c0_104 = arith.constant 0 : index
    %c0_105 = arith.constant 0 : index
    %122 = vector.load %arg11[%c6_103, %c0_104, %c0_105] : memref<9x4x25xf32, #tpu.memory_space<vmem>>, vector<1x4x25xf32>
    %123 = vector.shape_cast %122 : vector<1x4x25xf32> to vector<4x25xf32>
    %cst_106 = arith.constant dense<0.000000e+00> : vector<16x25xf32>
    %124 = tpu.matmul %121, %123, %cst_106 {dimension_numbers = #tpu.dot_dimension_numbers<[1], [0], [0], [1], [0, 0, 1, 1], [], []>} : vector<16x4xf32>, vector<4x25xf32>, vector<16x25xf32> -> vector<16x25xf32>
    %125 = arith.addf %106, %124 : vector<16x25xf32>
    %126 = vector.extract_strided_slice %94 {offsets = [112, 0], sizes = [16, 4], strides = [1, 1]} : vector<144x4xf32> to vector<16x4xf32>
    %c7_107 = arith.constant 7 : index
    %c0_108 = arith.constant 0 : index
    %c0_109 = arith.constant 0 : index
    %127 = vector.load %arg11[%c7_107, %c0_108, %c0_109] : memref<9x4x25xf32, #tpu.memory_space<vmem>>, vector<1x4x25xf32>
    %128 = vector.shape_cast %127 : vector<1x4x25xf32> to vector<4x25xf32>
    %cst_110 = arith.constant dense<0.000000e+00> : vector<16x25xf32>
    %129 = tpu.matmul %126, %128, %cst_110 {dimension_numbers = #tpu.dot_dimension_numbers<[1], [0], [0], [1], [0, 0, 1, 1], [], []>} : vector<16x4xf32>, vector<4x25xf32>, vector<16x25xf32> -> vector<16x25xf32>
    %130 = arith.addf %110, %129 : vector<16x25xf32>
    %131 = vector.extract_strided_slice %94 {offsets = [128, 0], sizes = [16, 4], strides = [1, 1]} : vector<144x4xf32> to vector<16x4xf32>
    %c8_111 = arith.constant 8 : index
    %c0_112 = arith.constant 0 : index
    %c0_113 = arith.constant 0 : index
    %132 = vector.load %arg11[%c8_111, %c0_112, %c0_113] : memref<9x4x25xf32, #tpu.memory_space<vmem>>, vector<1x4x25xf32>
    %133 = vector.shape_cast %132 : vector<1x4x25xf32> to vector<4x25xf32>
    %cst_114 = arith.constant dense<0.000000e+00> : vector<16x25xf32>
    %134 = tpu.matmul %131, %133, %cst_114 {dimension_numbers = #tpu.dot_dimension_numbers<[1], [0], [0], [1], [0, 0, 1, 1], [], []>} : vector<16x4xf32>, vector<4x25xf32>, vector<16x25xf32> -> vector<16x25xf32>
    %135 = arith.addf %115, %134 : vector<16x25xf32>
    %136 = arith.addf %135, %120 : vector<16x25xf32>
    %137 = arith.addf %136, %125 : vector<16x25xf32>
    %138 = arith.addf %137, %130 : vector<16x25xf32>
    %c0_115 = arith.constant 0 : index
    %c0_116 = arith.constant 0 : index
    %139 = vector.load %arg10[%c0_115, %c0_116] : memref<16x1xf32, #tpu.memory_space<vmem>>, vector<16x1xf32>
    %140 = vector.broadcast %139 : vector<16x1xf32> to vector<16x25xf32>
    %141 = arith.addf %138, %140 : vector<16x25xf32>
    %cst_117 = arith.constant 0.000000e+00 : f32
    %142 = vector.broadcast %cst_117 : f32 to vector<16x25xf32>
    %143 = arith.maximumf %141, %142 : vector<16x25xf32>
    %c0_118 = arith.constant 0 : index
    %c0_119 = arith.constant 0 : index
    %144 = vector.load %arg12[%c0_118, %c0_119] : memref<200x16xf32, #tpu.memory_space<vmem>>, vector<200x16xf32>
    %cst_120 = arith.constant dense<0.000000e+00> : vector<200x25xf32>
    %145 = tpu.matmul %144, %143, %cst_120 {dimension_numbers = #tpu.dot_dimension_numbers<[1], [0], [0], [1], [0, 0, 1, 1], [], []>} : vector<200x16xf32>, vector<16x25xf32>, vector<200x25xf32> -> vector<200x25xf32>
    %146 = vector.extract_strided_slice %145 {offsets = [0, 0], sizes = [8, 25], strides = [1, 1]} : vector<200x25xf32> to vector<8x25xf32>
    %c0_121 = arith.constant 0 : index
    %c0_122 = arith.constant 0 : index
    %c0_123 = arith.constant 0 : index
    %147 = vector.load %arg14[%c0_121, %c0_122, %c0_123] : memref<25x25x225xf32, #tpu.memory_space<vmem>>, vector<1x25x225xf32>
    %148 = vector.shape_cast %147 : vector<1x25x225xf32> to vector<25x225xf32>
    %cst_124 = arith.constant dense<0.000000e+00> : vector<8x225xf32>
    %149 = tpu.matmul %146, %148, %cst_124 {dimension_numbers = #tpu.dot_dimension_numbers<[1], [0], [0], [1], [0, 0, 1, 1], [], []>} : vector<8x25xf32>, vector<25x225xf32>, vector<8x225xf32> -> vector<8x225xf32>
    %150 = vector.extract_strided_slice %145 {offsets = [8, 0], sizes = [8, 25], strides = [1, 1]} : vector<200x25xf32> to vector<8x25xf32>
    %c1_125 = arith.constant 1 : index
    %c0_126 = arith.constant 0 : index
    %c0_127 = arith.constant 0 : index
    %151 = vector.load %arg14[%c1_125, %c0_126, %c0_127] : memref<25x25x225xf32, #tpu.memory_space<vmem>>, vector<1x25x225xf32>
    %152 = vector.shape_cast %151 : vector<1x25x225xf32> to vector<25x225xf32>
    %cst_128 = arith.constant dense<0.000000e+00> : vector<8x225xf32>
    %153 = tpu.matmul %150, %152, %cst_128 {dimension_numbers = #tpu.dot_dimension_numbers<[1], [0], [0], [1], [0, 0, 1, 1], [], []>} : vector<8x25xf32>, vector<25x225xf32>, vector<8x225xf32> -> vector<8x225xf32>
    %154 = vector.extract_strided_slice %145 {offsets = [16, 0], sizes = [8, 25], strides = [1, 1]} : vector<200x25xf32> to vector<8x25xf32>
    %c2_129 = arith.constant 2 : index
    %c0_130 = arith.constant 0 : index
    %c0_131 = arith.constant 0 : index
    %155 = vector.load %arg14[%c2_129, %c0_130, %c0_131] : memref<25x25x225xf32, #tpu.memory_space<vmem>>, vector<1x25x225xf32>
    %156 = vector.shape_cast %155 : vector<1x25x225xf32> to vector<25x225xf32>
    %cst_132 = arith.constant dense<0.000000e+00> : vector<8x225xf32>
    %157 = tpu.matmul %154, %156, %cst_132 {dimension_numbers = #tpu.dot_dimension_numbers<[1], [0], [0], [1], [0, 0, 1, 1], [], []>} : vector<8x25xf32>, vector<25x225xf32>, vector<8x225xf32> -> vector<8x225xf32>
    %158 = vector.extract_strided_slice %145 {offsets = [24, 0], sizes = [8, 25], strides = [1, 1]} : vector<200x25xf32> to vector<8x25xf32>
    %c3_133 = arith.constant 3 : index
    %c0_134 = arith.constant 0 : index
    %c0_135 = arith.constant 0 : index
    %159 = vector.load %arg14[%c3_133, %c0_134, %c0_135] : memref<25x25x225xf32, #tpu.memory_space<vmem>>, vector<1x25x225xf32>
    %160 = vector.shape_cast %159 : vector<1x25x225xf32> to vector<25x225xf32>
    %cst_136 = arith.constant dense<0.000000e+00> : vector<8x225xf32>
    %161 = tpu.matmul %158, %160, %cst_136 {dimension_numbers = #tpu.dot_dimension_numbers<[1], [0], [0], [1], [0, 0, 1, 1], [], []>} : vector<8x25xf32>, vector<25x225xf32>, vector<8x225xf32> -> vector<8x225xf32>
    %162 = vector.extract_strided_slice %145 {offsets = [32, 0], sizes = [8, 25], strides = [1, 1]} : vector<200x25xf32> to vector<8x25xf32>
    %c4_137 = arith.constant 4 : index
    %c0_138 = arith.constant 0 : index
    %c0_139 = arith.constant 0 : index
    %163 = vector.load %arg14[%c4_137, %c0_138, %c0_139] : memref<25x25x225xf32, #tpu.memory_space<vmem>>, vector<1x25x225xf32>
    %164 = vector.shape_cast %163 : vector<1x25x225xf32> to vector<25x225xf32>
    %cst_140 = arith.constant dense<0.000000e+00> : vector<8x225xf32>
    %165 = tpu.matmul %162, %164, %cst_140 {dimension_numbers = #tpu.dot_dimension_numbers<[1], [0], [0], [1], [0, 0, 1, 1], [], []>} : vector<8x25xf32>, vector<25x225xf32>, vector<8x225xf32> -> vector<8x225xf32>
    %166 = arith.addf %149, %165 : vector<8x225xf32>
    %167 = vector.extract_strided_slice %145 {offsets = [40, 0], sizes = [8, 25], strides = [1, 1]} : vector<200x25xf32> to vector<8x25xf32>
    %c5_141 = arith.constant 5 : index
    %c0_142 = arith.constant 0 : index
    %c0_143 = arith.constant 0 : index
    %168 = vector.load %arg14[%c5_141, %c0_142, %c0_143] : memref<25x25x225xf32, #tpu.memory_space<vmem>>, vector<1x25x225xf32>
    %169 = vector.shape_cast %168 : vector<1x25x225xf32> to vector<25x225xf32>
    %cst_144 = arith.constant dense<0.000000e+00> : vector<8x225xf32>
    %170 = tpu.matmul %167, %169, %cst_144 {dimension_numbers = #tpu.dot_dimension_numbers<[1], [0], [0], [1], [0, 0, 1, 1], [], []>} : vector<8x25xf32>, vector<25x225xf32>, vector<8x225xf32> -> vector<8x225xf32>
    %171 = arith.addf %153, %170 : vector<8x225xf32>
    %172 = vector.extract_strided_slice %145 {offsets = [48, 0], sizes = [8, 25], strides = [1, 1]} : vector<200x25xf32> to vector<8x25xf32>
    %c6_145 = arith.constant 6 : index
    %c0_146 = arith.constant 0 : index
    %c0_147 = arith.constant 0 : index
    %173 = vector.load %arg14[%c6_145, %c0_146, %c0_147] : memref<25x25x225xf32, #tpu.memory_space<vmem>>, vector<1x25x225xf32>
    %174 = vector.shape_cast %173 : vector<1x25x225xf32> to vector<25x225xf32>
    %cst_148 = arith.constant dense<0.000000e+00> : vector<8x225xf32>
    %175 = tpu.matmul %172, %174, %cst_148 {dimension_numbers = #tpu.dot_dimension_numbers<[1], [0], [0], [1], [0, 0, 1, 1], [], []>} : vector<8x25xf32>, vector<25x225xf32>, vector<8x225xf32> -> vector<8x225xf32>
    %176 = arith.addf %157, %175 : vector<8x225xf32>
    %177 = vector.extract_strided_slice %145 {offsets = [56, 0], sizes = [8, 25], strides = [1, 1]} : vector<200x25xf32> to vector<8x25xf32>
    %c7_149 = arith.constant 7 : index
    %c0_150 = arith.constant 0 : index
    %c0_151 = arith.constant 0 : index
    %178 = vector.load %arg14[%c7_149, %c0_150, %c0_151] : memref<25x25x225xf32, #tpu.memory_space<vmem>>, vector<1x25x225xf32>
    %179 = vector.shape_cast %178 : vector<1x25x225xf32> to vector<25x225xf32>
    %cst_152 = arith.constant dense<0.000000e+00> : vector<8x225xf32>
    %180 = tpu.matmul %177, %179, %cst_152 {dimension_numbers = #tpu.dot_dimension_numbers<[1], [0], [0], [1], [0, 0, 1, 1], [], []>} : vector<8x25xf32>, vector<25x225xf32>, vector<8x225xf32> -> vector<8x225xf32>
    %181 = arith.addf %161, %180 : vector<8x225xf32>
    %182 = vector.extract_strided_slice %145 {offsets = [64, 0], sizes = [8, 25], strides = [1, 1]} : vector<200x25xf32> to vector<8x25xf32>
    %c8_153 = arith.constant 8 : index
    %c0_154 = arith.constant 0 : index
    %c0_155 = arith.constant 0 : index
    %183 = vector.load %arg14[%c8_153, %c0_154, %c0_155] : memref<25x25x225xf32, #tpu.memory_space<vmem>>, vector<1x25x225xf32>
    %184 = vector.shape_cast %183 : vector<1x25x225xf32> to vector<25x225xf32>
    %cst_156 = arith.constant dense<0.000000e+00> : vector<8x225xf32>
    %185 = tpu.matmul %182, %184, %cst_156 {dimension_numbers = #tpu.dot_dimension_numbers<[1], [0], [0], [1], [0, 0, 1, 1], [], []>} : vector<8x25xf32>, vector<25x225xf32>, vector<8x225xf32> -> vector<8x225xf32>
    %186 = arith.addf %166, %185 : vector<8x225xf32>
    %187 = vector.extract_strided_slice %145 {offsets = [72, 0], sizes = [8, 25], strides = [1, 1]} : vector<200x25xf32> to vector<8x25xf32>
    %c9 = arith.constant 9 : index
    %c0_157 = arith.constant 0 : index
    %c0_158 = arith.constant 0 : index
    %188 = vector.load %arg14[%c9, %c0_157, %c0_158] : memref<25x25x225xf32, #tpu.memory_space<vmem>>, vector<1x25x225xf32>
    %189 = vector.shape_cast %188 : vector<1x25x225xf32> to vector<25x225xf32>
    %cst_159 = arith.constant dense<0.000000e+00> : vector<8x225xf32>
    %190 = tpu.matmul %187, %189, %cst_159 {dimension_numbers = #tpu.dot_dimension_numbers<[1], [0], [0], [1], [0, 0, 1, 1], [], []>} : vector<8x25xf32>, vector<25x225xf32>, vector<8x225xf32> -> vector<8x225xf32>
    %191 = arith.addf %171, %190 : vector<8x225xf32>
    %192 = vector.extract_strided_slice %145 {offsets = [80, 0], sizes = [8, 25], strides = [1, 1]} : vector<200x25xf32> to vector<8x25xf32>
    %c10 = arith.constant 10 : index
    %c0_160 = arith.constant 0 : index
    %c0_161 = arith.constant 0 : index
    %193 = vector.load %arg14[%c10, %c0_160, %c0_161] : memref<25x25x225xf32, #tpu.memory_space<vmem>>, vector<1x25x225xf32>
    %194 = vector.shape_cast %193 : vector<1x25x225xf32> to vector<25x225xf32>
    %cst_162 = arith.constant dense<0.000000e+00> : vector<8x225xf32>
    %195 = tpu.matmul %192, %194, %cst_162 {dimension_numbers = #tpu.dot_dimension_numbers<[1], [0], [0], [1], [0, 0, 1, 1], [], []>} : vector<8x25xf32>, vector<25x225xf32>, vector<8x225xf32> -> vector<8x225xf32>
    %196 = arith.addf %176, %195 : vector<8x225xf32>
    %197 = vector.extract_strided_slice %145 {offsets = [88, 0], sizes = [8, 25], strides = [1, 1]} : vector<200x25xf32> to vector<8x25xf32>
    %c11 = arith.constant 11 : index
    %c0_163 = arith.constant 0 : index
    %c0_164 = arith.constant 0 : index
    %198 = vector.load %arg14[%c11, %c0_163, %c0_164] : memref<25x25x225xf32, #tpu.memory_space<vmem>>, vector<1x25x225xf32>
    %199 = vector.shape_cast %198 : vector<1x25x225xf32> to vector<25x225xf32>
    %cst_165 = arith.constant dense<0.000000e+00> : vector<8x225xf32>
    %200 = tpu.matmul %197, %199, %cst_165 {dimension_numbers = #tpu.dot_dimension_numbers<[1], [0], [0], [1], [0, 0, 1, 1], [], []>} : vector<8x25xf32>, vector<25x225xf32>, vector<8x225xf32> -> vector<8x225xf32>
    %201 = arith.addf %181, %200 : vector<8x225xf32>
    %202 = vector.extract_strided_slice %145 {offsets = [96, 0], sizes = [8, 25], strides = [1, 1]} : vector<200x25xf32> to vector<8x25xf32>
    %c12 = arith.constant 12 : index
    %c0_166 = arith.constant 0 : index
    %c0_167 = arith.constant 0 : index
    %203 = vector.load %arg14[%c12, %c0_166, %c0_167] : memref<25x25x225xf32, #tpu.memory_space<vmem>>, vector<1x25x225xf32>
    %204 = vector.shape_cast %203 : vector<1x25x225xf32> to vector<25x225xf32>
    %cst_168 = arith.constant dense<0.000000e+00> : vector<8x225xf32>
    %205 = tpu.matmul %202, %204, %cst_168 {dimension_numbers = #tpu.dot_dimension_numbers<[1], [0], [0], [1], [0, 0, 1, 1], [], []>} : vector<8x25xf32>, vector<25x225xf32>, vector<8x225xf32> -> vector<8x225xf32>
    %206 = arith.addf %186, %205 : vector<8x225xf32>
    %207 = vector.extract_strided_slice %145 {offsets = [104, 0], sizes = [8, 25], strides = [1, 1]} : vector<200x25xf32> to vector<8x25xf32>
    %c13 = arith.constant 13 : index
    %c0_169 = arith.constant 0 : index
    %c0_170 = arith.constant 0 : index
    %208 = vector.load %arg14[%c13, %c0_169, %c0_170] : memref<25x25x225xf32, #tpu.memory_space<vmem>>, vector<1x25x225xf32>
    %209 = vector.shape_cast %208 : vector<1x25x225xf32> to vector<25x225xf32>
    %cst_171 = arith.constant dense<0.000000e+00> : vector<8x225xf32>
    %210 = tpu.matmul %207, %209, %cst_171 {dimension_numbers = #tpu.dot_dimension_numbers<[1], [0], [0], [1], [0, 0, 1, 1], [], []>} : vector<8x25xf32>, vector<25x225xf32>, vector<8x225xf32> -> vector<8x225xf32>
    %211 = arith.addf %191, %210 : vector<8x225xf32>
    %212 = vector.extract_strided_slice %145 {offsets = [112, 0], sizes = [8, 25], strides = [1, 1]} : vector<200x25xf32> to vector<8x25xf32>
    %c14 = arith.constant 14 : index
    %c0_172 = arith.constant 0 : index
    %c0_173 = arith.constant 0 : index
    %213 = vector.load %arg14[%c14, %c0_172, %c0_173] : memref<25x25x225xf32, #tpu.memory_space<vmem>>, vector<1x25x225xf32>
    %214 = vector.shape_cast %213 : vector<1x25x225xf32> to vector<25x225xf32>
    %cst_174 = arith.constant dense<0.000000e+00> : vector<8x225xf32>
    %215 = tpu.matmul %212, %214, %cst_174 {dimension_numbers = #tpu.dot_dimension_numbers<[1], [0], [0], [1], [0, 0, 1, 1], [], []>} : vector<8x25xf32>, vector<25x225xf32>, vector<8x225xf32> -> vector<8x225xf32>
    %216 = arith.addf %196, %215 : vector<8x225xf32>
    %217 = vector.extract_strided_slice %145 {offsets = [120, 0], sizes = [8, 25], strides = [1, 1]} : vector<200x25xf32> to vector<8x25xf32>
    %c15 = arith.constant 15 : index
    %c0_175 = arith.constant 0 : index
    %c0_176 = arith.constant 0 : index
    %218 = vector.load %arg14[%c15, %c0_175, %c0_176] : memref<25x25x225xf32, #tpu.memory_space<vmem>>, vector<1x25x225xf32>
    %219 = vector.shape_cast %218 : vector<1x25x225xf32> to vector<25x225xf32>
    %cst_177 = arith.constant dense<0.000000e+00> : vector<8x225xf32>
    %220 = tpu.matmul %217, %219, %cst_177 {dimension_numbers = #tpu.dot_dimension_numbers<[1], [0], [0], [1], [0, 0, 1, 1], [], []>} : vector<8x25xf32>, vector<25x225xf32>, vector<8x225xf32> -> vector<8x225xf32>
    %221 = arith.addf %201, %220 : vector<8x225xf32>
    %222 = vector.extract_strided_slice %145 {offsets = [128, 0], sizes = [8, 25], strides = [1, 1]} : vector<200x25xf32> to vector<8x25xf32>
    %c16 = arith.constant 16 : index
    %c0_178 = arith.constant 0 : index
    %c0_179 = arith.constant 0 : index
    %223 = vector.load %arg14[%c16, %c0_178, %c0_179] : memref<25x25x225xf32, #tpu.memory_space<vmem>>, vector<1x25x225xf32>
    %224 = vector.shape_cast %223 : vector<1x25x225xf32> to vector<25x225xf32>
    %cst_180 = arith.constant dense<0.000000e+00> : vector<8x225xf32>
    %225 = tpu.matmul %222, %224, %cst_180 {dimension_numbers = #tpu.dot_dimension_numbers<[1], [0], [0], [1], [0, 0, 1, 1], [], []>} : vector<8x25xf32>, vector<25x225xf32>, vector<8x225xf32> -> vector<8x225xf32>
    %226 = arith.addf %206, %225 : vector<8x225xf32>
    %227 = vector.extract_strided_slice %145 {offsets = [136, 0], sizes = [8, 25], strides = [1, 1]} : vector<200x25xf32> to vector<8x25xf32>
    %c17 = arith.constant 17 : index
    %c0_181 = arith.constant 0 : index
    %c0_182 = arith.constant 0 : index
    %228 = vector.load %arg14[%c17, %c0_181, %c0_182] : memref<25x25x225xf32, #tpu.memory_space<vmem>>, vector<1x25x225xf32>
    %229 = vector.shape_cast %228 : vector<1x25x225xf32> to vector<25x225xf32>
    %cst_183 = arith.constant dense<0.000000e+00> : vector<8x225xf32>
    %230 = tpu.matmul %227, %229, %cst_183 {dimension_numbers = #tpu.dot_dimension_numbers<[1], [0], [0], [1], [0, 0, 1, 1], [], []>} : vector<8x25xf32>, vector<25x225xf32>, vector<8x225xf32> -> vector<8x225xf32>
    %231 = arith.addf %211, %230 : vector<8x225xf32>
    %232 = vector.extract_strided_slice %145 {offsets = [144, 0], sizes = [8, 25], strides = [1, 1]} : vector<200x25xf32> to vector<8x25xf32>
    %c18 = arith.constant 18 : index
    %c0_184 = arith.constant 0 : index
    %c0_185 = arith.constant 0 : index
    %233 = vector.load %arg14[%c18, %c0_184, %c0_185] : memref<25x25x225xf32, #tpu.memory_space<vmem>>, vector<1x25x225xf32>
    %234 = vector.shape_cast %233 : vector<1x25x225xf32> to vector<25x225xf32>
    %cst_186 = arith.constant dense<0.000000e+00> : vector<8x225xf32>
    %235 = tpu.matmul %232, %234, %cst_186 {dimension_numbers = #tpu.dot_dimension_numbers<[1], [0], [0], [1], [0, 0, 1, 1], [], []>} : vector<8x25xf32>, vector<25x225xf32>, vector<8x225xf32> -> vector<8x225xf32>
    %236 = arith.addf %216, %235 : vector<8x225xf32>
    %237 = vector.extract_strided_slice %145 {offsets = [152, 0], sizes = [8, 25], strides = [1, 1]} : vector<200x25xf32> to vector<8x25xf32>
    %c19 = arith.constant 19 : index
    %c0_187 = arith.constant 0 : index
    %c0_188 = arith.constant 0 : index
    %238 = vector.load %arg14[%c19, %c0_187, %c0_188] : memref<25x25x225xf32, #tpu.memory_space<vmem>>, vector<1x25x225xf32>
    %239 = vector.shape_cast %238 : vector<1x25x225xf32> to vector<25x225xf32>
    %cst_189 = arith.constant dense<0.000000e+00> : vector<8x225xf32>
    %240 = tpu.matmul %237, %239, %cst_189 {dimension_numbers = #tpu.dot_dimension_numbers<[1], [0], [0], [1], [0, 0, 1, 1], [], []>} : vector<8x25xf32>, vector<25x225xf32>, vector<8x225xf32> -> vector<8x225xf32>
    %241 = arith.addf %221, %240 : vector<8x225xf32>
    %242 = vector.extract_strided_slice %145 {offsets = [160, 0], sizes = [8, 25], strides = [1, 1]} : vector<200x25xf32> to vector<8x25xf32>
    %c20 = arith.constant 20 : index
    %c0_190 = arith.constant 0 : index
    %c0_191 = arith.constant 0 : index
    %243 = vector.load %arg14[%c20, %c0_190, %c0_191] : memref<25x25x225xf32, #tpu.memory_space<vmem>>, vector<1x25x225xf32>
    %244 = vector.shape_cast %243 : vector<1x25x225xf32> to vector<25x225xf32>
    %cst_192 = arith.constant dense<0.000000e+00> : vector<8x225xf32>
    %245 = tpu.matmul %242, %244, %cst_192 {dimension_numbers = #tpu.dot_dimension_numbers<[1], [0], [0], [1], [0, 0, 1, 1], [], []>} : vector<8x25xf32>, vector<25x225xf32>, vector<8x225xf32> -> vector<8x225xf32>
    %246 = arith.addf %226, %245 : vector<8x225xf32>
    %247 = vector.extract_strided_slice %145 {offsets = [168, 0], sizes = [8, 25], strides = [1, 1]} : vector<200x25xf32> to vector<8x25xf32>
    %c21 = arith.constant 21 : index
    %c0_193 = arith.constant 0 : index
    %c0_194 = arith.constant 0 : index
    %248 = vector.load %arg14[%c21, %c0_193, %c0_194] : memref<25x25x225xf32, #tpu.memory_space<vmem>>, vector<1x25x225xf32>
    %249 = vector.shape_cast %248 : vector<1x25x225xf32> to vector<25x225xf32>
    %cst_195 = arith.constant dense<0.000000e+00> : vector<8x225xf32>
    %250 = tpu.matmul %247, %249, %cst_195 {dimension_numbers = #tpu.dot_dimension_numbers<[1], [0], [0], [1], [0, 0, 1, 1], [], []>} : vector<8x25xf32>, vector<25x225xf32>, vector<8x225xf32> -> vector<8x225xf32>
    %251 = arith.addf %231, %250 : vector<8x225xf32>
    %252 = vector.extract_strided_slice %145 {offsets = [176, 0], sizes = [8, 25], strides = [1, 1]} : vector<200x25xf32> to vector<8x25xf32>
    %c22 = arith.constant 22 : index
    %c0_196 = arith.constant 0 : index
    %c0_197 = arith.constant 0 : index
    %253 = vector.load %arg14[%c22, %c0_196, %c0_197] : memref<25x25x225xf32, #tpu.memory_space<vmem>>, vector<1x25x225xf32>
    %254 = vector.shape_cast %253 : vector<1x25x225xf32> to vector<25x225xf32>
    %cst_198 = arith.constant dense<0.000000e+00> : vector<8x225xf32>
    %255 = tpu.matmul %252, %254, %cst_198 {dimension_numbers = #tpu.dot_dimension_numbers<[1], [0], [0], [1], [0, 0, 1, 1], [], []>} : vector<8x25xf32>, vector<25x225xf32>, vector<8x225xf32> -> vector<8x225xf32>
    %256 = arith.addf %236, %255 : vector<8x225xf32>
    %257 = vector.extract_strided_slice %145 {offsets = [184, 0], sizes = [8, 25], strides = [1, 1]} : vector<200x25xf32> to vector<8x25xf32>
    %c23 = arith.constant 23 : index
    %c0_199 = arith.constant 0 : index
    %c0_200 = arith.constant 0 : index
    %258 = vector.load %arg14[%c23, %c0_199, %c0_200] : memref<25x25x225xf32, #tpu.memory_space<vmem>>, vector<1x25x225xf32>
    %259 = vector.shape_cast %258 : vector<1x25x225xf32> to vector<25x225xf32>
    %cst_201 = arith.constant dense<0.000000e+00> : vector<8x225xf32>
    %260 = tpu.matmul %257, %259, %cst_201 {dimension_numbers = #tpu.dot_dimension_numbers<[1], [0], [0], [1], [0, 0, 1, 1], [], []>} : vector<8x25xf32>, vector<25x225xf32>, vector<8x225xf32> -> vector<8x225xf32>
    %261 = arith.addf %241, %260 : vector<8x225xf32>
    %262 = vector.extract_strided_slice %145 {offsets = [192, 0], sizes = [8, 25], strides = [1, 1]} : vector<200x25xf32> to vector<8x25xf32>
    %c24 = arith.constant 24 : index
    %c0_202 = arith.constant 0 : index
    %c0_203 = arith.constant 0 : index
    %263 = vector.load %arg14[%c24, %c0_202, %c0_203] : memref<25x25x225xf32, #tpu.memory_space<vmem>>, vector<1x25x225xf32>
    %264 = vector.shape_cast %263 : vector<1x25x225xf32> to vector<25x225xf32>
    %cst_204 = arith.constant dense<0.000000e+00> : vector<8x225xf32>
    %265 = tpu.matmul %262, %264, %cst_204 {dimension_numbers = #tpu.dot_dimension_numbers<[1], [0], [0], [1], [0, 0, 1, 1], [], []>} : vector<8x25xf32>, vector<25x225xf32>, vector<8x225xf32> -> vector<8x225xf32>
    %266 = arith.addf %246, %265 : vector<8x225xf32>
    %267 = arith.addf %266, %251 : vector<8x225xf32>
    %268 = arith.addf %267, %256 : vector<8x225xf32>
    %269 = arith.addf %268, %261 : vector<8x225xf32>
    %c0_205 = arith.constant 0 : index
    %c0_206 = arith.constant 0 : index
    %270 = vector.load %arg13[%c0_205, %c0_206] : memref<8x1xf32, #tpu.memory_space<vmem>>, vector<8x1xf32>
    %271 = vector.broadcast %270 : vector<8x1xf32> to vector<8x225xf32>
    %272 = arith.addf %269, %271 : vector<8x225xf32>
    %cst_207 = arith.constant 0.000000e+00 : f32
    %273 = vector.broadcast %cst_207 : f32 to vector<8x225xf32>
    %274 = arith.maximumf %272, %273 : vector<8x225xf32>
    %c0_208 = arith.constant 0 : index
    %c0_209 = arith.constant 0 : index
    %275 = vector.load %arg15[%c0_208, %c0_209] : memref<4x8xf32, #tpu.memory_space<vmem>>, vector<4x8xf32>
    %cst_210 = arith.constant dense<0.000000e+00> : vector<4x225xf32>
    %276 = tpu.matmul %275, %274, %cst_210 {dimension_numbers = #tpu.dot_dimension_numbers<[1], [0], [0], [1], [0, 0, 1, 1], [], []>} : vector<4x8xf32>, vector<8x225xf32>, vector<4x225xf32> -> vector<4x225xf32>
    %c0_211 = arith.constant 0 : index
    %c0_212 = arith.constant 0 : index
    %277 = vector.load %arg16[%c0_211, %c0_212] : memref<4x1xf32, #tpu.memory_space<vmem>>, vector<4x1xf32>
    %278 = vector.broadcast %277 : vector<4x1xf32> to vector<4x225xf32>
    %279 = arith.addf %276, %278 : vector<4x225xf32>
    %280 = math.tanh %279 : vector<4x225xf32>
    %c0_213 = arith.constant 0 : index
    %c0_214 = arith.constant 0 : index
    %c0_215 = arith.constant 0 : index
    %281 = vector.load %arg17[%c0_213, %c0_214, %c0_215] : memref<2x4x225xf32, #tpu.memory_space<vmem>>, vector<1x4x225xf32>
    %282 = vector.shape_cast %281 : vector<1x4x225xf32> to vector<4x225xf32>
    %283 = vector.shape_cast %280 : vector<4x225xf32> to vector<1x4x225xf32>
    tpu.vector_store %arg17[%c0_213, %c0_214, %c0_215], %283 {strides = array<i32>} : memref<2x4x225xf32, #tpu.memory_space<vmem>>, vector<1x4x225xf32>,
    %c1_216 = arith.constant 1 : index
    %c0_217 = arith.constant 0 : index
    %c0_218 = arith.constant 0 : index
    %284 = vector.load %arg1[%c1_216, %c0_217, %c0_218] : memref<2x9x100xf32, #tpu.memory_space<vmem>>, vector<1x9x100xf32>
    %285 = vector.shape_cast %284 : vector<1x9x100xf32> to vector<9x100xf32>
    %c0_219 = arith.constant 0 : index
    %c0_220 = arith.constant 0 : index
    %286 = vector.load %arg2[%c0_219, %c0_220] : memref<16x9xf32, #tpu.memory_space<vmem>>, vector<16x9xf32>
    %cst_221 = arith.constant dense<0.000000e+00> : vector<16x100xf32>
    %287 = tpu.matmul %286, %285, %cst_221 {dimension_numbers = #tpu.dot_dimension_numbers<[1], [0], [0], [1], [0, 0, 1, 1], [], []>} : vector<16x9xf32>, vector<9x100xf32>, vector<16x100xf32> -> vector<16x100xf32>
    %c0_222 = arith.constant 0 : index
    %c0_223 = arith.constant 0 : index
    %288 = vector.load %arg3[%c0_222, %c0_223] : memref<16x1xf32, #tpu.memory_space<vmem>>, vector<16x1xf32>
    %289 = vector.broadcast %288 : vector<16x1xf32> to vector<16x100xf32>
    %290 = arith.addf %287, %289 : vector<16x100xf32>
    %cst_224 = arith.constant 0.000000e+00 : f32
    %291 = vector.broadcast %cst_224 : f32 to vector<16x100xf32>
    %292 = arith.maximumf %290, %291 : vector<16x100xf32>
    %c0_225 = arith.constant 0 : index
    %c0_226 = arith.constant 0 : index
    %c0_227 = arith.constant 0 : index
    %293 = vector.load %arg4[%c0_225, %c0_226, %c0_227] : memref<4x100x25xf32, #tpu.memory_space<vmem>>, vector<1x100x25xf32>
    %294 = vector.shape_cast %293 : vector<1x100x25xf32> to vector<100x25xf32>
    %cst_228 = arith.constant dense<0.000000e+00> : vector<16x25xf32>
    %295 = tpu.matmul %292, %294, %cst_228 {dimension_numbers = #tpu.dot_dimension_numbers<[1], [0], [0], [1], [0, 0, 1, 1], [], []>} : vector<16x100xf32>, vector<100x25xf32>, vector<16x25xf32> -> vector<16x25xf32>
    %c1_229 = arith.constant 1 : index
    %c0_230 = arith.constant 0 : index
    %c0_231 = arith.constant 0 : index
    %296 = vector.load %arg4[%c1_229, %c0_230, %c0_231] : memref<4x100x25xf32, #tpu.memory_space<vmem>>, vector<1x100x25xf32>
    %297 = vector.shape_cast %296 : vector<1x100x25xf32> to vector<100x25xf32>
    %cst_232 = arith.constant dense<0.000000e+00> : vector<16x25xf32>
    %298 = tpu.matmul %292, %297, %cst_232 {dimension_numbers = #tpu.dot_dimension_numbers<[1], [0], [0], [1], [0, 0, 1, 1], [], []>} : vector<16x100xf32>, vector<100x25xf32>, vector<16x25xf32> -> vector<16x25xf32>
    %c2_233 = arith.constant 2 : index
    %c0_234 = arith.constant 0 : index
    %c0_235 = arith.constant 0 : index
    %299 = vector.load %arg4[%c2_233, %c0_234, %c0_235] : memref<4x100x25xf32, #tpu.memory_space<vmem>>, vector<1x100x25xf32>
    %300 = vector.shape_cast %299 : vector<1x100x25xf32> to vector<100x25xf32>
    %cst_236 = arith.constant dense<0.000000e+00> : vector<16x25xf32>
    %301 = tpu.matmul %292, %300, %cst_236 {dimension_numbers = #tpu.dot_dimension_numbers<[1], [0], [0], [1], [0, 0, 1, 1], [], []>} : vector<16x100xf32>, vector<100x25xf32>, vector<16x25xf32> -> vector<16x25xf32>
    %c3_237 = arith.constant 3 : index
    %c0_238 = arith.constant 0 : index
    %c0_239 = arith.constant 0 : index
    %302 = vector.load %arg4[%c3_237, %c0_238, %c0_239] : memref<4x100x25xf32, #tpu.memory_space<vmem>>, vector<1x100x25xf32>
    %303 = vector.shape_cast %302 : vector<1x100x25xf32> to vector<100x25xf32>
    %cst_240 = arith.constant dense<0.000000e+00> : vector<16x25xf32>
    %304 = tpu.matmul %292, %303, %cst_240 {dimension_numbers = #tpu.dot_dimension_numbers<[1], [0], [0], [1], [0, 0, 1, 1], [], []>} : vector<16x100xf32>, vector<100x25xf32>, vector<16x25xf32> -> vector<16x25xf32>
    %305 = arith.maximumf %295, %298 : vector<16x25xf32>
    %306 = arith.maximumf %305, %301 : vector<16x25xf32>
    %307 = arith.maximumf %306, %304 : vector<16x25xf32>
    %c0_241 = arith.constant 0 : index
    %c0_242 = arith.constant 0 : index
    %308 = vector.load %arg5[%c0_241, %c0_242] : memref<72x16xf32, #tpu.memory_space<vmem>>, vector<72x16xf32>
    %cst_243 = arith.constant dense<0.000000e+00> : vector<72x25xf32>
    %309 = tpu.matmul %308, %307, %cst_243 {dimension_numbers = #tpu.dot_dimension_numbers<[1], [0], [0], [1], [0, 0, 1, 1], [], []>} : vector<72x16xf32>, vector<16x25xf32>, vector<72x25xf32> -> vector<72x25xf32>
    %310 = vector.extract_strided_slice %309 {offsets = [0, 0], sizes = [8, 25], strides = [1, 1]} : vector<72x25xf32> to vector<8x25xf32>
    %c0_244 = arith.constant 0 : index
    %c0_245 = arith.constant 0 : index
    %c0_246 = arith.constant 0 : index
    %311 = vector.load %arg7[%c0_244, %c0_245, %c0_246] : memref<9x25x9xf32, #tpu.memory_space<vmem>>, vector<1x25x9xf32>
    %312 = vector.shape_cast %311 : vector<1x25x9xf32> to vector<25x9xf32>
    %cst_247 = arith.constant dense<0.000000e+00> : vector<8x9xf32>
    %313 = tpu.matmul %310, %312, %cst_247 {dimension_numbers = #tpu.dot_dimension_numbers<[1], [0], [0], [1], [0, 0, 1, 1], [], []>} : vector<8x25xf32>, vector<25x9xf32>, vector<8x9xf32> -> vector<8x9xf32>
    %314 = vector.extract_strided_slice %309 {offsets = [8, 0], sizes = [8, 25], strides = [1, 1]} : vector<72x25xf32> to vector<8x25xf32>
    %c1_248 = arith.constant 1 : index
    %c0_249 = arith.constant 0 : index
    %c0_250 = arith.constant 0 : index
    %315 = vector.load %arg7[%c1_248, %c0_249, %c0_250] : memref<9x25x9xf32, #tpu.memory_space<vmem>>, vector<1x25x9xf32>
    %316 = vector.shape_cast %315 : vector<1x25x9xf32> to vector<25x9xf32>
    %cst_251 = arith.constant dense<0.000000e+00> : vector<8x9xf32>
    %317 = tpu.matmul %314, %316, %cst_251 {dimension_numbers = #tpu.dot_dimension_numbers<[1], [0], [0], [1], [0, 0, 1, 1], [], []>} : vector<8x25xf32>, vector<25x9xf32>, vector<8x9xf32> -> vector<8x9xf32>
    %318 = vector.extract_strided_slice %309 {offsets = [16, 0], sizes = [8, 25], strides = [1, 1]} : vector<72x25xf32> to vector<8x25xf32>
    %c2_252 = arith.constant 2 : index
    %c0_253 = arith.constant 0 : index
    %c0_254 = arith.constant 0 : index
    %319 = vector.load %arg7[%c2_252, %c0_253, %c0_254] : memref<9x25x9xf32, #tpu.memory_space<vmem>>, vector<1x25x9xf32>
    %320 = vector.shape_cast %319 : vector<1x25x9xf32> to vector<25x9xf32>
    %cst_255 = arith.constant dense<0.000000e+00> : vector<8x9xf32>
    %321 = tpu.matmul %318, %320, %cst_255 {dimension_numbers = #tpu.dot_dimension_numbers<[1], [0], [0], [1], [0, 0, 1, 1], [], []>} : vector<8x25xf32>, vector<25x9xf32>, vector<8x9xf32> -> vector<8x9xf32>
    %322 = vector.extract_strided_slice %309 {offsets = [24, 0], sizes = [8, 25], strides = [1, 1]} : vector<72x25xf32> to vector<8x25xf32>
    %c3_256 = arith.constant 3 : index
    %c0_257 = arith.constant 0 : index
    %c0_258 = arith.constant 0 : index
    %323 = vector.load %arg7[%c3_256, %c0_257, %c0_258] : memref<9x25x9xf32, #tpu.memory_space<vmem>>, vector<1x25x9xf32>
    %324 = vector.shape_cast %323 : vector<1x25x9xf32> to vector<25x9xf32>
    %cst_259 = arith.constant dense<0.000000e+00> : vector<8x9xf32>
    %325 = tpu.matmul %322, %324, %cst_259 {dimension_numbers = #tpu.dot_dimension_numbers<[1], [0], [0], [1], [0, 0, 1, 1], [], []>} : vector<8x25xf32>, vector<25x9xf32>, vector<8x9xf32> -> vector<8x9xf32>
    %326 = vector.extract_strided_slice %309 {offsets = [32, 0], sizes = [8, 25], strides = [1, 1]} : vector<72x25xf32> to vector<8x25xf32>
    %c4_260 = arith.constant 4 : index
    %c0_261 = arith.constant 0 : index
    %c0_262 = arith.constant 0 : index
    %327 = vector.load %arg7[%c4_260, %c0_261, %c0_262] : memref<9x25x9xf32, #tpu.memory_space<vmem>>, vector<1x25x9xf32>
    %328 = vector.shape_cast %327 : vector<1x25x9xf32> to vector<25x9xf32>
    %cst_263 = arith.constant dense<0.000000e+00> : vector<8x9xf32>
    %329 = tpu.matmul %326, %328, %cst_263 {dimension_numbers = #tpu.dot_dimension_numbers<[1], [0], [0], [1], [0, 0, 1, 1], [], []>} : vector<8x25xf32>, vector<25x9xf32>, vector<8x9xf32> -> vector<8x9xf32>
    %330 = arith.addf %313, %329 : vector<8x9xf32>
    %331 = vector.extract_strided_slice %309 {offsets = [40, 0], sizes = [8, 25], strides = [1, 1]} : vector<72x25xf32> to vector<8x25xf32>
    %c5_264 = arith.constant 5 : index
    %c0_265 = arith.constant 0 : index
    %c0_266 = arith.constant 0 : index
    %332 = vector.load %arg7[%c5_264, %c0_265, %c0_266] : memref<9x25x9xf32, #tpu.memory_space<vmem>>, vector<1x25x9xf32>
    %333 = vector.shape_cast %332 : vector<1x25x9xf32> to vector<25x9xf32>
    %cst_267 = arith.constant dense<0.000000e+00> : vector<8x9xf32>
    %334 = tpu.matmul %331, %333, %cst_267 {dimension_numbers = #tpu.dot_dimension_numbers<[1], [0], [0], [1], [0, 0, 1, 1], [], []>} : vector<8x25xf32>, vector<25x9xf32>, vector<8x9xf32> -> vector<8x9xf32>
    %335 = arith.addf %317, %334 : vector<8x9xf32>
    %336 = vector.extract_strided_slice %309 {offsets = [48, 0], sizes = [8, 25], strides = [1, 1]} : vector<72x25xf32> to vector<8x25xf32>
    %c6_268 = arith.constant 6 : index
    %c0_269 = arith.constant 0 : index
    %c0_270 = arith.constant 0 : index
    %337 = vector.load %arg7[%c6_268, %c0_269, %c0_270] : memref<9x25x9xf32, #tpu.memory_space<vmem>>, vector<1x25x9xf32>
    %338 = vector.shape_cast %337 : vector<1x25x9xf32> to vector<25x9xf32>
    %cst_271 = arith.constant dense<0.000000e+00> : vector<8x9xf32>
    %339 = tpu.matmul %336, %338, %cst_271 {dimension_numbers = #tpu.dot_dimension_numbers<[1], [0], [0], [1], [0, 0, 1, 1], [], []>} : vector<8x25xf32>, vector<25x9xf32>, vector<8x9xf32> -> vector<8x9xf32>
    %340 = arith.addf %321, %339 : vector<8x9xf32>
    %341 = vector.extract_strided_slice %309 {offsets = [56, 0], sizes = [8, 25], strides = [1, 1]} : vector<72x25xf32> to vector<8x25xf32>
    %c7_272 = arith.constant 7 : index
    %c0_273 = arith.constant 0 : index
    %c0_274 = arith.constant 0 : index
    %342 = vector.load %arg7[%c7_272, %c0_273, %c0_274] : memref<9x25x9xf32, #tpu.memory_space<vmem>>, vector<1x25x9xf32>
    %343 = vector.shape_cast %342 : vector<1x25x9xf32> to vector<25x9xf32>
    %cst_275 = arith.constant dense<0.000000e+00> : vector<8x9xf32>
    %344 = tpu.matmul %341, %343, %cst_275 {dimension_numbers = #tpu.dot_dimension_numbers<[1], [0], [0], [1], [0, 0, 1, 1], [], []>} : vector<8x25xf32>, vector<25x9xf32>, vector<8x9xf32> -> vector<8x9xf32>
    %345 = arith.addf %325, %344 : vector<8x9xf32>
    %346 = vector.extract_strided_slice %309 {offsets = [64, 0], sizes = [8, 25], strides = [1, 1]} : vector<72x25xf32> to vector<8x25xf32>
    %c8_276 = arith.constant 8 : index
    %c0_277 = arith.constant 0 : index
    %c0_278 = arith.constant 0 : index
    %347 = vector.load %arg7[%c8_276, %c0_277, %c0_278] : memref<9x25x9xf32, #tpu.memory_space<vmem>>, vector<1x25x9xf32>
    %348 = vector.shape_cast %347 : vector<1x25x9xf32> to vector<25x9xf32>
    %cst_279 = arith.constant dense<0.000000e+00> : vector<8x9xf32>
    %349 = tpu.matmul %346, %348, %cst_279 {dimension_numbers = #tpu.dot_dimension_numbers<[1], [0], [0], [1], [0, 0, 1, 1], [], []>} : vector<8x25xf32>, vector<25x9xf32>, vector<8x9xf32> -> vector<8x9xf32>
    %350 = arith.addf %330, %349 : vector<8x9xf32>
    %351 = arith.addf %350, %335 : vector<8x9xf32>
    %352 = arith.addf %351, %340 : vector<8x9xf32>
    %353 = arith.addf %352, %345 : vector<8x9xf32>
    %c0_280 = arith.constant 0 : index
    %c0_281 = arith.constant 0 : index
    %354 = vector.load %arg6[%c0_280, %c0_281] : memref<8x1xf32, #tpu.memory_space<vmem>>, vector<8x1xf32>
    %355 = vector.broadcast %354 : vector<8x1xf32> to vector<8x9xf32>
    %356 = arith.addf %353, %355 : vector<8x9xf32>
    %cst_282 = arith.constant 0.000000e+00 : f32
    %357 = vector.broadcast %cst_282 : f32 to vector<8x9xf32>
    %358 = arith.maximumf %356, %357 : vector<8x9xf32>
    %c0_283 = arith.constant 0 : index
    %c0_284 = arith.constant 0 : index
    %c0_285 = arith.constant 0 : index
    %359 = vector.load %arg8[%c0_283, %c0_284, %c0_285] : memref<4x9x4xf32, #tpu.memory_space<vmem>>, vector<1x9x4xf32>
    %360 = vector.shape_cast %359 : vector<1x9x4xf32> to vector<9x4xf32>
    %cst_286 = arith.constant dense<0.000000e+00> : vector<8x4xf32>
    %361 = tpu.matmul %358, %360, %cst_286 {dimension_numbers = #tpu.dot_dimension_numbers<[1], [0], [0], [1], [0, 0, 1, 1], [], []>} : vector<8x9xf32>, vector<9x4xf32>, vector<8x4xf32> -> vector<8x4xf32>
    %c1_287 = arith.constant 1 : index
    %c0_288 = arith.constant 0 : index
    %c0_289 = arith.constant 0 : index
    %362 = vector.load %arg8[%c1_287, %c0_288, %c0_289] : memref<4x9x4xf32, #tpu.memory_space<vmem>>, vector<1x9x4xf32>
    %363 = vector.shape_cast %362 : vector<1x9x4xf32> to vector<9x4xf32>
    %cst_290 = arith.constant dense<0.000000e+00> : vector<8x4xf32>
    %364 = tpu.matmul %358, %363, %cst_290 {dimension_numbers = #tpu.dot_dimension_numbers<[1], [0], [0], [1], [0, 0, 1, 1], [], []>} : vector<8x9xf32>, vector<9x4xf32>, vector<8x4xf32> -> vector<8x4xf32>
    %c2_291 = arith.constant 2 : index
    %c0_292 = arith.constant 0 : index
    %c0_293 = arith.constant 0 : index
    %365 = vector.load %arg8[%c2_291, %c0_292, %c0_293] : memref<4x9x4xf32, #tpu.memory_space<vmem>>, vector<1x9x4xf32>
    %366 = vector.shape_cast %365 : vector<1x9x4xf32> to vector<9x4xf32>
    %cst_294 = arith.constant dense<0.000000e+00> : vector<8x4xf32>
    %367 = tpu.matmul %358, %366, %cst_294 {dimension_numbers = #tpu.dot_dimension_numbers<[1], [0], [0], [1], [0, 0, 1, 1], [], []>} : vector<8x9xf32>, vector<9x4xf32>, vector<8x4xf32> -> vector<8x4xf32>
    %c3_295 = arith.constant 3 : index
    %c0_296 = arith.constant 0 : index
    %c0_297 = arith.constant 0 : index
    %368 = vector.load %arg8[%c3_295, %c0_296, %c0_297] : memref<4x9x4xf32, #tpu.memory_space<vmem>>, vector<1x9x4xf32>
    %369 = vector.shape_cast %368 : vector<1x9x4xf32> to vector<9x4xf32>
    %cst_298 = arith.constant dense<0.000000e+00> : vector<8x4xf32>
    %370 = tpu.matmul %358, %369, %cst_298 {dimension_numbers = #tpu.dot_dimension_numbers<[1], [0], [0], [1], [0, 0, 1, 1], [], []>} : vector<8x9xf32>, vector<9x4xf32>, vector<8x4xf32> -> vector<8x4xf32>
    %371 = arith.maximumf %361, %364 : vector<8x4xf32>
    %372 = arith.maximumf %371, %367 : vector<8x4xf32>
    %373 = arith.maximumf %372, %370 : vector<8x4xf32>
    %c1_299 = arith.constant 1 : index
    %c0_300 = arith.constant 0 : index
    %c0_301 = arith.constant 0 : index
    %374 = vector.load %arg18[%c1_299, %c0_300, %c0_301] : memref<2x8x4xf32, #tpu.memory_space<vmem>>, vector<1x8x4xf32>
    %375 = vector.shape_cast %374 : vector<1x8x4xf32> to vector<8x4xf32>
    %376 = vector.shape_cast %373 : vector<8x4xf32> to vector<1x8x4xf32>
    tpu.vector_store %arg18[%c1_299, %c0_300, %c0_301], %376 {strides = array<i32>} : memref<2x8x4xf32, #tpu.memory_space<vmem>>, vector<1x8x4xf32>,
    %c0_302 = arith.constant 0 : index
    %c0_303 = arith.constant 0 : index
    %377 = vector.load %arg9[%c0_302, %c0_303] : memref<144x8xf32, #tpu.memory_space<vmem>>, vector<144x8xf32>
    %cst_304 = arith.constant dense<0.000000e+00> : vector<144x4xf32>
    %378 = tpu.matmul %377, %373, %cst_304 {dimension_numbers = #tpu.dot_dimension_numbers<[1], [0], [0], [1], [0, 0, 1, 1], [], []>} : vector<144x8xf32>, vector<8x4xf32>, vector<144x4xf32> -> vector<144x4xf32>
    %379 = vector.extract_strided_slice %378 {offsets = [0, 0], sizes = [16, 4], strides = [1, 1]} : vector<144x4xf32> to vector<16x4xf32>
    %c0_305 = arith.constant 0 : index
    %c0_306 = arith.constant 0 : index
    %c0_307 = arith.constant 0 : index
    %380 = vector.load %arg11[%c0_305, %c0_306, %c0_307] : memref<9x4x25xf32, #tpu.memory_space<vmem>>, vector<1x4x25xf32>
    %381 = vector.shape_cast %380 : vector<1x4x25xf32> to vector<4x25xf32>
    %cst_308 = arith.constant dense<0.000000e+00> : vector<16x25xf32>
    %382 = tpu.matmul %379, %381, %cst_308 {dimension_numbers = #tpu.dot_dimension_numbers<[1], [0], [0], [1], [0, 0, 1, 1], [], []>} : vector<16x4xf32>, vector<4x25xf32>, vector<16x25xf32> -> vector<16x25xf32>
    %383 = vector.extract_strided_slice %378 {offsets = [16, 0], sizes = [16, 4], strides = [1, 1]} : vector<144x4xf32> to vector<16x4xf32>
    %c1_309 = arith.constant 1 : index
    %c0_310 = arith.constant 0 : index
    %c0_311 = arith.constant 0 : index
    %384 = vector.load %arg11[%c1_309, %c0_310, %c0_311] : memref<9x4x25xf32, #tpu.memory_space<vmem>>, vector<1x4x25xf32>
    %385 = vector.shape_cast %384 : vector<1x4x25xf32> to vector<4x25xf32>
    %cst_312 = arith.constant dense<0.000000e+00> : vector<16x25xf32>
    %386 = tpu.matmul %383, %385, %cst_312 {dimension_numbers = #tpu.dot_dimension_numbers<[1], [0], [0], [1], [0, 0, 1, 1], [], []>} : vector<16x4xf32>, vector<4x25xf32>, vector<16x25xf32> -> vector<16x25xf32>
    %387 = vector.extract_strided_slice %378 {offsets = [32, 0], sizes = [16, 4], strides = [1, 1]} : vector<144x4xf32> to vector<16x4xf32>
    %c2_313 = arith.constant 2 : index
    %c0_314 = arith.constant 0 : index
    %c0_315 = arith.constant 0 : index
    %388 = vector.load %arg11[%c2_313, %c0_314, %c0_315] : memref<9x4x25xf32, #tpu.memory_space<vmem>>, vector<1x4x25xf32>
    %389 = vector.shape_cast %388 : vector<1x4x25xf32> to vector<4x25xf32>
    %cst_316 = arith.constant dense<0.000000e+00> : vector<16x25xf32>
    %390 = tpu.matmul %387, %389, %cst_316 {dimension_numbers = #tpu.dot_dimension_numbers<[1], [0], [0], [1], [0, 0, 1, 1], [], []>} : vector<16x4xf32>, vector<4x25xf32>, vector<16x25xf32> -> vector<16x25xf32>
    %391 = vector.extract_strided_slice %378 {offsets = [48, 0], sizes = [16, 4], strides = [1, 1]} : vector<144x4xf32> to vector<16x4xf32>
    %c3_317 = arith.constant 3 : index
    %c0_318 = arith.constant 0 : index
    %c0_319 = arith.constant 0 : index
    %392 = vector.load %arg11[%c3_317, %c0_318, %c0_319] : memref<9x4x25xf32, #tpu.memory_space<vmem>>, vector<1x4x25xf32>
    %393 = vector.shape_cast %392 : vector<1x4x25xf32> to vector<4x25xf32>
    %cst_320 = arith.constant dense<0.000000e+00> : vector<16x25xf32>
    %394 = tpu.matmul %391, %393, %cst_320 {dimension_numbers = #tpu.dot_dimension_numbers<[1], [0], [0], [1], [0, 0, 1, 1], [], []>} : vector<16x4xf32>, vector<4x25xf32>, vector<16x25xf32> -> vector<16x25xf32>
    %395 = vector.extract_strided_slice %378 {offsets = [64, 0], sizes = [16, 4], strides = [1, 1]} : vector<144x4xf32> to vector<16x4xf32>
    %c4_321 = arith.constant 4 : index
    %c0_322 = arith.constant 0 : index
    %c0_323 = arith.constant 0 : index
    %396 = vector.load %arg11[%c4_321, %c0_322, %c0_323] : memref<9x4x25xf32, #tpu.memory_space<vmem>>, vector<1x4x25xf32>
    %397 = vector.shape_cast %396 : vector<1x4x25xf32> to vector<4x25xf32>
    %cst_324 = arith.constant dense<0.000000e+00> : vector<16x25xf32>
    %398 = tpu.matmul %395, %397, %cst_324 {dimension_numbers = #tpu.dot_dimension_numbers<[1], [0], [0], [1], [0, 0, 1, 1], [], []>} : vector<16x4xf32>, vector<4x25xf32>, vector<16x25xf32> -> vector<16x25xf32>
    %399 = arith.addf %382, %398 : vector<16x25xf32>
    %400 = vector.extract_strided_slice %378 {offsets = [80, 0], sizes = [16, 4], strides = [1, 1]} : vector<144x4xf32> to vector<16x4xf32>
    %c5_325 = arith.constant 5 : index
    %c0_326 = arith.constant 0 : index
    %c0_327 = arith.constant 0 : index
    %401 = vector.load %arg11[%c5_325, %c0_326, %c0_327] : memref<9x4x25xf32, #tpu.memory_space<vmem>>, vector<1x4x25xf32>
    %402 = vector.shape_cast %401 : vector<1x4x25xf32> to vector<4x25xf32>
    %cst_328 = arith.constant dense<0.000000e+00> : vector<16x25xf32>
    %403 = tpu.matmul %400, %402, %cst_328 {dimension_numbers = #tpu.dot_dimension_numbers<[1], [0], [0], [1], [0, 0, 1, 1], [], []>} : vector<16x4xf32>, vector<4x25xf32>, vector<16x25xf32> -> vector<16x25xf32>
    %404 = arith.addf %386, %403 : vector<16x25xf32>
    %405 = vector.extract_strided_slice %378 {offsets = [96, 0], sizes = [16, 4], strides = [1, 1]} : vector<144x4xf32> to vector<16x4xf32>
    %c6_329 = arith.constant 6 : index
    %c0_330 = arith.constant 0 : index
    %c0_331 = arith.constant 0 : index
    %406 = vector.load %arg11[%c6_329, %c0_330, %c0_331] : memref<9x4x25xf32, #tpu.memory_space<vmem>>, vector<1x4x25xf32>
    %407 = vector.shape_cast %406 : vector<1x4x25xf32> to vector<4x25xf32>
    %cst_332 = arith.constant dense<0.000000e+00> : vector<16x25xf32>
    %408 = tpu.matmul %405, %407, %cst_332 {dimension_numbers = #tpu.dot_dimension_numbers<[1], [0], [0], [1], [0, 0, 1, 1], [], []>} : vector<16x4xf32>, vector<4x25xf32>, vector<16x25xf32> -> vector<16x25xf32>
    %409 = arith.addf %390, %408 : vector<16x25xf32>
    %410 = vector.extract_strided_slice %378 {offsets = [112, 0], sizes = [16, 4], strides = [1, 1]} : vector<144x4xf32> to vector<16x4xf32>
    %c7_333 = arith.constant 7 : index
    %c0_334 = arith.constant 0 : index
    %c0_335 = arith.constant 0 : index
    %411 = vector.load %arg11[%c7_333, %c0_334, %c0_335] : memref<9x4x25xf32, #tpu.memory_space<vmem>>, vector<1x4x25xf32>
    %412 = vector.shape_cast %411 : vector<1x4x25xf32> to vector<4x25xf32>
    %cst_336 = arith.constant dense<0.000000e+00> : vector<16x25xf32>
    %413 = tpu.matmul %410, %412, %cst_336 {dimension_numbers = #tpu.dot_dimension_numbers<[1], [0], [0], [1], [0, 0, 1, 1], [], []>} : vector<16x4xf32>, vector<4x25xf32>, vector<16x25xf32> -> vector<16x25xf32>
    %414 = arith.addf %394, %413 : vector<16x25xf32>
    %415 = vector.extract_strided_slice %378 {offsets = [128, 0], sizes = [16, 4], strides = [1, 1]} : vector<144x4xf32> to vector<16x4xf32>
    %c8_337 = arith.constant 8 : index
    %c0_338 = arith.constant 0 : index
    %c0_339 = arith.constant 0 : index
    %416 = vector.load %arg11[%c8_337, %c0_338, %c0_339] : memref<9x4x25xf32, #tpu.memory_space<vmem>>, vector<1x4x25xf32>
    %417 = vector.shape_cast %416 : vector<1x4x25xf32> to vector<4x25xf32>
    %cst_340 = arith.constant dense<0.000000e+00> : vector<16x25xf32>
    %418 = tpu.matmul %415, %417, %cst_340 {dimension_numbers = #tpu.dot_dimension_numbers<[1], [0], [0], [1], [0, 0, 1, 1], [], []>} : vector<16x4xf32>, vector<4x25xf32>, vector<16x25xf32> -> vector<16x25xf32>
    %419 = arith.addf %399, %418 : vector<16x25xf32>
    %420 = arith.addf %419, %404 : vector<16x25xf32>
    %421 = arith.addf %420, %409 : vector<16x25xf32>
    %422 = arith.addf %421, %414 : vector<16x25xf32>
    %c0_341 = arith.constant 0 : index
    %c0_342 = arith.constant 0 : index
    %423 = vector.load %arg10[%c0_341, %c0_342] : memref<16x1xf32, #tpu.memory_space<vmem>>, vector<16x1xf32>
    %424 = vector.broadcast %423 : vector<16x1xf32> to vector<16x25xf32>
    %425 = arith.addf %422, %424 : vector<16x25xf32>
    %cst_343 = arith.constant 0.000000e+00 : f32
    %426 = vector.broadcast %cst_343 : f32 to vector<16x25xf32>
    %427 = arith.maximumf %425, %426 : vector<16x25xf32>
    %c0_344 = arith.constant 0 : index
    %c0_345 = arith.constant 0 : index
    %428 = vector.load %arg12[%c0_344, %c0_345] : memref<200x16xf32, #tpu.memory_space<vmem>>, vector<200x16xf32>
    %cst_346 = arith.constant dense<0.000000e+00> : vector<200x25xf32>
    %429 = tpu.matmul %428, %427, %cst_346 {dimension_numbers = #tpu.dot_dimension_numbers<[1], [0], [0], [1], [0, 0, 1, 1], [], []>} : vector<200x16xf32>, vector<16x25xf32>, vector<200x25xf32> -> vector<200x25xf32>
    %430 = vector.extract_strided_slice %429 {offsets = [0, 0], sizes = [8, 25], strides = [1, 1]} : vector<200x25xf32> to vector<8x25xf32>
    %c0_347 = arith.constant 0 : index
    %c0_348 = arith.constant 0 : index
    %c0_349 = arith.constant 0 : index
    %431 = vector.load %arg14[%c0_347, %c0_348, %c0_349] : memref<25x25x225xf32, #tpu.memory_space<vmem>>, vector<1x25x225xf32>
    %432 = vector.shape_cast %431 : vector<1x25x225xf32> to vector<25x225xf32>
    %cst_350 = arith.constant dense<0.000000e+00> : vector<8x225xf32>
    %433 = tpu.matmul %430, %432, %cst_350 {dimension_numbers = #tpu.dot_dimension_numbers<[1], [0], [0], [1], [0, 0, 1, 1], [], []>} : vector<8x25xf32>, vector<25x225xf32>, vector<8x225xf32> -> vector<8x225xf32>
    %434 = vector.extract_strided_slice %429 {offsets = [8, 0], sizes = [8, 25], strides = [1, 1]} : vector<200x25xf32> to vector<8x25xf32>
    %c1_351 = arith.constant 1 : index
    %c0_352 = arith.constant 0 : index
    %c0_353 = arith.constant 0 : index
    %435 = vector.load %arg14[%c1_351, %c0_352, %c0_353] : memref<25x25x225xf32, #tpu.memory_space<vmem>>, vector<1x25x225xf32>
    %436 = vector.shape_cast %435 : vector<1x25x225xf32> to vector<25x225xf32>
    %cst_354 = arith.constant dense<0.000000e+00> : vector<8x225xf32>
    %437 = tpu.matmul %434, %436, %cst_354 {dimension_numbers = #tpu.dot_dimension_numbers<[1], [0], [0], [1], [0, 0, 1, 1], [], []>} : vector<8x25xf32>, vector<25x225xf32>, vector<8x225xf32> -> vector<8x225xf32>
    %438 = vector.extract_strided_slice %429 {offsets = [16, 0], sizes = [8, 25], strides = [1, 1]} : vector<200x25xf32> to vector<8x25xf32>
    %c2_355 = arith.constant 2 : index
    %c0_356 = arith.constant 0 : index
    %c0_357 = arith.constant 0 : index
    %439 = vector.load %arg14[%c2_355, %c0_356, %c0_357] : memref<25x25x225xf32, #tpu.memory_space<vmem>>, vector<1x25x225xf32>
    %440 = vector.shape_cast %439 : vector<1x25x225xf32> to vector<25x225xf32>
    %cst_358 = arith.constant dense<0.000000e+00> : vector<8x225xf32>
    %441 = tpu.matmul %438, %440, %cst_358 {dimension_numbers = #tpu.dot_dimension_numbers<[1], [0], [0], [1], [0, 0, 1, 1], [], []>} : vector<8x25xf32>, vector<25x225xf32>, vector<8x225xf32> -> vector<8x225xf32>
    %442 = vector.extract_strided_slice %429 {offsets = [24, 0], sizes = [8, 25], strides = [1, 1]} : vector<200x25xf32> to vector<8x25xf32>
    %c3_359 = arith.constant 3 : index
    %c0_360 = arith.constant 0 : index
    %c0_361 = arith.constant 0 : index
    %443 = vector.load %arg14[%c3_359, %c0_360, %c0_361] : memref<25x25x225xf32, #tpu.memory_space<vmem>>, vector<1x25x225xf32>
    %444 = vector.shape_cast %443 : vector<1x25x225xf32> to vector<25x225xf32>
    %cst_362 = arith.constant dense<0.000000e+00> : vector<8x225xf32>
    %445 = tpu.matmul %442, %444, %cst_362 {dimension_numbers = #tpu.dot_dimension_numbers<[1], [0], [0], [1], [0, 0, 1, 1], [], []>} : vector<8x25xf32>, vector<25x225xf32>, vector<8x225xf32> -> vector<8x225xf32>
    %446 = vector.extract_strided_slice %429 {offsets = [32, 0], sizes = [8, 25], strides = [1, 1]} : vector<200x25xf32> to vector<8x25xf32>
    %c4_363 = arith.constant 4 : index
    %c0_364 = arith.constant 0 : index
    %c0_365 = arith.constant 0 : index
    %447 = vector.load %arg14[%c4_363, %c0_364, %c0_365] : memref<25x25x225xf32, #tpu.memory_space<vmem>>, vector<1x25x225xf32>
    %448 = vector.shape_cast %447 : vector<1x25x225xf32> to vector<25x225xf32>
    %cst_366 = arith.constant dense<0.000000e+00> : vector<8x225xf32>
    %449 = tpu.matmul %446, %448, %cst_366 {dimension_numbers = #tpu.dot_dimension_numbers<[1], [0], [0], [1], [0, 0, 1, 1], [], []>} : vector<8x25xf32>, vector<25x225xf32>, vector<8x225xf32> -> vector<8x225xf32>
    %450 = arith.addf %433, %449 : vector<8x225xf32>
    %451 = vector.extract_strided_slice %429 {offsets = [40, 0], sizes = [8, 25], strides = [1, 1]} : vector<200x25xf32> to vector<8x25xf32>
    %c5_367 = arith.constant 5 : index
    %c0_368 = arith.constant 0 : index
    %c0_369 = arith.constant 0 : index
    %452 = vector.load %arg14[%c5_367, %c0_368, %c0_369] : memref<25x25x225xf32, #tpu.memory_space<vmem>>, vector<1x25x225xf32>
    %453 = vector.shape_cast %452 : vector<1x25x225xf32> to vector<25x225xf32>
    %cst_370 = arith.constant dense<0.000000e+00> : vector<8x225xf32>
    %454 = tpu.matmul %451, %453, %cst_370 {dimension_numbers = #tpu.dot_dimension_numbers<[1], [0], [0], [1], [0, 0, 1, 1], [], []>} : vector<8x25xf32>, vector<25x225xf32>, vector<8x225xf32> -> vector<8x225xf32>
    %455 = arith.addf %437, %454 : vector<8x225xf32>
    %456 = vector.extract_strided_slice %429 {offsets = [48, 0], sizes = [8, 25], strides = [1, 1]} : vector<200x25xf32> to vector<8x25xf32>
    %c6_371 = arith.constant 6 : index
    %c0_372 = arith.constant 0 : index
    %c0_373 = arith.constant 0 : index
    %457 = vector.load %arg14[%c6_371, %c0_372, %c0_373] : memref<25x25x225xf32, #tpu.memory_space<vmem>>, vector<1x25x225xf32>
    %458 = vector.shape_cast %457 : vector<1x25x225xf32> to vector<25x225xf32>
    %cst_374 = arith.constant dense<0.000000e+00> : vector<8x225xf32>
    %459 = tpu.matmul %456, %458, %cst_374 {dimension_numbers = #tpu.dot_dimension_numbers<[1], [0], [0], [1], [0, 0, 1, 1], [], []>} : vector<8x25xf32>, vector<25x225xf32>, vector<8x225xf32> -> vector<8x225xf32>
    %460 = arith.addf %441, %459 : vector<8x225xf32>
    %461 = vector.extract_strided_slice %429 {offsets = [56, 0], sizes = [8, 25], strides = [1, 1]} : vector<200x25xf32> to vector<8x25xf32>
    %c7_375 = arith.constant 7 : index
    %c0_376 = arith.constant 0 : index
    %c0_377 = arith.constant 0 : index
    %462 = vector.load %arg14[%c7_375, %c0_376, %c0_377] : memref<25x25x225xf32, #tpu.memory_space<vmem>>, vector<1x25x225xf32>
    %463 = vector.shape_cast %462 : vector<1x25x225xf32> to vector<25x225xf32>
    %cst_378 = arith.constant dense<0.000000e+00> : vector<8x225xf32>
    %464 = tpu.matmul %461, %463, %cst_378 {dimension_numbers = #tpu.dot_dimension_numbers<[1], [0], [0], [1], [0, 0, 1, 1], [], []>} : vector<8x25xf32>, vector<25x225xf32>, vector<8x225xf32> -> vector<8x225xf32>
    %465 = arith.addf %445, %464 : vector<8x225xf32>
    %466 = vector.extract_strided_slice %429 {offsets = [64, 0], sizes = [8, 25], strides = [1, 1]} : vector<200x25xf32> to vector<8x25xf32>
    %c8_379 = arith.constant 8 : index
    %c0_380 = arith.constant 0 : index
    %c0_381 = arith.constant 0 : index
    %467 = vector.load %arg14[%c8_379, %c0_380, %c0_381] : memref<25x25x225xf32, #tpu.memory_space<vmem>>, vector<1x25x225xf32>
    %468 = vector.shape_cast %467 : vector<1x25x225xf32> to vector<25x225xf32>
    %cst_382 = arith.constant dense<0.000000e+00> : vector<8x225xf32>
    %469 = tpu.matmul %466, %468, %cst_382 {dimension_numbers = #tpu.dot_dimension_numbers<[1], [0], [0], [1], [0, 0, 1, 1], [], []>} : vector<8x25xf32>, vector<25x225xf32>, vector<8x225xf32> -> vector<8x225xf32>
    %470 = arith.addf %450, %469 : vector<8x225xf32>
    %471 = vector.extract_strided_slice %429 {offsets = [72, 0], sizes = [8, 25], strides = [1, 1]} : vector<200x25xf32> to vector<8x25xf32>
    %c9_383 = arith.constant 9 : index
    %c0_384 = arith.constant 0 : index
    %c0_385 = arith.constant 0 : index
    %472 = vector.load %arg14[%c9_383, %c0_384, %c0_385] : memref<25x25x225xf32, #tpu.memory_space<vmem>>, vector<1x25x225xf32>
    %473 = vector.shape_cast %472 : vector<1x25x225xf32> to vector<25x225xf32>
    %cst_386 = arith.constant dense<0.000000e+00> : vector<8x225xf32>
    %474 = tpu.matmul %471, %473, %cst_386 {dimension_numbers = #tpu.dot_dimension_numbers<[1], [0], [0], [1], [0, 0, 1, 1], [], []>} : vector<8x25xf32>, vector<25x225xf32>, vector<8x225xf32> -> vector<8x225xf32>
    %475 = arith.addf %455, %474 : vector<8x225xf32>
    %476 = vector.extract_strided_slice %429 {offsets = [80, 0], sizes = [8, 25], strides = [1, 1]} : vector<200x25xf32> to vector<8x25xf32>
    %c10_387 = arith.constant 10 : index
    %c0_388 = arith.constant 0 : index
    %c0_389 = arith.constant 0 : index
    %477 = vector.load %arg14[%c10_387, %c0_388, %c0_389] : memref<25x25x225xf32, #tpu.memory_space<vmem>>, vector<1x25x225xf32>
    %478 = vector.shape_cast %477 : vector<1x25x225xf32> to vector<25x225xf32>
    %cst_390 = arith.constant dense<0.000000e+00> : vector<8x225xf32>
    %479 = tpu.matmul %476, %478, %cst_390 {dimension_numbers = #tpu.dot_dimension_numbers<[1], [0], [0], [1], [0, 0, 1, 1], [], []>} : vector<8x25xf32>, vector<25x225xf32>, vector<8x225xf32> -> vector<8x225xf32>
    %480 = arith.addf %460, %479 : vector<8x225xf32>
    %481 = vector.extract_strided_slice %429 {offsets = [88, 0], sizes = [8, 25], strides = [1, 1]} : vector<200x25xf32> to vector<8x25xf32>
    %c11_391 = arith.constant 11 : index
    %c0_392 = arith.constant 0 : index
    %c0_393 = arith.constant 0 : index
    %482 = vector.load %arg14[%c11_391, %c0_392, %c0_393] : memref<25x25x225xf32, #tpu.memory_space<vmem>>, vector<1x25x225xf32>
    %483 = vector.shape_cast %482 : vector<1x25x225xf32> to vector<25x225xf32>
    %cst_394 = arith.constant dense<0.000000e+00> : vector<8x225xf32>
    %484 = tpu.matmul %481, %483, %cst_394 {dimension_numbers = #tpu.dot_dimension_numbers<[1], [0], [0], [1], [0, 0, 1, 1], [], []>} : vector<8x25xf32>, vector<25x225xf32>, vector<8x225xf32> -> vector<8x225xf32>
    %485 = arith.addf %465, %484 : vector<8x225xf32>
    %486 = vector.extract_strided_slice %429 {offsets = [96, 0], sizes = [8, 25], strides = [1, 1]} : vector<200x25xf32> to vector<8x25xf32>
    %c12_395 = arith.constant 12 : index
    %c0_396 = arith.constant 0 : index
    %c0_397 = arith.constant 0 : index
    %487 = vector.load %arg14[%c12_395, %c0_396, %c0_397] : memref<25x25x225xf32, #tpu.memory_space<vmem>>, vector<1x25x225xf32>
    %488 = vector.shape_cast %487 : vector<1x25x225xf32> to vector<25x225xf32>
    %cst_398 = arith.constant dense<0.000000e+00> : vector<8x225xf32>
    %489 = tpu.matmul %486, %488, %cst_398 {dimension_numbers = #tpu.dot_dimension_numbers<[1], [0], [0], [1], [0, 0, 1, 1], [], []>} : vector<8x25xf32>, vector<25x225xf32>, vector<8x225xf32> -> vector<8x225xf32>
    %490 = arith.addf %470, %489 : vector<8x225xf32>
    %491 = vector.extract_strided_slice %429 {offsets = [104, 0], sizes = [8, 25], strides = [1, 1]} : vector<200x25xf32> to vector<8x25xf32>
    %c13_399 = arith.constant 13 : index
    %c0_400 = arith.constant 0 : index
    %c0_401 = arith.constant 0 : index
    %492 = vector.load %arg14[%c13_399, %c0_400, %c0_401] : memref<25x25x225xf32, #tpu.memory_space<vmem>>, vector<1x25x225xf32>
    %493 = vector.shape_cast %492 : vector<1x25x225xf32> to vector<25x225xf32>
    %cst_402 = arith.constant dense<0.000000e+00> : vector<8x225xf32>
    %494 = tpu.matmul %491, %493, %cst_402 {dimension_numbers = #tpu.dot_dimension_numbers<[1], [0], [0], [1], [0, 0, 1, 1], [], []>} : vector<8x25xf32>, vector<25x225xf32>, vector<8x225xf32> -> vector<8x225xf32>
    %495 = arith.addf %475, %494 : vector<8x225xf32>
    %496 = vector.extract_strided_slice %429 {offsets = [112, 0], sizes = [8, 25], strides = [1, 1]} : vector<200x25xf32> to vector<8x25xf32>
    %c14_403 = arith.constant 14 : index
    %c0_404 = arith.constant 0 : index
    %c0_405 = arith.constant 0 : index
    %497 = vector.load %arg14[%c14_403, %c0_404, %c0_405] : memref<25x25x225xf32, #tpu.memory_space<vmem>>, vector<1x25x225xf32>
    %498 = vector.shape_cast %497 : vector<1x25x225xf32> to vector<25x225xf32>
    %cst_406 = arith.constant dense<0.000000e+00> : vector<8x225xf32>
    %499 = tpu.matmul %496, %498, %cst_406 {dimension_numbers = #tpu.dot_dimension_numbers<[1], [0], [0], [1], [0, 0, 1, 1], [], []>} : vector<8x25xf32>, vector<25x225xf32>, vector<8x225xf32> -> vector<8x225xf32>
    %500 = arith.addf %480, %499 : vector<8x225xf32>
    %501 = vector.extract_strided_slice %429 {offsets = [120, 0], sizes = [8, 25], strides = [1, 1]} : vector<200x25xf32> to vector<8x25xf32>
    %c15_407 = arith.constant 15 : index
    %c0_408 = arith.constant 0 : index
    %c0_409 = arith.constant 0 : index
    %502 = vector.load %arg14[%c15_407, %c0_408, %c0_409] : memref<25x25x225xf32, #tpu.memory_space<vmem>>, vector<1x25x225xf32>
    %503 = vector.shape_cast %502 : vector<1x25x225xf32> to vector<25x225xf32>
    %cst_410 = arith.constant dense<0.000000e+00> : vector<8x225xf32>
    %504 = tpu.matmul %501, %503, %cst_410 {dimension_numbers = #tpu.dot_dimension_numbers<[1], [0], [0], [1], [0, 0, 1, 1], [], []>} : vector<8x25xf32>, vector<25x225xf32>, vector<8x225xf32> -> vector<8x225xf32>
    %505 = arith.addf %485, %504 : vector<8x225xf32>
    %506 = vector.extract_strided_slice %429 {offsets = [128, 0], sizes = [8, 25], strides = [1, 1]} : vector<200x25xf32> to vector<8x25xf32>
    %c16_411 = arith.constant 16 : index
    %c0_412 = arith.constant 0 : index
    %c0_413 = arith.constant 0 : index
    %507 = vector.load %arg14[%c16_411, %c0_412, %c0_413] : memref<25x25x225xf32, #tpu.memory_space<vmem>>, vector<1x25x225xf32>
    %508 = vector.shape_cast %507 : vector<1x25x225xf32> to vector<25x225xf32>
    %cst_414 = arith.constant dense<0.000000e+00> : vector<8x225xf32>
    %509 = tpu.matmul %506, %508, %cst_414 {dimension_numbers = #tpu.dot_dimension_numbers<[1], [0], [0], [1], [0, 0, 1, 1], [], []>} : vector<8x25xf32>, vector<25x225xf32>, vector<8x225xf32> -> vector<8x225xf32>
    %510 = arith.addf %490, %509 : vector<8x225xf32>
    %511 = vector.extract_strided_slice %429 {offsets = [136, 0], sizes = [8, 25], strides = [1, 1]} : vector<200x25xf32> to vector<8x25xf32>
    %c17_415 = arith.constant 17 : index
    %c0_416 = arith.constant 0 : index
    %c0_417 = arith.constant 0 : index
    %512 = vector.load %arg14[%c17_415, %c0_416, %c0_417] : memref<25x25x225xf32, #tpu.memory_space<vmem>>, vector<1x25x225xf32>
    %513 = vector.shape_cast %512 : vector<1x25x225xf32> to vector<25x225xf32>
    %cst_418 = arith.constant dense<0.000000e+00> : vector<8x225xf32>
    %514 = tpu.matmul %511, %513, %cst_418 {dimension_numbers = #tpu.dot_dimension_numbers<[1], [0], [0], [1], [0, 0, 1, 1], [], []>} : vector<8x25xf32>, vector<25x225xf32>, vector<8x225xf32> -> vector<8x225xf32>
    %515 = arith.addf %495, %514 : vector<8x225xf32>
    %516 = vector.extract_strided_slice %429 {offsets = [144, 0], sizes = [8, 25], strides = [1, 1]} : vector<200x25xf32> to vector<8x25xf32>
    %c18_419 = arith.constant 18 : index
    %c0_420 = arith.constant 0 : index
    %c0_421 = arith.constant 0 : index
    %517 = vector.load %arg14[%c18_419, %c0_420, %c0_421] : memref<25x25x225xf32, #tpu.memory_space<vmem>>, vector<1x25x225xf32>
    %518 = vector.shape_cast %517 : vector<1x25x225xf32> to vector<25x225xf32>
    %cst_422 = arith.constant dense<0.000000e+00> : vector<8x225xf32>
    %519 = tpu.matmul %516, %518, %cst_422 {dimension_numbers = #tpu.dot_dimension_numbers<[1], [0], [0], [1], [0, 0, 1, 1], [], []>} : vector<8x25xf32>, vector<25x225xf32>, vector<8x225xf32> -> vector<8x225xf32>
    %520 = arith.addf %500, %519 : vector<8x225xf32>
    %521 = vector.extract_strided_slice %429 {offsets = [152, 0], sizes = [8, 25], strides = [1, 1]} : vector<200x25xf32> to vector<8x25xf32>
    %c19_423 = arith.constant 19 : index
    %c0_424 = arith.constant 0 : index
    %c0_425 = arith.constant 0 : index
    %522 = vector.load %arg14[%c19_423, %c0_424, %c0_425] : memref<25x25x225xf32, #tpu.memory_space<vmem>>, vector<1x25x225xf32>
    %523 = vector.shape_cast %522 : vector<1x25x225xf32> to vector<25x225xf32>
    %cst_426 = arith.constant dense<0.000000e+00> : vector<8x225xf32>
    %524 = tpu.matmul %521, %523, %cst_426 {dimension_numbers = #tpu.dot_dimension_numbers<[1], [0], [0], [1], [0, 0, 1, 1], [], []>} : vector<8x25xf32>, vector<25x225xf32>, vector<8x225xf32> -> vector<8x225xf32>
    %525 = arith.addf %505, %524 : vector<8x225xf32>
    %526 = vector.extract_strided_slice %429 {offsets = [160, 0], sizes = [8, 25], strides = [1, 1]} : vector<200x25xf32> to vector<8x25xf32>
    %c20_427 = arith.constant 20 : index
    %c0_428 = arith.constant 0 : index
    %c0_429 = arith.constant 0 : index
    %527 = vector.load %arg14[%c20_427, %c0_428, %c0_429] : memref<25x25x225xf32, #tpu.memory_space<vmem>>, vector<1x25x225xf32>
    %528 = vector.shape_cast %527 : vector<1x25x225xf32> to vector<25x225xf32>
    %cst_430 = arith.constant dense<0.000000e+00> : vector<8x225xf32>
    %529 = tpu.matmul %526, %528, %cst_430 {dimension_numbers = #tpu.dot_dimension_numbers<[1], [0], [0], [1], [0, 0, 1, 1], [], []>} : vector<8x25xf32>, vector<25x225xf32>, vector<8x225xf32> -> vector<8x225xf32>
    %530 = arith.addf %510, %529 : vector<8x225xf32>
    %531 = vector.extract_strided_slice %429 {offsets = [168, 0], sizes = [8, 25], strides = [1, 1]} : vector<200x25xf32> to vector<8x25xf32>
    %c21_431 = arith.constant 21 : index
    %c0_432 = arith.constant 0 : index
    %c0_433 = arith.constant 0 : index
    %532 = vector.load %arg14[%c21_431, %c0_432, %c0_433] : memref<25x25x225xf32, #tpu.memory_space<vmem>>, vector<1x25x225xf32>
    %533 = vector.shape_cast %532 : vector<1x25x225xf32> to vector<25x225xf32>
    %cst_434 = arith.constant dense<0.000000e+00> : vector<8x225xf32>
    %534 = tpu.matmul %531, %533, %cst_434 {dimension_numbers = #tpu.dot_dimension_numbers<[1], [0], [0], [1], [0, 0, 1, 1], [], []>} : vector<8x25xf32>, vector<25x225xf32>, vector<8x225xf32> -> vector<8x225xf32>
    %535 = arith.addf %515, %534 : vector<8x225xf32>
    %536 = vector.extract_strided_slice %429 {offsets = [176, 0], sizes = [8, 25], strides = [1, 1]} : vector<200x25xf32> to vector<8x25xf32>
    %c22_435 = arith.constant 22 : index
    %c0_436 = arith.constant 0 : index
    %c0_437 = arith.constant 0 : index
    %537 = vector.load %arg14[%c22_435, %c0_436, %c0_437] : memref<25x25x225xf32, #tpu.memory_space<vmem>>, vector<1x25x225xf32>
    %538 = vector.shape_cast %537 : vector<1x25x225xf32> to vector<25x225xf32>
    %cst_438 = arith.constant dense<0.000000e+00> : vector<8x225xf32>
    %539 = tpu.matmul %536, %538, %cst_438 {dimension_numbers = #tpu.dot_dimension_numbers<[1], [0], [0], [1], [0, 0, 1, 1], [], []>} : vector<8x25xf32>, vector<25x225xf32>, vector<8x225xf32> -> vector<8x225xf32>
    %540 = arith.addf %520, %539 : vector<8x225xf32>
    %541 = vector.extract_strided_slice %429 {offsets = [184, 0], sizes = [8, 25], strides = [1, 1]} : vector<200x25xf32> to vector<8x25xf32>
    %c23_439 = arith.constant 23 : index
    %c0_440 = arith.constant 0 : index
    %c0_441 = arith.constant 0 : index
    %542 = vector.load %arg14[%c23_439, %c0_440, %c0_441] : memref<25x25x225xf32, #tpu.memory_space<vmem>>, vector<1x25x225xf32>
    %543 = vector.shape_cast %542 : vector<1x25x225xf32> to vector<25x225xf32>
    %cst_442 = arith.constant dense<0.000000e+00> : vector<8x225xf32>
    %544 = tpu.matmul %541, %543, %cst_442 {dimension_numbers = #tpu.dot_dimension_numbers<[1], [0], [0], [1], [0, 0, 1, 1], [], []>} : vector<8x25xf32>, vector<25x225xf32>, vector<8x225xf32> -> vector<8x225xf32>
    %545 = arith.addf %525, %544 : vector<8x225xf32>
    %546 = vector.extract_strided_slice %429 {offsets = [192, 0], sizes = [8, 25], strides = [1, 1]} : vector<200x25xf32> to vector<8x25xf32>
    %c24_443 = arith.constant 24 : index
    %c0_444 = arith.constant 0 : index
    %c0_445 = arith.constant 0 : index
    %547 = vector.load %arg14[%c24_443, %c0_444, %c0_445] : memref<25x25x225xf32, #tpu.memory_space<vmem>>, vector<1x25x225xf32>
    %548 = vector.shape_cast %547 : vector<1x25x225xf32> to vector<25x225xf32>
    %cst_446 = arith.constant dense<0.000000e+00> : vector<8x225xf32>
    %549 = tpu.matmul %546, %548, %cst_446 {dimension_numbers = #tpu.dot_dimension_numbers<[1], [0], [0], [1], [0, 0, 1, 1], [], []>} : vector<8x25xf32>, vector<25x225xf32>, vector<8x225xf32> -> vector<8x225xf32>
    %550 = arith.addf %530, %549 : vector<8x225xf32>
    %551 = arith.addf %550, %535 : vector<8x225xf32>
    %552 = arith.addf %551, %540 : vector<8x225xf32>
    %553 = arith.addf %552, %545 : vector<8x225xf32>
    %c0_447 = arith.constant 0 : index
    %c0_448 = arith.constant 0 : index
    %554 = vector.load %arg13[%c0_447, %c0_448] : memref<8x1xf32, #tpu.memory_space<vmem>>, vector<8x1xf32>
    %555 = vector.broadcast %554 : vector<8x1xf32> to vector<8x225xf32>
    %556 = arith.addf %553, %555 : vector<8x225xf32>
    %cst_449 = arith.constant 0.000000e+00 : f32
    %557 = vector.broadcast %cst_449 : f32 to vector<8x225xf32>
    %558 = arith.maximumf %556, %557 : vector<8x225xf32>
    %c0_450 = arith.constant 0 : index
    %c0_451 = arith.constant 0 : index
    %559 = vector.load %arg15[%c0_450, %c0_451] : memref<4x8xf32, #tpu.memory_space<vmem>>, vector<4x8xf32>
    %cst_452 = arith.constant dense<0.000000e+00> : vector<4x225xf32>
    %560 = tpu.matmul %559, %558, %cst_452 {dimension_numbers = #tpu.dot_dimension_numbers<[1], [0], [0], [1], [0, 0, 1, 1], [], []>} : vector<4x8xf32>, vector<8x225xf32>, vector<4x225xf32> -> vector<4x225xf32>
    %c0_453 = arith.constant 0 : index
    %c0_454 = arith.constant 0 : index
    %561 = vector.load %arg16[%c0_453, %c0_454] : memref<4x1xf32, #tpu.memory_space<vmem>>, vector<4x1xf32>
    %562 = vector.broadcast %561 : vector<4x1xf32> to vector<4x225xf32>
    %563 = arith.addf %560, %562 : vector<4x225xf32>
    %564 = math.tanh %563 : vector<4x225xf32>
    %c1_455 = arith.constant 1 : index
    %c0_456 = arith.constant 0 : index
    %c0_457 = arith.constant 0 : index
    %565 = vector.load %arg17[%c1_455, %c0_456, %c0_457] : memref<2x4x225xf32, #tpu.memory_space<vmem>>, vector<1x4x225xf32>
    %566 = vector.shape_cast %565 : vector<1x4x225xf32> to vector<4x225xf32>
    %567 = vector.shape_cast %564 : vector<4x225xf32> to vector<1x4x225xf32>
    tpu.vector_store %arg17[%c1_455, %c0_456, %c0_457], %567 {strides = array<i32>} : memref<2x4x225xf32, #tpu.memory_space<vmem>>, vector<1x4x225xf32>,
    return
  }
  func.func @transform_0(%arg0: i32) -> (i32, i32, i32) {
    %c0_i32 = arith.constant 0 : i32
    %c0_i32_0 = arith.constant 0 : i32
    %c0_i32_1 = arith.constant 0 : i32
    return %arg0, %c0_i32, %c0_i32_0 : i32, i32, i32
  }
  func.func @transform_1(%arg0: i32) -> (i32, i32) {
    %c0_i32 = arith.constant 0 : i32
    %c0_i32_0 = arith.constant 0 : i32
    %c0_i32_1 = arith.constant 0 : i32
    return %c0_i32, %c0_i32_0 : i32, i32
  }
  func.func @transform_2(%arg0: i32) -> (i32, i32) {
    %c0_i32 = arith.constant 0 : i32
    %c0_i32_0 = arith.constant 0 : i32
    %c0_i32_1 = arith.constant 0 : i32
    return %c0_i32, %c0_i32_0 : i32, i32
  }
  func.func @transform_3(%arg0: i32) -> (i32, i32, i32) {
    %c0_i32 = arith.constant 0 : i32
    %c0_i32_0 = arith.constant 0 : i32
    %c0_i32_1 = arith.constant 0 : i32
    %c0_i32_2 = arith.constant 0 : i32
    return %c0_i32, %c0_i32_0, %c0_i32_1 : i32, i32, i32
  }
  func.func @transform_4(%arg0: i32) -> (i32, i32) {
    %c0_i32 = arith.constant 0 : i32
    %c0_i32_0 = arith.constant 0 : i32
    %c0_i32_1 = arith.constant 0 : i32
    return %c0_i32, %c0_i32_0 : i32, i32
  }
  func.func @transform_5(%arg0: i32) -> (i32, i32) {
    %c0_i32 = arith.constant 0 : i32
    %c0_i32_0 = arith.constant 0 : i32
    %c0_i32_1 = arith.constant 0 : i32
    return %c0_i32, %c0_i32_0 : i32, i32
  }
  func.func @transform_6(%arg0: i32) -> (i32, i32, i32) {
    %c0_i32 = arith.constant 0 : i32
    %c0_i32_0 = arith.constant 0 : i32
    %c0_i32_1 = arith.constant 0 : i32
    %c0_i32_2 = arith.constant 0 : i32
    return %c0_i32, %c0_i32_0, %c0_i32_1 : i32, i32, i32
  }
  func.func @transform_7(%arg0: i32) -> (i32, i32, i32) {
    %c0_i32 = arith.constant 0 : i32
    %c0_i32_0 = arith.constant 0 : i32
    %c0_i32_1 = arith.constant 0 : i32
    %c0_i32_2 = arith.constant 0 : i32
    return %c0_i32, %c0_i32_0, %c0_i32_1 : i32, i32, i32
  }
  func.func @transform_8(%arg0: i32) -> (i32, i32) {
    %c0_i32 = arith.constant 0 : i32
    %c0_i32_0 = arith.constant 0 : i32
    %c0_i32_1 = arith.constant 0 : i32
    return %c0_i32, %c0_i32_0 : i32, i32
  }
  func.func @transform_9(%arg0: i32) -> (i32, i32) {
    %c0_i32 = arith.constant 0 : i32
    %c0_i32_0 = arith.constant 0 : i32
    %c0_i32_1 = arith.constant 0 : i32
    return %c0_i32, %c0_i32_0 : i32, i32
  }
  func.func @transform_10(%arg0: i32) -> (i32, i32, i32) {
    %c0_i32 = arith.constant 0 : i32
    %c0_i32_0 = arith.constant 0 : i32
    %c0_i32_1 = arith.constant 0 : i32
    %c0_i32_2 = arith.constant 0 : i32
    return %c0_i32, %c0_i32_0, %c0_i32_1 : i32, i32, i32
  }
  func.func @transform_11(%arg0: i32) -> (i32, i32) {
    %c0_i32 = arith.constant 0 : i32
    %c0_i32_0 = arith.constant 0 : i32
    %c0_i32_1 = arith.constant 0 : i32
    return %c0_i32, %c0_i32_0 : i32, i32
  }
  func.func @transform_12(%arg0: i32) -> (i32, i32) {
    %c0_i32 = arith.constant 0 : i32
    %c0_i32_0 = arith.constant 0 : i32
    %c0_i32_1 = arith.constant 0 : i32
    return %c0_i32, %c0_i32_0 : i32, i32
  }
  func.func @transform_13(%arg0: i32) -> (i32, i32, i32) {
    %c0_i32 = arith.constant 0 : i32
    %c0_i32_0 = arith.constant 0 : i32
    %c0_i32_1 = arith.constant 0 : i32
    %c0_i32_2 = arith.constant 0 : i32
    return %c0_i32, %c0_i32_0, %c0_i32_1 : i32, i32, i32
  }
  func.func @transform_14(%arg0: i32) -> (i32, i32) {
    %c0_i32 = arith.constant 0 : i32
    %c0_i32_0 = arith.constant 0 : i32
    %c0_i32_1 = arith.constant 0 : i32
    return %c0_i32, %c0_i32_0 : i32, i32
  }
  func.func @transform_15(%arg0: i32) -> (i32, i32) {
    %c0_i32 = arith.constant 0 : i32
    %c0_i32_0 = arith.constant 0 : i32
    %c0_i32_1 = arith.constant 0 : i32
    return %c0_i32, %c0_i32_0 : i32, i32
  }
  func.func @transform_16(%arg0: i32) -> (i32, i32, i32) {
    %c0_i32 = arith.constant 0 : i32
    %c0_i32_0 = arith.constant 0 : i32
    %c0_i32_1 = arith.constant 0 : i32
    return %arg0, %c0_i32, %c0_i32_0 : i32, i32, i32
  }
  func.func @transform_17(%arg0: i32) -> (i32, i32, i32) {
    %c0_i32 = arith.constant 0 : i32
    %c0_i32_0 = arith.constant 0 : i32
    %c0_i32_1 = arith.constant 0 : i32
    return %arg0, %c0_i32, %c0_i32_0 : i32, i32, i32
  }
}

</mosaic_0001>

<llo_original>
// kernel: autoencoder_forward.1
$region0: #{autoencoder_forward.1}
  #allocation0 [shape = 'u32[]', space=smem, size = 0x4, offset = 0x4, fixed_abs, tag = 'smem constant byte address 0x4 - core index']
  #allocation1 [shape = 'u32[72,128]{1,0:T(1,128)}', space=vmem, size = 0x9000, scoped, tag = 'internal scratch']
  %s0 = inlined_call_operand.vmem [shape: f32[2,9,100], index: 0, kind: input, shape index: {}]
  %s1 = inlined_call_operand.vmem [shape: f32[16,9], index: 1, kind: input, shape index: {}]
  %s2 = inlined_call_operand.vmem [shape: f32[16,1], index: 2, kind: input, shape index: {}]
  %s3 = inlined_call_operand.vmem [shape: f32[4,100,25], index: 3, kind: input, shape index: {}]
  %s4 = inlined_call_operand.vmem [shape: f32[72,16], index: 4, kind: input, shape index: {}]
  %s5 = inlined_call_operand.vmem [shape: f32[8,1], index: 5, kind: input, shape index: {}]
  %s6 = inlined_call_operand.vmem [shape: f32[9,25,9], index: 6, kind: input, shape index: {}]
  %s7 = inlined_call_operand.vmem [shape: f32[4,9,4], index: 7, kind: input, shape index: {}]
  %s8 = inlined_call_operand.vmem [shape: f32[144,8], index: 8, kind: input, shape index: {}]
  %s9 = inlined_call_operand.vmem [shape: f32[16,1], index: 9, kind: input, shape index: {}]
  %s10 = inlined_call_operand.vmem [shape: f32[9,4,25], index: 10, kind: input, shape index: {}]
  %s11 = inlined_call_operand.vmem [shape: f32[200,16], index: 11, kind: input, shape index: {}]
  %s12 = inlined_call_operand.vmem [shape: f32[8,1], index: 12, kind: input, shape index: {}]
  %s13 = inlined_call_operand.vmem [shape: f32[25,25,225], index: 13, kind: input, shape index: {}]
  %s14 = inlined_call_operand.vmem [shape: f32[4,8], index: 14, kind: input, shape index: {}]
  %s15 = inlined_call_operand.vmem [shape: f32[4,1], index: 15, kind: input, shape index: {}]
  %s16 = inlined_call_operand.vmem [shape: f32[2,4,225], index: 16, kind: output, shape index: {0}]
  %s17 = inlined_call_operand.vmem [shape: f32[2,8,4], index: 17, kind: output, shape index: {1}]
  %18 = xla_tuple %s16, %s17
  %s19 = sld [smem:[#allocation0]]
  $region82: #{autoencoder_forward.1} parent=0
    _
  %s21 = ssub.s32 1, %s19
  %s22 = scalar_select 0, %s21, %s19
  // Predicated region
  $region2: #{autoencoder_forward.1} parent=0 // pred_check
    _
  $region3: #{autoencoder_forward.1} parent=0 // pred_check_branch
    %24 = sbr.rel (0) target = $region5
  $region4: #{autoencoder_forward.1} parent=0 // pred_region
    _
  $region5: #{autoencoder_forward.1} parent=0 // pred_fallthru
    _
  // Predicated region
  $region6: #{autoencoder_forward.1} parent=0 // pred_check
    _
  $region7: #{autoencoder_forward.1} parent=0 // pred_check_branch
    %26 = sbr.rel (0) target = $region9
  $region8: #{autoencoder_forward.1} parent=0 // pred_region
    _
  $region9: #{autoencoder_forward.1} parent=0 // pred_fallthru
    _
  // Predicated region
  $region10: #{autoencoder_forward.1} parent=0 // pred_check
    _
  $region11: #{autoencoder_forward.1} parent=0 // pred_check_branch
    %28 = sbr.rel (0) target = $region13
  $region12: #{autoencoder_forward.1} parent=0 // pred_region
    _
  $region13: #{autoencoder_forward.1} parent=0 // pred_fallthru
    _
  // Predicated region
  $region14: #{autoencoder_forward.1} parent=0 // pred_check
    _
  $region15: #{autoencoder_forward.1} parent=0 // pred_check_branch
    %30 = sbr.rel (0) target = $region17
  $region16: #{autoencoder_forward.1} parent=0 // pred_region
    _
  $region17: #{autoencoder_forward.1} parent=0 // pred_fallthru
    _
  // Predicated region
  $region18: #{autoencoder_forward.1} parent=0 // pred_check
    _
  $region19: #{autoencoder_forward.1} parent=0 // pred_check_branch
    %32 = sbr.rel (0) target = $region21
  $region20: #{autoencoder_forward.1} parent=0 // pred_region
    _
  $region21: #{autoencoder_forward.1} parent=0 // pred_fallthru
    _
  // Predicated region
  $region22: #{autoencoder_forward.1} parent=0 // pred_check
    _
  $region23: #{autoencoder_forward.1} parent=0 // pred_check_branch
    %34 = sbr.rel (0) target = $region25
  $region24: #{autoencoder_forward.1} parent=0 // pred_region
    _
  $region25: #{autoencoder_forward.1} parent=0 // pred_fallthru
    _
  // Predicated region
  $region26: #{autoencoder_forward.1} parent=0 // pred_check
    _
  $region27: #{autoencoder_forward.1} parent=0 // pred_check_branch
    %36 = sbr.rel (0) target = $region29
  $region28: #{autoencoder_forward.1} parent=0 // pred_region
    _
  $region29: #{autoencoder_forward.1} parent=0 // pred_fallthru
    _
  // Predicated region
  $region30: #{autoencoder_forward.1} parent=0 // pred_check
    _
  $region31: #{autoencoder_forward.1} parent=0 // pred_check_branch
    %38 = sbr.rel (0) target = $region33
  $region32: #{autoencoder_forward.1} parent=0 // pred_region
    _
  $region33: #{autoencoder_forward.1} parent=0 // pred_fallthru
    _
  // Predicated region
  $region34: #{autoencoder_forward.1} parent=0 // pred_check
    _
  $region35: #{autoencoder_forward.1} parent=0 // pred_check_branch
    %40 = sbr.rel (0) target = $region37
  $region36: #{autoencoder_forward.1} parent=0 // pred_region
    _
  $region37: #{autoencoder_forward.1} parent=0 // pred_fallthru
    _
  // Predicated region
  $region38: #{autoencoder_forward.1} parent=0 // pred_check
    _
  $region39: #{autoencoder_forward.1} parent=0 // pred_check_branch
    %42 = sbr.rel (0) target = $region41
  $region40: #{autoencoder_forward.1} parent=0 // pred_region
    _
  $region41: #{autoencoder_forward.1} parent=0 // pred_fallthru
    _
  // Predicated region
  $region42: #{autoencoder_forward.1} parent=0 // pred_check
    _
  $region43: #{autoencoder_forward.1} parent=0 // pred_check_branch
    %44 = sbr.rel (0) target = $region45
  $region44: #{autoencoder_forward.1} parent=0 // pred_region
    _
  $region45: #{autoencoder_forward.1} parent=0 // pred_fallthru
    _
  // Predicated region
  $region46: #{autoencoder_forward.1} parent=0 // pred_check
    _
  $region47: #{autoencoder_forward.1} parent=0 // pred_check_branch
    %46 = sbr.rel (0) target = $region49
  $region48: #{autoencoder_forward.1} parent=0 // pred_region
    _
  $region49: #{autoencoder_forward.1} parent=0 // pred_fallthru
    _
  // Predicated region
  $region50: #{autoencoder_forward.1} parent=0 // pred_check
    _
  $region51: #{autoencoder_forward.1} parent=0 // pred_check_branch
    %48 = sbr.rel (0) target = $region53
  $region52: #{autoencoder_forward.1} parent=0 // pred_region
    _
  $region53: #{autoencoder_forward.1} parent=0 // pred_fallthru
    _
  // Predicated region
  $region54: #{autoencoder_forward.1} parent=0 // pred_check
    _
  $region55: #{autoencoder_forward.1} parent=0 // pred_check_branch
    %50 = sbr.rel (0) target = $region57
  $region56: #{autoencoder_forward.1} parent=0 // pred_region
    _
  $region57: #{autoencoder_forward.1} parent=0 // pred_fallthru
    _
  // Predicated region
  $region58: #{autoencoder_forward.1} parent=0 // pred_check
    _
  $region59: #{autoencoder_forward.1} parent=0 // pred_check_branch
    %52 = sbr.rel (0) target = $region61
  $region60: #{autoencoder_forward.1} parent=0 // pred_region
    _
  $region61: #{autoencoder_forward.1} parent=0 // pred_fallthru
    _
  // Predicated region
  $region62: #{autoencoder_forward.1} parent=0 // pred_check
    _
  $region63: #{autoencoder_forward.1} parent=0 // pred_check_branch
    %54 = sbr.rel (0) target = $region65
  $region64: #{autoencoder_forward.1} parent=0 // pred_region
    _
  $region65: #{autoencoder_forward.1} parent=0 // pred_fallthru
    _
  %v55 = vld [vmem:[%s0] sm:$0xff]
  %v56 = vld [vmem:[%s0 + $0x8] sm:$0x1]
  %v57 = vld [vmem:[%s1] sm:$0xff]
  %v58 = vld [vmem:[%s1 + $0x8] sm:$0xff]
  %v59 = vld [vmem:[%s2] sm:$0xff]
  %v60 = vld [vmem:[%s2 + $0x8] sm:$0xff]
  %62 = vset.pattern.permute.xlu0 0
  %63 = vperm.xlu0 %62, %v59
  %v64 = vpop.permute.xlu0 %63
  %67 = vset.pattern.permute.xlu0 0
  %68 = vperm.xlu0 %67, %v60
  %v69 = vpop.permute.xlu0 %68
  %vm71 = vcmask 72704
  %v73 = vsel %vm71, %v57, 0
  %v76 = vsel %vm71, %v58, 0
  %vm78 = vcmask 1040384
  %v80 = vsel %vm78, %v56, 0
  %82 = vmatpush.msra.mxu0 0.0
  %83 = vmatpush.msra.mxu0 0.0
  %84 = vmatpush.msra.mxu0 0.0
  %85 = vmatpush.msra.mxu0 0.0
  %86 = vmatpush.msra.mxu0 0.0
  %87 = vmatpush.msra.mxu0 0.0
  %88 = vmatpush.msra.mxu0 0.0
  %89 = vmatpush.msra.mxu0 0.0
  %90 = vmatpush.msra.mxu0 0.0
  %91 = vmatpush.msra.mxu0 0.0
  %92 = vmatpush.msra.mxu0 0.0
  %93 = vmatpush.msra.mxu0 0.0
  %94 = vmatpush.msra.mxu0 0.0
  %95 = vmatpush.msra.mxu0 0.0
  %96 = vmatpush.msra.mxu0 %v80
  %97 = vmatpush.msra.mxu0 %v55
  %98 = vmatmul.f32.gmra.mxu0 %v73
  %v99 = vpop.f32.mrf.mxu0
  %v100 = vadd.f32 %v64, %v99
  %101 = vmatmul.f32.gmra.mxu0 %v76
  %v102 = vpop.f32.mrf.mxu0
  %v103 = vadd.f32 %v69, %v102
  %104 = vdwg.mxu0
  %v105 = vmax.f32 %v100, 0.0
  %v106 = vmax.f32 %v103, 0.0
  %v107 = vld [vmem:[%s3] sm:$0xff]
  %v108 = vld [vmem:[%s3 + $0x8] sm:$0xff]
  %v109 = vld [vmem:[%s3 + $0x10] sm:$0xff]
  %v110 = vld [vmem:[%s3 + $0x18] sm:$0xff]
  %v111 = vld [vmem:[%s3 + $0x20] sm:$0xff]
  %v112 = vld [vmem:[%s3 + $0x28] sm:$0xff]
  %v113 = vld [vmem:[%s3 + $0x30] sm:$0xff]
  %v114 = vld [vmem:[%s3 + $0x38] sm:$0xff]
  %v115 = vld [vmem:[%s3 + $0x40] sm:$0xff]
  %v116 = vld [vmem:[%s3 + $0x48] sm:$0xff]
  %v117 = vld [vmem:[%s3 + $0x50] sm:$0xff]
  %v118 = vld [vmem:[%s3 + $0x58] sm:$0xff]
  %v119 = vld [vmem:[%s3 + $0x60] sm:$0xf]
  %vm120 = vcmask 818176
  %v122 = vsel %vm120, %v105, 0
  %v125 = vsel %vm120, %v106, 0
  %vm127 = vcmask 1043456
  %v129 = vsel %vm127, %v119, 0
  %131 = vmatpush.msra.mxu0 0.0
  %132 = vmatpush.msra.mxu0 0.0
  %133 = vmatpush.msra.mxu0 0.0
  %134 = vmatpush.msra.mxu0 %v129
  %135 = vmatpush.msra.mxu0 %v118
  %136 = vmatpush.msra.mxu0 %v117
  %137 = vmatpush.msra.mxu0 %v116
  %138 = vmatpush.msra.mxu0 %v115
  %139 = vmatpush.msra.mxu0 %v114
  %140 = vmatpush.msra.mxu0 %v113
  %141 = vmatpush.msra.mxu0 %v112
  %142 = vmatpush.msra.mxu0 %v111
  %143 = vmatpush.msra.mxu0 %v110
  %144 = vmatpush.msra.mxu0 %v109
  %145 = vmatpush.msra.mxu0 %v108
  %146 = vmatpush.msra.mxu0 %v107
  %147 = vmatmul.f32.gmra.mxu0 %v122
  %v148 = vpop.f32.mrf.mxu0
  %v149 = vadd.f32 0.0, %v148
  %150 = vmatmul.f32.gmra.mxu0 %v125
  %v151 = vpop.f32.mrf.mxu0
  %v152 = vadd.f32 0.0, %v151
  %153 = vdwg.mxu0
  %s154 = scalar_lea.vmem %s3, 104
  %v155 = vld [vmem:[%s154] sm:$0xff]
  %v156 = vld [vmem:[%s154 + $0x8] sm:$0xff]
  %v157 = vld [vmem:[%s154 + $0x10] sm:$0xff]
  %v158 = vld [vmem:[%s154 + $0x18] sm:$0xff]
  %v159 = vld [vmem:[%s154 + $0x20] sm:$0xff]
  %v160 = vld [vmem:[%s154 + $0x28] sm:$0xff]
  %v161 = vld [vmem:[%s154 + $0x30] sm:$0xff]
  %v162 = vld [vmem:[%s154 + $0x38] sm:$0xff]
  %v163 = vld [vmem:[%s154 + $0x40] sm:$0xff]
  %v164 = vld [vmem:[%s154 + $0x48] sm:$0xff]
  %v165 = vld [vmem:[%s154 + $0x50] sm:$0xff]
  %v166 = vld [vmem:[%s154 + $0x58] sm:$0xff]
  %v167 = vld [vmem:[%s154 + $0x60] sm:$0xf]
  %v169 = vsel %vm127, %v167, 0
  %171 = vmatpush.msra.mxu0 0.0
  %172 = vmatpush.msra.mxu0 0.0
  %173 = vmatpush.msra.mxu0 0.0
  %174 = vmatpush.msra.mxu0 %v169
  %175 = vmatpush.msra.mxu0 %v166
  %176 = vmatpush.msra.mxu0 %v165
  %177 = vmatpush.msra.mxu0 %v164
  %178 = vmatpush.msra.mxu0 %v163
  %179 = vmatpush.msra.mxu0 %v162
  %180 = vmatpush.msra.mxu0 %v161
  %181 = vmatpush.msra.mxu0 %v160
  %182 = vmatpush.msra.mxu0 %v159
  %183 = vmatpush.msra.mxu0 %v158
  %184 = vmatpush.msra.mxu0 %v157
  %185 = vmatpush.msra.mxu0 %v156
  %186 = vmatpush.msra.mxu0 %v155
  %187 = vmatmul.f32.gmra.mxu0 %v122
  %v188 = vpop.f32.mrf.mxu0
  %v189 = vadd.f32 0.0, %v188
  %190 = vmatmul.f32.gmra.mxu0 %v125
  %v191 = vpop.f32.mrf.mxu0
  %v192 = vadd.f32 0.0, %v191
  %193 = vdwg.mxu0
  %s194 = scalar_lea.vmem %s3, 208
  %v195 = vld [vmem:[%s194] sm:$0xff]
  %v196 = vld [vmem:[%s194 + $0x8] sm:$0xff]
  %v197 = vld [vmem:[%s194 + $0x10] sm:$0xff]
  %v198 = vld [vmem:[%s194 + $0x18] sm:$0xff]
  %v199 = vld [vmem:[%s194 + $0x20] sm:$0xff]
  %v200 = vld [vmem:[%s194 + $0x28] sm:$0xff]
  %v201 = vld [vmem:[%s194 + $0x30] sm:$0xff]
  %v202 = vld [vmem:[%s194 + $0x38] sm:$0xff]
  %v203 = vld [vmem:[%s194 + $0x40] sm:$0xff]
  %v204 = vld [vmem:[%s194 + $0x48] sm:$0xff]
  %v205 = vld [vmem:[%s194 + $0x50] sm:$0xff]
  %v206 = vld [vmem:[%s194 + $0x58] sm:$0xff]
  %v207 = vld [vmem:[%s194 + $0x60] sm:$0xf]
  %v209 = vsel %vm127, %v207, 0
  %211 = vmatpush.msra.mxu0 0.0
  %212 = vmatpush.msra.mxu0 0.0
  %213 = vmatpush.msra.mxu0 0.0
  %214 = vmatpush.msra.mxu0 %v209
  %215 = vmatpush.msra.mxu0 %v206
  %216 = vmatpush.msra.mxu0 %v205
  %217 = vmatpush.msra.mxu0 %v204
  %218 = vmatpush.msra.mxu0 %v203
  %219 = vmatpush.msra.mxu0 %v202
  %220 = vmatpush.msra.mxu0 %v201
  %221 = vmatpush.msra.mxu0 %v200
  %222 = vmatpush.msra.mxu0 %v199
  %223 = vmatpush.msra.mxu0 %v198
  %224 = vmatpush.msra.mxu0 %v197
  %225 = vmatpush.msra.mxu0 %v196
  %226 = vmatpush.msra.mxu0 %v195
  %227 = vmatmul.f32.gmra.mxu0 %v122
  %v228 = vpop.f32.mrf.mxu0
  %v229 = vadd.f32 0.0, %v228
  %230 = vmatmul.f32.gmra.mxu0 %v125
  %v231 = vpop.f32.mrf.mxu0
  %v232 = vadd.f32 0.0, %v231
  %233 = vdwg.mxu0
  %s234 = scalar_lea.vmem %s3, 312
  %v235 = vld [vmem:[%s234] sm:$0xff]
  %v236 = vld [vmem:[%s234 + $0x8] sm:$0xff]
  %v237 = vld [vmem:[%s234 + $0x10] sm:$0xff]
  %v238 = vld [vmem:[%s234 + $0x18] sm:$0xff]
  %v239 = vld [vmem:[%s234 + $0x20] sm:$0xff]
  %v240 = vld [vmem:[%s234 + $0x28] sm:$0xff]
  %v241 = vld [vmem:[%s234 + $0x30] sm:$0xff]
  %v242 = vld [vmem:[%s234 + $0x38] sm:$0xff]
  %v243 = vld [vmem:[%s234 + $0x40] sm:$0xff]
  %v244 = vld [vmem:[%s234 + $0x48] sm:$0xff]
  %v245 = vld [vmem:[%s234 + $0x50] sm:$0xff]
  %v246 = vld [vmem:[%s234 + $0x58] sm:$0xff]
  %v247 = vld [vmem:[%s234 + $0x60] sm:$0xf]
  %v249 = vsel %vm127, %v247, 0
  %251 = vmatpush.msra.mxu0 0.0
  %252 = vmatpush.msra.mxu0 0.0
  %253 = vmatpush.msra.mxu0 0.0
  %254 = vmatpush.msra.mxu0 %v249
  %255 = vmatpush.msra.mxu0 %v246
  %256 = vmatpush.msra.mxu0 %v245
  %257 = vmatpush.msra.mxu0 %v244
  %258 = vmatpush.msra.mxu0 %v243
  %259 = vmatpush.msra.mxu0 %v242
  %260 = vmatpush.msra.mxu0 %v241
  %261 = vmatpush.msra.mxu0 %v240
  %262 = vmatpush.msra.mxu0 %v239
  %263 = vmatpush.msra.mxu0 %v238
  %264 = vmatpush.msra.mxu0 %v237
  %265 = vmatpush.msra.mxu0 %v236
  %266 = vmatpush.msra.mxu0 %v235
  %267 = vmatmul.f32.gmra.mxu0 %v122
  %v268 = vpop.f32.mrf.mxu0
  %v269 = vadd.f32 0.0, %v268
  %270 = vmatmul.f32.gmra.mxu0 %v125
  %v271 = vpop.f32.mrf.mxu0
  %v272 = vadd.f32 0.0, %v271
  %273 = vdwg.mxu0
  %v274 = vmax.f32 %v149, %v189
  %v275 = vmax.f32 %v152, %v192
  %v276 = vmax.f32 %v274, %v229
  %v277 = vmax.f32 %v275, %v232
  %v278 = vmax.f32 %v276, %v269
  %v279 = vmax.f32 %v277, %v272
  %v280 = vld [vmem:[%s4] sm:$0xff]
  %v281 = vld [vmem:[%s4 + $0x8] sm:$0xff]
  %v282 = vld [vmem:[%s4 + $0x10] sm:$0xff]
  %v283 = vld [vmem:[%s4 + $0x18] sm:$0xff]
  %v284 = vld [vmem:[%s4 + $0x20] sm:$0xff]
  %v285 = vld [vmem:[%s4 + $0x28] sm:$0xff]
  %v286 = vld [vmem:[%s4 + $0x30] sm:$0xff]
  %v287 = vld [vmem:[%s4 + $0x38] sm:$0xff]
  %v288 = vld [vmem:[%s4 + $0x40] sm:$0xff]
  %vm289 = vcmask 130048
  %v291 = vsel %vm289, %v280, 0
  %v294 = vsel %vm289, %v281, 0
  %v297 = vsel %vm289, %v282, 0
  %v300 = vsel %vm289, %v283, 0
  %v303 = vsel %vm289, %v284, 0
  %v306 = vsel %vm289, %v285, 0
  %v309 = vsel %vm289, %v286, 0
  %v312 = vsel %vm289, %v287, 0
  %v315 = vsel %vm289, %v288, 0
  %317 = vmatpush.msra.mxu0 0.0
  %318 = vmatpush.msra.mxu0 0.0
  %319 = vmatpush.msra.mxu0 0.0
  %320 = vmatpush.msra.mxu0 0.0
  %321 = vmatpush.msra.mxu0 0.0
  %322 = vmatpush.msra.mxu0 0.0
  %323 = vmatpush.msra.mxu0 0.0
  %324 = vmatpush.msra.mxu0 0.0
  %325 = vmatpush.msra.mxu0 0.0
  %326 = vmatpush.msra.mxu0 0.0
  %327 = vmatpush.msra.mxu0 0.0
  %328 = vmatpush.msra.mxu0 0.0
  %329 = vmatpush.msra.mxu0 0.0
  %330 = vmatpush.msra.mxu0 0.0
  %331 = vmatpush.msra.mxu0 %v279
  %332 = vmatpush.msra.mxu0 %v278
  %333 = vmatmul.f32.gmra.mxu0 %v291
  %v334 = vpop.f32.mrf.mxu0
  %v335 = vadd.f32 0.0, %v334
  %336 = vmatmul.f32.gmra.mxu0 %v294
  %v337 = vpop.f32.mrf.mxu0
  %v338 = vadd.f32 0.0, %v337
  %339 = vmatmul.f32.gmra.mxu0 %v297
  %v340 = vpop.f32.mrf.mxu0
  %v341 = vadd.f32 0.0, %v340
  %342 = vmatmul.f32.gmra.mxu0 %v300
  %v343 = vpop.f32.mrf.mxu0
  %v344 = vadd.f32 0.0, %v343
  %345 = vmatmul.f32.gmra.mxu0 %v303
  %v346 = vpop.f32.mrf.mxu0
  %v347 = vadd.f32 0.0, %v346
  %348 = vmatmul.f32.gmra.mxu0 %v306
  %v349 = vpop.f32.mrf.mxu0
  %v350 = vadd.f32 0.0, %v349
  %351 = vmatmul.f32.gmra.mxu0 %v309
  %v352 = vpop.f32.mrf.mxu0
  %v353 = vadd.f32 0.0, %v352
  %354 = vmatmul.f32.gmra.mxu0 %v312
  %v355 = vpop.f32.mrf.mxu0
  %v356 = vadd.f32 0.0, %v355
  %357 = vmatmul.f32.gmra.mxu0 %v315
  %v358 = vpop.f32.mrf.mxu0
  %v359 = vadd.f32 0.0, %v358
  %360 = vdwg.mxu0
  %v361 = vld [vmem:[%s6] sm:$0xff]
  %v362 = vld [vmem:[%s6 + $0x8] sm:$0xff]
  %v363 = vld [vmem:[%s6 + $0x10] sm:$0xff]
  %v364 = vld [vmem:[%s6 + $0x18] sm:$0x1]
  %s365 = scalar_lea.vmem %s6, 32
  %v366 = vld [vmem:[%s365] sm:$0xff]
  %v367 = vld [vmem:[%s365 + $0x8] sm:$0xff]
  %v368 = vld [vmem:[%s365 + $0x10] sm:$0xff]
  %v369 = vld [vmem:[%s365 + $0x18] sm:$0x1]
  %s370 = scalar_lea.vmem %s6, 64
  %v371 = vld [vmem:[%s370] sm:$0xff]
  %v372 = vld [vmem:[%s370 + $0x8] sm:$0xff]
  %v373 = vld [vmem:[%s370 + $0x10] sm:$0xff]
  %v374 = vld [vmem:[%s370 + $0x18] sm:$0x1]
  %s375 = scalar_lea.vmem %s6, 96
  %v376 = vld [vmem:[%s375] sm:$0xff]
  %v377 = vld [vmem:[%s375 + $0x8] sm:$0xff]
  %v378 = vld [vmem:[%s375 + $0x10] sm:$0xff]
  %v379 = vld [vmem:[%s375 + $0x18] sm:$0x1]
  %s380 = scalar_lea.vmem %s6, 128
  %v381 = vld [vmem:[%s380] sm:$0xff]
  %v382 = vld [vmem:[%s380 + $0x8] sm:$0xff]
  %v383 = vld [vmem:[%s380 + $0x10] sm:$0xff]
  %v384 = vld [vmem:[%s380 + $0x18] sm:$0x1]
  %vm385 = vcmask 203776
  %v387 = vsel %vm385, %v347, 0
  %v390 = vsel %vm78, %v384, 0
  %392 = vmatpush.msra.mxu0 0.0
  %393 = vmatpush.msra.mxu0 0.0
  %394 = vmatpush.msra.mxu0 0.0
  %395 = vmatpush.msra.mxu0 0.0
  %396 = vmatpush.msra.mxu0 0.0
  %397 = vmatpush.msra.mxu0 0.0
  %398 = vmatpush.msra.mxu0 0.0
  %399 = vmatpush.msra.mxu0 0.0
  %400 = vmatpush.msra.mxu0 0.0
  %401 = vmatpush.msra.mxu0 0.0
  %402 = vmatpush.msra.mxu0 0.0
  %403 = vmatpush.msra.mxu0 0.0
  %404 = vmatpush.msra.mxu0 %v390
  %405 = vmatpush.msra.mxu0 %v383
  %406 = vmatpush.msra.mxu0 %v382
  %407 = vmatpush.msra.mxu0 %v381
  %408 = vmatmul.f32.gmra.mxu0 %v387
  %v409 = vpop.f32.mrf.mxu0
  %v410 = vadd.f32 0.0, %v409
  %411 = vdwg.mxu0
  %v413 = vsel %vm385, %v335, 0
  %v416 = vsel %vm78, %v364, 0
  %418 = vmatpush.msra.mxu0 0.0
  %419 = vmatpush.msra.mxu0 0.0
  %420 = vmatpush.msra.mxu0 0.0
  %421 = vmatpush.msra.mxu0 0.0
  %422 = vmatpush.msra.mxu0 0.0
  %423 = vmatpush.msra.mxu0 0.0
  %424 = vmatpush.msra.mxu0 0.0
  %425 = vmatpush.msra.mxu0 0.0
  %426 = vmatpush.msra.mxu0 0.0
  %427 = vmatpush.msra.mxu0 0.0
  %428 = vmatpush.msra.mxu0 0.0
  %429 = vmatpush.msra.mxu0 0.0
  %430 = vmatpush.msra.mxu0 %v416
  %431 = vmatpush.msra.mxu0 %v363
  %432 = vmatpush.msra.mxu0 %v362
  %433 = vmatpush.msra.mxu0 %v361
  %434 = vmatmul.f32.gmra.mxu0 %v413
  %v435 = vpop.f32.mrf.mxu0
  %v436 = vadd.f32 %v410, %v435
  %437 = vdwg.mxu0
  %s438 = scalar_lea.vmem %s6, 160
  %v439 = vld [vmem:[%s438] sm:$0xff]
  %v440 = vld [vmem:[%s438 + $0x8] sm:$0xff]
  %v441 = vld [vmem:[%s438 + $0x10] sm:$0xff]
  %v442 = vld [vmem:[%s438 + $0x18] sm:$0x1]
  %v444 = vsel %vm385, %v350, 0
  %v447 = vsel %vm78, %v442, 0
  %449 = vmatpush.msra.mxu0 0.0
  %450 = vmatpush.msra.mxu0 0.0
  %451 = vmatpush.msra.mxu0 0.0
  %452 = vmatpush.msra.mxu0 0.0
  %453 = vmatpush.msra.mxu0 0.0
  %454 = vmatpush.msra.mxu0 0.0
  %455 = vmatpush.msra.mxu0 0.0
  %456 = vmatpush.msra.mxu0 0.0
  %457 = vmatpush.msra.mxu0 0.0
  %458 = vmatpush.msra.mxu0 0.0
  %459 = vmatpush.msra.mxu0 0.0
  %460 = vmatpush.msra.mxu0 0.0
  %461 = vmatpush.msra.mxu0 %v447
  %462 = vmatpush.msra.mxu0 %v441
  %463 = vmatpush.msra.mxu0 %v440
  %464 = vmatpush.msra.mxu0 %v439
  %465 = vmatmul.f32.gmra.mxu0 %v444
  %v466 = vpop.f32.mrf.mxu0
  %v467 = vadd.f32 0.0, %v466
  %468 = vdwg.mxu0
  %v470 = vsel %vm385, %v338, 0
  %v473 = vsel %vm78, %v369, 0
  %475 = vmatpush.msra.mxu0 0.0
  %476 = vmatpush.msra.mxu0 0.0
  %477 = vmatpush.msra.mxu0 0.0
  %478 = vmatpush.msra.mxu0 0.0
  %479 = vmatpush.msra.mxu0 0.0
  %480 = vmatpush.msra.mxu0 0.0
  %481 = vmatpush.msra.mxu0 0.0
  %482 = vmatpush.msra.mxu0 0.0
  %483 = vmatpush.msra.mxu0 0.0
  %484 = vmatpush.msra.mxu0 0.0
  %485 = vmatpush.msra.mxu0 0.0
  %486 = vmatpush.msra.mxu0 0.0
  %487 = vmatpush.msra.mxu0 %v473
  %488 = vmatpush.msra.mxu0 %v368
  %489 = vmatpush.msra.mxu0 %v367
  %490 = vmatpush.msra.mxu0 %v366
  %491 = vmatmul.f32.gmra.mxu0 %v470
  %v492 = vpop.f32.mrf.mxu0
  %v493 = vadd.f32 %v467, %v492
  %494 = vdwg.mxu0
  %s495 = scalar_lea.vmem %s6, 192
  %v496 = vld [vmem:[%s495] sm:$0xff]
  %v497 = vld [vmem:[%s495 + $0x8] sm:$0xff]
  %v498 = vld [vmem:[%s495 + $0x10] sm:$0xff]
  %v499 = vld [vmem:[%s495 + $0x18] sm:$0x1]
  %v501 = vsel %vm385, %v353, 0
  %v504 = vsel %vm78, %v499, 0
  %506 = vmatpush.msra.mxu0 0.0
  %507 = vmatpush.msra.mxu0 0.0
  %508 = vmatpush.msra.mxu0 0.0
  %509 = vmatpush.msra.mxu0 0.0
  %510 = vmatpush.msra.mxu0 0.0
  %511 = vmatpush.msra.mxu0 0.0
  %512 = vmatpush.msra.mxu0 0.0
  %513 = vmatpush.msra.mxu0 0.0
  %514 = vmatpush.msra.mxu0 0.0
  %515 = vmatpush.msra.mxu0 0.0
  %516 = vmatpush.msra.mxu0 0.0
  %517 = vmatpush.msra.mxu0 0.0
  %518 = vmatpush.msra.mxu0 %v504
  %519 = vmatpush.msra.mxu0 %v498
  %520 = vmatpush.msra.mxu0 %v497
  %521 = vmatpush.msra.mxu0 %v496
  %522 = vmatmul.f32.gmra.mxu0 %v501
  %v523 = vpop.f32.mrf.mxu0
  %v524 = vadd.f32 0.0, %v523
  %525 = vdwg.mxu0
  %v527 = vsel %vm385, %v341, 0
  %v530 = vsel %vm78, %v374, 0
  %532 = vmatpush.msra.mxu0 0.0
  %533 = vmatpush.msra.mxu0 0.0
  %534 = vmatpush.msra.mxu0 0.0
  %535 = vmatpush.msra.mxu0 0.0
  %536 = vmatpush.msra.mxu0 0.0
  %537 = vmatpush.msra.mxu0 0.0
  %538 = vmatpush.msra.mxu0 0.0
  %539 = vmatpush.msra.mxu0 0.0
  %540 = vmatpush.msra.mxu0 0.0
  %541 = vmatpush.msra.mxu0 0.0
  %542 = vmatpush.msra.mxu0 0.0
  %543 = vmatpush.msra.mxu0 0.0
  %544 = vmatpush.msra.mxu0 %v530
  %545 = vmatpush.msra.mxu0 %v373
  %546 = vmatpush.msra.mxu0 %v372
  %547 = vmatpush.msra.mxu0 %v371
  %548 = vmatmul.f32.gmra.mxu0 %v527
  %v549 = vpop.f32.mrf.mxu0
  %v550 = vadd.f32 %v524, %v549
  %551 = vdwg.mxu0
  %s552 = scalar_lea.vmem %s6, 224
  %v553 = vld [vmem:[%s552] sm:$0xff]
  %v554 = vld [vmem:[%s552 + $0x8] sm:$0xff]
  %v555 = vld [vmem:[%s552 + $0x10] sm:$0xff]
  %v556 = vld [vmem:[%s552 + $0x18] sm:$0x1]
  %v558 = vsel %vm385, %v356, 0
  %v561 = vsel %vm78, %v556, 0
  %563 = vmatpush.msra.mxu0 0.0
  %564 = vmatpush.msra.mxu0 0.0
  %565 = vmatpush.msra.mxu0 0.0
  %566 = vmatpush.msra.mxu0 0.0
  %567 = vmatpush.msra.mxu0 0.0
  %568 = vmatpush.msra.mxu0 0.0
  %569 = vmatpush.msra.mxu0 0.0
  %570 = vmatpush.msra.mxu0 0.0
  %571 = vmatpush.msra.mxu0 0.0
  %572 = vmatpush.msra.mxu0 0.0
  %573 = vmatpush.msra.mxu0 0.0
  %574 = vmatpush.msra.mxu0 0.0
  %575 = vmatpush.msra.mxu0 %v561
  %576 = vmatpush.msra.mxu0 %v555
  %577 = vmatpush.msra.mxu0 %v554
  %578 = vmatpush.msra.mxu0 %v553
  %579 = vmatmul.f32.gmra.mxu0 %v558
  %v580 = vpop.f32.mrf.mxu0
  %v581 = vadd.f32 0.0, %v580
  %582 = vdwg.mxu0
  %v584 = vsel %vm385, %v344, 0
  %v587 = vsel %vm78, %v379, 0
  %589 = vmatpush.msra.mxu0 0.0
  %590 = vmatpush.msra.mxu0 0.0
  %591 = vmatpush.msra.mxu0 0.0
  %592 = vmatpush.msra.mxu0 0.0
  %593 = vmatpush.msra.mxu0 0.0
  %594 = vmatpush.msra.mxu0 0.0
  %595 = vmatpush.msra.mxu0 0.0
  %596 = vmatpush.msra.mxu0 0.0
  %597 = vmatpush.msra.mxu0 0.0
  %598 = vmatpush.msra.mxu0 0.0
  %599 = vmatpush.msra.mxu0 0.0
  %600 = vmatpush.msra.mxu0 0.0
  %601 = vmatpush.msra.mxu0 %v587
  %602 = vmatpush.msra.mxu0 %v378
  %603 = vmatpush.msra.mxu0 %v377
  %604 = vmatpush.msra.mxu0 %v376
  %605 = vmatmul.f32.gmra.mxu0 %v584
  %v606 = vpop.f32.mrf.mxu0
  %v607 = vadd.f32 %v581, %v606
  %608 = vdwg.mxu0
  %s609 = scalar_lea.vmem %s6, 256
  %v610 = vld [vmem:[%s609] sm:$0xff]
  %v611 = vld [vmem:[%s609 + $0x8] sm:$0xff]
  %v612 = vld [vmem:[%s609 + $0x10] sm:$0xff]
  %v613 = vld [vmem:[%s609 + $0x18] sm:$0x1]
  %v615 = vsel %vm385, %v359, 0
  %v618 = vsel %vm78, %v613, 0
  %620 = vmatpush.msra.mxu0 0.0
  %621 = vmatpush.msra.mxu0 0.0
  %622 = vmatpush.msra.mxu0 0.0
  %623 = vmatpush.msra.mxu0 0.0
  %624 = vmatpush.msra.mxu0 0.0
  %625 = vmatpush.msra.mxu0 0.0
  %626 = vmatpush.msra.mxu0 0.0
  %627 = vmatpush.msra.mxu0 0.0
  %628 = vmatpush.msra.mxu0 0.0
  %629 = vmatpush.msra.mxu0 0.0
  %630 = vmatpush.msra.mxu0 0.0
  %631 = vmatpush.msra.mxu0 0.0
  %632 = vmatpush.msra.mxu0 %v618
  %633 = vmatpush.msra.mxu0 %v612
  %634 = vmatpush.msra.mxu0 %v611
  %635 = vmatpush.msra.mxu0 %v610
  %636 = vmatmul.f32.gmra.mxu0 %v615
  %v637 = vpop.f32.mrf.mxu0
  %v638 = vadd.f32 0.0, %v637
  %639 = vdwg.mxu0
  %v640 = vadd.f32 %v436, %v638
  %v641 = vadd.f32 %v640, %v493
  %v642 = vadd.f32 %v641, %v550
  %v643 = vadd.f32 %v642, %v607
  %v644 = vld [vmem:[%s5] sm:$0xff]
  %646 = vset.pattern.permute.xlu0 0
  %647 = vperm.xlu0 %646, %v644
  %v648 = vpop.permute.xlu0 %647
  %v650 = vadd.f32 %v643, %v648
  %v651 = vmax.f32 %v650, 0.0
  %v652 = vld [vmem:[%s7] sm:$0xff]
  %v653 = vld [vmem:[%s7 + $0x8] sm:$0x1]
  %v655 = vsel %vm71, %v651, 0
  %v658 = vsel %vm78, %v653, 0
  %660 = vmatpush.msra.mxu0 0.0
  %661 = vmatpush.msra.mxu0 0.0
  %662 = vmatpush.msra.mxu0 0.0
  %663 = vmatpush.msra.mxu0 0.0
  %664 = vmatpush.msra.mxu0 0.0
  %665 = vmatpush.msra.mxu0 0.0
  %666 = vmatpush.msra.mxu0 0.0
  %667 = vmatpush.msra.mxu0 0.0
  %668 = vmatpush.msra.mxu0 0.0
  %669 = vmatpush.msra.mxu0 0.0
  %670 = vmatpush.msra.mxu0 0.0
  %671 = vmatpush.msra.mxu0 0.0
  %672 = vmatpush.msra.mxu0 0.0
  %673 = vmatpush.msra.mxu0 0.0
  %674 = vmatpush.msra.mxu0 %v658
  %675 = vmatpush.msra.mxu0 %v652
  %676 = vmatmul.f32.gmra.mxu0 %v655
  %v677 = vpop.f32.mrf.mxu0
  %v678 = vadd.f32 0.0, %v677
  %679 = vdwg.mxu0
  %s680 = scalar_lea.vmem %s7, 16
  %v681 = vld [vmem:[%s680] sm:$0xff]
  %v682 = vld [vmem:[%s680 + $0x8] sm:$0x1]
  %v684 = vsel %vm78, %v682, 0
  %686 = vmatpush.msra.mxu0 0.0
  %687 = vmatpush.msra.mxu0 0.0
  %688 = vmatpush.msra.mxu0 0.0
  %689 = vmatpush.msra.mxu0 0.0
  %690 = vmatpush.msra.mxu0 0.0
  %691 = vmatpush.msra.mxu0 0.0
  %692 = vmatpush.msra.mxu0 0.0
  %693 = vmatpush.msra.mxu0 0.0
  %694 = vmatpush.msra.mxu0 0.0
  %695 = vmatpush.msra.mxu0 0.0
  %696 = vmatpush.msra.mxu0 0.0
  %697 = vmatpush.msra.mxu0 0.0
  %698 = vmatpush.msra.mxu0 0.0
  %699 = vmatpush.msra.mxu0 0.0
  %700 = vmatpush.msra.mxu0 %v684
  %701 = vmatpush.msra.mxu0 %v681
  %702 = vmatmul.f32.gmra.mxu0 %v655
  %v703 = vpop.f32.mrf.mxu0
  %v704 = vadd.f32 0.0, %v703
  %705 = vdwg.mxu0
  %s706 = scalar_lea.vmem %s7, 32
  %v707 = vld [vmem:[%s706] sm:$0xff]
  %v708 = vld [vmem:[%s706 + $0x8] sm:$0x1]
  %v710 = vsel %vm78, %v708, 0
  %712 = vmatpush.msra.mxu0 0.0
  %713 = vmatpush.msra.mxu0 0.0
  %714 = vmatpush.msra.mxu0 0.0
  %715 = vmatpush.msra.mxu0 0.0
  %716 = vmatpush.msra.mxu0 0.0
  %717 = vmatpush.msra.mxu0 0.0
  %718 = vmatpush.msra.mxu0 0.0
  %719 = vmatpush.msra.mxu0 0.0
  %720 = vmatpush.msra.mxu0 0.0
  %721 = vmatpush.msra.mxu0 0.0
  %722 = vmatpush.msra.mxu0 0.0
  %723 = vmatpush.msra.mxu0 0.0
  %724 = vmatpush.msra.mxu0 0.0
  %725 = vmatpush.msra.mxu0 0.0
  %726 = vmatpush.msra.mxu0 %v710
  %727 = vmatpush.msra.mxu0 %v707
  %728 = vmatmul.f32.gmra.mxu0 %v655
  %v729 = vpop.f32.mrf.mxu0
  %v730 = vadd.f32 0.0, %v729
  %731 = vdwg.mxu0
  %s732 = scalar_lea.vmem %s7, 48
  %v733 = vld [vmem:[%s732] sm:$0xff]
  %v734 = vld [vmem:[%s732 + $0x8] sm:$0x1]
  %v736 = vsel %vm78, %v734, 0
  %738 = vmatpush.msra.mxu0 0.0
  %739 = vmatpush.msra.mxu0 0.0
  %740 = vmatpush.msra.mxu0 0.0
  %741 = vmatpush.msra.mxu0 0.0
  %742 = vmatpush.msra.mxu0 0.0
  %743 = vmatpush.msra.mxu0 0.0
  %744 = vmatpush.msra.mxu0 0.0
  %745 = vmatpush.msra.mxu0 0.0
  %746 = vmatpush.msra.mxu0 0.0
  %747 = vmatpush.msra.mxu0 0.0
  %748 = vmatpush.msra.mxu0 0.0
  %749 = vmatpush.msra.mxu0 0.0
  %750 = vmatpush.msra.mxu0 0.0
  %751 = vmatpush.msra.mxu0 0.0
  %752 = vmatpush.msra.mxu0 %v736
  %753 = vmatpush.msra.mxu0 %v733
  %754 = vmatmul.f32.gmra.mxu0 %v655
  %v755 = vpop.f32.mrf.mxu0
  %v756 = vadd.f32 0.0, %v755
  %757 = vdwg.mxu0
  %v758 = vmax.f32 %v678, %v704
  %v759 = vmax.f32 %v758, %v730
  %v760 = vmax.f32 %v759, %v756
  %vm761 = vcmask 31744
  %762 = vst.msk [vmem:[%s17] sm:$0xff] %vm761, %v760
  %v763 = vld [vmem:[%s8] sm:$0xff]
  %v764 = vld [vmem:[%s8 + $0x8] sm:$0xff]
  %v765 = vld [vmem:[%s8 + $0x10] sm:$0xff]
  %v766 = vld [vmem:[%s8 + $0x18] sm:$0xff]
  %v767 = vld [vmem:[%s8 + $0x20] sm:$0xff]
  %v768 = vld [vmem:[%s8 + $0x28] sm:$0xff]
  %v769 = vld [vmem:[%s8 + $0x30] sm:$0xff]
  %v770 = vld [vmem:[%s8 + $0x38] sm:$0xff]
  %v771 = vld [vmem:[%s8 + $0x40] sm:$0xff]
  %v772 = vld [vmem:[%s8 + $0x48] sm:$0xff]
  %v773 = vld [vmem:[%s8 + $0x50] sm:$0xff]
  %v774 = vld [vmem:[%s8 + $0x58] sm:$0xff]
  %v775 = vld [vmem:[%s8 + $0x60] sm:$0xff]
  %v776 = vld [vmem:[%s8 + $0x68] sm:$0xff]
  %v777 = vld [vmem:[%s8 + $0x70] sm:$0xff]
  %v778 = vld [vmem:[%s8 + $0x78] sm:$0xff]
  %v779 = vld [vmem:[%s8 + $0x80] sm:$0xff]
  %v780 = vld [vmem:[%s8 + $0x88] sm:$0xff]
  %vm781 = vcmask 64512
  %v783 = vsel %vm781, %v763, 0
  %v786 = vsel %vm781, %v764, 0
  %v789 = vsel %vm781, %v765, 0
  %v792 = vsel %vm781, %v766, 0
  %v795 = vsel %vm781, %v767, 0
  %v798 = vsel %vm781, %v768, 0
  %v801 = vsel %vm781, %v769, 0
  %v804 = vsel %vm781, %v770, 0
  %v807 = vsel %vm781, %v771, 0
  %v810 = vsel %vm781, %v772, 0
  %v813 = vsel %vm781, %v773, 0
  %v816 = vsel %vm781, %v774, 0
  %v819 = vsel %vm781, %v775, 0
  %v822 = vsel %vm781, %v776, 0
  %v825 = vsel %vm781, %v777, 0
  %v828 = vsel %vm781, %v778, 0
  %v831 = vsel %vm781, %v779, 0
  %v834 = vsel %vm781, %v780, 0
  %836 = vmatpush.msra.mxu0 0.0
  %837 = vmatpush.msra.mxu0 0.0
  %838 = vmatpush.msra.mxu0 0.0
  %839 = vmatpush.msra.mxu0 0.0
  %840 = vmatpush.msra.mxu0 0.0
  %841 = vmatpush.msra.mxu0 0.0
  %842 = vmatpush.msra.mxu0 0.0
  %843 = vmatpush.msra.mxu0 0.0
  %844 = vmatpush.msra.mxu0 0.0
  %845 = vmatpush.msra.mxu0 0.0
  %846 = vmatpush.msra.mxu0 0.0
  %847 = vmatpush.msra.mxu0 0.0
  %848 = vmatpush.msra.mxu0 0.0
  %849 = vmatpush.msra.mxu0 0.0
  %850 = vmatpush.msra.mxu0 0.0
  %851 = vmatpush.msra.mxu0 %v760
  %852 = vmatmul.f32.gmra.mxu0 %v783
  %v853 = vpop.f32.mrf.mxu0
  %v854 = vadd.f32 0.0, %v853
  %855 = vmatmul.f32.gmra.mxu0 %v786
  %v856 = vpop.f32.mrf.mxu0
  %v857 = vadd.f32 0.0, %v856
  %858 = vmatmul.f32.gmra.mxu0 %v789
  %v859 = vpop.f32.mrf.mxu0
  %v860 = vadd.f32 0.0, %v859
  %861 = vmatmul.f32.gmra.mxu0 %v792
  %v862 = vpop.f32.mrf.mxu0
  %v863 = vadd.f32 0.0, %v862
  %864 = vmatmul.f32.gmra.mxu0 %v795
  %v865 = vpop.f32.mrf.mxu0
  %v866 = vadd.f32 0.0, %v865
  %867 = vmatmul.f32.gmra.mxu0 %v798
  %v868 = vpop.f32.mrf.mxu0
  %v869 = vadd.f32 0.0, %v868
  %870 = vmatmul.f32.gmra.mxu0 %v801
  %v871 = vpop.f32.mrf.mxu0
  %v872 = vadd.f32 0.0, %v871
  %873 = vmatmul.f32.gmra.mxu0 %v804
  %v874 = vpop.f32.mrf.mxu0
  %v875 = vadd.f32 0.0, %v874
  %876 = vmatmul.f32.gmra.mxu0 %v807
  %v877 = vpop.f32.mrf.mxu0
  %v878 = vadd.f32 0.0, %v877
  %879 = vmatmul.f32.gmra.mxu0 %v810
  %v880 = vpop.f32.mrf.mxu0
  %v881 = vadd.f32 0.0, %v880
  %882 = vmatmul.f32.gmra.mxu0 %v813
  %v883 = vpop.f32.mrf.mxu0
  %v884 = vadd.f32 0.0, %v883
  %885 = vmatmul.f32.gmra.mxu0 %v816
  %v886 = vpop.f32.mrf.mxu0
  %v887 = vadd.f32 0.0, %v886
  %888 = vmatmul.f32.gmra.mxu0 %v819
  %v889 = vpop.f32.mrf.mxu0
  %v890 = vadd.f32 0.0, %v889
  %891 = vmatmul.f32.gmra.mxu0 %v822
  %v892 = vpop.f32.mrf.mxu0
  %v893 = vadd.f32 0.0, %v892
  %894 = vmatmul.f32.gmra.mxu0 %v825
  %v895 = vpop.f32.mrf.mxu0
  %v896 = vadd.f32 0.0, %v895
  %897 = vmatmul.f32.gmra.mxu0 %v828
  %v898 = vpop.f32.mrf.mxu0
  %v899 = vadd.f32 0.0, %v898
  %900 = vmatmul.f32.gmra.mxu0 %v831
  %v901 = vpop.f32.mrf.mxu0
  %v902 = vadd.f32 0.0, %v901
  %903 = vmatmul.f32.gmra.mxu0 %v834
  %v904 = vpop.f32.mrf.mxu0
  %v905 = vadd.f32 0.0, %v904
  %906 = vdwg.mxu0
  %v907 = vld [vmem:[%s10] sm:$0xf]
  %s908 = scalar_lea.vmem %s10, 4
  %v909 = vld [vmem:[%s908] sm:$0xf]
  %s910 = scalar_lea.vmem %s10, 8
  %v911 = vld [vmem:[%s910] sm:$0xf]
  %s912 = scalar_lea.vmem %s10, 12
  %v913 = vld [vmem:[%s912] sm:$0xf]
  %s914 = scalar_lea.vmem %s10, 16
  %v915 = vld [vmem:[%s914] sm:$0xf]
  %v917 = vsel %vm761, %v878, 0
  %v920 = vsel %vm761, %v881, 0
  %v923 = vsel %vm127, %v915, 0
  %925 = vmatpush.msra.mxu0 0.0
  %926 = vmatpush.msra.mxu0 0.0
  %927 = vmatpush.msra.mxu0 0.0
  %928 = vmatpush.msra.mxu0 0.0
  %929 = vmatpush.msra.mxu0 0.0
  %930 = vmatpush.msra.mxu0 0.0
  %931 = vmatpush.msra.mxu0 0.0
  %932 = vmatpush.msra.mxu0 0.0
  %933 = vmatpush.msra.mxu0 0.0
  %934 = vmatpush.msra.mxu0 0.0
  %935 = vmatpush.msra.mxu0 0.0
  %936 = vmatpush.msra.mxu0 0.0
  %937 = vmatpush.msra.mxu0 0.0
  %938 = vmatpush.msra.mxu0 0.0
  %939 = vmatpush.msra.mxu0 0.0
  %940 = vmatpush.msra.mxu0 %v923
  %941 = vmatmul.f32.gmra.mxu0 %v917
  %v942 = vpop.f32.mrf.mxu0
  %v943 = vadd.f32 0.0, %v942
  %944 = vmatmul.f32.gmra.mxu0 %v920
  %v945 = vpop.f32.mrf.mxu0
  %v946 = vadd.f32 0.0, %v945
  %947 = vdwg.mxu0
  %v949 = vsel %vm761, %v854, 0
  %v952 = vsel %vm761, %v857, 0
  %v955 = vsel %vm127, %v907, 0
  %957 = vmatpush.msra.mxu0 0.0
  %958 = vmatpush.msra.mxu0 0.0
  %959 = vmatpush.msra.mxu0 0.0
  %960 = vmatpush.msra.mxu0 0.0
  %961 = vmatpush.msra.mxu0 0.0
  %962 = vmatpush.msra.mxu0 0.0
  %963 = vmatpush.msra.mxu0 0.0
  %964 = vmatpush.msra.mxu0 0.0
  %965 = vmatpush.msra.mxu0 0.0
  %966 = vmatpush.msra.mxu0 0.0
  %967 = vmatpush.msra.mxu0 0.0
  %968 = vmatpush.msra.mxu0 0.0
  %969 = vmatpush.msra.mxu0 0.0
  %970 = vmatpush.msra.mxu0 0.0
  %971 = vmatpush.msra.mxu0 0.0
  %972 = vmatpush.msra.mxu0 %v955
  %973 = vmatmul.f32.gmra.mxu0 %v949
  %v974 = vpop.f32.mrf.mxu0
  %v975 = vadd.f32 %v943, %v974
  %976 = vmatmul.f32.gmra.mxu0 %v952
  %v977 = vpop.f32.mrf.mxu0
  %v978 = vadd.f32 %v946, %v977
  %979 = vdwg.mxu0
  %s980 = scalar_lea.vmem %s10, 20
  %v981 = vld [vmem:[%s980] sm:$0xf]
  %v983 = vsel %vm761, %v884, 0
  %v986 = vsel %vm761, %v887, 0
  %v989 = vsel %vm127, %v981, 0
  %991 = vmatpush.msra.mxu0 0.0
  %992 = vmatpush.msra.mxu0 0.0
  %993 = vmatpush.msra.mxu0 0.0
  %994 = vmatpush.msra.mxu0 0.0
  %995 = vmatpush.msra.mxu0 0.0
  %996 = vmatpush.msra.mxu0 0.0
  %997 = vmatpush.msra.mxu0 0.0
  %998 = vmatpush.msra.mxu0 0.0
  %999 = vmatpush.msra.mxu0 0.0
  %1000 = vmatpush.msra.mxu0 0.0
  %1001 = vmatpush.msra.mxu0 0.0
  %1002 = vmatpush.msra.mxu0 0.0
  %1003 = vmatpush.msra.mxu0 0.0
  %1004 = vmatpush.msra.mxu0 0.0
  %1005 = vmatpush.msra.mxu0 0.0
  %1006 = vmatpush.msra.mxu0 %v989
  %1007 = vmatmul.f32.gmra.mxu0 %v983
  %v1008 = vpop.f32.mrf.mxu0
  %v1009 = vadd.f32 0.0, %v1008
  %1010 = vmatmul.f32.gmra.mxu0 %v986
  %v1011 = vpop.f32.mrf.mxu0
  %v1012 = vadd.f32 0.0, %v1011
  %1013 = vdwg.mxu0
  %v1015 = vsel %vm761, %v860, 0
  %v1018 = vsel %vm761, %v863, 0
  %v1021 = vsel %vm127, %v909, 0
  %1023 = vmatpush.msra.mxu0 0.0
  %1024 = vmatpush.msra.mxu0 0.0
  %1025 = vmatpush.msra.mxu0 0.0
  %1026 = vmatpush.msra.mxu0 0.0
  %1027 = vmatpush.msra.mxu0 0.0
  %1028 = vmatpush.msra.mxu0 0.0
  %1029 = vmatpush.msra.mxu0 0.0
  %1030 = vmatpush.msra.mxu0 0.0
  %1031 = vmatpush.msra.mxu0 0.0
  %1032 = vmatpush.msra.mxu0 0.0
  %1033 = vmatpush.msra.mxu0 0.0
  %1034 = vmatpush.msra.mxu0 0.0
  %1035 = vmatpush.msra.mxu0 0.0
  %1036 = vmatpush.msra.mxu0 0.0
  %1037 = vmatpush.msra.mxu0 0.0
  %1038 = vmatpush.msra.mxu0 %v1021
  %1039 = vmatmul.f32.gmra.mxu0 %v1015
  %v1040 = vpop.f32.mrf.mxu0
  %v1041 = vadd.f32 %v1009, %v1040
  %1042 = vmatmul.f32.gmra.mxu0 %v1018
  %v1043 = vpop.f32.mrf.mxu0
  %v1044 = vadd.f32 %v1012, %v1043
  %1045 = vdwg.mxu0
  %s1046 = scalar_lea.vmem %s10, 24
  %v1047 = vld [vmem:[%s1046] sm:$0xf]
  %v1049 = vsel %vm761, %v890, 0
  %v1052 = vsel %vm761, %v893, 0
  %v1055 = vsel %vm127, %v1047, 0
  %1057 = vmatpush.msra.mxu0 0.0
  %1058 = vmatpush.msra.mxu0 0.0
  %1059 = vmatpush.msra.mxu0 0.0
  %1060 = vmatpush.msra.mxu0 0.0
  %1061 = vmatpush.msra.mxu0 0.0
  %1062 = vmatpush.msra.mxu0 0.0
  %1063 = vmatpush.msra.mxu0 0.0
  %1064 = vmatpush.msra.mxu0 0.0
  %1065 = vmatpush.msra.mxu0 0.0
  %1066 = vmatpush.msra.mxu0 0.0
  %1067 = vmatpush.msra.mxu0 0.0
  %1068 = vmatpush.msra.mxu0 0.0
  %1069 = vmatpush.msra.mxu0 0.0
  %1070 = vmatpush.msra.mxu0 0.0
  %1071 = vmatpush.msra.mxu0 0.0
  %1072 = vmatpush.msra.mxu0 %v1055
  %1073 = vmatmul.f32.gmra.mxu0 %v1049
  %v1074 = vpop.f32.mrf.mxu0
  %v1075 = vadd.f32 0.0, %v1074
  %1076 = vmatmul.f32.gmra.mxu0 %v1052
  %v1077 = vpop.f32.mrf.mxu0
  %v1078 = vadd.f32 0.0, %v1077
  %1079 = vdwg.mxu0
  %v1081 = vsel %vm761, %v866, 0
  %v1084 = vsel %vm761, %v869, 0
  %v1087 = vsel %vm127, %v911, 0
  %1089 = vmatpush.msra.mxu0 0.0
  %1090 = vmatpush.msra.mxu0 0.0
  %1091 = vmatpush.msra.mxu0 0.0
  %1092 = vmatpush.msra.mxu0 0.0
  %1093 = vmatpush.msra.mxu0 0.0
  %1094 = vmatpush.msra.mxu0 0.0
  %1095 = vmatpush.msra.mxu0 0.0
  %1096 = vmatpush.msra.mxu0 0.0
  %1097 = vmatpush.msra.mxu0 0.0
  %1098 = vmatpush.msra.mxu0 0.0
  %1099 = vmatpush.msra.mxu0 0.0
  %1100 = vmatpush.msra.mxu0 0.0
  %1101 = vmatpush.msra.mxu0 0.0
  %1102 = vmatpush.msra.mxu0 0.0
  %1103 = vmatpush.msra.mxu0 0.0
  %1104 = vmatpush.msra.mxu0 %v1087
  %1105 = vmatmul.f32.gmra.mxu0 %v1081
  %v1106 = vpop.f32.mrf.mxu0
  %v1107 = vadd.f32 %v1075, %v1106
  %1108 = vmatmul.f32.gmra.mxu0 %v1084
  %v1109 = vpop.f32.mrf.mxu0
  %v1110 = vadd.f32 %v1078, %v1109
  %1111 = vdwg.mxu0
  %s1112 = scalar_lea.vmem %s10, 28
  %v1113 = vld [vmem:[%s1112] sm:$0xf]
  %v1115 = vsel %vm761, %v896, 0
  %v1118 = vsel %vm761, %v899, 0
  %v1121 = vsel %vm127, %v1113, 0
  %1123 = vmatpush.msra.mxu0 0.0
  %1124 = vmatpush.msra.mxu0 0.0
  %1125 = vmatpush.msra.mxu0 0.0
  %1126 = vmatpush.msra.mxu0 0.0
  %1127 = vmatpush.msra.mxu0 0.0
  %1128 = vmatpush.msra.mxu0 0.0
  %1129 = vmatpush.msra.mxu0 0.0
  %1130 = vmatpush.msra.mxu0 0.0
  %1131 = vmatpush.msra.mxu0 0.0
  %1132 = vmatpush.msra.mxu0 0.0
  %1133 = vmatpush.msra.mxu0 0.0
  %1134 = vmatpush.msra.mxu0 0.0
  %1135 = vmatpush.msra.mxu0 0.0
  %1136 = vmatpush.msra.mxu0 0.0
  %1137 = vmatpush.msra.mxu0 0.0
  %1138 = vmatpush.msra.mxu0 %v1121
  %1139 = vmatmul.f32.gmra.mxu0 %v1115
  %v1140 = vpop.f32.mrf.mxu0
  %v1141 = vadd.f32 0.0, %v1140
  %1142 = vmatmul.f32.gmra.mxu0 %v1118
  %v1143 = vpop.f32.mrf.mxu0
  %v1144 = vadd.f32 0.0, %v1143
  %1145 = vdwg.mxu0
  %v1147 = vsel %vm761, %v872, 0
  %v1150 = vsel %vm761, %v875, 0
  %v1153 = vsel %vm127, %v913, 0
  %1155 = vmatpush.msra.mxu0 0.0
  %1156 = vmatpush.msra.mxu0 0.0
  %1157 = vmatpush.msra.mxu0 0.0
  %1158 = vmatpush.msra.mxu0 0.0
  %1159 = vmatpush.msra.mxu0 0.0
  %1160 = vmatpush.msra.mxu0 0.0
  %1161 = vmatpush.msra.mxu0 0.0
  %1162 = vmatpush.msra.mxu0 0.0
  %1163 = vmatpush.msra.mxu0 0.0
  %1164 = vmatpush.msra.mxu0 0.0
  %1165 = vmatpush.msra.mxu0 0.0
  %1166 = vmatpush.msra.mxu0 0.0
  %1167 = vmatpush.msra.mxu0 0.0
  %1168 = vmatpush.msra.mxu0 0.0
  %1169 = vmatpush.msra.mxu0 0.0
  %1170 = vmatpush.msra.mxu0 %v1153
  %1171 = vmatmul.f32.gmra.mxu0 %v1147
  %v1172 = vpop.f32.mrf.mxu0
  %v1173 = vadd.f32 %v1141, %v1172
  %1174 = vmatmul.f32.gmra.mxu0 %v1150
  %v1175 = vpop.f32.mrf.mxu0
  %v1176 = vadd.f32 %v1144, %v1175
  %1177 = vdwg.mxu0
  %s1178 = scalar_lea.vmem %s10, 32
  %v1179 = vld [vmem:[%s1178] sm:$0xf]
  %v1181 = vsel %vm761, %v902, 0
  %v1184 = vsel %vm761, %v905, 0
  %v1187 = vsel %vm127, %v1179, 0
  %1189 = vmatpush.msra.mxu0 0.0
  %1190 = vmatpush.msra.mxu0 0.0
  %1191 = vmatpush.msra.mxu0 0.0
  %1192 = vmatpush.msra.mxu0 0.0
  %1193 = vmatpush.msra.mxu0 0.0
  %1194 = vmatpush.msra.mxu0 0.0
  %1195 = vmatpush.msra.mxu0 0.0
  %1196 = vmatpush.msra.mxu0 0.0
  %1197 = vmatpush.msra.mxu0 0.0
  %1198 = vmatpush.msra.mxu0 0.0
  %1199 = vmatpush.msra.mxu0 0.0
  %1200 = vmatpush.msra.mxu0 0.0
  %1201 = vmatpush.msra.mxu0 0.0
  %1202 = vmatpush.msra.mxu0 0.0
  %1203 = vmatpush.msra.mxu0 0.0
  %1204 = vmatpush.msra.mxu0 %v1187
  %1205 = vmatmul.f32.gmra.mxu0 %v1181
  %v1206 = vpop.f32.mrf.mxu0
  %v1207 = vadd.f32 0.0, %v1206
  %1208 = vmatmul.f32.gmra.mxu0 %v1184
  %v1209 = vpop.f32.mrf.mxu0
  %v1210 = vadd.f32 0.0, %v1209
  %1211 = vdwg.mxu0
  %v1212 = vadd.f32 %v975, %v1207
  %v1213 = vadd.f32 %v978, %v1210
  %v1214 = vadd.f32 %v1212, %v1041
  %v1215 = vadd.f32 %v1213, %v1044
  %v1216 = vadd.f32 %v1214, %v1107
  %v1217 = vadd.f32 %v1215, %v1110
  %v1218 = vadd.f32 %v1216, %v1173
  %v1219 = vadd.f32 %v1217, %v1176
  %v1220 = vld [vmem:[%s9] sm:$0xff]
  %v1221 = vld [vmem:[%s9 + $0x8] sm:$0xff]
  %1223 = vset.pattern.permute.xlu0 0
  %1224 = vperm.xlu0 %1223, %v1220
  %v1225 = vpop.permute.xlu0 %1224
  %1228 = vset.pattern.permute.xlu0 0
  %1229 = vperm.xlu0 %1228, %v1221
  %v1230 = vpop.permute.xlu0 %1229
  %v1232 = vadd.f32 %v1218, %v1225
  %v1233 = vadd.f32 %v1219, %v1230
  %v1234 = vmax.f32 %v1232, 0.0
  %v1235 = vmax.f32 %v1233, 0.0
  %v1236 = vld [vmem:[%s11] sm:$0xff]
  %v1237 = vld [vmem:[%s11 + $0x8] sm:$0xff]
  %v1238 = vld [vmem:[%s11 + $0x10] sm:$0xff]
  %v1239 = vld [vmem:[%s11 + $0x18] sm:$0xff]
  %v1240 = vld [vmem:[%s11 + $0x20] sm:$0xff]
  %v1241 = vld [vmem:[%s11 + $0x28] sm:$0xff]
  %v1242 = vld [vmem:[%s11 + $0x30] sm:$0xff]
  %v1243 = vld [vmem:[%s11 + $0x38] sm:$0xff]
  %v1244 = vld [vmem:[%s11 + $0x40] sm:$0xff]
  %v1245 = vld [vmem:[%s11 + $0x48] sm:$0xff]
  %v1246 = vld [vmem:[%s11 + $0x50] sm:$0xff]
  %v1247 = vld [vmem:[%s11 + $0x58] sm:$0xff]
  %v1248 = vld [vmem:[%s11 + $0x60] sm:$0xff]
  %v1249 = vld [vmem:[%s11 + $0x68] sm:$0xff]
  %v1250 = vld [vmem:[%s11 + $0x70] sm:$0xff]
  %v1251 = vld [vmem:[%s11 + $0x78] sm:$0xff]
  %v1252 = vld [vmem:[%s11 + $0x80] sm:$0xff]
  %v1253 = vld [vmem:[%s11 + $0x88] sm:$0xff]
  %v1254 = vld [vmem:[%s11 + $0x90] sm:$0xff]
  %v1255 = vld [vmem:[%s11 + $0x98] sm:$0xff]
  %v1256 = vld [vmem:[%s11 + $0xa0] sm:$0xff]
  %v1257 = vld [vmem:[%s11 + $0xa8] sm:$0xff]
  %v1258 = vld [vmem:[%s11 + $0xb0] sm:$0xff]
  %v1259 = vld [vmem:[%s11 + $0xb8] sm:$0xff]
  %v1260 = vld [vmem:[%s11 + $0xc0] sm:$0xff]
  %v1262 = vsel %vm289, %v1236, 0
  %v1265 = vsel %vm289, %v1237, 0
  %v1268 = vsel %vm289, %v1238, 0
  %v1271 = vsel %vm289, %v1239, 0
  %v1274 = vsel %vm289, %v1240, 0
  %v1277 = vsel %vm289, %v1241, 0
  %v1280 = vsel %vm289, %v1242, 0
  %v1283 = vsel %vm289, %v1243, 0
  %v1286 = vsel %vm289, %v1244, 0
  %v1289 = vsel %vm289, %v1245, 0
  %v1292 = vsel %vm289, %v1246, 0
  %v1295 = vsel %vm289, %v1247, 0
  %v1298 = vsel %vm289, %v1248, 0
  %v1301 = vsel %vm289, %v1249, 0
  %v1304 = vsel %vm289, %v1250, 0
  %v1307 = vsel %vm289, %v1251, 0
  %v1310 = vsel %vm289, %v1252, 0
  %v1313 = vsel %vm289, %v1253, 0
  %v1316 = vsel %vm289, %v1254, 0
  %v1319 = vsel %vm289, %v1255, 0
  %v1322 = vsel %vm289, %v1256, 0
  %v1325 = vsel %vm289, %v1257, 0
  %v1328 = vsel %vm289, %v1258, 0
  %v1331 = vsel %vm289, %v1259, 0
  %v1334 = vsel %vm289, %v1260, 0
  %1336 = vmatpush.msra.mxu0 0.0
  %1337 = vmatpush.msra.mxu0 0.0
  %1338 = vmatpush.msra.mxu0 0.0
  %1339 = vmatpush.msra.mxu0 0.0
  %1340 = vmatpush.msra.mxu0 0.0
  %1341 = vmatpush.msra.mxu0 0.0
  %1342 = vmatpush.msra.mxu0 0.0
  %1343 = vmatpush.msra.mxu0 0.0
  %1344 = vmatpush.msra.mxu0 0.0
  %1345 = vmatpush.msra.mxu0 0.0
  %1346 = vmatpush.msra.mxu0 0.0
  %1347 = vmatpush.msra.mxu0 0.0
  %1348 = vmatpush.msra.mxu0 0.0
  %1349 = vmatpush.msra.mxu0 0.0
  %1350 = vmatpush.msra.mxu0 %v1235
  %1351 = vmatpush.msra.mxu0 %v1234
  %1352 = vmatmul.f32.gmra.mxu0 %v1262
  %v1353 = vpop.f32.mrf.mxu0
  %v1354 = vadd.f32 0.0, %v1353
  %1355 = vmatmul.f32.gmra.mxu0 %v1265
  %v1356 = vpop.f32.mrf.mxu0
  %v1357 = vadd.f32 0.0, %v1356
  %1358 = vmatmul.f32.gmra.mxu0 %v1268
  %v1359 = vpop.f32.mrf.mxu0
  %v1360 = vadd.f32 0.0, %v1359
  %1361 = vmatmul.f32.gmra.mxu0 %v1271
  %v1362 = vpop.f32.mrf.mxu0
  %v1363 = vadd.f32 0.0, %v1362
  %1364 = vmatmul.f32.gmra.mxu0 %v1274
  %v1365 = vpop.f32.mrf.mxu0
  %v1366 = vadd.f32 0.0, %v1365
  %1367 = vmatmul.f32.gmra.mxu0 %v1277
  %v1368 = vpop.f32.mrf.mxu0
  %v1369 = vadd.f32 0.0, %v1368
  %1370 = vmatmul.f32.gmra.mxu0 %v1280
  %v1371 = vpop.f32.mrf.mxu0
  %v1372 = vadd.f32 0.0, %v1371
  %1373 = vmatmul.f32.gmra.mxu0 %v1283
  %v1374 = vpop.f32.mrf.mxu0
  %v1375 = vadd.f32 0.0, %v1374
  %1376 = vmatmul.f32.gmra.mxu0 %v1286
  %v1377 = vpop.f32.mrf.mxu0
  %v1378 = vadd.f32 0.0, %v1377
  %1379 = vmatmul.f32.gmra.mxu0 %v1289
  %v1380 = vpop.f32.mrf.mxu0
  %v1381 = vadd.f32 0.0, %v1380
  %1382 = vmatmul.f32.gmra.mxu0 %v1292
  %v1383 = vpop.f32.mrf.mxu0
  %v1384 = vadd.f32 0.0, %v1383
  %1385 = vmatmul.f32.gmra.mxu0 %v1295
  %v1386 = vpop.f32.mrf.mxu0
  %v1387 = vadd.f32 0.0, %v1386
  %1388 = vmatmul.f32.gmra.mxu0 %v1298
  %v1389 = vpop.f32.mrf.mxu0
  %v1390 = vadd.f32 0.0, %v1389
  %1391 = vmatmul.f32.gmra.mxu0 %v1301
  %v1392 = vpop.f32.mrf.mxu0
  %v1393 = vadd.f32 0.0, %v1392
  %1394 = vmatmul.f32.gmra.mxu0 %v1304
  %v1395 = vpop.f32.mrf.mxu0
  %v1396 = vadd.f32 0.0, %v1395
  %1397 = vmatmul.f32.gmra.mxu0 %v1307
  %v1398 = vpop.f32.mrf.mxu0
  %v1399 = vadd.f32 0.0, %v1398
  %1400 = vmatmul.f32.gmra.mxu0 %v1310
  %v1401 = vpop.f32.mrf.mxu0
  %v1402 = vadd.f32 0.0, %v1401
  %1403 = vmatmul.f32.gmra.mxu0 %v1313
  %v1404 = vpop.f32.mrf.mxu0
  %v1405 = vadd.f32 0.0, %v1404
  %1406 = vmatmul.f32.gmra.mxu0 %v1316
  %v1407 = vpop.f32.mrf.mxu0
  %v1408 = vadd.f32 0.0, %v1407
  %1409 = vmatmul.f32.gmra.mxu0 %v1319
  %v1410 = vpop.f32.mrf.mxu0
  %v1411 = vadd.f32 0.0, %v1410
  %1412 = vmatmul.f32.gmra.mxu0 %v1322
  %v1413 = vpop.f32.mrf.mxu0
  %v1414 = vadd.f32 0.0, %v1413
  %1415 = vmatmul.f32.gmra.mxu0 %v1325
  %v1416 = vpop.f32.mrf.mxu0
  %v1417 = vadd.f32 0.0, %v1416
  %1418 = vmatmul.f32.gmra.mxu0 %v1328
  %v1419 = vpop.f32.mrf.mxu0
  %v1420 = vadd.f32 0.0, %v1419
  %1421 = vmatmul.f32.gmra.mxu0 %v1331
  %v1422 = vpop.f32.mrf.mxu0
  %v1423 = vadd.f32 0.0, %v1422
  %1424 = vmatmul.f32.gmra.mxu0 %v1334
  %v1425 = vpop.f32.mrf.mxu0
  %v1426 = vadd.f32 0.0, %v1425
  %1427 = vdwg.mxu0
  %v1428 = vld [vmem:[%s13] sm:$0xff]
  %v1429 = vld [vmem:[%s13 + $0x8] sm:$0xff]
  %v1430 = vld [vmem:[%s13 + $0x10] sm:$0xff]
  %v1431 = vld [vmem:[%s13 + $0x18] sm:$0xff]
  %v1432 = vld [vmem:[%s13 + $0x20] sm:$0xff]
  %v1433 = vld [vmem:[%s13 + $0x28] sm:$0xff]
  %v1434 = vld [vmem:[%s13 + $0x30] sm:$0x1]
  %v1435 = vld [vmem:[%s13 + $0x38] sm:$0x1]
  %s1436 = scalar_lea.vmem %s13, 64
  %v1437 = vld [vmem:[%s1436] sm:$0xff]
  %v1438 = vld [vmem:[%s1436 + $0x8] sm:$0xff]
  %v1439 = vld [vmem:[%s1436 + $0x10] sm:$0xff]
  %v1440 = vld [vmem:[%s1436 + $0x18] sm:$0xff]
  %v1441 = vld [vmem:[%s1436 + $0x20] sm:$0xff]
  %v1442 = vld [vmem:[%s1436 + $0x28] sm:$0xff]
  %v1443 = vld [vmem:[%s1436 + $0x30] sm:$0x1]
  %v1444 = vld [vmem:[%s1436 + $0x38] sm:$0x1]
  %s1445 = scalar_lea.vmem %s13, 128
  %v1446 = vld [vmem:[%s1445] sm:$0xff]
  %v1447 = vld [vmem:[%s1445 + $0x8] sm:$0xff]
  %v1448 = vld [vmem:[%s1445 + $0x10] sm:$0xff]
  %v1449 = vld [vmem:[%s1445 + $0x18] sm:$0xff]
  %v1450 = vld [vmem:[%s1445 + $0x20] sm:$0xff]
  %v1451 = vld [vmem:[%s1445 + $0x28] sm:$0xff]
  %v1452 = vld [vmem:[%s1445 + $0x30] sm:$0x1]
  %v1453 = vld [vmem:[%s1445 + $0x38] sm:$0x1]
  %s1454 = scalar_lea.vmem %s13, 192
  %v1455 = vld [vmem:[%s1454] sm:$0xff]
  %v1456 = vld [vmem:[%s1454 + $0x8] sm:$0xff]
  %v1457 = vld [vmem:[%s1454 + $0x10] sm:$0xff]
  %v1458 = vld [vmem:[%s1454 + $0x18] sm:$0xff]
  %v1459 = vld [vmem:[%s1454 + $0x20] sm:$0xff]
  %v1460 = vld [vmem:[%s1454 + $0x28] sm:$0xff]
  %v1461 = vld [vmem:[%s1454 + $0x30] sm:$0x1]
  %v1462 = vld [vmem:[%s1454 + $0x38] sm:$0x1]
  %s1463 = scalar_lea.vmem %s13, 256
  %v1464 = vld [vmem:[%s1463] sm:$0xff]
  %v1465 = vld [vmem:[%s1463 + $0x8] sm:$0xff]
  %v1466 = vld [vmem:[%s1463 + $0x10] sm:$0xff]
  %v1467 = vld [vmem:[%s1463 + $0x18] sm:$0xff]
  %v1468 = vld [vmem:[%s1463 + $0x20] sm:$0xff]
  %v1469 = vld [vmem:[%s1463 + $0x28] sm:$0xff]
  %v1470 = vld [vmem:[%s1463 + $0x30] sm:$0x1]
  %v1471 = vld [vmem:[%s1463 + $0x38] sm:$0x1]
  %v1473 = vsel %vm385, %v1366, 0
  %v1476 = vsel %vm78, %v1470, 0
  %v1479 = vsel %vm78, %v1471, 0
  %1481 = vmatpush.msra.mxu0 0.0
  %1482 = vmatpush.msra.mxu0 0.0
  %1483 = vmatpush.msra.mxu0 0.0
  %1484 = vmatpush.msra.mxu0 0.0
  %1485 = vmatpush.msra.mxu0 0.0
  %1486 = vmatpush.msra.mxu0 0.0
  %1487 = vmatpush.msra.mxu0 0.0
  %1488 = vmatpush.msra.mxu0 0.0
  %1489 = vmatpush.msra.mxu0 0.0
  %1490 = vmatpush.msra.mxu0 0.0
  %1491 = vmatpush.msra.mxu0 0.0
  %1492 = vmatpush.msra.mxu0 0.0
  %1493 = vmatpush.msra.mxu0 %v1476
  %1494 = vmatpush.msra.mxu0 %v1468
  %1495 = vmatpush.msra.mxu0 %v1466
  %1496 = vmatpush.msra.mxu0 %v1464
  %1497 = vmatmul.f32.gmra.mxu0 %v1473
  %v1498 = vpop.f32.mrf.mxu0
  %v1499 = vadd.f32 0.0, %v1498
  %1500 = vdwg.mxu0
  %1501 = vmatpush.msra.mxu0 0.0
  %1502 = vmatpush.msra.mxu0 0.0
  %1503 = vmatpush.msra.mxu0 0.0
  %1504 = vmatpush.msra.mxu0 0.0
  %1505 = vmatpush.msra.mxu0 0.0
  %1506 = vmatpush.msra.mxu0 0.0
  %1507 = vmatpush.msra.mxu0 0.0
  %1508 = vmatpush.msra.mxu0 0.0
  %1509 = vmatpush.msra.mxu0 0.0
  %1510 = vmatpush.msra.mxu0 0.0
  %1511 = vmatpush.msra.mxu0 0.0
  %1512 = vmatpush.msra.mxu0 0.0
  %1513 = vmatpush.msra.mxu0 %v1479
  %1514 = vmatpush.msra.mxu0 %v1469
  %1515 = vmatpush.msra.mxu0 %v1467
  %1516 = vmatpush.msra.mxu0 %v1465
  %1517 = vmatmul.f32.gmra.mxu0 %v1473
  %v1518 = vpop.f32.mrf.mxu0
  %v1519 = vadd.f32 0.0, %v1518
  %1520 = vdwg.mxu0
  %v1522 = vsel %vm385, %v1354, 0
  %v1525 = vsel %vm78, %v1434, 0
  %v1528 = vsel %vm78, %v1435, 0
  %1530 = vmatpush.msra.mxu0 0.0
  %1531 = vmatpush.msra.mxu0 0.0
  %1532 = vmatpush.msra.mxu0 0.0
  %1533 = vmatpush.msra.mxu0 0.0
  %1534 = vmatpush.msra.mxu0 0.0
  %1535 = vmatpush.msra.mxu0 0.0
  %1536 = vmatpush.msra.mxu0 0.0
  %1537 = vmatpush.msra.mxu0 0.0
  %1538 = vmatpush.msra.mxu0 0.0
  %1539 = vmatpush.msra.mxu0 0.0
  %1540 = vmatpush.msra.mxu0 0.0
  %1541 = vmatpush.msra.mxu0 0.0
  %1542 = vmatpush.msra.mxu0 %v1525
  %1543 = vmatpush.msra.mxu0 %v1432
  %1544 = vmatpush.msra.mxu0 %v1430
  %1545 = vmatpush.msra.mxu0 %v1428
  %1546 = vmatmul.f32.gmra.mxu0 %v1522
  %v1547 = vpop.f32.mrf.mxu0
  %v1548 = vadd.f32 %v1499, %v1547
  %1549 = vdwg.mxu0
  %1550 = vmatpush.msra.mxu0 0.0
  %1551 = vmatpush.msra.mxu0 0.0
  %1552 = vmatpush.msra.mxu0 0.0
  %1553 = vmatpush.msra.mxu0 0.0
  %1554 = vmatpush.msra.mxu0 0.0
  %1555 = vmatpush.msra.mxu0 0.0
  %1556 = vmatpush.msra.mxu0 0.0
  %1557 = vmatpush.msra.mxu0 0.0
  %1558 = vmatpush.msra.mxu0 0.0
  %1559 = vmatpush.msra.mxu0 0.0
  %1560 = vmatpush.msra.mxu0 0.0
  %1561 = vmatpush.msra.mxu0 0.0
  %1562 = vmatpush.msra.mxu0 %v1528
  %1563 = vmatpush.msra.mxu0 %v1433
  %1564 = vmatpush.msra.mxu0 %v1431
  %1565 = vmatpush.msra.mxu0 %v1429
  %1566 = vmatmul.f32.gmra.mxu0 %v1522
  %v1567 = vpop.f32.mrf.mxu0
  %v1568 = vadd.f32 %v1519, %v1567
  %1569 = vdwg.mxu0
  %s1570 = scalar_lea.vmem %s13, 320
  %v1571 = vld [vmem:[%s1570] sm:$0xff]
  %v1572 = vld [vmem:[%s1570 + $0x8] sm:$0xff]
  %v1573 = vld [vmem:[%s1570 + $0x10] sm:$0xff]
  %v1574 = vld [vmem:[%s1570 + $0x18] sm:$0xff]
  %v1575 = vld [vmem:[%s1570 + $0x20] sm:$0xff]
  %v1576 = vld [vmem:[%s1570 + $0x28] sm:$0xff]
  %v1577 = vld [vmem:[%s1570 + $0x30] sm:$0x1]
  %v1578 = vld [vmem:[%s1570 + $0x38] sm:$0x1]
  %v1580 = vsel %vm385, %v1369, 0
  %v1583 = vsel %vm78, %v1577, 0
  %v1586 = vsel %vm78, %v1578, 0
  %1588 = vmatpush.msra.mxu0 0.0
  %1589 = vmatpush.msra.mxu0 0.0
  %1590 = vmatpush.msra.mxu0 0.0
  %1591 = vmatpush.msra.mxu0 0.0
  %1592 = vmatpush.msra.mxu0 0.0
  %1593 = vmatpush.msra.mxu0 0.0
  %1594 = vmatpush.msra.mxu0 0.0
  %1595 = vmatpush.msra.mxu0 0.0
  %1596 = vmatpush.msra.mxu0 0.0
  %1597 = vmatpush.msra.mxu0 0.0
  %1598 = vmatpush.msra.mxu0 0.0
  %1599 = vmatpush.msra.mxu0 0.0
  %1600 = vmatpush.msra.mxu0 %v1583
  %1601 = vmatpush.msra.mxu0 %v1575
  %1602 = vmatpush.msra.mxu0 %v1573
  %1603 = vmatpush.msra.mxu0 %v1571
  %1604 = vmatmul.f32.gmra.mxu0 %v1580
  %v1605 = vpop.f32.mrf.mxu0
  %v1606 = vadd.f32 0.0, %v1605
  %1607 = vdwg.mxu0
  %1608 = vmatpush.msra.mxu0 0.0
  %1609 = vmatpush.msra.mxu0 0.0
  %1610 = vmatpush.msra.mxu0 0.0
  %1611 = vmatpush.msra.mxu0 0.0
  %1612 = vmatpush.msra.mxu0 0.0
  %1613 = vmatpush.msra.mxu0 0.0
  %1614 = vmatpush.msra.mxu0 0.0
  %1615 = vmatpush.msra.mxu0 0.0
  %1616 = vmatpush.msra.mxu0 0.0
  %1617 = vmatpush.msra.mxu0 0.0
  %1618 = vmatpush.msra.mxu0 0.0
  %1619 = vmatpush.msra.mxu0 0.0
  %1620 = vmatpush.msra.mxu0 %v1586
  %1621 = vmatpush.msra.mxu0 %v1576
  %1622 = vmatpush.msra.mxu0 %v1574
  %1623 = vmatpush.msra.mxu0 %v1572
  %1624 = vmatmul.f32.gmra.mxu0 %v1580
  %v1625 = vpop.f32.mrf.mxu0
  %v1626 = vadd.f32 0.0, %v1625
  %1627 = vdwg.mxu0
  %v1629 = vsel %vm385, %v1357, 0
  %v1632 = vsel %vm78, %v1443, 0
  %v1635 = vsel %vm78, %v1444, 0
  %1637 = vmatpush.msra.mxu0 0.0
  %1638 = vmatpush.msra.mxu0 0.0
  %1639 = vmatpush.msra.mxu0 0.0
  %1640 = vmatpush.msra.mxu0 0.0
  %1641 = vmatpush.msra.mxu0 0.0
  %1642 = vmatpush.msra.mxu0 0.0
  %1643 = vmatpush.msra.mxu0 0.0
  %1644 = vmatpush.msra.mxu0 0.0
  %1645 = vmatpush.msra.mxu0 0.0
  %1646 = vmatpush.msra.mxu0 0.0
  %1647 = vmatpush.msra.mxu0 0.0
  %1648 = vmatpush.msra.mxu0 0.0
  %1649 = vmatpush.msra.mxu0 %v1632
  %1650 = vmatpush.msra.mxu0 %v1441
  %1651 = vmatpush.msra.mxu0 %v1439
  %1652 = vmatpush.msra.mxu0 %v1437
  %1653 = vmatmul.f32.gmra.mxu0 %v1629
  %v1654 = vpop.f32.mrf.mxu0
  %v1655 = vadd.f32 %v1606, %v1654
  %1656 = vdwg.mxu0
  %1657 = vmatpush.msra.mxu0 0.0
  %1658 = vmatpush.msra.mxu0 0.0
  %1659 = vmatpush.msra.mxu0 0.0
  %1660 = vmatpush.msra.mxu0 0.0
  %1661 = vmatpush.msra.mxu0 0.0
  %1662 = vmatpush.msra.mxu0 0.0
  %1663 = vmatpush.msra.mxu0 0.0
  %1664 = vmatpush.msra.mxu0 0.0
  %1665 = vmatpush.msra.mxu0 0.0
  %1666 = vmatpush.msra.mxu0 0.0
  %1667 = vmatpush.msra.mxu0 0.0
  %1668 = vmatpush.msra.mxu0 0.0
  %1669 = vmatpush.msra.mxu0 %v1635
  %1670 = vmatpush.msra.mxu0 %v1442
  %1671 = vmatpush.msra.mxu0 %v1440
  %1672 = vmatpush.msra.mxu0 %v1438
  %1673 = vmatmul.f32.gmra.mxu0 %v1629
  %v1674 = vpop.f32.mrf.mxu0
  %v1675 = vadd.f32 %v1626, %v1674
  %1676 = vdwg.mxu0
  %s1677 = scalar_lea.vmem %s13, 384
  %v1678 = vld [vmem:[%s1677] sm:$0xff]
  %v1679 = vld [vmem:[%s1677 + $0x8] sm:$0xff]
  %v1680 = vld [vmem:[%s1677 + $0x10] sm:$0xff]
  %v1681 = vld [vmem:[%s1677 + $0x18] sm:$0xff]
  %v1682 = vld [vmem:[%s1677 + $0x20] sm:$0xff]
  %v1683 = vld [vmem:[%s1677 + $0x28] sm:$0xff]
  %v1684 = vld [vmem:[%s1677 + $0x30] sm:$0x1]
  %v1685 = vld [vmem:[%s1677 + $0x38] sm:$0x1]
  %v1687 = vsel %vm385, %v1372, 0
  %v1690 = vsel %vm78, %v1684, 0
  %v1693 = vsel %vm78, %v1685, 0
  %1695 = vmatpush.msra.mxu0 0.0
  %1696 = vmatpush.msra.mxu0 0.0
  %1697 = vmatpush.msra.mxu0 0.0
  %1698 = vmatpush.msra.mxu0 0.0
  %1699 = vmatpush.msra.mxu0 0.0
  %1700 = vmatpush.msra.mxu0 0.0
  %1701 = vmatpush.msra.mxu0 0.0
  %1702 = vmatpush.msra.mxu0 0.0
  %1703 = vmatpush.msra.mxu0 0.0
  %1704 = vmatpush.msra.mxu0 0.0
  %1705 = vmatpush.msra.mxu0 0.0
  %1706 = vmatpush.msra.mxu0 0.0
  %1707 = vmatpush.msra.mxu0 %v1690
  %1708 = vmatpush.msra.mxu0 %v1682
  %1709 = vmatpush.msra.mxu0 %v1680
  %1710 = vmatpush.msra.mxu0 %v1678
  %1711 = vmatmul.f32.gmra.mxu0 %v1687
  %v1712 = vpop.f32.mrf.mxu0
  %v1713 = vadd.f32 0.0, %v1712
  %1714 = vdwg.mxu0
  %1715 = vmatpush.msra.mxu0 0.0
  %1716 = vmatpush.msra.mxu0 0.0
  %1717 = vmatpush.msra.mxu0 0.0
  %1718 = vmatpush.msra.mxu0 0.0
  %1719 = vmatpush.msra.mxu0 0.0
  %1720 = vmatpush.msra.mxu0 0.0
  %1721 = vmatpush.msra.mxu0 0.0
  %1722 = vmatpush.msra.mxu0 0.0
  %1723 = vmatpush.msra.mxu0 0.0
  %1724 = vmatpush.msra.mxu0 0.0
  %1725 = vmatpush.msra.mxu0 0.0
  %1726 = vmatpush.msra.mxu0 0.0
  %1727 = vmatpush.msra.mxu0 %v1693
  %1728 = vmatpush.msra.mxu0 %v1683
  %1729 = vmatpush.msra.mxu0 %v1681
  %1730 = vmatpush.msra.mxu0 %v1679
  %1731 = vmatmul.f32.gmra.mxu0 %v1687
  %v1732 = vpop.f32.mrf.mxu0
  %v1733 = vadd.f32 0.0, %v1732
  %1734 = vdwg.mxu0
  %v1736 = vsel %vm385, %v1360, 0
  %v1739 = vsel %vm78, %v1452, 0
  %v1742 = vsel %vm78, %v1453, 0
  %1744 = vmatpush.msra.mxu0 0.0
  %1745 = vmatpush.msra.mxu0 0.0
  %1746 = vmatpush.msra.mxu0 0.0
  %1747 = vmatpush.msra.mxu0 0.0
  %1748 = vmatpush.msra.mxu0 0.0
  %1749 = vmatpush.msra.mxu0 0.0
  %1750 = vmatpush.msra.mxu0 0.0
  %1751 = vmatpush.msra.mxu0 0.0
  %1752 = vmatpush.msra.mxu0 0.0
  %1753 = vmatpush.msra.mxu0 0.0
  %1754 = vmatpush.msra.mxu0 0.0
  %1755 = vmatpush.msra.mxu0 0.0
  %1756 = vmatpush.msra.mxu0 %v1739
  %1757 = vmatpush.msra.mxu0 %v1450
  %1758 = vmatpush.msra.mxu0 %v1448
  %1759 = vmatpush.msra.mxu0 %v1446
  %1760 = vmatmul.f32.gmra.mxu0 %v1736
  %v1761 = vpop.f32.mrf.mxu0
  %v1762 = vadd.f32 %v1713, %v1761
  %1763 = vdwg.mxu0
  %1764 = vmatpush.msra.mxu0 0.0
  %1765 = vmatpush.msra.mxu0 0.0
  %1766 = vmatpush.msra.mxu0 0.0
  %1767 = vmatpush.msra.mxu0 0.0
  %1768 = vmatpush.msra.mxu0 0.0
  %1769 = vmatpush.msra.mxu0 0.0
  %1770 = vmatpush.msra.mxu0 0.0
  %1771 = vmatpush.msra.mxu0 0.0
  %1772 = vmatpush.msra.mxu0 0.0
  %1773 = vmatpush.msra.mxu0 0.0
  %1774 = vmatpush.msra.mxu0 0.0
  %1775 = vmatpush.msra.mxu0 0.0
  %1776 = vmatpush.msra.mxu0 %v1742
  %1777 = vmatpush.msra.mxu0 %v1451
  %1778 = vmatpush.msra.mxu0 %v1449
  %1779 = vmatpush.msra.mxu0 %v1447
  %1780 = vmatmul.f32.gmra.mxu0 %v1736
  %v1781 = vpop.f32.mrf.mxu0
  %v1782 = vadd.f32 %v1733, %v1781
  %1783 = vdwg.mxu0
  %s1784 = scalar_lea.vmem %s13, 448
  %v1785 = vld [vmem:[%s1784] sm:$0xff]
  %v1786 = vld [vmem:[%s1784 + $0x8] sm:$0xff]
  %v1787 = vld [vmem:[%s1784 + $0x10] sm:$0xff]
  %v1788 = vld [vmem:[%s1784 + $0x18] sm:$0xff]
  %v1789 = vld [vmem:[%s1784 + $0x20] sm:$0xff]
  %v1790 = vld [vmem:[%s1784 + $0x28] sm:$0xff]
  %v1791 = vld [vmem:[%s1784 + $0x30] sm:$0x1]
  %v1792 = vld [vmem:[%s1784 + $0x38] sm:$0x1]
  %v1794 = vsel %vm385, %v1375, 0
  %v1797 = vsel %vm78, %v1791, 0
  %v1800 = vsel %vm78, %v1792, 0
  %1802 = vmatpush.msra.mxu0 0.0
  %1803 = vmatpush.msra.mxu0 0.0
  %1804 = vmatpush.msra.mxu0 0.0
  %1805 = vmatpush.msra.mxu0 0.0
  %1806 = vmatpush.msra.mxu0 0.0
  %1807 = vmatpush.msra.mxu0 0.0
  %1808 = vmatpush.msra.mxu0 0.0
  %1809 = vmatpush.msra.mxu0 0.0
  %1810 = vmatpush.msra.mxu0 0.0
  %1811 = vmatpush.msra.mxu0 0.0
  %1812 = vmatpush.msra.mxu0 0.0
  %1813 = vmatpush.msra.mxu0 0.0
  %1814 = vmatpush.msra.mxu0 %v1797
  %1815 = vmatpush.msra.mxu0 %v1789
  %1816 = vmatpush.msra.mxu0 %v1787
  %1817 = vmatpush.msra.mxu0 %v1785
  %1818 = vmatmul.f32.gmra.mxu0 %v1794
  %v1819 = vpop.f32.mrf.mxu0
  %v1820 = vadd.f32 0.0, %v1819
  %1821 = vdwg.mxu0
  %1822 = vmatpush.msra.mxu0 0.0
  %1823 = vmatpush.msra.mxu0 0.0
  %1824 = vmatpush.msra.mxu0 0.0
  %1825 = vmatpush.msra.mxu0 0.0
  %1826 = vmatpush.msra.mxu0 0.0
  %1827 = vmatpush.msra.mxu0 0.0
  %1828 = vmatpush.msra.mxu0 0.0
  %1829 = vmatpush.msra.mxu0 0.0
  %1830 = vmatpush.msra.mxu0 0.0
  %1831 = vmatpush.msra.mxu0 0.0
  %1832 = vmatpush.msra.mxu0 0.0
  %1833 = vmatpush.msra.mxu0 0.0
  %1834 = vmatpush.msra.mxu0 %v1800
  %1835 = vmatpush.msra.mxu0 %v1790
  %1836 = vmatpush.msra.mxu0 %v1788
  %1837 = vmatpush.msra.mxu0 %v1786
  %1838 = vmatmul.f32.gmra.mxu0 %v1794
  %v1839 = vpop.f32.mrf.mxu0
  %v1840 = vadd.f32 0.0, %v1839
  %1841 = vdwg.mxu0
  %v1843 = vsel %vm385, %v1363, 0
  %v1846 = vsel %vm78, %v1461, 0
  %v1849 = vsel %vm78, %v1462, 0
  %1851 = vmatpush.msra.mxu0 0.0
  %1852 = vmatpush.msra.mxu0 0.0
  %1853 = vmatpush.msra.mxu0 0.0
  %1854 = vmatpush.msra.mxu0 0.0
  %1855 = vmatpush.msra.mxu0 0.0
  %1856 = vmatpush.msra.mxu0 0.0
  %1857 = vmatpush.msra.mxu0 0.0
  %1858 = vmatpush.msra.mxu0 0.0
  %1859 = vmatpush.msra.mxu0 0.0
  %1860 = vmatpush.msra.mxu0 0.0
  %1861 = vmatpush.msra.mxu0 0.0
  %1862 = vmatpush.msra.mxu0 0.0
  %1863 = vmatpush.msra.mxu0 %v1846
  %1864 = vmatpush.msra.mxu0 %v1459
  %1865 = vmatpush.msra.mxu0 %v1457
  %1866 = vmatpush.msra.mxu0 %v1455
  %1867 = vmatmul.f32.gmra.mxu0 %v1843
  %v1868 = vpop.f32.mrf.mxu0
  %v1869 = vadd.f32 %v1820, %v1868
  %1870 = vdwg.mxu0
  %1871 = vmatpush.msra.mxu0 0.0
  %1872 = vmatpush.msra.mxu0 0.0
  %1873 = vmatpush.msra.mxu0 0.0
  %1874 = vmatpush.msra.mxu0 0.0
  %1875 = vmatpush.msra.mxu0 0.0
  %1876 = vmatpush.msra.mxu0 0.0
  %1877 = vmatpush.msra.mxu0 0.0
  %1878 = vmatpush.msra.mxu0 0.0
  %1879 = vmatpush.msra.mxu0 0.0
  %1880 = vmatpush.msra.mxu0 0.0
  %1881 = vmatpush.msra.mxu0 0.0
  %1882 = vmatpush.msra.mxu0 0.0
  %1883 = vmatpush.msra.mxu0 %v1849
  %1884 = vmatpush.msra.mxu0 %v1460
  %1885 = vmatpush.msra.mxu0 %v1458
  %1886 = vmatpush.msra.mxu0 %v1456
  %1887 = vmatmul.f32.gmra.mxu0 %v1843
  %v1888 = vpop.f32.mrf.mxu0
  %v1889 = vadd.f32 %v1840, %v1888
  %1890 = vdwg.mxu0
  %s1891 = scalar_lea.vmem %s13, 512
  %v1892 = vld [vmem:[%s1891] sm:$0xff]
  %v1893 = vld [vmem:[%s1891 + $0x8] sm:$0xff]
  %v1894 = vld [vmem:[%s1891 + $0x10] sm:$0xff]
  %v1895 = vld [vmem:[%s1891 + $0x18] sm:$0xff]
  %v1896 = vld [vmem:[%s1891 + $0x20] sm:$0xff]
  %v1897 = vld [vmem:[%s1891 + $0x28] sm:$0xff]
  %v1898 = vld [vmem:[%s1891 + $0x30] sm:$0x1]
  %v1899 = vld [vmem:[%s1891 + $0x38] sm:$0x1]
  %v1901 = vsel %vm385, %v1378, 0
  %v1904 = vsel %vm78, %v1898, 0
  %v1907 = vsel %vm78, %v1899, 0
  %1909 = vmatpush.msra.mxu0 0.0
  %1910 = vmatpush.msra.mxu0 0.0
  %1911 = vmatpush.msra.mxu0 0.0
  %1912 = vmatpush.msra.mxu0 0.0
  %1913 = vmatpush.msra.mxu0 0.0
  %1914 = vmatpush.msra.mxu0 0.0
  %1915 = vmatpush.msra.mxu0 0.0
  %1916 = vmatpush.msra.mxu0 0.0
  %1917 = vmatpush.msra.mxu0 0.0
  %1918 = vmatpush.msra.mxu0 0.0
  %1919 = vmatpush.msra.mxu0 0.0
  %1920 = vmatpush.msra.mxu0 0.0
  %1921 = vmatpush.msra.mxu0 %v1904
  %1922 = vmatpush.msra.mxu0 %v1896
  %1923 = vmatpush.msra.mxu0 %v1894
  %1924 = vmatpush.msra.mxu0 %v1892
  %1925 = vmatmul.f32.gmra.mxu0 %v1901
  %v1926 = vpop.f32.mrf.mxu0
  %v1927 = vadd.f32 0.0, %v1926
  %1928 = vdwg.mxu0
  %1929 = vmatpush.msra.mxu0 0.0
  %1930 = vmatpush.msra.mxu0 0.0
  %1931 = vmatpush.msra.mxu0 0.0
  %1932 = vmatpush.msra.mxu0 0.0
  %1933 = vmatpush.msra.mxu0 0.0
  %1934 = vmatpush.msra.mxu0 0.0
  %1935 = vmatpush.msra.mxu0 0.0
  %1936 = vmatpush.msra.mxu0 0.0
  %1937 = vmatpush.msra.mxu0 0.0
  %1938 = vmatpush.msra.mxu0 0.0
  %1939 = vmatpush.msra.mxu0 0.0
  %1940 = vmatpush.msra.mxu0 0.0
  %1941 = vmatpush.msra.mxu0 %v1907
  %1942 = vmatpush.msra.mxu0 %v1897
  %1943 = vmatpush.msra.mxu0 %v1895
  %1944 = vmatpush.msra.mxu0 %v1893
  %1945 = vmatmul.f32.gmra.mxu0 %v1901
  %v1946 = vpop.f32.mrf.mxu0
  %v1947 = vadd.f32 0.0, %v1946
  %1948 = vdwg.mxu0
  %v1949 = vadd.f32 %v1548, %v1927
  %v1950 = vadd.f32 %v1568, %v1947
  %s1951 = scalar_lea.vmem %s13, 576
  %v1952 = vld [vmem:[%s1951] sm:$0xff]
  %v1953 = vld [vmem:[%s1951 + $0x8] sm:$0xff]
  %v1954 = vld [vmem:[%s1951 + $0x10] sm:$0xff]
  %v1955 = vld [vmem:[%s1951 + $0x18] sm:$0xff]
  %v1956 = vld [vmem:[%s1951 + $0x20] sm:$0xff]
  %v1957 = vld [vmem:[%s1951 + $0x28] sm:$0xff]
  %v1958 = vld [vmem:[%s1951 + $0x30] sm:$0x1]
  %v1959 = vld [vmem:[%s1951 + $0x38] sm:$0x1]
  %v1961 = vsel %vm385, %v1381, 0
  %v1964 = vsel %vm78, %v1958, 0
  %v1967 = vsel %vm78, %v1959, 0
  %1969 = vmatpush.msra.mxu0 0.0
  %1970 = vmatpush.msra.mxu0 0.0
  %1971 = vmatpush.msra.mxu0 0.0
  %1972 = vmatpush.msra.mxu0 0.0
  %1973 = vmatpush.msra.mxu0 0.0
  %1974 = vmatpush.msra.mxu0 0.0
  %1975 = vmatpush.msra.mxu0 0.0
  %1976 = vmatpush.msra.mxu0 0.0
  %1977 = vmatpush.msra.mxu0 0.0
  %1978 = vmatpush.msra.mxu0 0.0
  %1979 = vmatpush.msra.mxu0 0.0
  %1980 = vmatpush.msra.mxu0 0.0
  %1981 = vmatpush.msra.mxu0 %v1964
  %1982 = vmatpush.msra.mxu0 %v1956
  %1983 = vmatpush.msra.mxu0 %v1954
  %1984 = vmatpush.msra.mxu0 %v1952
  %1985 = vmatmul.f32.gmra.mxu0 %v1961
  %v1986 = vpop.f32.mrf.mxu0
  %v1987 = vadd.f32 0.0, %v1986
  %1988 = vdwg.mxu0
  %1989 = vmatpush.msra.mxu0 0.0
  %1990 = vmatpush.msra.mxu0 0.0
  %1991 = vmatpush.msra.mxu0 0.0
  %1992 = vmatpush.msra.mxu0 0.0
  %1993 = vmatpush.msra.mxu0 0.0
  %1994 = vmatpush.msra.mxu0 0.0
  %1995 = vmatpush.msra.mxu0 0.0
  %1996 = vmatpush.msra.mxu0 0.0
  %1997 = vmatpush.msra.mxu0 0.0
  %1998 = vmatpush.msra.mxu0 0.0
  %1999 = vmatpush.msra.mxu0 0.0
  %2000 = vmatpush.msra.mxu0 0.0
  %2001 = vmatpush.msra.mxu0 %v1967
  %2002 = vmatpush.msra.mxu0 %v1957
  %2003 = vmatpush.msra.mxu0 %v1955
  %2004 = vmatpush.msra.mxu0 %v1953
  %2005 = vmatmul.f32.gmra.mxu0 %v1961
  %v2006 = vpop.f32.mrf.mxu0
  %v2007 = vadd.f32 0.0, %v2006
  %2008 = vdwg.mxu0
  %v2009 = vadd.f32 %v1655, %v1987
  %v2010 = vadd.f32 %v1675, %v2007
  %s2011 = scalar_lea.vmem %s13, 640
  %v2012 = vld [vmem:[%s2011] sm:$0xff]
  %v2013 = vld [vmem:[%s2011 + $0x8] sm:$0xff]
  %v2014 = vld [vmem:[%s2011 + $0x10] sm:$0xff]
  %v2015 = vld [vmem:[%s2011 + $0x18] sm:$0xff]
  %v2016 = vld [vmem:[%s2011 + $0x20] sm:$0xff]
  %v2017 = vld [vmem:[%s2011 + $0x28] sm:$0xff]
  %v2018 = vld [vmem:[%s2011 + $0x30] sm:$0x1]
  %v2019 = vld [vmem:[%s2011 + $0x38] sm:$0x1]
  %v2021 = vsel %vm385, %v1384, 0
  %v2024 = vsel %vm78, %v2018, 0
  %v2027 = vsel %vm78, %v2019, 0
  %2029 = vmatpush.msra.mxu0 0.0
  %2030 = vmatpush.msra.mxu0 0.0
  %2031 = vmatpush.msra.mxu0 0.0
  %2032 = vmatpush.msra.mxu0 0.0
  %2033 = vmatpush.msra.mxu0 0.0
  %2034 = vmatpush.msra.mxu0 0.0
  %2035 = vmatpush.msra.mxu0 0.0
  %2036 = vmatpush.msra.mxu0 0.0
  %2037 = vmatpush.msra.mxu0 0.0
  %2038 = vmatpush.msra.mxu0 0.0
  %2039 = vmatpush.msra.mxu0 0.0
  %2040 = vmatpush.msra.mxu0 0.0
  %2041 = vmatpush.msra.mxu0 %v2024
  %2042 = vmatpush.msra.mxu0 %v2016
  %2043 = vmatpush.msra.mxu0 %v2014
  %2044 = vmatpush.msra.mxu0 %v2012
  %2045 = vmatmul.f32.gmra.mxu0 %v2021
  %v2046 = vpop.f32.mrf.mxu0
  %v2047 = vadd.f32 0.0, %v2046
  %2048 = vdwg.mxu0
  %2049 = vmatpush.msra.mxu0 0.0
  %2050 = vmatpush.msra.mxu0 0.0
  %2051 = vmatpush.msra.mxu0 0.0
  %2052 = vmatpush.msra.mxu0 0.0
  %2053 = vmatpush.msra.mxu0 0.0
  %2054 = vmatpush.msra.mxu0 0.0
  %2055 = vmatpush.msra.mxu0 0.0
  %2056 = vmatpush.msra.mxu0 0.0
  %2057 = vmatpush.msra.mxu0 0.0
  %2058 = vmatpush.msra.mxu0 0.0
  %2059 = vmatpush.msra.mxu0 0.0
  %2060 = vmatpush.msra.mxu0 0.0
  %2061 = vmatpush.msra.mxu0 %v2027
  %2062 = vmatpush.msra.mxu0 %v2017
  %2063 = vmatpush.msra.mxu0 %v2015
  %2064 = vmatpush.msra.mxu0 %v2013
  %2065 = vmatmul.f32.gmra.mxu0 %v2021
  %v2066 = vpop.f32.mrf.mxu0
  %v2067 = vadd.f32 0.0, %v2066
  %2068 = vdwg.mxu0
  %v2069 = vadd.f32 %v1762, %v2047
  %v2070 = vadd.f32 %v1782, %v2067
  %s2071 = scalar_lea.vmem %s13, 704
  %v2072 = vld [vmem:[%s2071] sm:$0xff]
  %v2073 = vld [vmem:[%s2071 + $0x8] sm:$0xff]
  %v2074 = vld [vmem:[%s2071 + $0x10] sm:$0xff]
  %v2075 = vld [vmem:[%s2071 + $0x18] sm:$0xff]
  %v2076 = vld [vmem:[%s2071 + $0x20] sm:$0xff]
  %v2077 = vld [vmem:[%s2071 + $0x28] sm:$0xff]
  %v2078 = vld [vmem:[%s2071 + $0x30] sm:$0x1]
  %v2079 = vld [vmem:[%s2071 + $0x38] sm:$0x1]
  %v2081 = vsel %vm385, %v1387, 0
  %v2084 = vsel %vm78, %v2078, 0
  %v2087 = vsel %vm78, %v2079, 0
  %2089 = vmatpush.msra.mxu0 0.0
  %2090 = vmatpush.msra.mxu0 0.0
  %2091 = vmatpush.msra.mxu0 0.0
  %2092 = vmatpush.msra.mxu0 0.0
  %2093 = vmatpush.msra.mxu0 0.0
  %2094 = vmatpush.msra.mxu0 0.0
  %2095 = vmatpush.msra.mxu0 0.0
  %2096 = vmatpush.msra.mxu0 0.0
  %2097 = vmatpush.msra.mxu0 0.0
  %2098 = vmatpush.msra.mxu0 0.0
  %2099 = vmatpush.msra.mxu0 0.0
  %2100 = vmatpush.msra.mxu0 0.0
  %2101 = vmatpush.msra.mxu0 %v2084
  %2102 = vmatpush.msra.mxu0 %v2076
  %2103 = vmatpush.msra.mxu0 %v2074
  %2104 = vmatpush.msra.mxu0 %v2072
  %2105 = vmatmul.f32.gmra.mxu0 %v2081
  %v2106 = vpop.f32.mrf.mxu0
  %v2107 = vadd.f32 0.0, %v2106
  %2108 = vdwg.mxu0
  %2109 = vmatpush.msra.mxu0 0.0
  %2110 = vmatpush.msra.mxu0 0.0
  %2111 = vmatpush.msra.mxu0 0.0
  %2112 = vmatpush.msra.mxu0 0.0
  %2113 = vmatpush.msra.mxu0 0.0
  %2114 = vmatpush.msra.mxu0 0.0
  %2115 = vmatpush.msra.mxu0 0.0
  %2116 = vmatpush.msra.mxu0 0.0
  %2117 = vmatpush.msra.mxu0 0.0
  %2118 = vmatpush.msra.mxu0 0.0
  %2119 = vmatpush.msra.mxu0 0.0
  %2120 = vmatpush.msra.mxu0 0.0
  %2121 = vmatpush.msra.mxu0 %v2087
  %2122 = vmatpush.msra.mxu0 %v2077
  %2123 = vmatpush.msra.mxu0 %v2075
  %2124 = vmatpush.msra.mxu0 %v2073
  %2125 = vmatmul.f32.gmra.mxu0 %v2081
  %v2126 = vpop.f32.mrf.mxu0
  %v2127 = vadd.f32 0.0, %v2126
  %2128 = vdwg.mxu0
  %v2129 = vadd.f32 %v1869, %v2107
  %v2130 = vadd.f32 %v1889, %v2127
  %s2131 = scalar_lea.vmem %s13, 768
  %v2132 = vld [vmem:[%s2131] sm:$0xff]
  %v2133 = vld [vmem:[%s2131 + $0x8] sm:$0xff]
  %v2134 = vld [vmem:[%s2131 + $0x10] sm:$0xff]
  %v2135 = vld [vmem:[%s2131 + $0x18] sm:$0xff]
  %v2136 = vld [vmem:[%s2131 + $0x20] sm:$0xff]
  %v2137 = vld [vmem:[%s2131 + $0x28] sm:$0xff]
  %v2138 = vld [vmem:[%s2131 + $0x30] sm:$0x1]
  %v2139 = vld [vmem:[%s2131 + $0x38] sm:$0x1]
  %v2141 = vsel %vm385, %v1390, 0
  %v2144 = vsel %vm78, %v2138, 0
  %v2147 = vsel %vm78, %v2139, 0
  %2149 = vmatpush.msra.mxu0 0.0
  %2150 = vmatpush.msra.mxu0 0.0
  %2151 = vmatpush.msra.mxu0 0.0
  %2152 = vmatpush.msra.mxu0 0.0
  %2153 = vmatpush.msra.mxu0 0.0
  %2154 = vmatpush.msra.mxu0 0.0
  %2155 = vmatpush.msra.mxu0 0.0
  %2156 = vmatpush.msra.mxu0 0.0
  %2157 = vmatpush.msra.mxu0 0.0
  %2158 = vmatpush.msra.mxu0 0.0
  %2159 = vmatpush.msra.mxu0 0.0
  %2160 = vmatpush.msra.mxu0 0.0
  %2161 = vmatpush.msra.mxu0 %v2144
  %2162 = vmatpush.msra.mxu0 %v2136
  %2163 = vmatpush.msra.mxu0 %v2134
  %2164 = vmatpush.msra.mxu0 %v2132
  %2165 = vmatmul.f32.gmra.mxu0 %v2141
  %v2166 = vpop.f32.mrf.mxu0
  %v2167 = vadd.f32 0.0, %v2166
  %2168 = vdwg.mxu0
  %2169 = vmatpush.msra.mxu0 0.0
  %2170 = vmatpush.msra.mxu0 0.0
  %2171 = vmatpush.msra.mxu0 0.0
  %2172 = vmatpush.msra.mxu0 0.0
  %2173 = vmatpush.msra.mxu0 0.0
  %2174 = vmatpush.msra.mxu0 0.0
  %2175 = vmatpush.msra.mxu0 0.0
  %2176 = vmatpush.msra.mxu0 0.0
  %2177 = vmatpush.msra.mxu0 0.0
  %2178 = vmatpush.msra.mxu0 0.0
  %2179 = vmatpush.msra.mxu0 0.0
  %2180 = vmatpush.msra.mxu0 0.0
  %2181 = vmatpush.msra.mxu0 %v2147
  %2182 = vmatpush.msra.mxu0 %v2137
  %2183 = vmatpush.msra.mxu0 %v2135
  %2184 = vmatpush.msra.mxu0 %v2133
  %2185 = vmatmul.f32.gmra.mxu0 %v2141
  %v2186 = vpop.f32.mrf.mxu0
  %v2187 = vadd.f32 0.0, %v2186
  %2188 = vdwg.mxu0
  %v2189 = vadd.f32 %v1949, %v2167
  %v2190 = vadd.f32 %v1950, %v2187
  %s2191 = scalar_lea.vmem %s13, 832
  %v2192 = vld [vmem:[%s2191] sm:$0xff]
  %v2193 = vld [vmem:[%s2191 + $0x8] sm:$0xff]
  %v2194 = vld [vmem:[%s2191 + $0x10] sm:$0xff]
  %v2195 = vld [vmem:[%s2191 + $0x18] sm:$0xff]
  %v2196 = vld [vmem:[%s2191 + $0x20] sm:$0xff]
  %v2197 = vld [vmem:[%s2191 + $0x28] sm:$0xff]
  %v2198 = vld [vmem:[%s2191 + $0x30] sm:$0x1]
  %v2199 = vld [vmem:[%s2191 + $0x38] sm:$0x1]
  %v2201 = vsel %vm385, %v1393, 0
  %v2204 = vsel %vm78, %v2198, 0
  %v2207 = vsel %vm78, %v2199, 0
  %2209 = vmatpush.msra.mxu0 0.0
  %2210 = vmatpush.msra.mxu0 0.0
  %2211 = vmatpush.msra.mxu0 0.0
  %2212 = vmatpush.msra.mxu0 0.0
  %2213 = vmatpush.msra.mxu0 0.0
  %2214 = vmatpush.msra.mxu0 0.0
  %2215 = vmatpush.msra.mxu0 0.0
  %2216 = vmatpush.msra.mxu0 0.0
  %2217 = vmatpush.msra.mxu0 0.0
  %2218 = vmatpush.msra.mxu0 0.0
  %2219 = vmatpush.msra.mxu0 0.0
  %2220 = vmatpush.msra.mxu0 0.0
  %2221 = vmatpush.msra.mxu0 %v2204
  %2222 = vmatpush.msra.mxu0 %v2196
  %2223 = vmatpush.msra.mxu0 %v2194
  %2224 = vmatpush.msra.mxu0 %v2192
  %2225 = vmatmul.f32.gmra.mxu0 %v2201
  %v2226 = vpop.f32.mrf.mxu0
  %v2227 = vadd.f32 0.0, %v2226
  %2228 = vdwg.mxu0
  %2229 = vmatpush.msra.mxu0 0.0
  %2230 = vmatpush.msra.mxu0 0.0
  %2231 = vmatpush.msra.mxu0 0.0
  %2232 = vmatpush.msra.mxu0 0.0
  %2233 = vmatpush.msra.mxu0 0.0
  %2234 = vmatpush.msra.mxu0 0.0
  %2235 = vmatpush.msra.mxu0 0.0
  %2236 = vmatpush.msra.mxu0 0.0
  %2237 = vmatpush.msra.mxu0 0.0
  %2238 = vmatpush.msra.mxu0 0.0
  %2239 = vmatpush.msra.mxu0 0.0
  %2240 = vmatpush.msra.mxu0 0.0
  %2241 = vmatpush.msra.mxu0 %v2207
  %2242 = vmatpush.msra.mxu0 %v2197
  %2243 = vmatpush.msra.mxu0 %v2195
  %2244 = vmatpush.msra.mxu0 %v2193
  %2245 = vmatmul.f32.gmra.mxu0 %v2201
  %v2246 = vpop.f32.mrf.mxu0
  %v2247 = vadd.f32 0.0, %v2246
  %2248 = vdwg.mxu0
  %v2249 = vadd.f32 %v2009, %v2227
  %v2250 = vadd.f32 %v2010, %v2247
  %s2251 = scalar_lea.vmem %s13, 896
  %v2252 = vld [vmem:[%s2251] sm:$0xff]
  %v2253 = vld [vmem:[%s2251 + $0x8] sm:$0xff]
  %v2254 = vld [vmem:[%s2251 + $0x10] sm:$0xff]
  %v2255 = vld [vmem:[%s2251 + $0x18] sm:$0xff]
  %v2256 = vld [vmem:[%s2251 + $0x20] sm:$0xff]
  %v2257 = vld [vmem:[%s2251 + $0x28] sm:$0xff]
  %v2258 = vld [vmem:[%s2251 + $0x30] sm:$0x1]
  %v2259 = vld [vmem:[%s2251 + $0x38] sm:$0x1]
  %v2261 = vsel %vm385, %v1396, 0
  %v2264 = vsel %vm78, %v2258, 0
  %v2267 = vsel %vm78, %v2259, 0
  %2269 = vmatpush.msra.mxu0 0.0
  %2270 = vmatpush.msra.mxu0 0.0
  %2271 = vmatpush.msra.mxu0 0.0
  %2272 = vmatpush.msra.mxu0 0.0
  %2273 = vmatpush.msra.mxu0 0.0
  %2274 = vmatpush.msra.mxu0 0.0
  %2275 = vmatpush.msra.mxu0 0.0
  %2276 = vmatpush.msra.mxu0 0.0
  %2277 = vmatpush.msra.mxu0 0.0
  %2278 = vmatpush.msra.mxu0 0.0
  %2279 = vmatpush.msra.mxu0 0.0
  %2280 = vmatpush.msra.mxu0 0.0
  %2281 = vmatpush.msra.mxu0 %v2264
  %2282 = vmatpush.msra.mxu0 %v2256
  %2283 = vmatpush.msra.mxu0 %v2254
  %2284 = vmatpush.msra.mxu0 %v2252
  %2285 = vmatmul.f32.gmra.mxu0 %v2261
  %v2286 = vpop.f32.mrf.mxu0
  %v2287 = vadd.f32 0.0, %v2286
  %2288 = vdwg.mxu0
  %2289 = vmatpush.msra.mxu0 0.0
  %2290 = vmatpush.msra.mxu0 0.0
  %2291 = vmatpush.msra.mxu0 0.0
  %2292 = vmatpush.msra.mxu0 0.0
  %2293 = vmatpush.msra.mxu0 0.0
  %2294 = vmatpush.msra.mxu0 0.0
  %2295 = vmatpush.msra.mxu0 0.0
  %2296 = vmatpush.msra.mxu0 0.0
  %2297 = vmatpush.msra.mxu0 0.0
  %2298 = vmatpush.msra.mxu0 0.0
  %2299 = vmatpush.msra.mxu0 0.0
  %2300 = vmatpush.msra.mxu0 0.0
  %2301 = vmatpush.msra.mxu0 %v2267
  %2302 = vmatpush.msra.mxu0 %v2257
  %2303 = vmatpush.msra.mxu0 %v2255
  %2304 = vmatpush.msra.mxu0 %v2253
  %2305 = vmatmul.f32.gmra.mxu0 %v2261
  %v2306 = vpop.f32.mrf.mxu0
  %v2307 = vadd.f32 0.0, %v2306
  %2308 = vdwg.mxu0
  %v2309 = vadd.f32 %v2069, %v2287
  %v2310 = vadd.f32 %v2070, %v2307
  %s2311 = scalar_lea.vmem %s13, 960
  %v2312 = vld [vmem:[%s2311] sm:$0xff]
  %v2313 = vld [vmem:[%s2311 + $0x8] sm:$0xff]
  %v2314 = vld [vmem:[%s2311 + $0x10] sm:$0xff]
  %v2315 = vld [vmem:[%s2311 + $0x18] sm:$0xff]
  %v2316 = vld [vmem:[%s2311 + $0x20] sm:$0xff]
  %v2317 = vld [vmem:[%s2311 + $0x28] sm:$0xff]
  %v2318 = vld [vmem:[%s2311 + $0x30] sm:$0x1]
  %v2319 = vld [vmem:[%s2311 + $0x38] sm:$0x1]
  %v2321 = vsel %vm385, %v1399, 0
  %v2324 = vsel %vm78, %v2318, 0
  %v2327 = vsel %vm78, %v2319, 0
  %2329 = vmatpush.msra.mxu0 0.0
  %2330 = vmatpush.msra.mxu0 0.0
  %2331 = vmatpush.msra.mxu0 0.0
  %2332 = vmatpush.msra.mxu0 0.0
  %2333 = vmatpush.msra.mxu0 0.0
  %2334 = vmatpush.msra.mxu0 0.0
  %2335 = vmatpush.msra.mxu0 0.0
  %2336 = vmatpush.msra.mxu0 0.0
  %2337 = vmatpush.msra.mxu0 0.0
  %2338 = vmatpush.msra.mxu0 0.0
  %2339 = vmatpush.msra.mxu0 0.0
  %2340 = vmatpush.msra.mxu0 0.0
  %2341 = vmatpush.msra.mxu0 %v2324
  %2342 = vmatpush.msra.mxu0 %v2316
  %2343 = vmatpush.msra.mxu0 %v2314
  %2344 = vmatpush.msra.mxu0 %v2312
  %2345 = vmatmul.f32.gmra.mxu0 %v2321
  %v2346 = vpop.f32.mrf.mxu0
  %v2347 = vadd.f32 0.0, %v2346
  %2348 = vdwg.mxu0
  %2349 = vmatpush.msra.mxu0 0.0
  %2350 = vmatpush.msra.mxu0 0.0
  %2351 = vmatpush.msra.mxu0 0.0
  %2352 = vmatpush.msra.mxu0 0.0
  %2353 = vmatpush.msra.mxu0 0.0
  %2354 = vmatpush.msra.mxu0 0.0
  %2355 = vmatpush.msra.mxu0 0.0
  %2356 = vmatpush.msra.mxu0 0.0
  %2357 = vmatpush.msra.mxu0 0.0
  %2358 = vmatpush.msra.mxu0 0.0
  %2359 = vmatpush.msra.mxu0 0.0
  %2360 = vmatpush.msra.mxu0 0.0
  %2361 = vmatpush.msra.mxu0 %v2327
  %2362 = vmatpush.msra.mxu0 %v2317
  %2363 = vmatpush.msra.mxu0 %v2315
  %2364 = vmatpush.msra.mxu0 %v2313
  %2365 = vmatmul.f32.gmra.mxu0 %v2321
  %v2366 = vpop.f32.mrf.mxu0
  %v2367 = vadd.f32 0.0, %v2366
  %2368 = vdwg.mxu0
  %v2369 = vadd.f32 %v2129, %v2347
  %v2370 = vadd.f32 %v2130, %v2367
  %s2371 = scalar_lea.vmem %s13, 1024
  %v2372 = vld [vmem:[%s2371] sm:$0xff]
  %v2373 = vld [vmem:[%s2371 + $0x8] sm:$0xff]
  %v2374 = vld [vmem:[%s2371 + $0x10] sm:$0xff]
  %v2375 = vld [vmem:[%s2371 + $0x18] sm:$0xff]
  %v2376 = vld [vmem:[%s2371 + $0x20] sm:$0xff]
  %v2377 = vld [vmem:[%s2371 + $0x28] sm:$0xff]
  %v2378 = vld [vmem:[%s2371 + $0x30] sm:$0x1]
  %v2379 = vld [vmem:[%s2371 + $0x38] sm:$0x1]
  %v2381 = vsel %vm385, %v1402, 0
  %v2384 = vsel %vm78, %v2378, 0
  %v2387 = vsel %vm78, %v2379, 0
  %2389 = vmatpush.msra.mxu0 0.0
  %2390 = vmatpush.msra.mxu0 0.0
  %2391 = vmatpush.msra.mxu0 0.0
  %2392 = vmatpush.msra.mxu0 0.0
  %2393 = vmatpush.msra.mxu0 0.0
  %2394 = vmatpush.msra.mxu0 0.0
  %2395 = vmatpush.msra.mxu0 0.0
  %2396 = vmatpush.msra.mxu0 0.0
  %2397 = vmatpush.msra.mxu0 0.0
  %2398 = vmatpush.msra.mxu0 0.0
  %2399 = vmatpush.msra.mxu0 0.0
  %2400 = vmatpush.msra.mxu0 0.0
  %2401 = vmatpush.msra.mxu0 %v2384
  %2402 = vmatpush.msra.mxu0 %v2376
  %2403 = vmatpush.msra.mxu0 %v2374
  %2404 = vmatpush.msra.mxu0 %v2372
  %2405 = vmatmul.f32.gmra.mxu0 %v2381
  %v2406 = vpop.f32.mrf.mxu0
  %v2407 = vadd.f32 0.0, %v2406
  %2408 = vdwg.mxu0
  %2409 = vmatpush.msra.mxu0 0.0
  %2410 = vmatpush.msra.mxu0 0.0
  %2411 = vmatpush.msra.mxu0 0.0
  %2412 = vmatpush.msra.mxu0 0.0
  %2413 = vmatpush.msra.mxu0 0.0
  %2414 = vmatpush.msra.mxu0 0.0
  %2415 = vmatpush.msra.mxu0 0.0
  %2416 = vmatpush.msra.mxu0 0.0
  %2417 = vmatpush.msra.mxu0 0.0
  %2418 = vmatpush.msra.mxu0 0.0
  %2419 = vmatpush.msra.mxu0 0.0
  %2420 = vmatpush.msra.mxu0 0.0
  %2421 = vmatpush.msra.mxu0 %v2387
  %2422 = vmatpush.msra.mxu0 %v2377
  %2423 = vmatpush.msra.mxu0 %v2375
  %2424 = vmatpush.msra.mxu0 %v2373
  %2425 = vmatmul.f32.gmra.mxu0 %v2381
  %v2426 = vpop.f32.mrf.mxu0
  %v2427 = vadd.f32 0.0, %v2426
  %2428 = vdwg.mxu0
  %v2429 = vadd.f32 %v2189, %v2407
  %v2430 = vadd.f32 %v2190, %v2427
  %s2431 = scalar_lea.vmem %s13, 1088
  %v2432 = vld [vmem:[%s2431] sm:$0xff]
  %v2433 = vld [vmem:[%s2431 + $0x8] sm:$0xff]
  %v2434 = vld [vmem:[%s2431 + $0x10] sm:$0xff]
  %v2435 = vld [vmem:[%s2431 + $0x18] sm:$0xff]
  %v2436 = vld [vmem:[%s2431 + $0x20] sm:$0xff]
  %v2437 = vld [vmem:[%s2431 + $0x28] sm:$0xff]
  %v2438 = vld [vmem:[%s2431 + $0x30] sm:$0x1]
  %v2439 = vld [vmem:[%s2431 + $0x38] sm:$0x1]
  %v2441 = vsel %vm385, %v1405, 0
  %v2444 = vsel %vm78, %v2438, 0
  %v2447 = vsel %vm78, %v2439, 0
  %2449 = vmatpush.msra.mxu0 0.0
  %2450 = vmatpush.msra.mxu0 0.0
  %2451 = vmatpush.msra.mxu0 0.0
  %2452 = vmatpush.msra.mxu0 0.0
  %2453 = vmatpush.msra.mxu0 0.0
  %2454 = vmatpush.msra.mxu0 0.0
  %2455 = vmatpush.msra.mxu0 0.0
  %2456 = vmatpush.msra.mxu0 0.0
  %2457 = vmatpush.msra.mxu0 0.0
  %2458 = vmatpush.msra.mxu0 0.0
  %2459 = vmatpush.msra.mxu0 0.0
  %2460 = vmatpush.msra.mxu0 0.0
  %2461 = vmatpush.msra.mxu0 %v2444
  %2462 = vmatpush.msra.mxu0 %v2436
  %2463 = vmatpush.msra.mxu0 %v2434
  %2464 = vmatpush.msra.mxu0 %v2432
  %2465 = vmatmul.f32.gmra.mxu0 %v2441
  %v2466 = vpop.f32.mrf.mxu0
  %v2467 = vadd.f32 0.0, %v2466
  %2468 = vdwg.mxu0
  %2469 = vmatpush.msra.mxu0 0.0
  %2470 = vmatpush.msra.mxu0 0.0
  %2471 = vmatpush.msra.mxu0 0.0
  %2472 = vmatpush.msra.mxu0 0.0
  %2473 = vmatpush.msra.mxu0 0.0
  %2474 = vmatpush.msra.mxu0 0.0
  %2475 = vmatpush.msra.mxu0 0.0
  %2476 = vmatpush.msra.mxu0 0.0
  %2477 = vmatpush.msra.mxu0 0.0
  %2478 = vmatpush.msra.mxu0 0.0
  %2479 = vmatpush.msra.mxu0 0.0
  %2480 = vmatpush.msra.mxu0 0.0
  %2481 = vmatpush.msra.mxu0 %v2447
  %2482 = vmatpush.msra.mxu0 %v2437
  %2483 = vmatpush.msra.mxu0 %v2435
  %2484 = vmatpush.msra.mxu0 %v2433
  %2485 = vmatmul.f32.gmra.mxu0 %v2441
  %v2486 = vpop.f32.mrf.mxu0
  %v2487 = vadd.f32 0.0, %v2486
  %2488 = vdwg.mxu0
  %v2489 = vadd.f32 %v2249, %v2467
  %v2490 = vadd.f32 %v2250, %v2487
  %s2491 = scalar_lea.vmem %s13, 1152
  %v2492 = vld [vmem:[%s2491] sm:$0xff]
  %v2493 = vld [vmem:[%s2491 + $0x8] sm:$0xff]
  %v2494 = vld [vmem:[%s2491 + $0x10] sm:$0xff]
  %v2495 = vld [vmem:[%s2491 + $0x18] sm:$0xff]
  %v2496 = vld [vmem:[%s2491 + $0x20] sm:$0xff]
  %v2497 = vld [vmem:[%s2491 + $0x28] sm:$0xff]
  %v2498 = vld [vmem:[%s2491 + $0x30] sm:$0x1]
  %v2499 = vld [vmem:[%s2491 + $0x38] sm:$0x1]
  %v2501 = vsel %vm385, %v1408, 0
  %v2504 = vsel %vm78, %v2498, 0
  %v2507 = vsel %vm78, %v2499, 0
  %2509 = vmatpush.msra.mxu0 0.0
  %2510 = vmatpush.msra.mxu0 0.0
  %2511 = vmatpush.msra.mxu0 0.0
  %2512 = vmatpush.msra.mxu0 0.0
  %2513 = vmatpush.msra.mxu0 0.0
  %2514 = vmatpush.msra.mxu0 0.0
  %2515 = vmatpush.msra.mxu0 0.0
  %2516 = vmatpush.msra.mxu0 0.0
  %2517 = vmatpush.msra.mxu0 0.0
  %2518 = vmatpush.msra.mxu0 0.0
  %2519 = vmatpush.msra.mxu0 0.0
  %2520 = vmatpush.msra.mxu0 0.0
  %2521 = vmatpush.msra.mxu0 %v2504
  %2522 = vmatpush.msra.mxu0 %v2496
  %2523 = vmatpush.msra.mxu0 %v2494
  %2524 = vmatpush.msra.mxu0 %v2492
  %2525 = vmatmul.f32.gmra.mxu0 %v2501
  %v2526 = vpop.f32.mrf.mxu0
  %v2527 = vadd.f32 0.0, %v2526
  %2528 = vdwg.mxu0
  %2529 = vmatpush.msra.mxu0 0.0
  %2530 = vmatpush.msra.mxu0 0.0
  %2531 = vmatpush.msra.mxu0 0.0
  %2532 = vmatpush.msra.mxu0 0.0
  %2533 = vmatpush.msra.mxu0 0.0
  %2534 = vmatpush.msra.mxu0 0.0
  %2535 = vmatpush.msra.mxu0 0.0
  %2536 = vmatpush.msra.mxu0 0.0
  %2537 = vmatpush.msra.mxu0 0.0
  %2538 = vmatpush.msra.mxu0 0.0
  %2539 = vmatpush.msra.mxu0 0.0
  %2540 = vmatpush.msra.mxu0 0.0
  %2541 = vmatpush.msra.mxu0 %v2507
  %2542 = vmatpush.msra.mxu0 %v2497
  %2543 = vmatpush.msra.mxu0 %v2495
  %2544 = vmatpush.msra.mxu0 %v2493
  %2545 = vmatmul.f32.gmra.mxu0 %v2501
  %v2546 = vpop.f32.mrf.mxu0
  %v2547 = vadd.f32 0.0, %v2546
  %2548 = vdwg.mxu0
  %v2549 = vadd.f32 %v2309, %v2527
  %v2550 = vadd.f32 %v2310, %v2547
  %s2551 = scalar_lea.vmem %s13, 1216
  %v2552 = vld [vmem:[%s2551] sm:$0xff]
  %v2553 = vld [vmem:[%s2551 + $0x8] sm:$0xff]
  %v2554 = vld [vmem:[%s2551 + $0x10] sm:$0xff]
  %v2555 = vld [vmem:[%s2551 + $0x18] sm:$0xff]
  %v2556 = vld [vmem:[%s2551 + $0x20] sm:$0xff]
  %v2557 = vld [vmem:[%s2551 + $0x28] sm:$0xff]
  %v2558 = vld [vmem:[%s2551 + $0x30] sm:$0x1]
  %v2559 = vld [vmem:[%s2551 + $0x38] sm:$0x1]
  %v2561 = vsel %vm385, %v1411, 0
  %v2564 = vsel %vm78, %v2558, 0
  %v2567 = vsel %vm78, %v2559, 0
  %2569 = vmatpush.msra.mxu0 0.0
  %2570 = vmatpush.msra.mxu0 0.0
  %2571 = vmatpush.msra.mxu0 0.0
  %2572 = vmatpush.msra.mxu0 0.0
  %2573 = vmatpush.msra.mxu0 0.0
  %2574 = vmatpush.msra.mxu0 0.0
  %2575 = vmatpush.msra.mxu0 0.0
  %2576 = vmatpush.msra.mxu0 0.0
  %2577 = vmatpush.msra.mxu0 0.0
  %2578 = vmatpush.msra.mxu0 0.0
  %2579 = vmatpush.msra.mxu0 0.0
  %2580 = vmatpush.msra.mxu0 0.0
  %2581 = vmatpush.msra.mxu0 %v2564
  %2582 = vmatpush.msra.mxu0 %v2556
  %2583 = vmatpush.msra.mxu0 %v2554
  %2584 = vmatpush.msra.mxu0 %v2552
  %2585 = vmatmul.f32.gmra.mxu0 %v2561
  %v2586 = vpop.f32.mrf.mxu0
  %v2587 = vadd.f32 0.0, %v2586
  %2588 = vdwg.mxu0
  %2589 = vmatpush.msra.mxu0 0.0
  %2590 = vmatpush.msra.mxu0 0.0
  %2591 = vmatpush.msra.mxu0 0.0
  %2592 = vmatpush.msra.mxu0 0.0
  %2593 = vmatpush.msra.mxu0 0.0
  %2594 = vmatpush.msra.mxu0 0.0
  %2595 = vmatpush.msra.mxu0 0.0
  %2596 = vmatpush.msra.mxu0 0.0
  %2597 = vmatpush.msra.mxu0 0.0
  %2598 = vmatpush.msra.mxu0 0.0
  %2599 = vmatpush.msra.mxu0 0.0
  %2600 = vmatpush.msra.mxu0 0.0
  %2601 = vmatpush.msra.mxu0 %v2567
  %2602 = vmatpush.msra.mxu0 %v2557
  %2603 = vmatpush.msra.mxu0 %v2555
  %2604 = vmatpush.msra.mxu0 %v2553
  %2605 = vmatmul.f32.gmra.mxu0 %v2561
  %v2606 = vpop.f32.mrf.mxu0
  %v2607 = vadd.f32 0.0, %v2606
  %2608 = vdwg.mxu0
  %v2609 = vadd.f32 %v2369, %v2587
  %v2610 = vadd.f32 %v2370, %v2607
  %s2611 = scalar_lea.vmem %s13, 1280
  %v2612 = vld [vmem:[%s2611] sm:$0xff]
  %v2613 = vld [vmem:[%s2611 + $0x8] sm:$0xff]
  %v2614 = vld [vmem:[%s2611 + $0x10] sm:$0xff]
  %v2615 = vld [vmem:[%s2611 + $0x18] sm:$0xff]
  %v2616 = vld [vmem:[%s2611 + $0x20] sm:$0xff]
  %v2617 = vld [vmem:[%s2611 + $0x28] sm:$0xff]
  %v2618 = vld [vmem:[%s2611 + $0x30] sm:$0x1]
  %v2619 = vld [vmem:[%s2611 + $0x38] sm:$0x1]
  %v2621 = vsel %vm385, %v1414, 0
  %v2624 = vsel %vm78, %v2618, 0
  %v2627 = vsel %vm78, %v2619, 0
  %2629 = vmatpush.msra.mxu0 0.0
  %2630 = vmatpush.msra.mxu0 0.0
  %2631 = vmatpush.msra.mxu0 0.0
  %2632 = vmatpush.msra.mxu0 0.0
  %2633 = vmatpush.msra.mxu0 0.0
  %2634 = vmatpush.msra.mxu0 0.0
  %2635 = vmatpush.msra.mxu0 0.0
  %2636 = vmatpush.msra.mxu0 0.0
  %2637 = vmatpush.msra.mxu0 0.0
  %2638 = vmatpush.msra.mxu0 0.0
  %2639 = vmatpush.msra.mxu0 0.0
  %2640 = vmatpush.msra.mxu0 0.0
  %2641 = vmatpush.msra.mxu0 %v2624
  %2642 = vmatpush.msra.mxu0 %v2616
  %2643 = vmatpush.msra.mxu0 %v2614
  %2644 = vmatpush.msra.mxu0 %v2612
  %2645 = vmatmul.f32.gmra.mxu0 %v2621
  %v2646 = vpop.f32.mrf.mxu0
  %v2647 = vadd.f32 0.0, %v2646
  %2648 = vdwg.mxu0
  %2649 = vmatpush.msra.mxu0 0.0
  %2650 = vmatpush.msra.mxu0 0.0
  %2651 = vmatpush.msra.mxu0 0.0
  %2652 = vmatpush.msra.mxu0 0.0
  %2653 = vmatpush.msra.mxu0 0.0
  %2654 = vmatpush.msra.mxu0 0.0
  %2655 = vmatpush.msra.mxu0 0.0
  %2656 = vmatpush.msra.mxu0 0.0
  %2657 = vmatpush.msra.mxu0 0.0
  %2658 = vmatpush.msra.mxu0 0.0
  %2659 = vmatpush.msra.mxu0 0.0
  %2660 = vmatpush.msra.mxu0 0.0
  %2661 = vmatpush.msra.mxu0 %v2627
  %2662 = vmatpush.msra.mxu0 %v2617
  %2663 = vmatpush.msra.mxu0 %v2615
  %2664 = vmatpush.msra.mxu0 %v2613
  %2665 = vmatmul.f32.gmra.mxu0 %v2621
  %v2666 = vpop.f32.mrf.mxu0
  %v2667 = vadd.f32 0.0, %v2666
  %2668 = vdwg.mxu0
  %v2669 = vadd.f32 %v2429, %v2647
  %v2670 = vadd.f32 %v2430, %v2667
  %s2671 = scalar_lea.vmem %s13, 1344
  %v2672 = vld [vmem:[%s2671] sm:$0xff]
  %v2673 = vld [vmem:[%s2671 + $0x8] sm:$0xff]
  %v2674 = vld [vmem:[%s2671 + $0x10] sm:$0xff]
  %v2675 = vld [vmem:[%s2671 + $0x18] sm:$0xff]
  %v2676 = vld [vmem:[%s2671 + $0x20] sm:$0xff]
  %v2677 = vld [vmem:[%s2671 + $0x28] sm:$0xff]
  %v2678 = vld [vmem:[%s2671 + $0x30] sm:$0x1]
  %v2679 = vld [vmem:[%s2671 + $0x38] sm:$0x1]
  %v2681 = vsel %vm385, %v1417, 0
  %v2684 = vsel %vm78, %v2678, 0
  %v2687 = vsel %vm78, %v2679, 0
  %2689 = vmatpush.msra.mxu0 0.0
  %2690 = vmatpush.msra.mxu0 0.0
  %2691 = vmatpush.msra.mxu0 0.0
  %2692 = vmatpush.msra.mxu0 0.0
  %2693 = vmatpush.msra.mxu0 0.0
  %2694 = vmatpush.msra.mxu0 0.0
  %2695 = vmatpush.msra.mxu0 0.0
  %2696 = vmatpush.msra.mxu0 0.0
  %2697 = vmatpush.msra.mxu0 0.0
  %2698 = vmatpush.msra.mxu0 0.0
  %2699 = vmatpush.msra.mxu0 0.0
  %2700 = vmatpush.msra.mxu0 0.0
  %2701 = vmatpush.msra.mxu0 %v2684
  %2702 = vmatpush.msra.mxu0 %v2676
  %2703 = vmatpush.msra.mxu0 %v2674
  %2704 = vmatpush.msra.mxu0 %v2672
  %2705 = vmatmul.f32.gmra.mxu0 %v2681
  %v2706 = vpop.f32.mrf.mxu0
  %v2707 = vadd.f32 0.0, %v2706
  %2708 = vdwg.mxu0
  %2709 = vmatpush.msra.mxu0 0.0
  %2710 = vmatpush.msra.mxu0 0.0
  %2711 = vmatpush.msra.mxu0 0.0
  %2712 = vmatpush.msra.mxu0 0.0
  %2713 = vmatpush.msra.mxu0 0.0
  %2714 = vmatpush.msra.mxu0 0.0
  %2715 = vmatpush.msra.mxu0 0.0
  %2716 = vmatpush.msra.mxu0 0.0
  %2717 = vmatpush.msra.mxu0 0.0
  %2718 = vmatpush.msra.mxu0 0.0
  %2719 = vmatpush.msra.mxu0 0.0
  %2720 = vmatpush.msra.mxu0 0.0
  %2721 = vmatpush.msra.mxu0 %v2687
  %2722 = vmatpush.msra.mxu0 %v2677
  %2723 = vmatpush.msra.mxu0 %v2675
  %2724 = vmatpush.msra.mxu0 %v2673
  %2725 = vmatmul.f32.gmra.mxu0 %v2681
  %v2726 = vpop.f32.mrf.mxu0
  %v2727 = vadd.f32 0.0, %v2726
  %2728 = vdwg.mxu0
  %v2729 = vadd.f32 %v2489, %v2707
  %v2730 = vadd.f32 %v2490, %v2727
  %s2731 = scalar_lea.vmem %s13, 1408
  %v2732 = vld [vmem:[%s2731] sm:$0xff]
  %v2733 = vld [vmem:[%s2731 + $0x8] sm:$0xff]
  %v2734 = vld [vmem:[%s2731 + $0x10] sm:$0xff]
  %v2735 = vld [vmem:[%s2731 + $0x18] sm:$0xff]
  %v2736 = vld [vmem:[%s2731 + $0x20] sm:$0xff]
  %v2737 = vld [vmem:[%s2731 + $0x28] sm:$0xff]
  %v2738 = vld [vmem:[%s2731 + $0x30] sm:$0x1]
  %v2739 = vld [vmem:[%s2731 + $0x38] sm:$0x1]
  %v2741 = vsel %vm385, %v1420, 0
  %v2744 = vsel %vm78, %v2738, 0
  %v2747 = vsel %vm78, %v2739, 0
  %2749 = vmatpush.msra.mxu0 0.0
  %2750 = vmatpush.msra.mxu0 0.0
  %2751 = vmatpush.msra.mxu0 0.0
  %2752 = vmatpush.msra.mxu0 0.0
  %2753 = vmatpush.msra.mxu0 0.0
  %2754 = vmatpush.msra.mxu0 0.0
  %2755 = vmatpush.msra.mxu0 0.0
  %2756 = vmatpush.msra.mxu0 0.0
  %2757 = vmatpush.msra.mxu0 0.0
  %2758 = vmatpush.msra.mxu0 0.0
  %2759 = vmatpush.msra.mxu0 0.0
  %2760 = vmatpush.msra.mxu0 0.0
  %2761 = vmatpush.msra.mxu0 %v2744
  %2762 = vmatpush.msra.mxu0 %v2736
  %2763 = vmatpush.msra.mxu0 %v2734
  %2764 = vmatpush.msra.mxu0 %v2732
  %2765 = vmatmul.f32.gmra.mxu0 %v2741
  %v2766 = vpop.f32.mrf.mxu0
  %v2767 = vadd.f32 0.0, %v2766
  %2768 = vdwg.mxu0
  %2769 = vmatpush.msra.mxu0 0.0
  %2770 = vmatpush.msra.mxu0 0.0
  %2771 = vmatpush.msra.mxu0 0.0
  %2772 = vmatpush.msra.mxu0 0.0
  %2773 = vmatpush.msra.mxu0 0.0
  %2774 = vmatpush.msra.mxu0 0.0
  %2775 = vmatpush.msra.mxu0 0.0
  %2776 = vmatpush.msra.mxu0 0.0
  %2777 = vmatpush.msra.mxu0 0.0
  %2778 = vmatpush.msra.mxu0 0.0
  %2779 = vmatpush.msra.mxu0 0.0
  %2780 = vmatpush.msra.mxu0 0.0
  %2781 = vmatpush.msra.mxu0 %v2747
  %2782 = vmatpush.msra.mxu0 %v2737
  %2783 = vmatpush.msra.mxu0 %v2735
  %2784 = vmatpush.msra.mxu0 %v2733
  %2785 = vmatmul.f32.gmra.mxu0 %v2741
  %v2786 = vpop.f32.mrf.mxu0
  %v2787 = vadd.f32 0.0, %v2786
  %2788 = vdwg.mxu0
  %v2789 = vadd.f32 %v2549, %v2767
  %v2790 = vadd.f32 %v2550, %v2787
  %s2791 = scalar_lea.vmem %s13, 1472
  %v2792 = vld [vmem:[%s2791] sm:$0xff]
  %v2793 = vld [vmem:[%s2791 + $0x8] sm:$0xff]
  %v2794 = vld [vmem:[%s2791 + $0x10] sm:$0xff]
  %v2795 = vld [vmem:[%s2791 + $0x18] sm:$0xff]
  %v2796 = vld [vmem:[%s2791 + $0x20] sm:$0xff]
  %v2797 = vld [vmem:[%s2791 + $0x28] sm:$0xff]
  %v2798 = vld [vmem:[%s2791 + $0x30] sm:$0x1]
  %v2799 = vld [vmem:[%s2791 + $0x38] sm:$0x1]
  %v2801 = vsel %vm385, %v1423, 0
  %v2804 = vsel %vm78, %v2798, 0
  %v2807 = vsel %vm78, %v2799, 0
  %2809 = vmatpush.msra.mxu0 0.0
  %2810 = vmatpush.msra.mxu0 0.0
  %2811 = vmatpush.msra.mxu0 0.0
  %2812 = vmatpush.msra.mxu0 0.0
  %2813 = vmatpush.msra.mxu0 0.0
  %2814 = vmatpush.msra.mxu0 0.0
  %2815 = vmatpush.msra.mxu0 0.0
  %2816 = vmatpush.msra.mxu0 0.0
  %2817 = vmatpush.msra.mxu0 0.0
  %2818 = vmatpush.msra.mxu0 0.0
  %2819 = vmatpush.msra.mxu0 0.0
  %2820 = vmatpush.msra.mxu0 0.0
  %2821 = vmatpush.msra.mxu0 %v2804
  %2822 = vmatpush.msra.mxu0 %v2796
  %2823 = vmatpush.msra.mxu0 %v2794
  %2824 = vmatpush.msra.mxu0 %v2792
  %2825 = vmatmul.f32.gmra.mxu0 %v2801
  %v2826 = vpop.f32.mrf.mxu0
  %v2827 = vadd.f32 0.0, %v2826
  %2828 = vdwg.mxu0
  %2829 = vmatpush.msra.mxu0 0.0
  %2830 = vmatpush.msra.mxu0 0.0
  %2831 = vmatpush.msra.mxu0 0.0
  %2832 = vmatpush.msra.mxu0 0.0
  %2833 = vmatpush.msra.mxu0 0.0
  %2834 = vmatpush.msra.mxu0 0.0
  %2835 = vmatpush.msra.mxu0 0.0
  %2836 = vmatpush.msra.mxu0 0.0
  %2837 = vmatpush.msra.mxu0 0.0
  %2838 = vmatpush.msra.mxu0 0.0
  %2839 = vmatpush.msra.mxu0 0.0
  %2840 = vmatpush.msra.mxu0 0.0
  %2841 = vmatpush.msra.mxu0 %v2807
  %2842 = vmatpush.msra.mxu0 %v2797
  %2843 = vmatpush.msra.mxu0 %v2795
  %2844 = vmatpush.msra.mxu0 %v2793
  %2845 = vmatmul.f32.gmra.mxu0 %v2801
  %v2846 = vpop.f32.mrf.mxu0
  %v2847 = vadd.f32 0.0, %v2846
  %2848 = vdwg.mxu0
  %v2849 = vadd.f32 %v2609, %v2827
  %v2850 = vadd.f32 %v2610, %v2847
  %s2851 = scalar_lea.vmem %s13, 1536
  %v2852 = vld [vmem:[%s2851] sm:$0xff]
  %v2853 = vld [vmem:[%s2851 + $0x8] sm:$0xff]
  %v2854 = vld [vmem:[%s2851 + $0x10] sm:$0xff]
  %v2855 = vld [vmem:[%s2851 + $0x18] sm:$0xff]
  %v2856 = vld [vmem:[%s2851 + $0x20] sm:$0xff]
  %v2857 = vld [vmem:[%s2851 + $0x28] sm:$0xff]
  %v2858 = vld [vmem:[%s2851 + $0x30] sm:$0x1]
  %v2859 = vld [vmem:[%s2851 + $0x38] sm:$0x1]
  %v2861 = vsel %vm385, %v1426, 0
  %v2864 = vsel %vm78, %v2858, 0
  %v2867 = vsel %vm78, %v2859, 0
  %2869 = vmatpush.msra.mxu0 0.0
  %2870 = vmatpush.msra.mxu0 0.0
  %2871 = vmatpush.msra.mxu0 0.0
  %2872 = vmatpush.msra.mxu0 0.0
  %2873 = vmatpush.msra.mxu0 0.0
  %2874 = vmatpush.msra.mxu0 0.0
  %2875 = vmatpush.msra.mxu0 0.0
  %2876 = vmatpush.msra.mxu0 0.0
  %2877 = vmatpush.msra.mxu0 0.0
  %2878 = vmatpush.msra.mxu0 0.0
  %2879 = vmatpush.msra.mxu0 0.0
  %2880 = vmatpush.msra.mxu0 0.0
  %2881 = vmatpush.msra.mxu0 %v2864
  %2882 = vmatpush.msra.mxu0 %v2856
  %2883 = vmatpush.msra.mxu0 %v2854
  %2884 = vmatpush.msra.mxu0 %v2852
  %2885 = vmatmul.f32.gmra.mxu0 %v2861
  %v2886 = vpop.f32.mrf.mxu0
  %v2887 = vadd.f32 0.0, %v2886
  %2888 = vdwg.mxu0
  %2889 = vmatpush.msra.mxu0 0.0
  %2890 = vmatpush.msra.mxu0 0.0
  %2891 = vmatpush.msra.mxu0 0.0
  %2892 = vmatpush.msra.mxu0 0.0
  %2893 = vmatpush.msra.mxu0 0.0
  %2894 = vmatpush.msra.mxu0 0.0
  %2895 = vmatpush.msra.mxu0 0.0
  %2896 = vmatpush.msra.mxu0 0.0
  %2897 = vmatpush.msra.mxu0 0.0
  %2898 = vmatpush.msra.mxu0 0.0
  %2899 = vmatpush.msra.mxu0 0.0
  %2900 = vmatpush.msra.mxu0 0.0
  %2901 = vmatpush.msra.mxu0 %v2867
  %2902 = vmatpush.msra.mxu0 %v2857
  %2903 = vmatpush.msra.mxu0 %v2855
  %2904 = vmatpush.msra.mxu0 %v2853
  %2905 = vmatmul.f32.gmra.mxu0 %v2861
  %v2906 = vpop.f32.mrf.mxu0
  %v2907 = vadd.f32 0.0, %v2906
  %2908 = vdwg.mxu0
  %v2909 = vadd.f32 %v2669, %v2887
  %v2910 = vadd.f32 %v2670, %v2907
  %v2911 = vadd.f32 %v2909, %v2729
  %v2912 = vadd.f32 %v2910, %v2730
  %v2913 = vadd.f32 %v2911, %v2789
  %v2914 = vadd.f32 %v2912, %v2790
  %v2915 = vadd.f32 %v2913, %v2849
  %v2916 = vadd.f32 %v2914, %v2850
  %v2917 = vld [vmem:[%s12] sm:$0xff]
  %2919 = vset.pattern.permute.xlu0 0
  %2920 = vperm.xlu0 %2919, %v2917
  %v2921 = vpop.permute.xlu0 %2920
  %v2923 = vadd.f32 %v2915, %v2921
  %v2924 = vadd.f32 %v2916, %v2921
  %v2925 = vmax.f32 %v2923, 0.0
  %v2926 = vmax.f32 %v2924, 0.0
  %v2927 = vld [vmem:[%s14] sm:$0xf]
  %v2928 = vld [vmem:[%s15] sm:$0xf]
  %2930 = vset.pattern.permute.xlu0 0
  %2931 = vperm.xlu0 %2930, %v2928
  %v2932 = vpop.permute.xlu0 %2931
  %v2935 = vsel %vm781, %v2927, 0
  %2937 = vmatpush.msra.mxu0 0.0
  %2938 = vmatpush.msra.mxu0 0.0
  %2939 = vmatpush.msra.mxu0 0.0
  %2940 = vmatpush.msra.mxu0 0.0
  %2941 = vmatpush.msra.mxu0 0.0
  %2942 = vmatpush.msra.mxu0 0.0
  %2943 = vmatpush.msra.mxu0 0.0
  %2944 = vmatpush.msra.mxu0 0.0
  %2945 = vmatpush.msra.mxu0 0.0
  %2946 = vmatpush.msra.mxu0 0.0
  %2947 = vmatpush.msra.mxu0 0.0
  %2948 = vmatpush.msra.mxu0 0.0
  %2949 = vmatpush.msra.mxu0 0.0
  %2950 = vmatpush.msra.mxu0 0.0
  %2951 = vmatpush.msra.mxu0 0.0
  %2952 = vmatpush.msra.mxu0 %v2925
  %2953 = vmatmul.f32.gmra.mxu0 %v2935
  %v2954 = vpop.f32.mrf.mxu0
  %v2955 = vadd.f32 %v2932, %v2954
  %2956 = vdwg.mxu0
  %2957 = vmatpush.msra.mxu0 0.0
  %2958 = vmatpush.msra.mxu0 0.0
  %2959 = vmatpush.msra.mxu0 0.0
  %2960 = vmatpush.msra.mxu0 0.0
  %2961 = vmatpush.msra.mxu0 0.0
  %2962 = vmatpush.msra.mxu0 0.0
  %2963 = vmatpush.msra.mxu0 0.0
  %2964 = vmatpush.msra.mxu0 0.0
  %2965 = vmatpush.msra.mxu0 0.0
  %2966 = vmatpush.msra.mxu0 0.0
  %2967 = vmatpush.msra.mxu0 0.0
  %2968 = vmatpush.msra.mxu0 0.0
  %2969 = vmatpush.msra.mxu0 0.0
  %2970 = vmatpush.msra.mxu0 0.0
  %2971 = vmatpush.msra.mxu0 0.0
  %2972 = vmatpush.msra.mxu0 %v2926
  %2973 = vmatmul.f32.gmra.mxu0 %v2935
  %v2974 = vpop.f32.mrf.mxu0
  %v2975 = vadd.f32 %v2932, %v2974
  %2976 = vdwg.mxu0
  %v2977 = vtanh.pop %v2955
  %v2978 = vtanh.pop %v2975
  %v2981 = vrot.slane %v2978, 4
  %v2982 = vsel %vm127, %v2977, %v2981
  %vm2984 = vcmask 793604
  %vm2985 = vmor %vm2984, %vm127
  %2986 = vst.msk [vmem:[%s16] sm:$0xff] %vm2985, %v2982
  %s2987 = scalar_lea.vmem %s0, 16
  %v2988 = vld [vmem:[%s2987] sm:$0xff]
  %v2989 = vld [vmem:[%s2987 + $0x8] sm:$0x1]
  %v2990 = vld [vmem:[%s1] sm:$0xff]
  %v2991 = vld [vmem:[%s1 + $0x8] sm:$0xff]
  %v2992 = vld [vmem:[%s2] sm:$0xff]
  %v2993 = vld [vmem:[%s2 + $0x8] sm:$0xff]
  %2995 = vset.pattern.permute.xlu0 0
  %2996 = vperm.xlu0 %2995, %v2992
  %v2997 = vpop.permute.xlu0 %2996
  %3000 = vset.pattern.permute.xlu0 0
  %3001 = vperm.xlu0 %3000, %v2993
  %v3002 = vpop.permute.xlu0 %3001
  %v3005 = vsel %vm71, %v2990, 0
  %v3008 = vsel %vm71, %v2991, 0
  %v3011 = vsel %vm78, %v2989, 0
  %3013 = vmatpush.msra.mxu0 0.0
  %3014 = vmatpush.msra.mxu0 0.0
  %3015 = vmatpush.msra.mxu0 0.0
  %3016 = vmatpush.msra.mxu0 0.0
  %3017 = vmatpush.msra.mxu0 0.0
  %3018 = vmatpush.msra.mxu0 0.0
  %3019 = vmatpush.msra.mxu0 0.0
  %3020 = vmatpush.msra.mxu0 0.0
  %3021 = vmatpush.msra.mxu0 0.0
  %3022 = vmatpush.msra.mxu0 0.0
  %3023 = vmatpush.msra.mxu0 0.0
  %3024 = vmatpush.msra.mxu0 0.0
  %3025 = vmatpush.msra.mxu0 0.0
  %3026 = vmatpush.msra.mxu0 0.0
  %3027 = vmatpush.msra.mxu0 %v3011
  %3028 = vmatpush.msra.mxu0 %v2988
  %3029 = vmatmul.f32.gmra.mxu0 %v3005
  %v3030 = vpop.f32.mrf.mxu0
  %v3031 = vadd.f32 %v2997, %v3030
  %3032 = vmatmul.f32.gmra.mxu0 %v3008
  %v3033 = vpop.f32.mrf.mxu0
  %v3034 = vadd.f32 %v3002, %v3033
  %3035 = vdwg.mxu0
  %v3036 = vmax.f32 %v3031, 0.0
  %v3037 = vmax.f32 %v3034, 0.0
  %v3038 = vld [vmem:[%s3] sm:$0xff]
  %v3039 = vld [vmem:[%s3 + $0x8] sm:$0xff]
  %v3040 = vld [vmem:[%s3 + $0x10] sm:$0xff]
  %v3041 = vld [vmem:[%s3 + $0x18] sm:$0xff]
  %v3042 = vld [vmem:[%s3 + $0x20] sm:$0xff]
  %v3043 = vld [vmem:[%s3 + $0x28] sm:$0xff]
  %v3044 = vld [vmem:[%s3 + $0x30] sm:$0xff]
  %v3045 = vld [vmem:[%s3 + $0x38] sm:$0xff]
  %v3046 = vld [vmem:[%s3 + $0x40] sm:$0xff]
  %v3047 = vld [vmem:[%s3 + $0x48] sm:$0xff]
  %v3048 = vld [vmem:[%s3 + $0x50] sm:$0xff]
  %v3049 = vld [vmem:[%s3 + $0x58] sm:$0xff]
  %v3050 = vld [vmem:[%s3 + $0x60] sm:$0xf]
  %v3052 = vsel %vm120, %v3036, 0
  %v3055 = vsel %vm120, %v3037, 0
  %v3058 = vsel %vm127, %v3050, 0
  %3060 = vmatpush.msra.mxu0 0.0
  %3061 = vmatpush.msra.mxu0 0.0
  %3062 = vmatpush.msra.mxu0 0.0
  %3063 = vmatpush.msra.mxu0 %v3058
  %3064 = vmatpush.msra.mxu0 %v3049
  %3065 = vmatpush.msra.mxu0 %v3048
  %3066 = vmatpush.msra.mxu0 %v3047
  %3067 = vmatpush.msra.mxu0 %v3046
  %3068 = vmatpush.msra.mxu0 %v3045
  %3069 = vmatpush.msra.mxu0 %v3044
  %3070 = vmatpush.msra.mxu0 %v3043
  %3071 = vmatpush.msra.mxu0 %v3042
  %3072 = vmatpush.msra.mxu0 %v3041
  %3073 = vmatpush.msra.mxu0 %v3040
  %3074 = vmatpush.msra.mxu0 %v3039
  %3075 = vmatpush.msra.mxu0 %v3038
  %3076 = vmatmul.f32.gmra.mxu0 %v3052
  %v3077 = vpop.f32.mrf.mxu0
  %v3078 = vadd.f32 0.0, %v3077
  %3079 = vmatmul.f32.gmra.mxu0 %v3055
  %v3080 = vpop.f32.mrf.mxu0
  %v3081 = vadd.f32 0.0, %v3080
  %3082 = vdwg.mxu0
  %v3083 = vld [vmem:[%s154] sm:$0xff]
  %v3084 = vld [vmem:[%s154 + $0x8] sm:$0xff]
  %v3085 = vld [vmem:[%s154 + $0x10] sm:$0xff]
  %v3086 = vld [vmem:[%s154 + $0x18] sm:$0xff]
  %v3087 = vld [vmem:[%s154 + $0x20] sm:$0xff]
  %v3088 = vld [vmem:[%s154 + $0x28] sm:$0xff]
  %v3089 = vld [vmem:[%s154 + $0x30] sm:$0xff]
  %v3090 = vld [vmem:[%s154 + $0x38] sm:$0xff]
  %v3091 = vld [vmem:[%s154 + $0x40] sm:$0xff]
  %v3092 = vld [vmem:[%s154 + $0x48] sm:$0xff]
  %v3093 = vld [vmem:[%s154 + $0x50] sm:$0xff]
  %v3094 = vld [vmem:[%s154 + $0x58] sm:$0xff]
  %v3095 = vld [vmem:[%s154 + $0x60] sm:$0xf]
  %v3097 = vsel %vm127, %v3095, 0
  %3099 = vmatpush.msra.mxu0 0.0
  %3100 = vmatpush.msra.mxu0 0.0
  %3101 = vmatpush.msra.mxu0 0.0
  %3102 = vmatpush.msra.mxu0 %v3097
  %3103 = vmatpush.msra.mxu0 %v3094
  %3104 = vmatpush.msra.mxu0 %v3093
  %3105 = vmatpush.msra.mxu0 %v3092
  %3106 = vmatpush.msra.mxu0 %v3091
  %3107 = vmatpush.msra.mxu0 %v3090
  %3108 = vmatpush.msra.mxu0 %v3089
  %3109 = vmatpush.msra.mxu0 %v3088
  %3110 = vmatpush.msra.mxu0 %v3087
  %3111 = vmatpush.msra.mxu0 %v3086
  %3112 = vmatpush.msra.mxu0 %v3085
  %3113 = vmatpush.msra.mxu0 %v3084
  %3114 = vmatpush.msra.mxu0 %v3083
  %3115 = vmatmul.f32.gmra.mxu0 %v3052
  %v3116 = vpop.f32.mrf.mxu0
  %v3117 = vadd.f32 0.0, %v3116
  %3118 = vmatmul.f32.gmra.mxu0 %v3055
  %v3119 = vpop.f32.mrf.mxu0
  %v3120 = vadd.f32 0.0, %v3119
  %3121 = vdwg.mxu0
  %v3122 = vld [vmem:[%s194] sm:$0xff]
  %v3123 = vld [vmem:[%s194 + $0x8] sm:$0xff]
  %v3124 = vld [vmem:[%s194 + $0x10] sm:$0xff]
  %v3125 = vld [vmem:[%s194 + $0x18] sm:$0xff]
  %v3126 = vld [vmem:[%s194 + $0x20] sm:$0xff]
  %v3127 = vld [vmem:[%s194 + $0x28] sm:$0xff]
  %v3128 = vld [vmem:[%s194 + $0x30] sm:$0xff]
  %v3129 = vld [vmem:[%s194 + $0x38] sm:$0xff]
  %v3130 = vld [vmem:[%s194 + $0x40] sm:$0xff]
  %v3131 = vld [vmem:[%s194 + $0x48] sm:$0xff]
  %v3132 = vld [vmem:[%s194 + $0x50] sm:$0xff]
  %v3133 = vld [vmem:[%s194 + $0x58] sm:$0xff]
  %v3134 = vld [vmem:[%s194 + $0x60] sm:$0xf]
  %v3136 = vsel %vm127, %v3134, 0
  %3138 = vmatpush.msra.mxu0 0.0
  %3139 = vmatpush.msra.mxu0 0.0
  %3140 = vmatpush.msra.mxu0 0.0
  %3141 = vmatpush.msra.mxu0 %v3136
  %3142 = vmatpush.msra.mxu0 %v3133
  %3143 = vmatpush.msra.mxu0 %v3132
  %3144 = vmatpush.msra.mxu0 %v3131
  %3145 = vmatpush.msra.mxu0 %v3130
  %3146 = vmatpush.msra.mxu0 %v3129
  %3147 = vmatpush.msra.mxu0 %v3128
  %3148 = vmatpush.msra.mxu0 %v3127
  %3149 = vmatpush.msra.mxu0 %v3126
  %3150 = vmatpush.msra.mxu0 %v3125
  %3151 = vmatpush.msra.mxu0 %v3124
  %3152 = vmatpush.msra.mxu0 %v3123
  %3153 = vmatpush.msra.mxu0 %v3122
  %3154 = vmatmul.f32.gmra.mxu0 %v3052
  %v3155 = vpop.f32.mrf.mxu0
  %v3156 = vadd.f32 0.0, %v3155
  %3157 = vmatmul.f32.gmra.mxu0 %v3055
  %v3158 = vpop.f32.mrf.mxu0
  %v3159 = vadd.f32 0.0, %v3158
  %3160 = vdwg.mxu0
  %v3161 = vld [vmem:[%s234] sm:$0xff]
  %v3162 = vld [vmem:[%s234 + $0x8] sm:$0xff]
  %v3163 = vld [vmem:[%s234 + $0x10] sm:$0xff]
  %v3164 = vld [vmem:[%s234 + $0x18] sm:$0xff]
  %v3165 = vld [vmem:[%s234 + $0x20] sm:$0xff]
  %v3166 = vld [vmem:[%s234 + $0x28] sm:$0xff]
  %v3167 = vld [vmem:[%s234 + $0x30] sm:$0xff]
  %v3168 = vld [vmem:[%s234 + $0x38] sm:$0xff]
  %v3169 = vld [vmem:[%s234 + $0x40] sm:$0xff]
  %v3170 = vld [vmem:[%s234 + $0x48] sm:$0xff]
  %v3171 = vld [vmem:[%s234 + $0x50] sm:$0xff]
  %v3172 = vld [vmem:[%s234 + $0x58] sm:$0xff]
  %v3173 = vld [vmem:[%s234 + $0x60] sm:$0xf]
  %v3175 = vsel %vm127, %v3173, 0
  %3177 = vmatpush.msra.mxu0 0.0
  %3178 = vmatpush.msra.mxu0 0.0
  %3179 = vmatpush.msra.mxu0 0.0
  %3180 = vmatpush.msra.mxu0 %v3175
  %3181 = vmatpush.msra.mxu0 %v3172
  %3182 = vmatpush.msra.mxu0 %v3171
  %3183 = vmatpush.msra.mxu0 %v3170
  %3184 = vmatpush.msra.mxu0 %v3169
  %3185 = vmatpush.msra.mxu0 %v3168
  %3186 = vmatpush.msra.mxu0 %v3167
  %3187 = vmatpush.msra.mxu0 %v3166
  %3188 = vmatpush.msra.mxu0 %v3165
  %3189 = vmatpush.msra.mxu0 %v3164
  %3190 = vmatpush.msra.mxu0 %v3163
  %3191 = vmatpush.msra.mxu0 %v3162
  %3192 = vmatpush.msra.mxu0 %v3161
  %3193 = vmatmul.f32.gmra.mxu0 %v3052
  %v3194 = vpop.f32.mrf.mxu0
  %v3195 = vadd.f32 0.0, %v3194
  %3196 = vmatmul.f32.gmra.mxu0 %v3055
  %v3197 = vpop.f32.mrf.mxu0
  %v3198 = vadd.f32 0.0, %v3197
  %3199 = vdwg.mxu0
  %v3200 = vmax.f32 %v3078, %v3117
  %v3201 = vmax.f32 %v3081, %v3120
  %v3202 = vmax.f32 %v3200, %v3156
  %v3203 = vmax.f32 %v3201, %v3159
  %v3204 = vmax.f32 %v3202, %v3195
  %v3205 = vmax.f32 %v3203, %v3198
  %v3206 = vld [vmem:[%s4] sm:$0xff]
  %v3207 = vld [vmem:[%s4 + $0x8] sm:$0xff]
  %v3208 = vld [vmem:[%s4 + $0x10] sm:$0xff]
  %v3209 = vld [vmem:[%s4 + $0x18] sm:$0xff]
  %v3210 = vld [vmem:[%s4 + $0x20] sm:$0xff]
  %v3211 = vld [vmem:[%s4 + $0x28] sm:$0xff]
  %v3212 = vld [vmem:[%s4 + $0x30] sm:$0xff]
  %v3213 = vld [vmem:[%s4 + $0x38] sm:$0xff]
  %v3214 = vld [vmem:[%s4 + $0x40] sm:$0xff]
  %v3216 = vsel %vm289, %v3206, 0
  %v3219 = vsel %vm289, %v3207, 0
  %v3222 = vsel %vm289, %v3208, 0
  %v3225 = vsel %vm289, %v3209, 0
  %v3228 = vsel %vm289, %v3210, 0
  %v3231 = vsel %vm289, %v3211, 0
  %v3234 = vsel %vm289, %v3212, 0
  %v3237 = vsel %vm289, %v3213, 0
  %v3240 = vsel %vm289, %v3214, 0
  %3242 = vmatpush.msra.mxu0 0.0
  %3243 = vmatpush.msra.mxu0 0.0
  %3244 = vmatpush.msra.mxu0 0.0
  %3245 = vmatpush.msra.mxu0 0.0
  %3246 = vmatpush.msra.mxu0 0.0
  %3247 = vmatpush.msra.mxu0 0.0
  %3248 = vmatpush.msra.mxu0 0.0
  %3249 = vmatpush.msra.mxu0 0.0
  %3250 = vmatpush.msra.mxu0 0.0
  %3251 = vmatpush.msra.mxu0 0.0
  %3252 = vmatpush.msra.mxu0 0.0
  %3253 = vmatpush.msra.mxu0 0.0
  %3254 = vmatpush.msra.mxu0 0.0
  %3255 = vmatpush.msra.mxu0 0.0
  %3256 = vmatpush.msra.mxu0 %v3205
  %3257 = vmatpush.msra.mxu0 %v3204
  %3258 = vmatmul.f32.gmra.mxu0 %v3216
  %v3259 = vpop.f32.mrf.mxu0
  %v3260 = vadd.f32 0.0, %v3259
  %3261 = vmatmul.f32.gmra.mxu0 %v3219
  %v3262 = vpop.f32.mrf.mxu0
  %v3263 = vadd.f32 0.0, %v3262
  %3264 = vmatmul.f32.gmra.mxu0 %v3222
  %v3265 = vpop.f32.mrf.mxu0
  %v3266 = vadd.f32 0.0, %v3265
  %3267 = vmatmul.f32.gmra.mxu0 %v3225
  %v3268 = vpop.f32.mrf.mxu0
  %v3269 = vadd.f32 0.0, %v3268
  %3270 = vmatmul.f32.gmra.mxu0 %v3228
  %v3271 = vpop.f32.mrf.mxu0
  %v3272 = vadd.f32 0.0, %v3271
  %3273 = vmatmul.f32.gmra.mxu0 %v3231
  %v3274 = vpop.f32.mrf.mxu0
  %v3275 = vadd.f32 0.0, %v3274
  %3276 = vmatmul.f32.gmra.mxu0 %v3234
  %v3277 = vpop.f32.mrf.mxu0
  %v3278 = vadd.f32 0.0, %v3277
  %3279 = vmatmul.f32.gmra.mxu0 %v3237
  %v3280 = vpop.f32.mrf.mxu0
  %v3281 = vadd.f32 0.0, %v3280
  %3282 = vmatmul.f32.gmra.mxu0 %v3240
  %v3283 = vpop.f32.mrf.mxu0
  %v3284 = vadd.f32 0.0, %v3283
  %3285 = vdwg.mxu0
  %v3286 = vld [vmem:[%s6] sm:$0xff]
  %v3287 = vld [vmem:[%s6 + $0x8] sm:$0xff]
  %v3288 = vld [vmem:[%s6 + $0x10] sm:$0xff]
  %v3289 = vld [vmem:[%s6 + $0x18] sm:$0x1]
  %v3290 = vld [vmem:[%s365] sm:$0xff]
  %v3291 = vld [vmem:[%s365 + $0x8] sm:$0xff]
  %v3292 = vld [vmem:[%s365 + $0x10] sm:$0xff]
  %v3293 = vld [vmem:[%s365 + $0x18] sm:$0x1]
  %v3294 = vld [vmem:[%s370] sm:$0xff]
  %v3295 = vld [vmem:[%s370 + $0x8] sm:$0xff]
  %v3296 = vld [vmem:[%s370 + $0x10] sm:$0xff]
  %v3297 = vld [vmem:[%s370 + $0x18] sm:$0x1]
  %v3298 = vld [vmem:[%s375] sm:$0xff]
  %v3299 = vld [vmem:[%s375 + $0x8] sm:$0xff]
  %v3300 = vld [vmem:[%s375 + $0x10] sm:$0xff]
  %v3301 = vld [vmem:[%s375 + $0x18] sm:$0x1]
  %v3302 = vld [vmem:[%s380] sm:$0xff]
  %v3303 = vld [vmem:[%s380 + $0x8] sm:$0xff]
  %v3304 = vld [vmem:[%s380 + $0x10] sm:$0xff]
  %v3305 = vld [vmem:[%s380 + $0x18] sm:$0x1]
  %v3307 = vsel %vm385, %v3272, 0
  %v3310 = vsel %vm78, %v3305, 0
  %3312 = vmatpush.msra.mxu0 0.0
  %3313 = vmatpush.msra.mxu0 0.0
  %3314 = vmatpush.msra.mxu0 0.0
  %3315 = vmatpush.msra.mxu0 0.0
  %3316 = vmatpush.msra.mxu0 0.0
  %3317 = vmatpush.msra.mxu0 0.0
  %3318 = vmatpush.msra.mxu0 0.0
  %3319 = vmatpush.msra.mxu0 0.0
  %3320 = vmatpush.msra.mxu0 0.0
  %3321 = vmatpush.msra.mxu0 0.0
  %3322 = vmatpush.msra.mxu0 0.0
  %3323 = vmatpush.msra.mxu0 0.0
  %3324 = vmatpush.msra.mxu0 %v3310
  %3325 = vmatpush.msra.mxu0 %v3304
  %3326 = vmatpush.msra.mxu0 %v3303
  %3327 = vmatpush.msra.mxu0 %v3302
  %3328 = vmatmul.f32.gmra.mxu0 %v3307
  %v3329 = vpop.f32.mrf.mxu0
  %v3330 = vadd.f32 0.0, %v3329
  %3331 = vdwg.mxu0
  %v3333 = vsel %vm385, %v3260, 0
  %v3336 = vsel %vm78, %v3289, 0
  %3338 = vmatpush.msra.mxu0 0.0
  %3339 = vmatpush.msra.mxu0 0.0
  %3340 = vmatpush.msra.mxu0 0.0
  %3341 = vmatpush.msra.mxu0 0.0
  %3342 = vmatpush.msra.mxu0 0.0
  %3343 = vmatpush.msra.mxu0 0.0
  %3344 = vmatpush.msra.mxu0 0.0
  %3345 = vmatpush.msra.mxu0 0.0
  %3346 = vmatpush.msra.mxu0 0.0
  %3347 = vmatpush.msra.mxu0 0.0
  %3348 = vmatpush.msra.mxu0 0.0
  %3349 = vmatpush.msra.mxu0 0.0
  %3350 = vmatpush.msra.mxu0 %v3336
  %3351 = vmatpush.msra.mxu0 %v3288
  %3352 = vmatpush.msra.mxu0 %v3287
  %3353 = vmatpush.msra.mxu0 %v3286
  %3354 = vmatmul.f32.gmra.mxu0 %v3333
  %v3355 = vpop.f32.mrf.mxu0
  %v3356 = vadd.f32 %v3330, %v3355
  %3357 = vdwg.mxu0
  %v3358 = vld [vmem:[%s438] sm:$0xff]
  %v3359 = vld [vmem:[%s438 + $0x8] sm:$0xff]
  %v3360 = vld [vmem:[%s438 + $0x10] sm:$0xff]
  %v3361 = vld [vmem:[%s438 + $0x18] sm:$0x1]
  %v3363 = vsel %vm385, %v3275, 0
  %v3366 = vsel %vm78, %v3361, 0
  %3368 = vmatpush.msra.mxu0 0.0
  %3369 = vmatpush.msra.mxu0 0.0
  %3370 = vmatpush.msra.mxu0 0.0
  %3371 = vmatpush.msra.mxu0 0.0
  %3372 = vmatpush.msra.mxu0 0.0
  %3373 = vmatpush.msra.mxu0 0.0
  %3374 = vmatpush.msra.mxu0 0.0
  %3375 = vmatpush.msra.mxu0 0.0
  %3376 = vmatpush.msra.mxu0 0.0
  %3377 = vmatpush.msra.mxu0 0.0
  %3378 = vmatpush.msra.mxu0 0.0
  %3379 = vmatpush.msra.mxu0 0.0
  %3380 = vmatpush.msra.mxu0 %v3366
  %3381 = vmatpush.msra.mxu0 %v3360
  %3382 = vmatpush.msra.mxu0 %v3359
  %3383 = vmatpush.msra.mxu0 %v3358
  %3384 = vmatmul.f32.gmra.mxu0 %v3363
  %v3385 = vpop.f32.mrf.mxu0
  %v3386 = vadd.f32 0.0, %v3385
  %3387 = vdwg.mxu0
  %v3389 = vsel %vm385, %v3263, 0
  %v3392 = vsel %vm78, %v3293, 0
  %3394 = vmatpush.msra.mxu0 0.0
  %3395 = vmatpush.msra.mxu0 0.0
  %3396 = vmatpush.msra.mxu0 0.0
  %3397 = vmatpush.msra.mxu0 0.0
  %3398 = vmatpush.msra.mxu0 0.0
  %3399 = vmatpush.msra.mxu0 0.0
  %3400 = vmatpush.msra.mxu0 0.0
  %3401 = vmatpush.msra.mxu0 0.0
  %3402 = vmatpush.msra.mxu0 0.0
  %3403 = vmatpush.msra.mxu0 0.0
  %3404 = vmatpush.msra.mxu0 0.0
  %3405 = vmatpush.msra.mxu0 0.0
  %3406 = vmatpush.msra.mxu0 %v3392
  %3407 = vmatpush.msra.mxu0 %v3292
  %3408 = vmatpush.msra.mxu0 %v3291
  %3409 = vmatpush.msra.mxu0 %v3290
  %3410 = vmatmul.f32.gmra.mxu0 %v3389
  %v3411 = vpop.f32.mrf.mxu0
  %v3412 = vadd.f32 %v3386, %v3411
  %3413 = vdwg.mxu0
  %v3414 = vld [vmem:[%s495] sm:$0xff]
  %v3415 = vld [vmem:[%s495 + $0x8] sm:$0xff]
  %v3416 = vld [vmem:[%s495 + $0x10] sm:$0xff]
  %v3417 = vld [vmem:[%s495 + $0x18] sm:$0x1]
  %v3419 = vsel %vm385, %v3278, 0
  %v3422 = vsel %vm78, %v3417, 0
  %3424 = vmatpush.msra.mxu0 0.0
  %3425 = vmatpush.msra.mxu0 0.0
  %3426 = vmatpush.msra.mxu0 0.0
  %3427 = vmatpush.msra.mxu0 0.0
  %3428 = vmatpush.msra.mxu0 0.0
  %3429 = vmatpush.msra.mxu0 0.0
  %3430 = vmatpush.msra.mxu0 0.0
  %3431 = vmatpush.msra.mxu0 0.0
  %3432 = vmatpush.msra.mxu0 0.0
  %3433 = vmatpush.msra.mxu0 0.0
  %3434 = vmatpush.msra.mxu0 0.0
  %3435 = vmatpush.msra.mxu0 0.0
  %3436 = vmatpush.msra.mxu0 %v3422
  %3437 = vmatpush.msra.mxu0 %v3416
  %3438 = vmatpush.msra.mxu0 %v3415
  %3439 = vmatpush.msra.mxu0 %v3414
  %3440 = vmatmul.f32.gmra.mxu0 %v3419
  %v3441 = vpop.f32.mrf.mxu0
  %v3442 = vadd.f32 0.0, %v3441
  %3443 = vdwg.mxu0
  %v3445 = vsel %vm385, %v3266, 0
  %v3448 = vsel %vm78, %v3297, 0
  %3450 = vmatpush.msra.mxu0 0.0
  %3451 = vmatpush.msra.mxu0 0.0
  %3452 = vmatpush.msra.mxu0 0.0
  %3453 = vmatpush.msra.mxu0 0.0
  %3454 = vmatpush.msra.mxu0 0.0
  %3455 = vmatpush.msra.mxu0 0.0
  %3456 = vmatpush.msra.mxu0 0.0
  %3457 = vmatpush.msra.mxu0 0.0
  %3458 = vmatpush.msra.mxu0 0.0
  %3459 = vmatpush.msra.mxu0 0.0
  %3460 = vmatpush.msra.mxu0 0.0
  %3461 = vmatpush.msra.mxu0 0.0
  %3462 = vmatpush.msra.mxu0 %v3448
  %3463 = vmatpush.msra.mxu0 %v3296
  %3464 = vmatpush.msra.mxu0 %v3295
  %3465 = vmatpush.msra.mxu0 %v3294
  %3466 = vmatmul.f32.gmra.mxu0 %v3445
  %v3467 = vpop.f32.mrf.mxu0
  %v3468 = vadd.f32 %v3442, %v3467
  %3469 = vdwg.mxu0
  %v3470 = vld [vmem:[%s552] sm:$0xff]
  %v3471 = vld [vmem:[%s552 + $0x8] sm:$0xff]
  %v3472 = vld [vmem:[%s552 + $0x10] sm:$0xff]
  %v3473 = vld [vmem:[%s552 + $0x18] sm:$0x1]
  %v3475 = vsel %vm385, %v3281, 0
  %v3478 = vsel %vm78, %v3473, 0
  %3480 = vmatpush.msra.mxu0 0.0
  %3481 = vmatpush.msra.mxu0 0.0
  %3482 = vmatpush.msra.mxu0 0.0
  %3483 = vmatpush.msra.mxu0 0.0
  %3484 = vmatpush.msra.mxu0 0.0
  %3485 = vmatpush.msra.mxu0 0.0
  %3486 = vmatpush.msra.mxu0 0.0
  %3487 = vmatpush.msra.mxu0 0.0
  %3488 = vmatpush.msra.mxu0 0.0
  %3489 = vmatpush.msra.mxu0 0.0
  %3490 = vmatpush.msra.mxu0 0.0
  %3491 = vmatpush.msra.mxu0 0.0
  %3492 = vmatpush.msra.mxu0 %v3478
  %3493 = vmatpush.msra.mxu0 %v3472
  %3494 = vmatpush.msra.mxu0 %v3471
  %3495 = vmatpush.msra.mxu0 %v3470
  %3496 = vmatmul.f32.gmra.mxu0 %v3475
  %v3497 = vpop.f32.mrf.mxu0
  %v3498 = vadd.f32 0.0, %v3497
  %3499 = vdwg.mxu0
  %v3501 = vsel %vm385, %v3269, 0
  %v3504 = vsel %vm78, %v3301, 0
  %3506 = vmatpush.msra.mxu0 0.0
  %3507 = vmatpush.msra.mxu0 0.0
  %3508 = vmatpush.msra.mxu0 0.0
  %3509 = vmatpush.msra.mxu0 0.0
  %3510 = vmatpush.msra.mxu0 0.0
  %3511 = vmatpush.msra.mxu0 0.0
  %3512 = vmatpush.msra.mxu0 0.0
  %3513 = vmatpush.msra.mxu0 0.0
  %3514 = vmatpush.msra.mxu0 0.0
  %3515 = vmatpush.msra.mxu0 0.0
  %3516 = vmatpush.msra.mxu0 0.0
  %3517 = vmatpush.msra.mxu0 0.0
  %3518 = vmatpush.msra.mxu0 %v3504
  %3519 = vmatpush.msra.mxu0 %v3300
  %3520 = vmatpush.msra.mxu0 %v3299
  %3521 = vmatpush.msra.mxu0 %v3298
  %3522 = vmatmul.f32.gmra.mxu0 %v3501
  %v3523 = vpop.f32.mrf.mxu0
  %v3524 = vadd.f32 %v3498, %v3523
  %3525 = vdwg.mxu0
  %v3526 = vld [vmem:[%s609] sm:$0xff]
  %v3527 = vld [vmem:[%s609 + $0x8] sm:$0xff]
  %v3528 = vld [vmem:[%s609 + $0x10] sm:$0xff]
  %v3529 = vld [vmem:[%s609 + $0x18] sm:$0x1]
  %v3531 = vsel %vm385, %v3284, 0
  %v3534 = vsel %vm78, %v3529, 0
  %3536 = vmatpush.msra.mxu0 0.0
  %3537 = vmatpush.msra.mxu0 0.0
  %3538 = vmatpush.msra.mxu0 0.0
  %3539 = vmatpush.msra.mxu0 0.0
  %3540 = vmatpush.msra.mxu0 0.0
  %3541 = vmatpush.msra.mxu0 0.0
  %3542 = vmatpush.msra.mxu0 0.0
  %3543 = vmatpush.msra.mxu0 0.0
  %3544 = vmatpush.msra.mxu0 0.0
  %3545 = vmatpush.msra.mxu0 0.0
  %3546 = vmatpush.msra.mxu0 0.0
  %3547 = vmatpush.msra.mxu0 0.0
  %3548 = vmatpush.msra.mxu0 %v3534
  %3549 = vmatpush.msra.mxu0 %v3528
  %3550 = vmatpush.msra.mxu0 %v3527
  %3551 = vmatpush.msra.mxu0 %v3526
  %3552 = vmatmul.f32.gmra.mxu0 %v3531
  %v3553 = vpop.f32.mrf.mxu0
  %v3554 = vadd.f32 0.0, %v3553
  %3555 = vdwg.mxu0
  %v3556 = vadd.f32 %v3356, %v3554
  %v3557 = vadd.f32 %v3556, %v3412
  %v3558 = vadd.f32 %v3557, %v3468
  %v3559 = vadd.f32 %v3558, %v3524
  %v3560 = vld [vmem:[%s5] sm:$0xff]
  %3562 = vset.pattern.permute.xlu0 0
  %3563 = vperm.xlu0 %3562, %v3560
  %v3564 = vpop.permute.xlu0 %3563
  %v3566 = vadd.f32 %v3559, %v3564
  %v3567 = vmax.f32 %v3566, 0.0
  %v3568 = vld [vmem:[%s7] sm:$0xff]
  %v3569 = vld [vmem:[%s7 + $0x8] sm:$0x1]
  %v3571 = vsel %vm71, %v3567, 0
  %v3574 = vsel %vm78, %v3569, 0
  %3576 = vmatpush.msra.mxu0 0.0
  %3577 = vmatpush.msra.mxu0 0.0
  %3578 = vmatpush.msra.mxu0 0.0
  %3579 = vmatpush.msra.mxu0 0.0
  %3580 = vmatpush.msra.mxu0 0.0
  %3581 = vmatpush.msra.mxu0 0.0
  %3582 = vmatpush.msra.mxu0 0.0
  %3583 = vmatpush.msra.mxu0 0.0
  %3584 = vmatpush.msra.mxu0 0.0
  %3585 = vmatpush.msra.mxu0 0.0
  %3586 = vmatpush.msra.mxu0 0.0
  %3587 = vmatpush.msra.mxu0 0.0
  %3588 = vmatpush.msra.mxu0 0.0
  %3589 = vmatpush.msra.mxu0 0.0
  %3590 = vmatpush.msra.mxu0 %v3574
  %3591 = vmatpush.msra.mxu0 %v3568
  %3592 = vmatmul.f32.gmra.mxu0 %v3571
  %v3593 = vpop.f32.mrf.mxu0
  %v3594 = vadd.f32 0.0, %v3593
  %3595 = vdwg.mxu0
  %v3596 = vld [vmem:[%s680] sm:$0xff]
  %v3597 = vld [vmem:[%s680 + $0x8] sm:$0x1]
  %v3599 = vsel %vm78, %v3597, 0
  %3601 = vmatpush.msra.mxu0 0.0
  %3602 = vmatpush.msra.mxu0 0.0
  %3603 = vmatpush.msra.mxu0 0.0
  %3604 = vmatpush.msra.mxu0 0.0
  %3605 = vmatpush.msra.mxu0 0.0
  %3606 = vmatpush.msra.mxu0 0.0
  %3607 = vmatpush.msra.mxu0 0.0
  %3608 = vmatpush.msra.mxu0 0.0
  %3609 = vmatpush.msra.mxu0 0.0
  %3610 = vmatpush.msra.mxu0 0.0
  %3611 = vmatpush.msra.mxu0 0.0
  %3612 = vmatpush.msra.mxu0 0.0
  %3613 = vmatpush.msra.mxu0 0.0
  %3614 = vmatpush.msra.mxu0 0.0
  %3615 = vmatpush.msra.mxu0 %v3599
  %3616 = vmatpush.msra.mxu0 %v3596
  %3617 = vmatmul.f32.gmra.mxu0 %v3571
  %v3618 = vpop.f32.mrf.mxu0
  %v3619 = vadd.f32 0.0, %v3618
  %3620 = vdwg.mxu0
  %v3621 = vld [vmem:[%s706] sm:$0xff]
  %v3622 = vld [vmem:[%s706 + $0x8] sm:$0x1]
  %v3624 = vsel %vm78, %v3622, 0
  %3626 = vmatpush.msra.mxu0 0.0
  %3627 = vmatpush.msra.mxu0 0.0
  %3628 = vmatpush.msra.mxu0 0.0
  %3629 = vmatpush.msra.mxu0 0.0
  %3630 = vmatpush.msra.mxu0 0.0
  %3631 = vmatpush.msra.mxu0 0.0
  %3632 = vmatpush.msra.mxu0 0.0
  %3633 = vmatpush.msra.mxu0 0.0
  %3634 = vmatpush.msra.mxu0 0.0
  %3635 = vmatpush.msra.mxu0 0.0
  %3636 = vmatpush.msra.mxu0 0.0
  %3637 = vmatpush.msra.mxu0 0.0
  %3638 = vmatpush.msra.mxu0 0.0
  %3639 = vmatpush.msra.mxu0 0.0
  %3640 = vmatpush.msra.mxu0 %v3624
  %3641 = vmatpush.msra.mxu0 %v3621
  %3642 = vmatmul.f32.gmra.mxu0 %v3571
  %v3643 = vpop.f32.mrf.mxu0
  %v3644 = vadd.f32 0.0, %v3643
  %3645 = vdwg.mxu0
  %v3646 = vld [vmem:[%s732] sm:$0xff]
  %v3647 = vld [vmem:[%s732 + $0x8] sm:$0x1]
  %v3649 = vsel %vm78, %v3647, 0
  %3651 = vmatpush.msra.mxu0 0.0
  %3652 = vmatpush.msra.mxu0 0.0
  %3653 = vmatpush.msra.mxu0 0.0
  %3654 = vmatpush.msra.mxu0 0.0
  %3655 = vmatpush.msra.mxu0 0.0
  %3656 = vmatpush.msra.mxu0 0.0
  %3657 = vmatpush.msra.mxu0 0.0
  %3658 = vmatpush.msra.mxu0 0.0
  %3659 = vmatpush.msra.mxu0 0.0
  %3660 = vmatpush.msra.mxu0 0.0
  %3661 = vmatpush.msra.mxu0 0.0
  %3662 = vmatpush.msra.mxu0 0.0
  %3663 = vmatpush.msra.mxu0 0.0
  %3664 = vmatpush.msra.mxu0 0.0
  %3665 = vmatpush.msra.mxu0 %v3649
  %3666 = vmatpush.msra.mxu0 %v3646
  %3667 = vmatmul.f32.gmra.mxu0 %v3571
  %v3668 = vpop.f32.mrf.mxu0
  %v3669 = vadd.f32 0.0, %v3668
  %3670 = vdwg.mxu0
  %v3671 = vmax.f32 %v3594, %v3619
  %v3672 = vmax.f32 %v3671, %v3644
  %v3673 = vmax.f32 %v3672, %v3669
  %s3674 = scalar_lea.vmem %s17, 8
  %3675 = vst.msk [vmem:[%s3674] sm:$0xff] %vm761, %v3673
  %v3676 = vld [vmem:[%s8] sm:$0xff]
  %v3677 = vld [vmem:[%s8 + $0x8] sm:$0xff]
  %v3678 = vld [vmem:[%s8 + $0x10] sm:$0xff]
  %v3679 = vld [vmem:[%s8 + $0x18] sm:$0xff]
  %v3680 = vld [vmem:[%s8 + $0x20] sm:$0xff]
  %v3681 = vld [vmem:[%s8 + $0x28] sm:$0xff]
  %v3682 = vld [vmem:[%s8 + $0x30] sm:$0xff]
  %v3683 = vld [vmem:[%s8 + $0x38] sm:$0xff]
  %v3684 = vld [vmem:[%s8 + $0x40] sm:$0xff]
  %v3685 = vld [vmem:[%s8 + $0x48] sm:$0xff]
  %v3686 = vld [vmem:[%s8 + $0x50] sm:$0xff]
  %v3687 = vld [vmem:[%s8 + $0x58] sm:$0xff]
  %v3688 = vld [vmem:[%s8 + $0x60] sm:$0xff]
  %v3689 = vld [vmem:[%s8 + $0x68] sm:$0xff]
  %v3690 = vld [vmem:[%s8 + $0x70] sm:$0xff]
  %v3691 = vld [vmem:[%s8 + $0x78] sm:$0xff]
  %v3692 = vld [vmem:[%s8 + $0x80] sm:$0xff]
  %v3693 = vld [vmem:[%s8 + $0x88] sm:$0xff]
  %v3695 = vsel %vm781, %v3676, 0
  %v3698 = vsel %vm781, %v3677, 0
  %v3701 = vsel %vm781, %v3678, 0
  %v3704 = vsel %vm781, %v3679, 0
  %v3707 = vsel %vm781, %v3680, 0
  %v3710 = vsel %vm781, %v3681, 0
  %v3713 = vsel %vm781, %v3682, 0
  %v3716 = vsel %vm781, %v3683, 0
  %v3719 = vsel %vm781, %v3684, 0
  %v3722 = vsel %vm781, %v3685, 0
  %v3725 = vsel %vm781, %v3686, 0
  %v3728 = vsel %vm781, %v3687, 0
  %v3731 = vsel %vm781, %v3688, 0
  %v3734 = vsel %vm781, %v3689, 0
  %v3737 = vsel %vm781, %v3690, 0
  %v3740 = vsel %vm781, %v3691, 0
  %v3743 = vsel %vm781, %v3692, 0
  %v3746 = vsel %vm781, %v3693, 0
  %3748 = vmatpush.msra.mxu0 0.0
  %3749 = vmatpush.msra.mxu0 0.0
  %3750 = vmatpush.msra.mxu0 0.0
  %3751 = vmatpush.msra.mxu0 0.0
  %3752 = vmatpush.msra.mxu0 0.0
  %3753 = vmatpush.msra.mxu0 0.0
  %3754 = vmatpush.msra.mxu0 0.0
  %3755 = vmatpush.msra.mxu0 0.0
  %3756 = vmatpush.msra.mxu0 0.0
  %3757 = vmatpush.msra.mxu0 0.0
  %3758 = vmatpush.msra.mxu0 0.0
  %3759 = vmatpush.msra.mxu0 0.0
  %3760 = vmatpush.msra.mxu0 0.0
  %3761 = vmatpush.msra.mxu0 0.0
  %3762 = vmatpush.msra.mxu0 0.0
  %3763 = vmatpush.msra.mxu0 %v3673
  %3764 = vmatmul.f32.gmra.mxu0 %v3695
  %v3765 = vpop.f32.mrf.mxu0
  %v3766 = vadd.f32 0.0, %v3765
  %3767 = vmatmul.f32.gmra.mxu0 %v3698
  %v3768 = vpop.f32.mrf.mxu0
  %v3769 = vadd.f32 0.0, %v3768
  %3770 = vmatmul.f32.gmra.mxu0 %v3701
  %v3771 = vpop.f32.mrf.mxu0
  %v3772 = vadd.f32 0.0, %v3771
  %3773 = vmatmul.f32.gmra.mxu0 %v3704
  %v3774 = vpop.f32.mrf.mxu0
  %v3775 = vadd.f32 0.0, %v3774
  %3776 = vmatmul.f32.gmra.mxu0 %v3707
  %v3777 = vpop.f32.mrf.mxu0
  %v3778 = vadd.f32 0.0, %v3777
  %3779 = vmatmul.f32.gmra.mxu0 %v3710
  %v3780 = vpop.f32.mrf.mxu0
  %v3781 = vadd.f32 0.0, %v3780
  %3782 = vmatmul.f32.gmra.mxu0 %v3713
  %v3783 = vpop.f32.mrf.mxu0
  %v3784 = vadd.f32 0.0, %v3783
  %3785 = vmatmul.f32.gmra.mxu0 %v3716
  %v3786 = vpop.f32.mrf.mxu0
  %v3787 = vadd.f32 0.0, %v3786
  %3788 = vmatmul.f32.gmra.mxu0 %v3719
  %v3789 = vpop.f32.mrf.mxu0
  %v3790 = vadd.f32 0.0, %v3789
  %3791 = vmatmul.f32.gmra.mxu0 %v3722
  %v3792 = vpop.f32.mrf.mxu0
  %v3793 = vadd.f32 0.0, %v3792
  %3794 = vmatmul.f32.gmra.mxu0 %v3725
  %v3795 = vpop.f32.mrf.mxu0
  %v3796 = vadd.f32 0.0, %v3795
  %3797 = vmatmul.f32.gmra.mxu0 %v3728
  %v3798 = vpop.f32.mrf.mxu0
  %v3799 = vadd.f32 0.0, %v3798
  %3800 = vmatmul.f32.gmra.mxu0 %v3731
  %v3801 = vpop.f32.mrf.mxu0
  %v3802 = vadd.f32 0.0, %v3801
  %3803 = vmatmul.f32.gmra.mxu0 %v3734
  %v3804 = vpop.f32.mrf.mxu0
  %v3805 = vadd.f32 0.0, %v3804
  %3806 = vmatmul.f32.gmra.mxu0 %v3737
  %v3807 = vpop.f32.mrf.mxu0
  %v3808 = vadd.f32 0.0, %v3807
  %3809 = vmatmul.f32.gmra.mxu0 %v3740
  %v3810 = vpop.f32.mrf.mxu0
  %v3811 = vadd.f32 0.0, %v3810
  %3812 = vmatmul.f32.gmra.mxu0 %v3743
  %v3813 = vpop.f32.mrf.mxu0
  %v3814 = vadd.f32 0.0, %v3813
  %3815 = vmatmul.f32.gmra.mxu0 %v3746
  %v3816 = vpop.f32.mrf.mxu0
  %v3817 = vadd.f32 0.0, %v3816
  %3818 = vdwg.mxu0
  %v3819 = vld [vmem:[%s10] sm:$0xf]
  %v3820 = vld [vmem:[%s908] sm:$0xf]
  %v3821 = vld [vmem:[%s910] sm:$0xf]
  %v3822 = vld [vmem:[%s912] sm:$0xf]
  %v3823 = vld [vmem:[%s914] sm:$0xf]
  %v3825 = vsel %vm761, %v3790, 0
  %v3828 = vsel %vm761, %v3793, 0
  %v3831 = vsel %vm127, %v3823, 0
  %3833 = vmatpush.msra.mxu0 0.0
  %3834 = vmatpush.msra.mxu0 0.0
  %3835 = vmatpush.msra.mxu0 0.0
  %3836 = vmatpush.msra.mxu0 0.0
  %3837 = vmatpush.msra.mxu0 0.0
  %3838 = vmatpush.msra.mxu0 0.0
  %3839 = vmatpush.msra.mxu0 0.0
  %3840 = vmatpush.msra.mxu0 0.0
  %3841 = vmatpush.msra.mxu0 0.0
  %3842 = vmatpush.msra.mxu0 0.0
  %3843 = vmatpush.msra.mxu0 0.0
  %3844 = vmatpush.msra.mxu0 0.0
  %3845 = vmatpush.msra.mxu0 0.0
  %3846 = vmatpush.msra.mxu0 0.0
  %3847 = vmatpush.msra.mxu0 0.0
  %3848 = vmatpush.msra.mxu0 %v3831
  %3849 = vmatmul.f32.gmra.mxu0 %v3825
  %v3850 = vpop.f32.mrf.mxu0
  %v3851 = vadd.f32 0.0, %v3850
  %3852 = vmatmul.f32.gmra.mxu0 %v3828
  %v3853 = vpop.f32.mrf.mxu0
  %v3854 = vadd.f32 0.0, %v3853
  %3855 = vdwg.mxu0
  %v3857 = vsel %vm761, %v3766, 0
  %v3860 = vsel %vm761, %v3769, 0
  %v3863 = vsel %vm127, %v3819, 0
  %3865 = vmatpush.msra.mxu0 0.0
  %3866 = vmatpush.msra.mxu0 0.0
  %3867 = vmatpush.msra.mxu0 0.0
  %3868 = vmatpush.msra.mxu0 0.0
  %3869 = vmatpush.msra.mxu0 0.0
  %3870 = vmatpush.msra.mxu0 0.0
  %3871 = vmatpush.msra.mxu0 0.0
  %3872 = vmatpush.msra.mxu0 0.0
  %3873 = vmatpush.msra.mxu0 0.0
  %3874 = vmatpush.msra.mxu0 0.0
  %3875 = vmatpush.msra.mxu0 0.0
  %3876 = vmatpush.msra.mxu0 0.0
  %3877 = vmatpush.msra.mxu0 0.0
  %3878 = vmatpush.msra.mxu0 0.0
  %3879 = vmatpush.msra.mxu0 0.0
  %3880 = vmatpush.msra.mxu0 %v3863
  %3881 = vmatmul.f32.gmra.mxu0 %v3857
  %v3882 = vpop.f32.mrf.mxu0
  %v3883 = vadd.f32 %v3851, %v3882
  %3884 = vmatmul.f32.gmra.mxu0 %v3860
  %v3885 = vpop.f32.mrf.mxu0
  %v3886 = vadd.f32 %v3854, %v3885
  %3887 = vdwg.mxu0
  %v3888 = vld [vmem:[%s980] sm:$0xf]
  %v3890 = vsel %vm761, %v3796, 0
  %v3893 = vsel %vm761, %v3799, 0
  %v3896 = vsel %vm127, %v3888, 0
  %3898 = vmatpush.msra.mxu0 0.0
  %3899 = vmatpush.msra.mxu0 0.0
  %3900 = vmatpush.msra.mxu0 0.0
  %3901 = vmatpush.msra.mxu0 0.0
  %3902 = vmatpush.msra.mxu0 0.0
  %3903 = vmatpush.msra.mxu0 0.0
  %3904 = vmatpush.msra.mxu0 0.0
  %3905 = vmatpush.msra.mxu0 0.0
  %3906 = vmatpush.msra.mxu0 0.0
  %3907 = vmatpush.msra.mxu0 0.0
  %3908 = vmatpush.msra.mxu0 0.0
  %3909 = vmatpush.msra.mxu0 0.0
  %3910 = vmatpush.msra.mxu0 0.0
  %3911 = vmatpush.msra.mxu0 0.0
  %3912 = vmatpush.msra.mxu0 0.0
  %3913 = vmatpush.msra.mxu0 %v3896
  %3914 = vmatmul.f32.gmra.mxu0 %v3890
  %v3915 = vpop.f32.mrf.mxu0
  %v3916 = vadd.f32 0.0, %v3915
  %3917 = vmatmul.f32.gmra.mxu0 %v3893
  %v3918 = vpop.f32.mrf.mxu0
  %v3919 = vadd.f32 0.0, %v3918
  %3920 = vdwg.mxu0
  %v3922 = vsel %vm761, %v3772, 0
  %v3925 = vsel %vm761, %v3775, 0
  %v3928 = vsel %vm127, %v3820, 0
  %3930 = vmatpush.msra.mxu0 0.0
  %3931 = vmatpush.msra.mxu0 0.0
  %3932 = vmatpush.msra.mxu0 0.0
  %3933 = vmatpush.msra.mxu0 0.0
  %3934 = vmatpush.msra.mxu0 0.0
  %3935 = vmatpush.msra.mxu0 0.0
  %3936 = vmatpush.msra.mxu0 0.0
  %3937 = vmatpush.msra.mxu0 0.0
  %3938 = vmatpush.msra.mxu0 0.0
  %3939 = vmatpush.msra.mxu0 0.0
  %3940 = vmatpush.msra.mxu0 0.0
  %3941 = vmatpush.msra.mxu0 0.0
  %3942 = vmatpush.msra.mxu0 0.0
  %3943 = vmatpush.msra.mxu0 0.0
  %3944 = vmatpush.msra.mxu0 0.0
  %3945 = vmatpush.msra.mxu0 %v3928
  %3946 = vmatmul.f32.gmra.mxu0 %v3922
  %v3947 = vpop.f32.mrf.mxu0
  %v3948 = vadd.f32 %v3916, %v3947
  %3949 = vmatmul.f32.gmra.mxu0 %v3925
  %v3950 = vpop.f32.mrf.mxu0
  %v3951 = vadd.f32 %v3919, %v3950
  %3952 = vdwg.mxu0
  %v3953 = vld [vmem:[%s1046] sm:$0xf]
  %v3955 = vsel %vm761, %v3802, 0
  %v3958 = vsel %vm761, %v3805, 0
  %v3961 = vsel %vm127, %v3953, 0
  %3963 = vmatpush.msra.mxu0 0.0
  %3964 = vmatpush.msra.mxu0 0.0
  %3965 = vmatpush.msra.mxu0 0.0
  %3966 = vmatpush.msra.mxu0 0.0
  %3967 = vmatpush.msra.mxu0 0.0
  %3968 = vmatpush.msra.mxu0 0.0
  %3969 = vmatpush.msra.mxu0 0.0
  %3970 = vmatpush.msra.mxu0 0.0
  %3971 = vmatpush.msra.mxu0 0.0
  %3972 = vmatpush.msra.mxu0 0.0
  %3973 = vmatpush.msra.mxu0 0.0
  %3974 = vmatpush.msra.mxu0 0.0
  %3975 = vmatpush.msra.mxu0 0.0
  %3976 = vmatpush.msra.mxu0 0.0
  %3977 = vmatpush.msra.mxu0 0.0
  %3978 = vmatpush.msra.mxu0 %v3961
  %3979 = vmatmul.f32.gmra.mxu0 %v3955
  %v3980 = vpop.f32.mrf.mxu0
  %v3981 = vadd.f32 0.0, %v3980
  %3982 = vmatmul.f32.gmra.mxu0 %v3958
  %v3983 = vpop.f32.mrf.mxu0
  %v3984 = vadd.f32 0.0, %v3983
  %3985 = vdwg.mxu0
  %v3987 = vsel %vm761, %v3778, 0
  %v3990 = vsel %vm761, %v3781, 0
  %v3993 = vsel %vm127, %v3821, 0
  %3995 = vmatpush.msra.mxu0 0.0
  %3996 = vmatpush.msra.mxu0 0.0
  %3997 = vmatpush.msra.mxu0 0.0
  %3998 = vmatpush.msra.mxu0 0.0
  %3999 = vmatpush.msra.mxu0 0.0
  %4000 = vmatpush.msra.mxu0 0.0
  %4001 = vmatpush.msra.mxu0 0.0
  %4002 = vmatpush.msra.mxu0 0.0
  %4003 = vmatpush.msra.mxu0 0.0
  %4004 = vmatpush.msra.mxu0 0.0
  %4005 = vmatpush.msra.mxu0 0.0
  %4006 = vmatpush.msra.mxu0 0.0
  %4007 = vmatpush.msra.mxu0 0.0
  %4008 = vmatpush.msra.mxu0 0.0
  %4009 = vmatpush.msra.mxu0 0.0
  %4010 = vmatpush.msra.mxu0 %v3993
  %4011 = vmatmul.f32.gmra.mxu0 %v3987
  %v4012 = vpop.f32.mrf.mxu0
  %v4013 = vadd.f32 %v3981, %v4012
  %4014 = vmatmul.f32.gmra.mxu0 %v3990
  %v4015 = vpop.f32.mrf.mxu0
  %v4016 = vadd.f32 %v3984, %v4015
  %4017 = vdwg.mxu0
  %v4018 = vld [vmem:[%s1112] sm:$0xf]
  %v4020 = vsel %vm761, %v3808, 0
  %v4023 = vsel %vm761, %v3811, 0
  %v4026 = vsel %vm127, %v4018, 0
  %4028 = vmatpush.msra.mxu0 0.0
  %4029 = vmatpush.msra.mxu0 0.0
  %4030 = vmatpush.msra.mxu0 0.0
  %4031 = vmatpush.msra.mxu0 0.0
  %4032 = vmatpush.msra.mxu0 0.0
  %4033 = vmatpush.msra.mxu0 0.0
  %4034 = vmatpush.msra.mxu0 0.0
  %4035 = vmatpush.msra.mxu0 0.0
  %4036 = vmatpush.msra.mxu0 0.0
  %4037 = vmatpush.msra.mxu0 0.0
  %4038 = vmatpush.msra.mxu0 0.0
  %4039 = vmatpush.msra.mxu0 0.0
  %4040 = vmatpush.msra.mxu0 0.0
  %4041 = vmatpush.msra.mxu0 0.0
  %4042 = vmatpush.msra.mxu0 0.0
  %4043 = vmatpush.msra.mxu0 %v4026
  %4044 = vmatmul.f32.gmra.mxu0 %v4020
  %v4045 = vpop.f32.mrf.mxu0
  %v4046 = vadd.f32 0.0, %v4045
  %4047 = vmatmul.f32.gmra.mxu0 %v4023
  %v4048 = vpop.f32.mrf.mxu0
  %v4049 = vadd.f32 0.0, %v4048
  %4050 = vdwg.mxu0
  %v4052 = vsel %vm761, %v3784, 0
  %v4055 = vsel %vm761, %v3787, 0
  %v4058 = vsel %vm127, %v3822, 0
  %4060 = vmatpush.msra.mxu0 0.0
  %4061 = vmatpush.msra.mxu0 0.0
  %4062 = vmatpush.msra.mxu0 0.0
  %4063 = vmatpush.msra.mxu0 0.0
  %4064 = vmatpush.msra.mxu0 0.0
  %4065 = vmatpush.msra.mxu0 0.0
  %4066 = vmatpush.msra.mxu0 0.0
  %4067 = vmatpush.msra.mxu0 0.0
  %4068 = vmatpush.msra.mxu0 0.0
  %4069 = vmatpush.msra.mxu0 0.0
  %4070 = vmatpush.msra.mxu0 0.0
  %4071 = vmatpush.msra.mxu0 0.0
  %4072 = vmatpush.msra.mxu0 0.0
  %4073 = vmatpush.msra.mxu0 0.0
  %4074 = vmatpush.msra.mxu0 0.0
  %4075 = vmatpush.msra.mxu0 %v4058
  %4076 = vmatmul.f32.gmra.mxu0 %v4052
  %v4077 = vpop.f32.mrf.mxu0
  %v4078 = vadd.f32 %v4046, %v4077
  %4079 = vmatmul.f32.gmra.mxu0 %v4055
  %v4080 = vpop.f32.mrf.mxu0
  %v4081 = vadd.f32 %v4049, %v4080
  %4082 = vdwg.mxu0
  %v4083 = vld [vmem:[%s1178] sm:$0xf]
  %v4085 = vsel %vm761, %v3814, 0
  %v4088 = vsel %vm761, %v3817, 0
  %v4091 = vsel %vm127, %v4083, 0
  %4093 = vmatpush.msra.mxu0 0.0
  %4094 = vmatpush.msra.mxu0 0.0
  %4095 = vmatpush.msra.mxu0 0.0
  %4096 = vmatpush.msra.mxu0 0.0
  %4097 = vmatpush.msra.mxu0 0.0
  %4098 = vmatpush.msra.mxu0 0.0
  %4099 = vmatpush.msra.mxu0 0.0
  %4100 = vmatpush.msra.mxu0 0.0
  %4101 = vmatpush.msra.mxu0 0.0
  %4102 = vmatpush.msra.mxu0 0.0
  %4103 = vmatpush.msra.mxu0 0.0
  %4104 = vmatpush.msra.mxu0 0.0
  %4105 = vmatpush.msra.mxu0 0.0
  %4106 = vmatpush.msra.mxu0 0.0
  %4107 = vmatpush.msra.mxu0 0.0
  %4108 = vmatpush.msra.mxu0 %v4091
  %4109 = vmatmul.f32.gmra.mxu0 %v4085
  %v4110 = vpop.f32.mrf.mxu0
  %v4111 = vadd.f32 0.0, %v4110
  %4112 = vmatmul.f32.gmra.mxu0 %v4088
  %v4113 = vpop.f32.mrf.mxu0
  %v4114 = vadd.f32 0.0, %v4113
  %4115 = vdwg.mxu0
  %v4116 = vadd.f32 %v3883, %v4111
  %v4117 = vadd.f32 %v3886, %v4114
  %v4118 = vadd.f32 %v4116, %v3948
  %v4119 = vadd.f32 %v4117, %v3951
  %v4120 = vadd.f32 %v4118, %v4013
  %v4121 = vadd.f32 %v4119, %v4016
  %v4122 = vadd.f32 %v4120, %v4078
  %v4123 = vadd.f32 %v4121, %v4081
  %v4124 = vld [vmem:[%s9] sm:$0xff]
  %v4125 = vld [vmem:[%s9 + $0x8] sm:$0xff]
  %4127 = vset.pattern.permute.xlu0 0
  %4128 = vperm.xlu0 %4127, %v4124
  %v4129 = vpop.permute.xlu0 %4128
  %4132 = vset.pattern.permute.xlu0 0
  %4133 = vperm.xlu0 %4132, %v4125
  %v4134 = vpop.permute.xlu0 %4133
  %v4136 = vadd.f32 %v4122, %v4129
  %v4137 = vadd.f32 %v4123, %v4134
  %v4138 = vmax.f32 %v4136, 0.0
  %v4139 = vmax.f32 %v4137, 0.0
  %v4140 = vld [vmem:[%s11] sm:$0xff]
  %v4141 = vld [vmem:[%s11 + $0x8] sm:$0xff]
  %v4142 = vld [vmem:[%s11 + $0x10] sm:$0xff]
  %v4143 = vld [vmem:[%s11 + $0x18] sm:$0xff]
  %v4144 = vld [vmem:[%s11 + $0x20] sm:$0xff]
  %v4145 = vld [vmem:[%s11 + $0x28] sm:$0xff]
  %v4146 = vld [vmem:[%s11 + $0x30] sm:$0xff]
  %v4147 = vld [vmem:[%s11 + $0x38] sm:$0xff]
  %v4148 = vld [vmem:[%s11 + $0x40] sm:$0xff]
  %v4149 = vld [vmem:[%s11 + $0x48] sm:$0xff]
  %v4150 = vld [vmem:[%s11 + $0x50] sm:$0xff]
  %v4151 = vld [vmem:[%s11 + $0x58] sm:$0xff]
  %v4152 = vld [vmem:[%s11 + $0x60] sm:$0xff]
  %v4153 = vld [vmem:[%s11 + $0x68] sm:$0xff]
  %v4154 = vld [vmem:[%s11 + $0x70] sm:$0xff]
  %v4155 = vld [vmem:[%s11 + $0x78] sm:$0xff]
  %v4156 = vld [vmem:[%s11 + $0x80] sm:$0xff]
  %v4157 = vld [vmem:[%s11 + $0x88] sm:$0xff]
  %v4158 = vld [vmem:[%s11 + $0x90] sm:$0xff]
  %v4159 = vld [vmem:[%s11 + $0x98] sm:$0xff]
  %v4160 = vld [vmem:[%s11 + $0xa0] sm:$0xff]
  %v4161 = vld [vmem:[%s11 + $0xa8] sm:$0xff]
  %v4162 = vld [vmem:[%s11 + $0xb0] sm:$0xff]
  %v4163 = vld [vmem:[%s11 + $0xb8] sm:$0xff]
  %v4164 = vld [vmem:[%s11 + $0xc0] sm:$0xff]
  %v4166 = vsel %vm289, %v4140, 0
  %v4169 = vsel %vm289, %v4141, 0
  %v4172 = vsel %vm289, %v4142, 0
  %v4175 = vsel %vm289, %v4143, 0
  %v4178 = vsel %vm289, %v4144, 0
  %v4181 = vsel %vm289, %v4145, 0
  %v4184 = vsel %vm289, %v4146, 0
  %v4187 = vsel %vm289, %v4147, 0
  %v4190 = vsel %vm289, %v4148, 0
  %v4193 = vsel %vm289, %v4149, 0
  %v4196 = vsel %vm289, %v4150, 0
  %v4199 = vsel %vm289, %v4151, 0
  %v4202 = vsel %vm289, %v4152, 0
  %v4205 = vsel %vm289, %v4153, 0
  %v4208 = vsel %vm289, %v4154, 0
  %v4211 = vsel %vm289, %v4155, 0
  %v4214 = vsel %vm289, %v4156, 0
  %v4217 = vsel %vm289, %v4157, 0
  %v4220 = vsel %vm289, %v4158, 0
  %v4223 = vsel %vm289, %v4159, 0
  %v4226 = vsel %vm289, %v4160, 0
  %v4229 = vsel %vm289, %v4161, 0
  %v4232 = vsel %vm289, %v4162, 0
  %v4235 = vsel %vm289, %v4163, 0
  %v4238 = vsel %vm289, %v4164, 0
  %4240 = vmatpush.msra.mxu0 0.0
  %4241 = vmatpush.msra.mxu0 0.0
  %4242 = vmatpush.msra.mxu0 0.0
  %4243 = vmatpush.msra.mxu0 0.0
  %4244 = vmatpush.msra.mxu0 0.0
  %4245 = vmatpush.msra.mxu0 0.0
  %4246 = vmatpush.msra.mxu0 0.0
  %4247 = vmatpush.msra.mxu0 0.0
  %4248 = vmatpush.msra.mxu0 0.0
  %4249 = vmatpush.msra.mxu0 0.0
  %4250 = vmatpush.msra.mxu0 0.0
  %4251 = vmatpush.msra.mxu0 0.0
  %4252 = vmatpush.msra.mxu0 0.0
  %4253 = vmatpush.msra.mxu0 0.0
  %4254 = vmatpush.msra.mxu0 %v4139
  %4255 = vmatpush.msra.mxu0 %v4138
  %4256 = vmatmul.f32.gmra.mxu0 %v4166
  %v4257 = vpop.f32.mrf.mxu0
  %v4258 = vadd.f32 0.0, %v4257
  %4259 = vmatmul.f32.gmra.mxu0 %v4169
  %v4260 = vpop.f32.mrf.mxu0
  %v4261 = vadd.f32 0.0, %v4260
  %4262 = vmatmul.f32.gmra.mxu0 %v4172
  %v4263 = vpop.f32.mrf.mxu0
  %v4264 = vadd.f32 0.0, %v4263
  %4265 = vmatmul.f32.gmra.mxu0 %v4175
  %v4266 = vpop.f32.mrf.mxu0
  %v4267 = vadd.f32 0.0, %v4266
  %4268 = vmatmul.f32.gmra.mxu0 %v4178
  %v4269 = vpop.f32.mrf.mxu0
  %v4270 = vadd.f32 0.0, %v4269
  %4271 = vmatmul.f32.gmra.mxu0 %v4181
  %v4272 = vpop.f32.mrf.mxu0
  %v4273 = vadd.f32 0.0, %v4272
  %4274 = vmatmul.f32.gmra.mxu0 %v4184
  %v4275 = vpop.f32.mrf.mxu0
  %v4276 = vadd.f32 0.0, %v4275
  %4277 = vmatmul.f32.gmra.mxu0 %v4187
  %v4278 = vpop.f32.mrf.mxu0
  %v4279 = vadd.f32 0.0, %v4278
  %4280 = vmatmul.f32.gmra.mxu0 %v4190
  %v4281 = vpop.f32.mrf.mxu0
  %v4282 = vadd.f32 0.0, %v4281
  %4283 = vmatmul.f32.gmra.mxu0 %v4193
  %v4284 = vpop.f32.mrf.mxu0
  %v4285 = vadd.f32 0.0, %v4284
  %4286 = vmatmul.f32.gmra.mxu0 %v4196
  %v4287 = vpop.f32.mrf.mxu0
  %v4288 = vadd.f32 0.0, %v4287
  %4289 = vmatmul.f32.gmra.mxu0 %v4199
  %v4290 = vpop.f32.mrf.mxu0
  %v4291 = vadd.f32 0.0, %v4290
  %4292 = vmatmul.f32.gmra.mxu0 %v4202
  %v4293 = vpop.f32.mrf.mxu0
  %v4294 = vadd.f32 0.0, %v4293
  %4295 = vmatmul.f32.gmra.mxu0 %v4205
  %v4296 = vpop.f32.mrf.mxu0
  %v4297 = vadd.f32 0.0, %v4296
  %4298 = vmatmul.f32.gmra.mxu0 %v4208
  %v4299 = vpop.f32.mrf.mxu0
  %v4300 = vadd.f32 0.0, %v4299
  %4301 = vmatmul.f32.gmra.mxu0 %v4211
  %v4302 = vpop.f32.mrf.mxu0
  %v4303 = vadd.f32 0.0, %v4302
  %4304 = vmatmul.f32.gmra.mxu0 %v4214
  %v4305 = vpop.f32.mrf.mxu0
  %v4306 = vadd.f32 0.0, %v4305
  %4307 = vmatmul.f32.gmra.mxu0 %v4217
  %v4308 = vpop.f32.mrf.mxu0
  %v4309 = vadd.f32 0.0, %v4308
  %4310 = vmatmul.f32.gmra.mxu0 %v4220
  %v4311 = vpop.f32.mrf.mxu0
  %v4312 = vadd.f32 0.0, %v4311
  %4313 = vmatmul.f32.gmra.mxu0 %v4223
  %v4314 = vpop.f32.mrf.mxu0
  %v4315 = vadd.f32 0.0, %v4314
  %4316 = vmatmul.f32.gmra.mxu0 %v4226
  %v4317 = vpop.f32.mrf.mxu0
  %v4318 = vadd.f32 0.0, %v4317
  %4319 = vmatmul.f32.gmra.mxu0 %v4229
  %v4320 = vpop.f32.mrf.mxu0
  %v4321 = vadd.f32 0.0, %v4320
  %4322 = vmatmul.f32.gmra.mxu0 %v4232
  %v4323 = vpop.f32.mrf.mxu0
  %v4324 = vadd.f32 0.0, %v4323
  %4325 = vmatmul.f32.gmra.mxu0 %v4235
  %v4326 = vpop.f32.mrf.mxu0
  %v4327 = vadd.f32 0.0, %v4326
  %4328 = vmatmul.f32.gmra.mxu0 %v4238
  %v4329 = vpop.f32.mrf.mxu0
  %v4330 = vadd.f32 0.0, %v4329
  %4331 = vdwg.mxu0
  %v4332 = vld [vmem:[%s13] sm:$0xff]
  %v4333 = vld [vmem:[%s13 + $0x8] sm:$0xff]
  %v4334 = vld [vmem:[%s13 + $0x10] sm:$0xff]
  %v4335 = vld [vmem:[%s13 + $0x18] sm:$0xff]
  %v4336 = vld [vmem:[%s13 + $0x20] sm:$0xff]
  %v4337 = vld [vmem:[%s13 + $0x28] sm:$0xff]
  %v4338 = vld [vmem:[%s13 + $0x30] sm:$0x1]
  %v4339 = vld [vmem:[%s13 + $0x38] sm:$0x1]
  %v4340 = vld [vmem:[%s1436] sm:$0xff]
  %v4341 = vld [vmem:[%s1436 + $0x8] sm:$0xff]
  %v4342 = vld [vmem:[%s1436 + $0x10] sm:$0xff]
  %v4343 = vld [vmem:[%s1436 + $0x18] sm:$0xff]
  %v4344 = vld [vmem:[%s1436 + $0x20] sm:$0xff]
  %v4345 = vld [vmem:[%s1436 + $0x28] sm:$0xff]
  %v4346 = vld [vmem:[%s1436 + $0x30] sm:$0x1]
  %v4347 = vld [vmem:[%s1436 + $0x38] sm:$0x1]
  %v4348 = vld [vmem:[%s1445] sm:$0xff]
  %v4349 = vld [vmem:[%s1445 + $0x8] sm:$0xff]
  %v4350 = vld [vmem:[%s1445 + $0x10] sm:$0xff]
  %v4351 = vld [vmem:[%s1445 + $0x18] sm:$0xff]
  %v4352 = vld [vmem:[%s1445 + $0x20] sm:$0xff]
  %v4353 = vld [vmem:[%s1445 + $0x28] sm:$0xff]
  %v4354 = vld [vmem:[%s1445 + $0x30] sm:$0x1]
  %v4355 = vld [vmem:[%s1445 + $0x38] sm:$0x1]
  %v4356 = vld [vmem:[%s1454] sm:$0xff]
  %v4357 = vld [vmem:[%s1454 + $0x8] sm:$0xff]
  %v4358 = vld [vmem:[%s1454 + $0x10] sm:$0xff]
  %v4359 = vld [vmem:[%s1454 + $0x18] sm:$0xff]
  %v4360 = vld [vmem:[%s1454 + $0x20] sm:$0xff]
  %v4361 = vld [vmem:[%s1454 + $0x28] sm:$0xff]
  %v4362 = vld [vmem:[%s1454 + $0x30] sm:$0x1]
  %v4363 = vld [vmem:[%s1454 + $0x38] sm:$0x1]
  %v4364 = vld [vmem:[%s1463] sm:$0xff]
  %v4365 = vld [vmem:[%s1463 + $0x8] sm:$0xff]
  %v4366 = vld [vmem:[%s1463 + $0x10] sm:$0xff]
  %v4367 = vld [vmem:[%s1463 + $0x18] sm:$0xff]
  %v4368 = vld [vmem:[%s1463 + $0x20] sm:$0xff]
  %v4369 = vld [vmem:[%s1463 + $0x28] sm:$0xff]
  %v4370 = vld [vmem:[%s1463 + $0x30] sm:$0x1]
  %v4371 = vld [vmem:[%s1463 + $0x38] sm:$0x1]
  %v4373 = vsel %vm385, %v4270, 0
  %v4376 = vsel %vm78, %v4370, 0
  %v4379 = vsel %vm78, %v4371, 0
  %4381 = vmatpush.msra.mxu0 0.0
  %4382 = vmatpush.msra.mxu0 0.0
  %4383 = vmatpush.msra.mxu0 0.0
  %4384 = vmatpush.msra.mxu0 0.0
  %4385 = vmatpush.msra.mxu0 0.0
  %4386 = vmatpush.msra.mxu0 0.0
  %4387 = vmatpush.msra.mxu0 0.0
  %4388 = vmatpush.msra.mxu0 0.0
  %4389 = vmatpush.msra.mxu0 0.0
  %4390 = vmatpush.msra.mxu0 0.0
  %4391 = vmatpush.msra.mxu0 0.0
  %4392 = vmatpush.msra.mxu0 0.0
  %4393 = vmatpush.msra.mxu0 %v4376
  %4394 = vmatpush.msra.mxu0 %v4368
  %4395 = vmatpush.msra.mxu0 %v4366
  %4396 = vmatpush.msra.mxu0 %v4364
  %4397 = vmatmul.f32.gmra.mxu0 %v4373
  %v4398 = vpop.f32.mrf.mxu0
  %v4399 = vadd.f32 0.0, %v4398
  %4400 = vdwg.mxu0
  %4401 = vmatpush.msra.mxu0 0.0
  %4402 = vmatpush.msra.mxu0 0.0
  %4403 = vmatpush.msra.mxu0 0.0
  %4404 = vmatpush.msra.mxu0 0.0
  %4405 = vmatpush.msra.mxu0 0.0
  %4406 = vmatpush.msra.mxu0 0.0
  %4407 = vmatpush.msra.mxu0 0.0
  %4408 = vmatpush.msra.mxu0 0.0
  %4409 = vmatpush.msra.mxu0 0.0
  %4410 = vmatpush.msra.mxu0 0.0
  %4411 = vmatpush.msra.mxu0 0.0
  %4412 = vmatpush.msra.mxu0 0.0
  %4413 = vmatpush.msra.mxu0 %v4379
  %4414 = vmatpush.msra.mxu0 %v4369
  %4415 = vmatpush.msra.mxu0 %v4367
  %4416 = vmatpush.msra.mxu0 %v4365
  %4417 = vmatmul.f32.gmra.mxu0 %v4373
  %v4418 = vpop.f32.mrf.mxu0
  %v4419 = vadd.f32 0.0, %v4418
  %4420 = vdwg.mxu0
  %v4422 = vsel %vm385, %v4258, 0
  %v4425 = vsel %vm78, %v4338, 0
  %v4428 = vsel %vm78, %v4339, 0
  %4430 = vmatpush.msra.mxu0 0.0
  %4431 = vmatpush.msra.mxu0 0.0
  %4432 = vmatpush.msra.mxu0 0.0
  %4433 = vmatpush.msra.mxu0 0.0
  %4434 = vmatpush.msra.mxu0 0.0
  %4435 = vmatpush.msra.mxu0 0.0
  %4436 = vmatpush.msra.mxu0 0.0
  %4437 = vmatpush.msra.mxu0 0.0
  %4438 = vmatpush.msra.mxu0 0.0
  %4439 = vmatpush.msra.mxu0 0.0
  %4440 = vmatpush.msra.mxu0 0.0
  %4441 = vmatpush.msra.mxu0 0.0
  %4442 = vmatpush.msra.mxu0 %v4425
  %4443 = vmatpush.msra.mxu0 %v4336
  %4444 = vmatpush.msra.mxu0 %v4334
  %4445 = vmatpush.msra.mxu0 %v4332
  %4446 = vmatmul.f32.gmra.mxu0 %v4422
  %v4447 = vpop.f32.mrf.mxu0
  %v4448 = vadd.f32 %v4399, %v4447
  %4449 = vdwg.mxu0
  %4450 = vmatpush.msra.mxu0 0.0
  %4451 = vmatpush.msra.mxu0 0.0
  %4452 = vmatpush.msra.mxu0 0.0
  %4453 = vmatpush.msra.mxu0 0.0
  %4454 = vmatpush.msra.mxu0 0.0
  %4455 = vmatpush.msra.mxu0 0.0
  %4456 = vmatpush.msra.mxu0 0.0
  %4457 = vmatpush.msra.mxu0 0.0
  %4458 = vmatpush.msra.mxu0 0.0
  %4459 = vmatpush.msra.mxu0 0.0
  %4460 = vmatpush.msra.mxu0 0.0
  %4461 = vmatpush.msra.mxu0 0.0
  %4462 = vmatpush.msra.mxu0 %v4428
  %4463 = vmatpush.msra.mxu0 %v4337
  %4464 = vmatpush.msra.mxu0 %v4335
  %4465 = vmatpush.msra.mxu0 %v4333
  %4466 = vmatmul.f32.gmra.mxu0 %v4422
  %v4467 = vpop.f32.mrf.mxu0
  %v4468 = vadd.f32 %v4419, %v4467
  %4469 = vdwg.mxu0
  %v4470 = vld [vmem:[%s1570] sm:$0xff]
  %v4471 = vld [vmem:[%s1570 + $0x8] sm:$0xff]
  %v4472 = vld [vmem:[%s1570 + $0x10] sm:$0xff]
  %v4473 = vld [vmem:[%s1570 + $0x18] sm:$0xff]
  %v4474 = vld [vmem:[%s1570 + $0x20] sm:$0xff]
  %v4475 = vld [vmem:[%s1570 + $0x28] sm:$0xff]
  %v4476 = vld [vmem:[%s1570 + $0x30] sm:$0x1]
  %v4477 = vld [vmem:[%s1570 + $0x38] sm:$0x1]
  %v4479 = vsel %vm385, %v4273, 0
  %v4482 = vsel %vm78, %v4476, 0
  %v4485 = vsel %vm78, %v4477, 0
  %4487 = vmatpush.msra.mxu0 0.0
  %4488 = vmatpush.msra.mxu0 0.0
  %4489 = vmatpush.msra.mxu0 0.0
  %4490 = vmatpush.msra.mxu0 0.0
  %4491 = vmatpush.msra.mxu0 0.0
  %4492 = vmatpush.msra.mxu0 0.0
  %4493 = vmatpush.msra.mxu0 0.0
  %4494 = vmatpush.msra.mxu0 0.0
  %4495 = vmatpush.msra.mxu0 0.0
  %4496 = vmatpush.msra.mxu0 0.0
  %4497 = vmatpush.msra.mxu0 0.0
  %4498 = vmatpush.msra.mxu0 0.0
  %4499 = vmatpush.msra.mxu0 %v4482
  %4500 = vmatpush.msra.mxu0 %v4474
  %4501 = vmatpush.msra.mxu0 %v4472
  %4502 = vmatpush.msra.mxu0 %v4470
  %4503 = vmatmul.f32.gmra.mxu0 %v4479
  %v4504 = vpop.f32.mrf.mxu0
  %v4505 = vadd.f32 0.0, %v4504
  %4506 = vdwg.mxu0
  %4507 = vmatpush.msra.mxu0 0.0
  %4508 = vmatpush.msra.mxu0 0.0
  %4509 = vmatpush.msra.mxu0 0.0
  %4510 = vmatpush.msra.mxu0 0.0
  %4511 = vmatpush.msra.mxu0 0.0
  %4512 = vmatpush.msra.mxu0 0.0
  %4513 = vmatpush.msra.mxu0 0.0
  %4514 = vmatpush.msra.mxu0 0.0
  %4515 = vmatpush.msra.mxu0 0.0
  %4516 = vmatpush.msra.mxu0 0.0
  %4517 = vmatpush.msra.mxu0 0.0
  %4518 = vmatpush.msra.mxu0 0.0
  %4519 = vmatpush.msra.mxu0 %v4485
  %4520 = vmatpush.msra.mxu0 %v4475
  %4521 = vmatpush.msra.mxu0 %v4473
  %4522 = vmatpush.msra.mxu0 %v4471
  %4523 = vmatmul.f32.gmra.mxu0 %v4479
  %v4524 = vpop.f32.mrf.mxu0
  %v4525 = vadd.f32 0.0, %v4524
  %4526 = vdwg.mxu0
  %v4528 = vsel %vm385, %v4261, 0
  %v4531 = vsel %vm78, %v4346, 0
  %v4534 = vsel %vm78, %v4347, 0
  %4536 = vmatpush.msra.mxu0 0.0
  %4537 = vmatpush.msra.mxu0 0.0
  %4538 = vmatpush.msra.mxu0 0.0
  %4539 = vmatpush.msra.mxu0 0.0
  %4540 = vmatpush.msra.mxu0 0.0
  %4541 = vmatpush.msra.mxu0 0.0
  %4542 = vmatpush.msra.mxu0 0.0
  %4543 = vmatpush.msra.mxu0 0.0
  %4544 = vmatpush.msra.mxu0 0.0
  %4545 = vmatpush.msra.mxu0 0.0
  %4546 = vmatpush.msra.mxu0 0.0
  %4547 = vmatpush.msra.mxu0 0.0
  %4548 = vmatpush.msra.mxu0 %v4531
  %4549 = vmatpush.msra.mxu0 %v4344
  %4550 = vmatpush.msra.mxu0 %v4342
  %4551 = vmatpush.msra.mxu0 %v4340
  %4552 = vmatmul.f32.gmra.mxu0 %v4528
  %v4553 = vpop.f32.mrf.mxu0
  %v4554 = vadd.f32 %v4505, %v4553
  %4555 = vdwg.mxu0
  %4556 = vmatpush.msra.mxu0 0.0
  %4557 = vmatpush.msra.mxu0 0.0
  %4558 = vmatpush.msra.mxu0 0.0
  %4559 = vmatpush.msra.mxu0 0.0
  %4560 = vmatpush.msra.mxu0 0.0
  %4561 = vmatpush.msra.mxu0 0.0
  %4562 = vmatpush.msra.mxu0 0.0
  %4563 = vmatpush.msra.mxu0 0.0
  %4564 = vmatpush.msra.mxu0 0.0
  %4565 = vmatpush.msra.mxu0 0.0
  %4566 = vmatpush.msra.mxu0 0.0
  %4567 = vmatpush.msra.mxu0 0.0
  %4568 = vmatpush.msra.mxu0 %v4534
  %4569 = vmatpush.msra.mxu0 %v4345
  %4570 = vmatpush.msra.mxu0 %v4343
  %4571 = vmatpush.msra.mxu0 %v4341
  %4572 = vmatmul.f32.gmra.mxu0 %v4528
  %v4573 = vpop.f32.mrf.mxu0
  %v4574 = vadd.f32 %v4525, %v4573
  %4575 = vdwg.mxu0
  %v4576 = vld [vmem:[%s1677] sm:$0xff]
  %v4577 = vld [vmem:[%s1677 + $0x8] sm:$0xff]
  %v4578 = vld [vmem:[%s1677 + $0x10] sm:$0xff]
  %v4579 = vld [vmem:[%s1677 + $0x18] sm:$0xff]
  %v4580 = vld [vmem:[%s1677 + $0x20] sm:$0xff]
  %v4581 = vld [vmem:[%s1677 + $0x28] sm:$0xff]
  %v4582 = vld [vmem:[%s1677 + $0x30] sm:$0x1]
  %v4583 = vld [vmem:[%s1677 + $0x38] sm:$0x1]
  %v4585 = vsel %vm385, %v4276, 0
  %v4588 = vsel %vm78, %v4582, 0
  %v4591 = vsel %vm78, %v4583, 0
  %4593 = vmatpush.msra.mxu0 0.0
  %4594 = vmatpush.msra.mxu0 0.0
  %4595 = vmatpush.msra.mxu0 0.0
  %4596 = vmatpush.msra.mxu0 0.0
  %4597 = vmatpush.msra.mxu0 0.0
  %4598 = vmatpush.msra.mxu0 0.0
  %4599 = vmatpush.msra.mxu0 0.0
  %4600 = vmatpush.msra.mxu0 0.0
  %4601 = vmatpush.msra.mxu0 0.0
  %4602 = vmatpush.msra.mxu0 0.0
  %4603 = vmatpush.msra.mxu0 0.0
  %4604 = vmatpush.msra.mxu0 0.0
  %4605 = vmatpush.msra.mxu0 %v4588
  %4606 = vmatpush.msra.mxu0 %v4580
  %4607 = vmatpush.msra.mxu0 %v4578
  %4608 = vmatpush.msra.mxu0 %v4576
  %4609 = vmatmul.f32.gmra.mxu0 %v4585
  %v4610 = vpop.f32.mrf.mxu0
  %v4611 = vadd.f32 0.0, %v4610
  %4612 = vdwg.mxu0
  %4613 = vmatpush.msra.mxu0 0.0
  %4614 = vmatpush.msra.mxu0 0.0
  %4615 = vmatpush.msra.mxu0 0.0
  %4616 = vmatpush.msra.mxu0 0.0
  %4617 = vmatpush.msra.mxu0 0.0
  %4618 = vmatpush.msra.mxu0 0.0
  %4619 = vmatpush.msra.mxu0 0.0
  %4620 = vmatpush.msra.mxu0 0.0
  %4621 = vmatpush.msra.mxu0 0.0
  %4622 = vmatpush.msra.mxu0 0.0
  %4623 = vmatpush.msra.mxu0 0.0
  %4624 = vmatpush.msra.mxu0 0.0
  %4625 = vmatpush.msra.mxu0 %v4591
  %4626 = vmatpush.msra.mxu0 %v4581
  %4627 = vmatpush.msra.mxu0 %v4579
  %4628 = vmatpush.msra.mxu0 %v4577
  %4629 = vmatmul.f32.gmra.mxu0 %v4585
  %v4630 = vpop.f32.mrf.mxu0
  %v4631 = vadd.f32 0.0, %v4630
  %4632 = vdwg.mxu0
  %v4634 = vsel %vm385, %v4264, 0
  %v4637 = vsel %vm78, %v4354, 0
  %v4640 = vsel %vm78, %v4355, 0
  %4642 = vmatpush.msra.mxu0 0.0
  %4643 = vmatpush.msra.mxu0 0.0
  %4644 = vmatpush.msra.mxu0 0.0
  %4645 = vmatpush.msra.mxu0 0.0
  %4646 = vmatpush.msra.mxu0 0.0
  %4647 = vmatpush.msra.mxu0 0.0
  %4648 = vmatpush.msra.mxu0 0.0
  %4649 = vmatpush.msra.mxu0 0.0
  %4650 = vmatpush.msra.mxu0 0.0
  %4651 = vmatpush.msra.mxu0 0.0
  %4652 = vmatpush.msra.mxu0 0.0
  %4653 = vmatpush.msra.mxu0 0.0
  %4654 = vmatpush.msra.mxu0 %v4637
  %4655 = vmatpush.msra.mxu0 %v4352
  %4656 = vmatpush.msra.mxu0 %v4350
  %4657 = vmatpush.msra.mxu0 %v4348
  %4658 = vmatmul.f32.gmra.mxu0 %v4634
  %v4659 = vpop.f32.mrf.mxu0
  %v4660 = vadd.f32 %v4611, %v4659
  %4661 = vdwg.mxu0
  %4662 = vmatpush.msra.mxu0 0.0
  %4663 = vmatpush.msra.mxu0 0.0
  %4664 = vmatpush.msra.mxu0 0.0
  %4665 = vmatpush.msra.mxu0 0.0
  %4666 = vmatpush.msra.mxu0 0.0
  %4667 = vmatpush.msra.mxu0 0.0
  %4668 = vmatpush.msra.mxu0 0.0
  %4669 = vmatpush.msra.mxu0 0.0
  %4670 = vmatpush.msra.mxu0 0.0
  %4671 = vmatpush.msra.mxu0 0.0
  %4672 = vmatpush.msra.mxu0 0.0
  %4673 = vmatpush.msra.mxu0 0.0
  %4674 = vmatpush.msra.mxu0 %v4640
  %4675 = vmatpush.msra.mxu0 %v4353
  %4676 = vmatpush.msra.mxu0 %v4351
  %4677 = vmatpush.msra.mxu0 %v4349
  %4678 = vmatmul.f32.gmra.mxu0 %v4634
  %v4679 = vpop.f32.mrf.mxu0
  %v4680 = vadd.f32 %v4631, %v4679
  %4681 = vdwg.mxu0
  %v4682 = vld [vmem:[%s1784] sm:$0xff]
  %v4683 = vld [vmem:[%s1784 + $0x8] sm:$0xff]
  %v4684 = vld [vmem:[%s1784 + $0x10] sm:$0xff]
  %v4685 = vld [vmem:[%s1784 + $0x18] sm:$0xff]
  %v4686 = vld [vmem:[%s1784 + $0x20] sm:$0xff]
  %v4687 = vld [vmem:[%s1784 + $0x28] sm:$0xff]
  %v4688 = vld [vmem:[%s1784 + $0x30] sm:$0x1]
  %v4689 = vld [vmem:[%s1784 + $0x38] sm:$0x1]
  %v4691 = vsel %vm385, %v4279, 0
  %v4694 = vsel %vm78, %v4688, 0
  %v4697 = vsel %vm78, %v4689, 0
  %4699 = vmatpush.msra.mxu0 0.0
  %4700 = vmatpush.msra.mxu0 0.0
  %4701 = vmatpush.msra.mxu0 0.0
  %4702 = vmatpush.msra.mxu0 0.0
  %4703 = vmatpush.msra.mxu0 0.0
  %4704 = vmatpush.msra.mxu0 0.0
  %4705 = vmatpush.msra.mxu0 0.0
  %4706 = vmatpush.msra.mxu0 0.0
  %4707 = vmatpush.msra.mxu0 0.0
  %4708 = vmatpush.msra.mxu0 0.0
  %4709 = vmatpush.msra.mxu0 0.0
  %4710 = vmatpush.msra.mxu0 0.0
  %4711 = vmatpush.msra.mxu0 %v4694
  %4712 = vmatpush.msra.mxu0 %v4686
  %4713 = vmatpush.msra.mxu0 %v4684
  %4714 = vmatpush.msra.mxu0 %v4682
  %4715 = vmatmul.f32.gmra.mxu0 %v4691
  %v4716 = vpop.f32.mrf.mxu0
  %v4717 = vadd.f32 0.0, %v4716
  %4718 = vdwg.mxu0
  %4719 = vmatpush.msra.mxu0 0.0
  %4720 = vmatpush.msra.mxu0 0.0
  %4721 = vmatpush.msra.mxu0 0.0
  %4722 = vmatpush.msra.mxu0 0.0
  %4723 = vmatpush.msra.mxu0 0.0
  %4724 = vmatpush.msra.mxu0 0.0
  %4725 = vmatpush.msra.mxu0 0.0
  %4726 = vmatpush.msra.mxu0 0.0
  %4727 = vmatpush.msra.mxu0 0.0
  %4728 = vmatpush.msra.mxu0 0.0
  %4729 = vmatpush.msra.mxu0 0.0
  %4730 = vmatpush.msra.mxu0 0.0
  %4731 = vmatpush.msra.mxu0 %v4697
  %4732 = vmatpush.msra.mxu0 %v4687
  %4733 = vmatpush.msra.mxu0 %v4685
  %4734 = vmatpush.msra.mxu0 %v4683
  %4735 = vmatmul.f32.gmra.mxu0 %v4691
  %v4736 = vpop.f32.mrf.mxu0
  %v4737 = vadd.f32 0.0, %v4736
  %4738 = vdwg.mxu0
  %v4740 = vsel %vm385, %v4267, 0
  %v4743 = vsel %vm78, %v4362, 0
  %v4746 = vsel %vm78, %v4363, 0
  %4748 = vmatpush.msra.mxu0 0.0
  %4749 = vmatpush.msra.mxu0 0.0
  %4750 = vmatpush.msra.mxu0 0.0
  %4751 = vmatpush.msra.mxu0 0.0
  %4752 = vmatpush.msra.mxu0 0.0
  %4753 = vmatpush.msra.mxu0 0.0
  %4754 = vmatpush.msra.mxu0 0.0
  %4755 = vmatpush.msra.mxu0 0.0
  %4756 = vmatpush.msra.mxu0 0.0
  %4757 = vmatpush.msra.mxu0 0.0
  %4758 = vmatpush.msra.mxu0 0.0
  %4759 = vmatpush.msra.mxu0 0.0
  %4760 = vmatpush.msra.mxu0 %v4743
  %4761 = vmatpush.msra.mxu0 %v4360
  %4762 = vmatpush.msra.mxu0 %v4358
  %4763 = vmatpush.msra.mxu0 %v4356
  %4764 = vmatmul.f32.gmra.mxu0 %v4740
  %v4765 = vpop.f32.mrf.mxu0
  %v4766 = vadd.f32 %v4717, %v4765
  %4767 = vdwg.mxu0
  %4768 = vmatpush.msra.mxu0 0.0
  %4769 = vmatpush.msra.mxu0 0.0
  %4770 = vmatpush.msra.mxu0 0.0
  %4771 = vmatpush.msra.mxu0 0.0
  %4772 = vmatpush.msra.mxu0 0.0
  %4773 = vmatpush.msra.mxu0 0.0
  %4774 = vmatpush.msra.mxu0 0.0
  %4775 = vmatpush.msra.mxu0 0.0
  %4776 = vmatpush.msra.mxu0 0.0
  %4777 = vmatpush.msra.mxu0 0.0
  %4778 = vmatpush.msra.mxu0 0.0
  %4779 = vmatpush.msra.mxu0 0.0
  %4780 = vmatpush.msra.mxu0 %v4746
  %4781 = vmatpush.msra.mxu0 %v4361
  %4782 = vmatpush.msra.mxu0 %v4359
  %4783 = vmatpush.msra.mxu0 %v4357
  %4784 = vmatmul.f32.gmra.mxu0 %v4740
  %v4785 = vpop.f32.mrf.mxu0
  %v4786 = vadd.f32 %v4737, %v4785
  %4787 = vdwg.mxu0
  %v4788 = vld [vmem:[%s1891] sm:$0xff]
  %v4789 = vld [vmem:[%s1891 + $0x8] sm:$0xff]
  %v4790 = vld [vmem:[%s1891 + $0x10] sm:$0xff]
  %v4791 = vld [vmem:[%s1891 + $0x18] sm:$0xff]
  %v4792 = vld [vmem:[%s1891 + $0x20] sm:$0xff]
  %v4793 = vld [vmem:[%s1891 + $0x28] sm:$0xff]
  %v4794 = vld [vmem:[%s1891 + $0x30] sm:$0x1]
  %v4795 = vld [vmem:[%s1891 + $0x38] sm:$0x1]
  %v4797 = vsel %vm385, %v4282, 0
  %v4800 = vsel %vm78, %v4794, 0
  %v4803 = vsel %vm78, %v4795, 0
  %4805 = vmatpush.msra.mxu0 0.0
  %4806 = vmatpush.msra.mxu0 0.0
  %4807 = vmatpush.msra.mxu0 0.0
  %4808 = vmatpush.msra.mxu0 0.0
  %4809 = vmatpush.msra.mxu0 0.0
  %4810 = vmatpush.msra.mxu0 0.0
  %4811 = vmatpush.msra.mxu0 0.0
  %4812 = vmatpush.msra.mxu0 0.0
  %4813 = vmatpush.msra.mxu0 0.0
  %4814 = vmatpush.msra.mxu0 0.0
  %4815 = vmatpush.msra.mxu0 0.0
  %4816 = vmatpush.msra.mxu0 0.0
  %4817 = vmatpush.msra.mxu0 %v4800
  %4818 = vmatpush.msra.mxu0 %v4792
  %4819 = vmatpush.msra.mxu0 %v4790
  %4820 = vmatpush.msra.mxu0 %v4788
  %4821 = vmatmul.f32.gmra.mxu0 %v4797
  %v4822 = vpop.f32.mrf.mxu0
  %v4823 = vadd.f32 0.0, %v4822
  %4824 = vdwg.mxu0
  %4825 = vmatpush.msra.mxu0 0.0
  %4826 = vmatpush.msra.mxu0 0.0
  %4827 = vmatpush.msra.mxu0 0.0
  %4828 = vmatpush.msra.mxu0 0.0
  %4829 = vmatpush.msra.mxu0 0.0
  %4830 = vmatpush.msra.mxu0 0.0
  %4831 = vmatpush.msra.mxu0 0.0
  %4832 = vmatpush.msra.mxu0 0.0
  %4833 = vmatpush.msra.mxu0 0.0
  %4834 = vmatpush.msra.mxu0 0.0
  %4835 = vmatpush.msra.mxu0 0.0
  %4836 = vmatpush.msra.mxu0 0.0
  %4837 = vmatpush.msra.mxu0 %v4803
  %4838 = vmatpush.msra.mxu0 %v4793
  %4839 = vmatpush.msra.mxu0 %v4791
  %4840 = vmatpush.msra.mxu0 %v4789
  %4841 = vmatmul.f32.gmra.mxu0 %v4797
  %v4842 = vpop.f32.mrf.mxu0
  %v4843 = vadd.f32 0.0, %v4842
  %4844 = vdwg.mxu0
  %v4845 = vadd.f32 %v4448, %v4823
  %v4846 = vadd.f32 %v4468, %v4843
  %v4847 = vld [vmem:[%s1951] sm:$0xff]
  %v4848 = vld [vmem:[%s1951 + $0x8] sm:$0xff]
  %v4849 = vld [vmem:[%s1951 + $0x10] sm:$0xff]
  %v4850 = vld [vmem:[%s1951 + $0x18] sm:$0xff]
  %v4851 = vld [vmem:[%s1951 + $0x20] sm:$0xff]
  %v4852 = vld [vmem:[%s1951 + $0x28] sm:$0xff]
  %v4853 = vld [vmem:[%s1951 + $0x30] sm:$0x1]
  %v4854 = vld [vmem:[%s1951 + $0x38] sm:$0x1]
  %v4856 = vsel %vm385, %v4285, 0
  %v4859 = vsel %vm78, %v4853, 0
  %v4862 = vsel %vm78, %v4854, 0
  %4864 = vmatpush.msra.mxu0 0.0
  %4865 = vmatpush.msra.mxu0 0.0
  %4866 = vmatpush.msra.mxu0 0.0
  %4867 = vmatpush.msra.mxu0 0.0
  %4868 = vmatpush.msra.mxu0 0.0
  %4869 = vmatpush.msra.mxu0 0.0
  %4870 = vmatpush.msra.mxu0 0.0
  %4871 = vmatpush.msra.mxu0 0.0
  %4872 = vmatpush.msra.mxu0 0.0
  %4873 = vmatpush.msra.mxu0 0.0
  %4874 = vmatpush.msra.mxu0 0.0
  %4875 = vmatpush.msra.mxu0 0.0
  %4876 = vmatpush.msra.mxu0 %v4859
  %4877 = vmatpush.msra.mxu0 %v4851
  %4878 = vmatpush.msra.mxu0 %v4849
  %4879 = vmatpush.msra.mxu0 %v4847
  %4880 = vmatmul.f32.gmra.mxu0 %v4856
  %v4881 = vpop.f32.mrf.mxu0
  %v4882 = vadd.f32 0.0, %v4881
  %4883 = vdwg.mxu0
  %4884 = vmatpush.msra.mxu0 0.0
  %4885 = vmatpush.msra.mxu0 0.0
  %4886 = vmatpush.msra.mxu0 0.0
  %4887 = vmatpush.msra.mxu0 0.0
  %4888 = vmatpush.msra.mxu0 0.0
  %4889 = vmatpush.msra.mxu0 0.0
  %4890 = vmatpush.msra.mxu0 0.0
  %4891 = vmatpush.msra.mxu0 0.0
  %4892 = vmatpush.msra.mxu0 0.0
  %4893 = vmatpush.msra.mxu0 0.0
  %4894 = vmatpush.msra.mxu0 0.0
  %4895 = vmatpush.msra.mxu0 0.0
  %4896 = vmatpush.msra.mxu0 %v4862
  %4897 = vmatpush.msra.mxu0 %v4852
  %4898 = vmatpush.msra.mxu0 %v4850
  %4899 = vmatpush.msra.mxu0 %v4848
  %4900 = vmatmul.f32.gmra.mxu0 %v4856
  %v4901 = vpop.f32.mrf.mxu0
  %v4902 = vadd.f32 0.0, %v4901
  %4903 = vdwg.mxu0
  %v4904 = vadd.f32 %v4554, %v4882
  %v4905 = vadd.f32 %v4574, %v4902
  %v4906 = vld [vmem:[%s2011] sm:$0xff]
  %v4907 = vld [vmem:[%s2011 + $0x8] sm:$0xff]
  %v4908 = vld [vmem:[%s2011 + $0x10] sm:$0xff]
  %v4909 = vld [vmem:[%s2011 + $0x18] sm:$0xff]
  %v4910 = vld [vmem:[%s2011 + $0x20] sm:$0xff]
  %v4911 = vld [vmem:[%s2011 + $0x28] sm:$0xff]
  %v4912 = vld [vmem:[%s2011 + $0x30] sm:$0x1]
  %v4913 = vld [vmem:[%s2011 + $0x38] sm:$0x1]
  %v4915 = vsel %vm385, %v4288, 0
  %v4918 = vsel %vm78, %v4912, 0
  %v4921 = vsel %vm78, %v4913, 0
  %4923 = vmatpush.msra.mxu0 0.0
  %4924 = vmatpush.msra.mxu0 0.0
  %4925 = vmatpush.msra.mxu0 0.0
  %4926 = vmatpush.msra.mxu0 0.0
  %4927 = vmatpush.msra.mxu0 0.0
  %4928 = vmatpush.msra.mxu0 0.0
  %4929 = vmatpush.msra.mxu0 0.0
  %4930 = vmatpush.msra.mxu0 0.0
  %4931 = vmatpush.msra.mxu0 0.0
  %4932 = vmatpush.msra.mxu0 0.0
  %4933 = vmatpush.msra.mxu0 0.0
  %4934 = vmatpush.msra.mxu0 0.0
  %4935 = vmatpush.msra.mxu0 %v4918
  %4936 = vmatpush.msra.mxu0 %v4910
  %4937 = vmatpush.msra.mxu0 %v4908
  %4938 = vmatpush.msra.mxu0 %v4906
  %4939 = vmatmul.f32.gmra.mxu0 %v4915
  %v4940 = vpop.f32.mrf.mxu0
  %v4941 = vadd.f32 0.0, %v4940
  %4942 = vdwg.mxu0
  %4943 = vmatpush.msra.mxu0 0.0
  %4944 = vmatpush.msra.mxu0 0.0
  %4945 = vmatpush.msra.mxu0 0.0
  %4946 = vmatpush.msra.mxu0 0.0
  %4947 = vmatpush.msra.mxu0 0.0
  %4948 = vmatpush.msra.mxu0 0.0
  %4949 = vmatpush.msra.mxu0 0.0
  %4950 = vmatpush.msra.mxu0 0.0
  %4951 = vmatpush.msra.mxu0 0.0
  %4952 = vmatpush.msra.mxu0 0.0
  %4953 = vmatpush.msra.mxu0 0.0
  %4954 = vmatpush.msra.mxu0 0.0
  %4955 = vmatpush.msra.mxu0 %v4921
  %4956 = vmatpush.msra.mxu0 %v4911
  %4957 = vmatpush.msra.mxu0 %v4909
  %4958 = vmatpush.msra.mxu0 %v4907
  %4959 = vmatmul.f32.gmra.mxu0 %v4915
  %v4960 = vpop.f32.mrf.mxu0
  %v4961 = vadd.f32 0.0, %v4960
  %4962 = vdwg.mxu0
  %v4963 = vadd.f32 %v4660, %v4941
  %v4964 = vadd.f32 %v4680, %v4961
  %v4965 = vld [vmem:[%s2071] sm:$0xff]
  %v4966 = vld [vmem:[%s2071 + $0x8] sm:$0xff]
  %v4967 = vld [vmem:[%s2071 + $0x10] sm:$0xff]
  %v4968 = vld [vmem:[%s2071 + $0x18] sm:$0xff]
  %v4969 = vld [vmem:[%s2071 + $0x20] sm:$0xff]
  %v4970 = vld [vmem:[%s2071 + $0x28] sm:$0xff]
  %v4971 = vld [vmem:[%s2071 + $0x30] sm:$0x1]
  %v4972 = vld [vmem:[%s2071 + $0x38] sm:$0x1]
  %v4974 = vsel %vm385, %v4291, 0
  %v4977 = vsel %vm78, %v4971, 0
  %v4980 = vsel %vm78, %v4972, 0
  %4982 = vmatpush.msra.mxu0 0.0
  %4983 = vmatpush.msra.mxu0 0.0
  %4984 = vmatpush.msra.mxu0 0.0
  %4985 = vmatpush.msra.mxu0 0.0
  %4986 = vmatpush.msra.mxu0 0.0
  %4987 = vmatpush.msra.mxu0 0.0
  %4988 = vmatpush.msra.mxu0 0.0
  %4989 = vmatpush.msra.mxu0 0.0
  %4990 = vmatpush.msra.mxu0 0.0
  %4991 = vmatpush.msra.mxu0 0.0
  %4992 = vmatpush.msra.mxu0 0.0
  %4993 = vmatpush.msra.mxu0 0.0
  %4994 = vmatpush.msra.mxu0 %v4977
  %4995 = vmatpush.msra.mxu0 %v4969
  %4996 = vmatpush.msra.mxu0 %v4967
  %4997 = vmatpush.msra.mxu0 %v4965
  %4998 = vmatmul.f32.gmra.mxu0 %v4974
  %v4999 = vpop.f32.mrf.mxu0
  %v5000 = vadd.f32 0.0, %v4999
  %5001 = vdwg.mxu0
  %5002 = vmatpush.msra.mxu0 0.0
  %5003 = vmatpush.msra.mxu0 0.0
  %5004 = vmatpush.msra.mxu0 0.0
  %5005 = vmatpush.msra.mxu0 0.0
  %5006 = vmatpush.msra.mxu0 0.0
  %5007 = vmatpush.msra.mxu0 0.0
  %5008 = vmatpush.msra.mxu0 0.0
  %5009 = vmatpush.msra.mxu0 0.0
  %5010 = vmatpush.msra.mxu0 0.0
  %5011 = vmatpush.msra.mxu0 0.0
  %5012 = vmatpush.msra.mxu0 0.0
  %5013 = vmatpush.msra.mxu0 0.0
  %5014 = vmatpush.msra.mxu0 %v4980
  %5015 = vmatpush.msra.mxu0 %v4970
  %5016 = vmatpush.msra.mxu0 %v4968
  %5017 = vmatpush.msra.mxu0 %v4966
  %5018 = vmatmul.f32.gmra.mxu0 %v4974
  %v5019 = vpop.f32.mrf.mxu0
  %v5020 = vadd.f32 0.0, %v5019
  %5021 = vdwg.mxu0
  %v5022 = vadd.f32 %v4766, %v5000
  %v5023 = vadd.f32 %v4786, %v5020
  %v5024 = vld [vmem:[%s2131] sm:$0xff]
  %v5025 = vld [vmem:[%s2131 + $0x8] sm:$0xff]
  %v5026 = vld [vmem:[%s2131 + $0x10] sm:$0xff]
  %v5027 = vld [vmem:[%s2131 + $0x18] sm:$0xff]
  %v5028 = vld [vmem:[%s2131 + $0x20] sm:$0xff]
  %v5029 = vld [vmem:[%s2131 + $0x28] sm:$0xff]
  %v5030 = vld [vmem:[%s2131 + $0x30] sm:$0x1]
  %v5031 = vld [vmem:[%s2131 + $0x38] sm:$0x1]
  %v5033 = vsel %vm385, %v4294, 0
  %v5036 = vsel %vm78, %v5030, 0
  %v5039 = vsel %vm78, %v5031, 0
  %5041 = vmatpush.msra.mxu0 0.0
  %5042 = vmatpush.msra.mxu0 0.0
  %5043 = vmatpush.msra.mxu0 0.0
  %5044 = vmatpush.msra.mxu0 0.0
  %5045 = vmatpush.msra.mxu0 0.0
  %5046 = vmatpush.msra.mxu0 0.0
  %5047 = vmatpush.msra.mxu0 0.0
  %5048 = vmatpush.msra.mxu0 0.0
  %5049 = vmatpush.msra.mxu0 0.0
  %5050 = vmatpush.msra.mxu0 0.0
  %5051 = vmatpush.msra.mxu0 0.0
  %5052 = vmatpush.msra.mxu0 0.0
  %5053 = vmatpush.msra.mxu0 %v5036
  %5054 = vmatpush.msra.mxu0 %v5028
  %5055 = vmatpush.msra.mxu0 %v5026
  %5056 = vmatpush.msra.mxu0 %v5024
  %5057 = vmatmul.f32.gmra.mxu0 %v5033
  %v5058 = vpop.f32.mrf.mxu0
  %v5059 = vadd.f32 0.0, %v5058
  %5060 = vdwg.mxu0
  %5061 = vmatpush.msra.mxu0 0.0
  %5062 = vmatpush.msra.mxu0 0.0
  %5063 = vmatpush.msra.mxu0 0.0
  %5064 = vmatpush.msra.mxu0 0.0
  %5065 = vmatpush.msra.mxu0 0.0
  %5066 = vmatpush.msra.mxu0 0.0
  %5067 = vmatpush.msra.mxu0 0.0
  %5068 = vmatpush.msra.mxu0 0.0
  %5069 = vmatpush.msra.mxu0 0.0
  %5070 = vmatpush.msra.mxu0 0.0
  %5071 = vmatpush.msra.mxu0 0.0
  %5072 = vmatpush.msra.mxu0 0.0
  %5073 = vmatpush.msra.mxu0 %v5039
  %5074 = vmatpush.msra.mxu0 %v5029
  %5075 = vmatpush.msra.mxu0 %v5027
  %5076 = vmatpush.msra.mxu0 %v5025
  %5077 = vmatmul.f32.gmra.mxu0 %v5033
  %v5078 = vpop.f32.mrf.mxu0
  %v5079 = vadd.f32 0.0, %v5078
  %5080 = vdwg.mxu0
  %v5081 = vadd.f32 %v4845, %v5059
  %v5082 = vadd.f32 %v4846, %v5079
  %v5083 = vld [vmem:[%s2191] sm:$0xff]
  %v5084 = vld [vmem:[%s2191 + $0x8] sm:$0xff]
  %v5085 = vld [vmem:[%s2191 + $0x10] sm:$0xff]
  %v5086 = vld [vmem:[%s2191 + $0x18] sm:$0xff]
  %v5087 = vld [vmem:[%s2191 + $0x20] sm:$0xff]
  %v5088 = vld [vmem:[%s2191 + $0x28] sm:$0xff]
  %v5089 = vld [vmem:[%s2191 + $0x30] sm:$0x1]
  %v5090 = vld [vmem:[%s2191 + $0x38] sm:$0x1]
  %v5092 = vsel %vm385, %v4297, 0
  %v5095 = vsel %vm78, %v5089, 0
  %v5098 = vsel %vm78, %v5090, 0
  %5100 = vmatpush.msra.mxu0 0.0
  %5101 = vmatpush.msra.mxu0 0.0
  %5102 = vmatpush.msra.mxu0 0.0
  %5103 = vmatpush.msra.mxu0 0.0
  %5104 = vmatpush.msra.mxu0 0.0
  %5105 = vmatpush.msra.mxu0 0.0
  %5106 = vmatpush.msra.mxu0 0.0
  %5107 = vmatpush.msra.mxu0 0.0
  %5108 = vmatpush.msra.mxu0 0.0
  %5109 = vmatpush.msra.mxu0 0.0
  %5110 = vmatpush.msra.mxu0 0.0
  %5111 = vmatpush.msra.mxu0 0.0
  %5112 = vmatpush.msra.mxu0 %v5095
  %5113 = vmatpush.msra.mxu0 %v5087
  %5114 = vmatpush.msra.mxu0 %v5085
  %5115 = vmatpush.msra.mxu0 %v5083
  %5116 = vmatmul.f32.gmra.mxu0 %v5092
  %v5117 = vpop.f32.mrf.mxu0
  %v5118 = vadd.f32 0.0, %v5117
  %5119 = vdwg.mxu0
  %5120 = vmatpush.msra.mxu0 0.0
  %5121 = vmatpush.msra.mxu0 0.0
  %5122 = vmatpush.msra.mxu0 0.0
  %5123 = vmatpush.msra.mxu0 0.0
  %5124 = vmatpush.msra.mxu0 0.0
  %5125 = vmatpush.msra.mxu0 0.0
  %5126 = vmatpush.msra.mxu0 0.0
  %5127 = vmatpush.msra.mxu0 0.0
  %5128 = vmatpush.msra.mxu0 0.0
  %5129 = vmatpush.msra.mxu0 0.0
  %5130 = vmatpush.msra.mxu0 0.0
  %5131 = vmatpush.msra.mxu0 0.0
  %5132 = vmatpush.msra.mxu0 %v5098
  %5133 = vmatpush.msra.mxu0 %v5088
  %5134 = vmatpush.msra.mxu0 %v5086
  %5135 = vmatpush.msra.mxu0 %v5084
  %5136 = vmatmul.f32.gmra.mxu0 %v5092
  %v5137 = vpop.f32.mrf.mxu0
  %v5138 = vadd.f32 0.0, %v5137
  %5139 = vdwg.mxu0
  %v5140 = vadd.f32 %v4904, %v5118
  %v5141 = vadd.f32 %v4905, %v5138
  %v5142 = vld [vmem:[%s2251] sm:$0xff]
  %v5143 = vld [vmem:[%s2251 + $0x8] sm:$0xff]
  %v5144 = vld [vmem:[%s2251 + $0x10] sm:$0xff]
  %v5145 = vld [vmem:[%s2251 + $0x18] sm:$0xff]
  %v5146 = vld [vmem:[%s2251 + $0x20] sm:$0xff]
  %v5147 = vld [vmem:[%s2251 + $0x28] sm:$0xff]
  %v5148 = vld [vmem:[%s2251 + $0x30] sm:$0x1]
  %v5149 = vld [vmem:[%s2251 + $0x38] sm:$0x1]
  %v5151 = vsel %vm385, %v4300, 0
  %v5154 = vsel %vm78, %v5148, 0
  %v5157 = vsel %vm78, %v5149, 0
  %5159 = vmatpush.msra.mxu0 0.0
  %5160 = vmatpush.msra.mxu0 0.0
  %5161 = vmatpush.msra.mxu0 0.0
  %5162 = vmatpush.msra.mxu0 0.0
  %5163 = vmatpush.msra.mxu0 0.0
  %5164 = vmatpush.msra.mxu0 0.0
  %5165 = vmatpush.msra.mxu0 0.0
  %5166 = vmatpush.msra.mxu0 0.0
  %5167 = vmatpush.msra.mxu0 0.0
  %5168 = vmatpush.msra.mxu0 0.0
  %5169 = vmatpush.msra.mxu0 0.0
  %5170 = vmatpush.msra.mxu0 0.0
  %5171 = vmatpush.msra.mxu0 %v5154
  %5172 = vmatpush.msra.mxu0 %v5146
  %5173 = vmatpush.msra.mxu0 %v5144
  %5174 = vmatpush.msra.mxu0 %v5142
  %5175 = vmatmul.f32.gmra.mxu0 %v5151
  %v5176 = vpop.f32.mrf.mxu0
  %v5177 = vadd.f32 0.0, %v5176
  %5178 = vdwg.mxu0
  %5179 = vmatpush.msra.mxu0 0.0
  %5180 = vmatpush.msra.mxu0 0.0
  %5181 = vmatpush.msra.mxu0 0.0
  %5182 = vmatpush.msra.mxu0 0.0
  %5183 = vmatpush.msra.mxu0 0.0
  %5184 = vmatpush.msra.mxu0 0.0
  %5185 = vmatpush.msra.mxu0 0.0
  %5186 = vmatpush.msra.mxu0 0.0
  %5187 = vmatpush.msra.mxu0 0.0
  %5188 = vmatpush.msra.mxu0 0.0
  %5189 = vmatpush.msra.mxu0 0.0
  %5190 = vmatpush.msra.mxu0 0.0
  %5191 = vmatpush.msra.mxu0 %v5157
  %5192 = vmatpush.msra.mxu0 %v5147
  %5193 = vmatpush.msra.mxu0 %v5145
  %5194 = vmatpush.msra.mxu0 %v5143
  %5195 = vmatmul.f32.gmra.mxu0 %v5151
  %v5196 = vpop.f32.mrf.mxu0
  %v5197 = vadd.f32 0.0, %v5196
  %5198 = vdwg.mxu0
  %v5199 = vadd.f32 %v4963, %v5177
  %v5200 = vadd.f32 %v4964, %v5197
  %v5201 = vld [vmem:[%s2311] sm:$0xff]
  %v5202 = vld [vmem:[%s2311 + $0x8] sm:$0xff]
  %v5203 = vld [vmem:[%s2311 + $0x10] sm:$0xff]
  %v5204 = vld [vmem:[%s2311 + $0x18] sm:$0xff]
  %v5205 = vld [vmem:[%s2311 + $0x20] sm:$0xff]
  %v5206 = vld [vmem:[%s2311 + $0x28] sm:$0xff]
  %v5207 = vld [vmem:[%s2311 + $0x30] sm:$0x1]
  %v5208 = vld [vmem:[%s2311 + $0x38] sm:$0x1]
  %v5210 = vsel %vm385, %v4303, 0
  %v5213 = vsel %vm78, %v5207, 0
  %v5216 = vsel %vm78, %v5208, 0
  %5218 = vmatpush.msra.mxu0 0.0
  %5219 = vmatpush.msra.mxu0 0.0
  %5220 = vmatpush.msra.mxu0 0.0
  %5221 = vmatpush.msra.mxu0 0.0
  %5222 = vmatpush.msra.mxu0 0.0
  %5223 = vmatpush.msra.mxu0 0.0
  %5224 = vmatpush.msra.mxu0 0.0
  %5225 = vmatpush.msra.mxu0 0.0
  %5226 = vmatpush.msra.mxu0 0.0
  %5227 = vmatpush.msra.mxu0 0.0
  %5228 = vmatpush.msra.mxu0 0.0
  %5229 = vmatpush.msra.mxu0 0.0
  %5230 = vmatpush.msra.mxu0 %v5213
  %5231 = vmatpush.msra.mxu0 %v5205
  %5232 = vmatpush.msra.mxu0 %v5203
  %5233 = vmatpush.msra.mxu0 %v5201
  %5234 = vmatmul.f32.gmra.mxu0 %v5210
  %v5235 = vpop.f32.mrf.mxu0
  %v5236 = vadd.f32 0.0, %v5235
  %5237 = vdwg.mxu0
  %5238 = vmatpush.msra.mxu0 0.0
  %5239 = vmatpush.msra.mxu0 0.0
  %5240 = vmatpush.msra.mxu0 0.0
  %5241 = vmatpush.msra.mxu0 0.0
  %5242 = vmatpush.msra.mxu0 0.0
  %5243 = vmatpush.msra.mxu0 0.0
  %5244 = vmatpush.msra.mxu0 0.0
  %5245 = vmatpush.msra.mxu0 0.0
  %5246 = vmatpush.msra.mxu0 0.0
  %5247 = vmatpush.msra.mxu0 0.0
  %5248 = vmatpush.msra.mxu0 0.0
  %5249 = vmatpush.msra.mxu0 0.0
  %5250 = vmatpush.msra.mxu0 %v5216
  %5251 = vmatpush.msra.mxu0 %v5206
  %5252 = vmatpush.msra.mxu0 %v5204
  %5253 = vmatpush.msra.mxu0 %v5202
  %5254 = vmatmul.f32.gmra.mxu0 %v5210
  %v5255 = vpop.f32.mrf.mxu0
  %v5256 = vadd.f32 0.0, %v5255
  %5257 = vdwg.mxu0
  %v5258 = vadd.f32 %v5022, %v5236
  %v5259 = vadd.f32 %v5023, %v5256
  %v5260 = vld [vmem:[%s2371] sm:$0xff]
  %v5261 = vld [vmem:[%s2371 + $0x8] sm:$0xff]
  %v5262 = vld [vmem:[%s2371 + $0x10] sm:$0xff]
  %v5263 = vld [vmem:[%s2371 + $0x18] sm:$0xff]
  %v5264 = vld [vmem:[%s2371 + $0x20] sm:$0xff]
  %v5265 = vld [vmem:[%s2371 + $0x28] sm:$0xff]
  %v5266 = vld [vmem:[%s2371 + $0x30] sm:$0x1]
  %v5267 = vld [vmem:[%s2371 + $0x38] sm:$0x1]
  %v5269 = vsel %vm385, %v4306, 0
  %v5272 = vsel %vm78, %v5266, 0
  %v5275 = vsel %vm78, %v5267, 0
  %5277 = vmatpush.msra.mxu0 0.0
  %5278 = vmatpush.msra.mxu0 0.0
  %5279 = vmatpush.msra.mxu0 0.0
  %5280 = vmatpush.msra.mxu0 0.0
  %5281 = vmatpush.msra.mxu0 0.0
  %5282 = vmatpush.msra.mxu0 0.0
  %5283 = vmatpush.msra.mxu0 0.0
  %5284 = vmatpush.msra.mxu0 0.0
  %5285 = vmatpush.msra.mxu0 0.0
  %5286 = vmatpush.msra.mxu0 0.0
  %5287 = vmatpush.msra.mxu0 0.0
  %5288 = vmatpush.msra.mxu0 0.0
  %5289 = vmatpush.msra.mxu0 %v5272
  %5290 = vmatpush.msra.mxu0 %v5264
  %5291 = vmatpush.msra.mxu0 %v5262
  %5292 = vmatpush.msra.mxu0 %v5260
  %5293 = vmatmul.f32.gmra.mxu0 %v5269
  %v5294 = vpop.f32.mrf.mxu0
  %v5295 = vadd.f32 0.0, %v5294
  %5296 = vdwg.mxu0
  %5297 = vmatpush.msra.mxu0 0.0
  %5298 = vmatpush.msra.mxu0 0.0
  %5299 = vmatpush.msra.mxu0 0.0
  %5300 = vmatpush.msra.mxu0 0.0
  %5301 = vmatpush.msra.mxu0 0.0
  %5302 = vmatpush.msra.mxu0 0.0
  %5303 = vmatpush.msra.mxu0 0.0
  %5304 = vmatpush.msra.mxu0 0.0
  %5305 = vmatpush.msra.mxu0 0.0
  %5306 = vmatpush.msra.mxu0 0.0
  %5307 = vmatpush.msra.mxu0 0.0
  %5308 = vmatpush.msra.mxu0 0.0
  %5309 = vmatpush.msra.mxu0 %v5275
  %5310 = vmatpush.msra.mxu0 %v5265
  %5311 = vmatpush.msra.mxu0 %v5263
  %5312 = vmatpush.msra.mxu0 %v5261
  %5313 = vmatmul.f32.gmra.mxu0 %v5269
  %v5314 = vpop.f32.mrf.mxu0
  %v5315 = vadd.f32 0.0, %v5314
  %5316 = vdwg.mxu0
  %v5317 = vadd.f32 %v5081, %v5295
  %v5318 = vadd.f32 %v5082, %v5315
  %v5319 = vld [vmem:[%s2431] sm:$0xff]
  %v5320 = vld [vmem:[%s2431 + $0x8] sm:$0xff]
  %v5321 = vld [vmem:[%s2431 + $0x10] sm:$0xff]
  %v5322 = vld [vmem:[%s2431 + $0x18] sm:$0xff]
  %v5323 = vld [vmem:[%s2431 + $0x20] sm:$0xff]
  %v5324 = vld [vmem:[%s2431 + $0x28] sm:$0xff]
  %v5325 = vld [vmem:[%s2431 + $0x30] sm:$0x1]
  %v5326 = vld [vmem:[%s2431 + $0x38] sm:$0x1]
  %v5328 = vsel %vm385, %v4309, 0
  %v5331 = vsel %vm78, %v5325, 0
  %v5334 = vsel %vm78, %v5326, 0
  %5336 = vmatpush.msra.mxu0 0.0
  %5337 = vmatpush.msra.mxu0 0.0
  %5338 = vmatpush.msra.mxu0 0.0
  %5339 = vmatpush.msra.mxu0 0.0
  %5340 = vmatpush.msra.mxu0 0.0
  %5341 = vmatpush.msra.mxu0 0.0
  %5342 = vmatpush.msra.mxu0 0.0
  %5343 = vmatpush.msra.mxu0 0.0
  %5344 = vmatpush.msra.mxu0 0.0
  %5345 = vmatpush.msra.mxu0 0.0
  %5346 = vmatpush.msra.mxu0 0.0
  %5347 = vmatpush.msra.mxu0 0.0
  %5348 = vmatpush.msra.mxu0 %v5331
  %5349 = vmatpush.msra.mxu0 %v5323
  %5350 = vmatpush.msra.mxu0 %v5321
  %5351 = vmatpush.msra.mxu0 %v5319
  %5352 = vmatmul.f32.gmra.mxu0 %v5328
  %v5353 = vpop.f32.mrf.mxu0
  %v5354 = vadd.f32 0.0, %v5353
  %5355 = vdwg.mxu0
  %5356 = vmatpush.msra.mxu0 0.0
  %5357 = vmatpush.msra.mxu0 0.0
  %5358 = vmatpush.msra.mxu0 0.0
  %5359 = vmatpush.msra.mxu0 0.0
  %5360 = vmatpush.msra.mxu0 0.0
  %5361 = vmatpush.msra.mxu0 0.0
  %5362 = vmatpush.msra.mxu0 0.0
  %5363 = vmatpush.msra.mxu0 0.0
  %5364 = vmatpush.msra.mxu0 0.0
  %5365 = vmatpush.msra.mxu0 0.0
  %5366 = vmatpush.msra.mxu0 0.0
  %5367 = vmatpush.msra.mxu0 0.0
  %5368 = vmatpush.msra.mxu0 %v5334
  %5369 = vmatpush.msra.mxu0 %v5324
  %5370 = vmatpush.msra.mxu0 %v5322
  %5371 = vmatpush.msra.mxu0 %v5320
  %5372 = vmatmul.f32.gmra.mxu0 %v5328
  %v5373 = vpop.f32.mrf.mxu0
  %v5374 = vadd.f32 0.0, %v5373
  %5375 = vdwg.mxu0
  %v5376 = vadd.f32 %v5140, %v5354
  %v5377 = vadd.f32 %v5141, %v5374
  %v5378 = vld [vmem:[%s2491] sm:$0xff]
  %v5379 = vld [vmem:[%s2491 + $0x8] sm:$0xff]
  %v5380 = vld [vmem:[%s2491 + $0x10] sm:$0xff]
  %v5381 = vld [vmem:[%s2491 + $0x18] sm:$0xff]
  %v5382 = vld [vmem:[%s2491 + $0x20] sm:$0xff]
  %v5383 = vld [vmem:[%s2491 + $0x28] sm:$0xff]
  %v5384 = vld [vmem:[%s2491 + $0x30] sm:$0x1]
  %v5385 = vld [vmem:[%s2491 + $0x38] sm:$0x1]
  %v5387 = vsel %vm385, %v4312, 0
  %v5390 = vsel %vm78, %v5384, 0
  %v5393 = vsel %vm78, %v5385, 0
  %5395 = vmatpush.msra.mxu0 0.0
  %5396 = vmatpush.msra.mxu0 0.0
  %5397 = vmatpush.msra.mxu0 0.0
  %5398 = vmatpush.msra.mxu0 0.0
  %5399 = vmatpush.msra.mxu0 0.0
  %5400 = vmatpush.msra.mxu0 0.0
  %5401 = vmatpush.msra.mxu0 0.0
  %5402 = vmatpush.msra.mxu0 0.0
  %5403 = vmatpush.msra.mxu0 0.0
  %5404 = vmatpush.msra.mxu0 0.0
  %5405 = vmatpush.msra.mxu0 0.0
  %5406 = vmatpush.msra.mxu0 0.0
  %5407 = vmatpush.msra.mxu0 %v5390
  %5408 = vmatpush.msra.mxu0 %v5382
  %5409 = vmatpush.msra.mxu0 %v5380
  %5410 = vmatpush.msra.mxu0 %v5378
  %5411 = vmatmul.f32.gmra.mxu0 %v5387
  %v5412 = vpop.f32.mrf.mxu0
  %v5413 = vadd.f32 0.0, %v5412
  %5414 = vdwg.mxu0
  %5415 = vmatpush.msra.mxu0 0.0
  %5416 = vmatpush.msra.mxu0 0.0
  %5417 = vmatpush.msra.mxu0 0.0
  %5418 = vmatpush.msra.mxu0 0.0
  %5419 = vmatpush.msra.mxu0 0.0
  %5420 = vmatpush.msra.mxu0 0.0
  %5421 = vmatpush.msra.mxu0 0.0
  %5422 = vmatpush.msra.mxu0 0.0
  %5423 = vmatpush.msra.mxu0 0.0
  %5424 = vmatpush.msra.mxu0 0.0
  %5425 = vmatpush.msra.mxu0 0.0
  %5426 = vmatpush.msra.mxu0 0.0
  %5427 = vmatpush.msra.mxu0 %v5393
  %5428 = vmatpush.msra.mxu0 %v5383
  %5429 = vmatpush.msra.mxu0 %v5381
  %5430 = vmatpush.msra.mxu0 %v5379
  %5431 = vmatmul.f32.gmra.mxu0 %v5387
  %v5432 = vpop.f32.mrf.mxu0
  %v5433 = vadd.f32 0.0, %v5432
  %5434 = vdwg.mxu0
  %v5435 = vadd.f32 %v5199, %v5413
  %v5436 = vadd.f32 %v5200, %v5433
  %v5437 = vld [vmem:[%s2551] sm:$0xff]
  %v5438 = vld [vmem:[%s2551 + $0x8] sm:$0xff]
  %v5439 = vld [vmem:[%s2551 + $0x10] sm:$0xff]
  %v5440 = vld [vmem:[%s2551 + $0x18] sm:$0xff]
  %v5441 = vld [vmem:[%s2551 + $0x20] sm:$0xff]
  %v5442 = vld [vmem:[%s2551 + $0x28] sm:$0xff]
  %v5443 = vld [vmem:[%s2551 + $0x30] sm:$0x1]
  %v5444 = vld [vmem:[%s2551 + $0x38] sm:$0x1]
  %v5446 = vsel %vm385, %v4315, 0
  %v5449 = vsel %vm78, %v5443, 0
  %v5452 = vsel %vm78, %v5444, 0
  %5454 = vmatpush.msra.mxu0 0.0
  %5455 = vmatpush.msra.mxu0 0.0
  %5456 = vmatpush.msra.mxu0 0.0
  %5457 = vmatpush.msra.mxu0 0.0
  %5458 = vmatpush.msra.mxu0 0.0
  %5459 = vmatpush.msra.mxu0 0.0
  %5460 = vmatpush.msra.mxu0 0.0
  %5461 = vmatpush.msra.mxu0 0.0
  %5462 = vmatpush.msra.mxu0 0.0
  %5463 = vmatpush.msra.mxu0 0.0
  %5464 = vmatpush.msra.mxu0 0.0
  %5465 = vmatpush.msra.mxu0 0.0
  %5466 = vmatpush.msra.mxu0 %v5449
  %5467 = vmatpush.msra.mxu0 %v5441
  %5468 = vmatpush.msra.mxu0 %v5439
  %5469 = vmatpush.msra.mxu0 %v5437
  %5470 = vmatmul.f32.gmra.mxu0 %v5446
  %v5471 = vpop.f32.mrf.mxu0
  %v5472 = vadd.f32 0.0, %v5471
  %5473 = vdwg.mxu0
  %5474 = vmatpush.msra.mxu0 0.0
  %5475 = vmatpush.msra.mxu0 0.0
  %5476 = vmatpush.msra.mxu0 0.0
  %5477 = vmatpush.msra.mxu0 0.0
  %5478 = vmatpush.msra.mxu0 0.0
  %5479 = vmatpush.msra.mxu0 0.0
  %5480 = vmatpush.msra.mxu0 0.0
  %5481 = vmatpush.msra.mxu0 0.0
  %5482 = vmatpush.msra.mxu0 0.0
  %5483 = vmatpush.msra.mxu0 0.0
  %5484 = vmatpush.msra.mxu0 0.0
  %5485 = vmatpush.msra.mxu0 0.0
  %5486 = vmatpush.msra.mxu0 %v5452
  %5487 = vmatpush.msra.mxu0 %v5442
  %5488 = vmatpush.msra.mxu0 %v5440
  %5489 = vmatpush.msra.mxu0 %v5438
  %5490 = vmatmul.f32.gmra.mxu0 %v5446
  %v5491 = vpop.f32.mrf.mxu0
  %v5492 = vadd.f32 0.0, %v5491
  %5493 = vdwg.mxu0
  %v5494 = vadd.f32 %v5258, %v5472
  %v5495 = vadd.f32 %v5259, %v5492
  %v5496 = vld [vmem:[%s2611] sm:$0xff]
  %v5497 = vld [vmem:[%s2611 + $0x8] sm:$0xff]
  %v5498 = vld [vmem:[%s2611 + $0x10] sm:$0xff]
  %v5499 = vld [vmem:[%s2611 + $0x18] sm:$0xff]
  %v5500 = vld [vmem:[%s2611 + $0x20] sm:$0xff]
  %v5501 = vld [vmem:[%s2611 + $0x28] sm:$0xff]
  %v5502 = vld [vmem:[%s2611 + $0x30] sm:$0x1]
  %v5503 = vld [vmem:[%s2611 + $0x38] sm:$0x1]
  %v5505 = vsel %vm385, %v4318, 0
  %v5508 = vsel %vm78, %v5502, 0
  %v5511 = vsel %vm78, %v5503, 0
  %5513 = vmatpush.msra.mxu0 0.0
  %5514 = vmatpush.msra.mxu0 0.0
  %5515 = vmatpush.msra.mxu0 0.0
  %5516 = vmatpush.msra.mxu0 0.0
  %5517 = vmatpush.msra.mxu0 0.0
  %5518 = vmatpush.msra.mxu0 0.0
  %5519 = vmatpush.msra.mxu0 0.0
  %5520 = vmatpush.msra.mxu0 0.0
  %5521 = vmatpush.msra.mxu0 0.0
  %5522 = vmatpush.msra.mxu0 0.0
  %5523 = vmatpush.msra.mxu0 0.0
  %5524 = vmatpush.msra.mxu0 0.0
  %5525 = vmatpush.msra.mxu0 %v5508
  %5526 = vmatpush.msra.mxu0 %v5500
  %5527 = vmatpush.msra.mxu0 %v5498
  %5528 = vmatpush.msra.mxu0 %v5496
  %5529 = vmatmul.f32.gmra.mxu0 %v5505
  %v5530 = vpop.f32.mrf.mxu0
  %v5531 = vadd.f32 0.0, %v5530
  %5532 = vdwg.mxu0
  %5533 = vmatpush.msra.mxu0 0.0
  %5534 = vmatpush.msra.mxu0 0.0
  %5535 = vmatpush.msra.mxu0 0.0
  %5536 = vmatpush.msra.mxu0 0.0
  %5537 = vmatpush.msra.mxu0 0.0
  %5538 = vmatpush.msra.mxu0 0.0
  %5539 = vmatpush.msra.mxu0 0.0
  %5540 = vmatpush.msra.mxu0 0.0
  %5541 = vmatpush.msra.mxu0 0.0
  %5542 = vmatpush.msra.mxu0 0.0
  %5543 = vmatpush.msra.mxu0 0.0
  %5544 = vmatpush.msra.mxu0 0.0
  %5545 = vmatpush.msra.mxu0 %v5511
  %5546 = vmatpush.msra.mxu0 %v5501
  %5547 = vmatpush.msra.mxu0 %v5499
  %5548 = vmatpush.msra.mxu0 %v5497
  %5549 = vmatmul.f32.gmra.mxu0 %v5505
  %v5550 = vpop.f32.mrf.mxu0
  %v5551 = vadd.f32 0.0, %v5550
  %5552 = vdwg.mxu0
  %v5553 = vadd.f32 %v5317, %v5531
  %v5554 = vadd.f32 %v5318, %v5551
  %v5555 = vld [vmem:[%s2671] sm:$0xff]
  %v5556 = vld [vmem:[%s2671 + $0x8] sm:$0xff]
  %v5557 = vld [vmem:[%s2671 + $0x10] sm:$0xff]
  %v5558 = vld [vmem:[%s2671 + $0x18] sm:$0xff]
  %v5559 = vld [vmem:[%s2671 + $0x20] sm:$0xff]
  %v5560 = vld [vmem:[%s2671 + $0x28] sm:$0xff]
  %v5561 = vld [vmem:[%s2671 + $0x30] sm:$0x1]
  %v5562 = vld [vmem:[%s2671 + $0x38] sm:$0x1]
  %v5564 = vsel %vm385, %v4321, 0
  %v5567 = vsel %vm78, %v5561, 0
  %v5570 = vsel %vm78, %v5562, 0
  %5572 = vmatpush.msra.mxu0 0.0
  %5573 = vmatpush.msra.mxu0 0.0
  %5574 = vmatpush.msra.mxu0 0.0
  %5575 = vmatpush.msra.mxu0 0.0
  %5576 = vmatpush.msra.mxu0 0.0
  %5577 = vmatpush.msra.mxu0 0.0
  %5578 = vmatpush.msra.mxu0 0.0
  %5579 = vmatpush.msra.mxu0 0.0
  %5580 = vmatpush.msra.mxu0 0.0
  %5581 = vmatpush.msra.mxu0 0.0
  %5582 = vmatpush.msra.mxu0 0.0
  %5583 = vmatpush.msra.mxu0 0.0
  %5584 = vmatpush.msra.mxu0 %v5567
  %5585 = vmatpush.msra.mxu0 %v5559
  %5586 = vmatpush.msra.mxu0 %v5557
  %5587 = vmatpush.msra.mxu0 %v5555
  %5588 = vmatmul.f32.gmra.mxu0 %v5564
  %v5589 = vpop.f32.mrf.mxu0
  %v5590 = vadd.f32 0.0, %v5589
  %5591 = vdwg.mxu0
  %5592 = vmatpush.msra.mxu0 0.0
  %5593 = vmatpush.msra.mxu0 0.0
  %5594 = vmatpush.msra.mxu0 0.0
  %5595 = vmatpush.msra.mxu0 0.0
  %5596 = vmatpush.msra.mxu0 0.0
  %5597 = vmatpush.msra.mxu0 0.0
  %5598 = vmatpush.msra.mxu0 0.0
  %5599 = vmatpush.msra.mxu0 0.0
  %5600 = vmatpush.msra.mxu0 0.0
  %5601 = vmatpush.msra.mxu0 0.0
  %5602 = vmatpush.msra.mxu0 0.0
  %5603 = vmatpush.msra.mxu0 0.0
  %5604 = vmatpush.msra.mxu0 %v5570
  %5605 = vmatpush.msra.mxu0 %v5560
  %5606 = vmatpush.msra.mxu0 %v5558
  %5607 = vmatpush.msra.mxu0 %v5556
  %5608 = vmatmul.f32.gmra.mxu0 %v5564
  %v5609 = vpop.f32.mrf.mxu0
  %v5610 = vadd.f32 0.0, %v5609
  %5611 = vdwg.mxu0
  %v5612 = vadd.f32 %v5376, %v5590
  %v5613 = vadd.f32 %v5377, %v5610
  %v5614 = vld [vmem:[%s2731] sm:$0xff]
  %v5615 = vld [vmem:[%s2731 + $0x8] sm:$0xff]
  %v5616 = vld [vmem:[%s2731 + $0x10] sm:$0xff]
  %v5617 = vld [vmem:[%s2731 + $0x18] sm:$0xff]
  %v5618 = vld [vmem:[%s2731 + $0x20] sm:$0xff]
  %v5619 = vld [vmem:[%s2731 + $0x28] sm:$0xff]
  %v5620 = vld [vmem:[%s2731 + $0x30] sm:$0x1]
  %v5621 = vld [vmem:[%s2731 + $0x38] sm:$0x1]
  %v5623 = vsel %vm385, %v4324, 0
  %v5626 = vsel %vm78, %v5620, 0
  %v5629 = vsel %vm78, %v5621, 0
  %5631 = vmatpush.msra.mxu0 0.0
  %5632 = vmatpush.msra.mxu0 0.0
  %5633 = vmatpush.msra.mxu0 0.0
  %5634 = vmatpush.msra.mxu0 0.0
  %5635 = vmatpush.msra.mxu0 0.0
  %5636 = vmatpush.msra.mxu0 0.0
  %5637 = vmatpush.msra.mxu0 0.0
  %5638 = vmatpush.msra.mxu0 0.0
  %5639 = vmatpush.msra.mxu0 0.0
  %5640 = vmatpush.msra.mxu0 0.0
  %5641 = vmatpush.msra.mxu0 0.0
  %5642 = vmatpush.msra.mxu0 0.0
  %5643 = vmatpush.msra.mxu0 %v5626
  %5644 = vmatpush.msra.mxu0 %v5618
  %5645 = vmatpush.msra.mxu0 %v5616
  %5646 = vmatpush.msra.mxu0 %v5614
  %5647 = vmatmul.f32.gmra.mxu0 %v5623
  %v5648 = vpop.f32.mrf.mxu0
  %v5649 = vadd.f32 0.0, %v5648
  %5650 = vdwg.mxu0
  %5651 = vmatpush.msra.mxu0 0.0
  %5652 = vmatpush.msra.mxu0 0.0
  %5653 = vmatpush.msra.mxu0 0.0
  %5654 = vmatpush.msra.mxu0 0.0
  %5655 = vmatpush.msra.mxu0 0.0
  %5656 = vmatpush.msra.mxu0 0.0
  %5657 = vmatpush.msra.mxu0 0.0
  %5658 = vmatpush.msra.mxu0 0.0
  %5659 = vmatpush.msra.mxu0 0.0
  %5660 = vmatpush.msra.mxu0 0.0
  %5661 = vmatpush.msra.mxu0 0.0
  %5662 = vmatpush.msra.mxu0 0.0
  %5663 = vmatpush.msra.mxu0 %v5629
  %5664 = vmatpush.msra.mxu0 %v5619
  %5665 = vmatpush.msra.mxu0 %v5617
  %5666 = vmatpush.msra.mxu0 %v5615
  %5667 = vmatmul.f32.gmra.mxu0 %v5623
  %v5668 = vpop.f32.mrf.mxu0
  %v5669 = vadd.f32 0.0, %v5668
  %5670 = vdwg.mxu0
  %v5671 = vadd.f32 %v5435, %v5649
  %v5672 = vadd.f32 %v5436, %v5669
  %v5673 = vld [vmem:[%s2791] sm:$0xff]
  %v5674 = vld [vmem:[%s2791 + $0x8] sm:$0xff]
  %v5675 = vld [vmem:[%s2791 + $0x10] sm:$0xff]
  %v5676 = vld [vmem:[%s2791 + $0x18] sm:$0xff]
  %v5677 = vld [vmem:[%s2791 + $0x20] sm:$0xff]
  %v5678 = vld [vmem:[%s2791 + $0x28] sm:$0xff]
  %v5679 = vld [vmem:[%s2791 + $0x30] sm:$0x1]
  %v5680 = vld [vmem:[%s2791 + $0x38] sm:$0x1]
  %v5682 = vsel %vm385, %v4327, 0
  %v5685 = vsel %vm78, %v5679, 0
  %v5688 = vsel %vm78, %v5680, 0
  %5690 = vmatpush.msra.mxu0 0.0
  %5691 = vmatpush.msra.mxu0 0.0
  %5692 = vmatpush.msra.mxu0 0.0
  %5693 = vmatpush.msra.mxu0 0.0
  %5694 = vmatpush.msra.mxu0 0.0
  %5695 = vmatpush.msra.mxu0 0.0
  %5696 = vmatpush.msra.mxu0 0.0
  %5697 = vmatpush.msra.mxu0 0.0
  %5698 = vmatpush.msra.mxu0 0.0
  %5699 = vmatpush.msra.mxu0 0.0
  %5700 = vmatpush.msra.mxu0 0.0
  %5701 = vmatpush.msra.mxu0 0.0
  %5702 = vmatpush.msra.mxu0 %v5685
  %5703 = vmatpush.msra.mxu0 %v5677
  %5704 = vmatpush.msra.mxu0 %v5675
  %5705 = vmatpush.msra.mxu0 %v5673
  %5706 = vmatmul.f32.gmra.mxu0 %v5682
  %v5707 = vpop.f32.mrf.mxu0
  %v5708 = vadd.f32 0.0, %v5707
  %5709 = vdwg.mxu0
  %5710 = vmatpush.msra.mxu0 0.0
  %5711 = vmatpush.msra.mxu0 0.0
  %5712 = vmatpush.msra.mxu0 0.0
  %5713 = vmatpush.msra.mxu0 0.0
  %5714 = vmatpush.msra.mxu0 0.0
  %5715 = vmatpush.msra.mxu0 0.0
  %5716 = vmatpush.msra.mxu0 0.0
  %5717 = vmatpush.msra.mxu0 0.0
  %5718 = vmatpush.msra.mxu0 0.0
  %5719 = vmatpush.msra.mxu0 0.0
  %5720 = vmatpush.msra.mxu0 0.0
  %5721 = vmatpush.msra.mxu0 0.0
  %5722 = vmatpush.msra.mxu0 %v5688
  %5723 = vmatpush.msra.mxu0 %v5678
  %5724 = vmatpush.msra.mxu0 %v5676
  %5725 = vmatpush.msra.mxu0 %v5674
  %5726 = vmatmul.f32.gmra.mxu0 %v5682
  %v5727 = vpop.f32.mrf.mxu0
  %v5728 = vadd.f32 0.0, %v5727
  %5729 = vdwg.mxu0
  %v5730 = vadd.f32 %v5494, %v5708
  %v5731 = vadd.f32 %v5495, %v5728
  %v5732 = vld [vmem:[%s2851] sm:$0xff]
  %v5733 = vld [vmem:[%s2851 + $0x8] sm:$0xff]
  %v5734 = vld [vmem:[%s2851 + $0x10] sm:$0xff]
  %v5735 = vld [vmem:[%s2851 + $0x18] sm:$0xff]
  %v5736 = vld [vmem:[%s2851 + $0x20] sm:$0xff]
  %v5737 = vld [vmem:[%s2851 + $0x28] sm:$0xff]
  %v5738 = vld [vmem:[%s2851 + $0x30] sm:$0x1]
  %v5739 = vld [vmem:[%s2851 + $0x38] sm:$0x1]
  %v5741 = vsel %vm385, %v4330, 0
  %v5744 = vsel %vm78, %v5738, 0
  %v5747 = vsel %vm78, %v5739, 0
  %5749 = vmatpush.msra.mxu0 0.0
  %5750 = vmatpush.msra.mxu0 0.0
  %5751 = vmatpush.msra.mxu0 0.0
  %5752 = vmatpush.msra.mxu0 0.0
  %5753 = vmatpush.msra.mxu0 0.0
  %5754 = vmatpush.msra.mxu0 0.0
  %5755 = vmatpush.msra.mxu0 0.0
  %5756 = vmatpush.msra.mxu0 0.0
  %5757 = vmatpush.msra.mxu0 0.0
  %5758 = vmatpush.msra.mxu0 0.0
  %5759 = vmatpush.msra.mxu0 0.0
  %5760 = vmatpush.msra.mxu0 0.0
  %5761 = vmatpush.msra.mxu0 %v5744
  %5762 = vmatpush.msra.mxu0 %v5736
  %5763 = vmatpush.msra.mxu0 %v5734
  %5764 = vmatpush.msra.mxu0 %v5732
  %5765 = vmatmul.f32.gmra.mxu0 %v5741
  %v5766 = vpop.f32.mrf.mxu0
  %v5767 = vadd.f32 0.0, %v5766
  %5768 = vdwg.mxu0
  %5769 = vmatpush.msra.mxu0 0.0
  %5770 = vmatpush.msra.mxu0 0.0
  %5771 = vmatpush.msra.mxu0 0.0
  %5772 = vmatpush.msra.mxu0 0.0
  %5773 = vmatpush.msra.mxu0 0.0
  %5774 = vmatpush.msra.mxu0 0.0
  %5775 = vmatpush.msra.mxu0 0.0
  %5776 = vmatpush.msra.mxu0 0.0
  %5777 = vmatpush.msra.mxu0 0.0
  %5778 = vmatpush.msra.mxu0 0.0
  %5779 = vmatpush.msra.mxu0 0.0
  %5780 = vmatpush.msra.mxu0 0.0
  %5781 = vmatpush.msra.mxu0 %v5747
  %5782 = vmatpush.msra.mxu0 %v5737
  %5783 = vmatpush.msra.mxu0 %v5735
  %5784 = vmatpush.msra.mxu0 %v5733
  %5785 = vmatmul.f32.gmra.mxu0 %v5741
  %v5786 = vpop.f32.mrf.mxu0
  %v5787 = vadd.f32 0.0, %v5786
  %5788 = vdwg.mxu0
  %v5789 = vadd.f32 %v5553, %v5767
  %v5790 = vadd.f32 %v5554, %v5787
  %v5791 = vadd.f32 %v5789, %v5612
  %v5792 = vadd.f32 %v5790, %v5613
  %v5793 = vadd.f32 %v5791, %v5671
  %v5794 = vadd.f32 %v5792, %v5672
  %v5795 = vadd.f32 %v5793, %v5730
  %v5796 = vadd.f32 %v5794, %v5731
  %v5797 = vld [vmem:[%s12] sm:$0xff]
  %5799 = vset.pattern.permute.xlu0 0
  %5800 = vperm.xlu0 %5799, %v5797
  %v5801 = vpop.permute.xlu0 %5800
  %v5803 = vadd.f32 %v5795, %v5801
  %v5804 = vadd.f32 %v5796, %v5801
  %v5805 = vmax.f32 %v5803, 0.0
  %v5806 = vmax.f32 %v5804, 0.0
  %v5807 = vld [vmem:[%s14] sm:$0xf]
  %v5808 = vld [vmem:[%s15] sm:$0xf]
  %5810 = vset.pattern.permute.xlu0 0
  %5811 = vperm.xlu0 %5810, %v5808
  %v5812 = vpop.permute.xlu0 %5811
  %v5815 = vsel %vm781, %v5807, 0
  %5817 = vmatpush.msra.mxu0 0.0
  %5818 = vmatpush.msra.mxu0 0.0
  %5819 = vmatpush.msra.mxu0 0.0
  %5820 = vmatpush.msra.mxu0 0.0
  %5821 = vmatpush.msra.mxu0 0.0
  %5822 = vmatpush.msra.mxu0 0.0
  %5823 = vmatpush.msra.mxu0 0.0
  %5824 = vmatpush.msra.mxu0 0.0
  %5825 = vmatpush.msra.mxu0 0.0
  %5826 = vmatpush.msra.mxu0 0.0
  %5827 = vmatpush.msra.mxu0 0.0
  %5828 = vmatpush.msra.mxu0 0.0
  %5829 = vmatpush.msra.mxu0 0.0
  %5830 = vmatpush.msra.mxu0 0.0
  %5831 = vmatpush.msra.mxu0 0.0
  %5832 = vmatpush.msra.mxu0 %v5805
  %5833 = vmatmul.f32.gmra.mxu0 %v5815
  %v5834 = vpop.f32.mrf.mxu0
  %v5835 = vadd.f32 %v5812, %v5834
  %5836 = vdwg.mxu0
  %5837 = vmatpush.msra.mxu0 0.0
  %5838 = vmatpush.msra.mxu0 0.0
  %5839 = vmatpush.msra.mxu0 0.0
  %5840 = vmatpush.msra.mxu0 0.0
  %5841 = vmatpush.msra.mxu0 0.0
  %5842 = vmatpush.msra.mxu0 0.0
  %5843 = vmatpush.msra.mxu0 0.0
  %5844 = vmatpush.msra.mxu0 0.0
  %5845 = vmatpush.msra.mxu0 0.0
  %5846 = vmatpush.msra.mxu0 0.0
  %5847 = vmatpush.msra.mxu0 0.0
  %5848 = vmatpush.msra.mxu0 0.0
  %5849 = vmatpush.msra.mxu0 0.0
  %5850 = vmatpush.msra.mxu0 0.0
  %5851 = vmatpush.msra.mxu0 0.0
  %5852 = vmatpush.msra.mxu0 %v5806
  %5853 = vmatmul.f32.gmra.mxu0 %v5815
  %v5854 = vpop.f32.mrf.mxu0
  %v5855 = vadd.f32 %v5812, %v5854
  %5856 = vdwg.mxu0
  %v5857 = vtanh.pop %v5835
  %v5858 = vtanh.pop %v5855
  %v5861 = vrot.slane %v5858, 4
  %v5862 = vsel %vm127, %v5857, %v5861
  %s5864 = scalar_lea.vmem %s16, 8
  %5865 = vst.msk [vmem:[%s5864] sm:$0xff] %vm2985, %v5862
  // Predicated region
  $region66: #{autoencoder_forward.1} parent=0 // pred_check
    _
  $region67: #{autoencoder_forward.1} parent=0 // pred_check_branch
    %5867 = sbr.rel (0) target = $region69
  $region68: #{autoencoder_forward.1} parent=0 // pred_region
    _
  $region69: #{autoencoder_forward.1} parent=0 // pred_fallthru
    _
  // Predicated region
  $region70: #{autoencoder_forward.1} parent=0 // pred_check
    _
  $region71: #{autoencoder_forward.1} parent=0 // pred_check_branch
    %5869 = sbr.rel (0) target = $region73
  $region72: #{autoencoder_forward.1} parent=0 // pred_region
    _
  $region73: #{autoencoder_forward.1} parent=0 // pred_fallthru
    _
  // Predicated region
  $region74: #{autoencoder_forward.1} parent=0 // pred_check
    _
  $region75: #{autoencoder_forward.1} parent=0 // pred_check_branch
    %5871 = sbr.rel (0) target = $region77
  $region76: #{autoencoder_forward.1} parent=0 // pred_region
    _
  $region77: #{autoencoder_forward.1} parent=0 // pred_fallthru
    _
  // Predicated region
  $region78: #{autoencoder_forward.1} parent=0 // pred_check
    _
  $region79: #{autoencoder_forward.1} parent=0 // pred_check_branch
    %5873 = sbr.rel (0) target = $region81
  $region80: #{autoencoder_forward.1} parent=0 // pred_region
    _
  $region81: #{autoencoder_forward.1} parent=0 // pred_fallthru
    _

</llo_original>
